<compile_context>
chip_gen: v7x
topology: tpu7x:2x2x1
jax: 0.10.0
libtpu: 0.0.40
codegen_flags: <defaults>
</compile_context>

<pallas_src>
import math

import jax
import jax.numpy as jnp
import numpy as np
from jax.experimental import pallas as pl
from jax.experimental.pallas import tpu as pltpu

F32 = jnp.float32
BF16 = jnp.bfloat16


# ----------------------------- shared math helpers ------------------------

def _bdot(a, b):
    # MXU matmul: bf16 operands, f32 accumulation (used by kernel AND reference).
    return jnp.dot(a.astype(BF16), b.astype(BF16), preferred_element_type=F32)


def _silu(v):
    return v * jax.nn.sigmoid(v)


def _ln_rows(v, eps, axis):
    # LayerNorm over `axis` (the channel axis), no affine.
    mu = jnp.mean(v, axis=axis, keepdims=True)
    var = jnp.mean(jnp.square(v - mu), axis=axis, keepdims=True)
    return (v - mu) * jax.lax.rsqrt(var + eps)


def timestep_embedding(t, dim, max_period=10000.0):
    # Sinusoidal frequency embedding (tiny, per-batch scalars) in plain JAX.
    half = dim // 2
    freqs = jnp.exp(-math.log(max_period) * jnp.arange(half, dtype=F32) / half)
    args = t[:, None].astype(F32) * freqs[None]
    return jnp.concatenate([jnp.cos(args), jnp.sin(args)], axis=-1)


def build_shift_matrix(H, W):
    # S[(h+dy)*W + (w+dx), t*HW + h*W + w] = 1 for in-bounds taps, else column=0.
    # tap index t = (dy+1)*3 + (dx+1)  <->  conv kernel position (ky, kx).
    HW = H * W
    S = np.zeros((HW, 9 * HW), np.float32)
    for t9 in range(9):
        dy, dx = t9 // 3 - 1, t9 % 3 - 1
        for h in range(H):
            hs = h + dy
            if not (0 <= hs < H):
                continue
            for w in range(W):
                ws = w + dx
                if 0 <= ws < W:
                    S[hs * W + ws, t9 * HW + h * W + w] = 1.0
    return S


# --------------------------------- kernel ---------------------------------

def make_kernel(num_resblks, mid, hw):
    def kernel(x_ref, c_ref, tf_ref, s_ref,
               ce_gamma, ce_beta,
               ce_w_mod1, ce_b_mod1,
               ce_w_mod2_sh, ce_b_mod2_sh,
               ce_w_mod2_sc, ce_b_mod2_sc,
               ce_w_conv, ce_b_conv,
               t_w1, t_b1, t_w2, t_b2,
               w_in, b_in,
               rb_wmod, rb_bmod, rb_w1, rb_b1, rb_w2, rb_b2,
               f_wmod, f_bmod, f_wout, f_bout,
               o_ref):

        def conv_taps(v):
            # All 9 shifted + zero-masked copies of v in one wide MXU matmul.
            return _bdot(v, s_ref[...])                      # (C, 9*hw)

        def conv_apply(taps, w_ref, b_ref):
            # 3x3 conv given the tap slab: 9 accumulate matmuls + bias.
            acc = _bdot(w_ref[0], taps[:, 0:hw])
            for t9 in range(1, 9):
                acc = acc + _bdot(w_ref[t9], taps[:, t9 * hw:(t9 + 1) * hw])
            return acc + b_ref[...]                          # (Cout, hw)

        # ---- ConditionalEmbedder --------------------------------------------
        cv = c_ref[0]                                        # (Cin, hw)
        m0 = _ln_rows(cv, 1e-8, 0) * ce_gamma[...] + ce_beta[...]
        m1 = _silu(conv_apply(conv_taps(m0), ce_w_mod1, ce_b_mod1))
        taps_m1 = conv_taps(m1)                              # shared by shift/scale
        shift = conv_apply(taps_m1, ce_w_mod2_sh, ce_b_mod2_sh)
        scale = conv_apply(taps_m1, ce_w_mod2_sc, ce_b_mod2_sc)
        cm = _ln_rows(cv, 1e-8, 0) * (scale + 1.0) + shift
        c_emb = conv_apply(conv_taps(cm), ce_w_conv, ce_b_conv)   # (mid, hw)

        # ---- TimestepEmbedder MLP (broadcast over lanes) --------------------
        tfb = jnp.broadcast_to(tf_ref[0], (tf_ref.shape[1], hw))  # (F, hw)
        t1 = _silu(_bdot(t_w1[...], tfb) + t_b1[...])
        t_emb = _bdot(t_w2[...], t1) + t_b2[...]                  # (mid, hw)

        # ---- main MLP path ---------------------------------------------------
        sy = _silu(t_emb + c_emb)                            # SiLU(y), (mid, hw)
        h = _bdot(w_in[...], x_ref[0]) + b_in[...]           # in_layer, (mid, hw)
        for r in range(num_resblks):
            mod = _bdot(rb_wmod[r], sy) + rb_bmod[r]         # fused (3*mid, hw)
            sh_r = mod[0:mid]
            sc_r = mod[mid:2 * mid]
            gt_r = mod[2 * mid:3 * mid]
            u = _ln_rows(h, 1e-6, 0) * (sc_r + 1.0) + sh_r
            u = _silu(_bdot(rb_w1[r], u) + rb_b1[r])
            u = _bdot(rb_w2[r], u) + rb_b2[r]
            h = h + gt_r * u
        fmod = _bdot(f_wmod[...], sy) + f_bmod[...]          # fused (2*mid, hw)
        o = _ln_rows(h, 1e-6, 0) * (fmod[mid:2 * mid] + 1.0) + fmod[0:mid]
        o = _bdot(f_wout[...], o) + f_bout[...]              # (Cout, hw) lane-dense
        o_ref[...] = o[None]

    return kernel


# -------------------------------- wrapper ----------------------------------

def diffusion_mlp_cond_cnn(x, t, c, p, num_resblks):
    B, Cin, H, W = x.shape
    HW = H * W
    mid = p['w_in'].shape[0]
    Cout = p['f_wout'].shape[0]
    F = p['t_w1'].shape[1]
    assert HW % 128 == 0 and mid % 8 == 0, "layout assumes lane/sublane alignment"

    # Free (contiguous) reshapes only — no transposes, no padding, no repeat.
    x3 = x.astype(F32).reshape(B, Cin, HW)
    c3 = c.astype(F32).reshape(B, Cin, HW)
    tf = timestep_embedding(t, F)[..., None]                 # (B, F, 1)

    weights = [p['s_wide'],
               p['ce_gamma'], p['ce_beta'],
               p['ce_w_mod1'], p['ce_b_mod1'],
               p['ce_w_mod2_sh'], p['ce_b_mod2_sh'],
               p['ce_w_mod2_sc'], p['ce_b_mod2_sc'],
               p['ce_w_conv'], p['ce_b_conv'],
               p['t_w1'], p['t_b1'], p['t_w2'], p['t_b2'],
               p['w_in'], p['b_in'],
               p['rb_wmod'], p['rb_bmod'],
               p['rb_w1'], p['rb_b1'], p['rb_w2'], p['rb_b2'],
               p['f_wmod'], p['f_bmod'],
               p['f_wout'], p['f_bout']]

    def const_spec(a):
        return pl.BlockSpec(a.shape, lambda b, nd=a.ndim: (0,) * nd)

    row3 = lambda d: pl.BlockSpec((1, d, HW), lambda b: (b, 0, 0))
    in_specs = ([row3(Cin), row3(Cin),
                 pl.BlockSpec((1, F, 1), lambda b: (b, 0, 0))]
                + [const_spec(a) for a in weights])

    out = pl.pallas_call(
        make_kernel(num_resblks, mid, HW),
        out_shape=jax.ShapeDtypeStruct((B, Cout, HW), F32),
        grid=(B,),                                           # >= 2 parallel steps
        in_specs=in_specs,
        out_specs=pl.BlockSpec((1, Cout, HW), lambda b: (b, 0, 0)),
        compiler_params=pltpu.CompilerParams(
            dimension_semantics=("parallel",)),
    )(x3, c3, tf, *weights)
    return out.reshape(B, Cout, H, W)


# ------------------------------ parameter init ------------------------------

def init_params(key, Cin, Cout, mid, R, H, W, freq=256):
    keys = iter(jax.random.split(key, 32))
    g = lambda shape, s=0.1: s * jax.random.normal(next(keys), shape, F32)
    p = {}
    # constant conv shift/mask selection matrix (0/1, exact in bf16)
    p['s_wide'] = jnp.asarray(build_shift_matrix(H, W), BF16)
    # ConditionalEmbedder (conv weights stored (9, Cout, Cin); conv2 pre-split)
    p['ce_gamma'] = 1.0 + g((Cin, 1)); p['ce_beta'] = g((Cin, 1))
    p['ce_w_mod1'] = g((9, 2 * Cin, Cin));    p['ce_b_mod1'] = g((2 * Cin, 1))
    p['ce_w_mod2_sh'] = g((9, Cin, 2 * Cin)); p['ce_b_mod2_sh'] = g((Cin, 1))
    p['ce_w_mod2_sc'] = g((9, Cin, 2 * Cin)); p['ce_b_mod2_sc'] = g((Cin, 1))
    p['ce_w_conv'] = g((9, mid, Cin));        p['ce_b_conv'] = g((mid, 1))
    # TimestepEmbedder (PyTorch-like (out, in) layout)
    p['t_w1'] = g((mid, freq)); p['t_b1'] = g((mid, 1))
    p['t_w2'] = g((mid, mid));  p['t_b2'] = g((mid, 1))
    # in_layer
    p['w_in'] = g((mid, Cin)); p['b_in'] = g((mid, 1))
    # ResBlocks: fused modulation weight rows = [shift; scale; gate]
    p['rb_wmod'] = g((R, 3 * mid, mid)); p['rb_bmod'] = g((R, 3 * mid, 1))
    p['rb_w1'] = g((R, mid, mid)); p['rb_b1'] = g((R, mid, 1))
    p['rb_w2'] = g((R, mid, mid)); p['rb_b2'] = g((R, mid, 1))
    # FinalLayer: fused modulation weight rows = [shift; scale]
    p['f_wmod'] = g((2 * mid, mid)); p['f_bmod'] = g((2 * mid, 1))
    p['f_wout'] = g((Cout, mid));    p['f_bout'] = g((Cout, 1))
    return p


# ---------------------------- pure-JAX reference ----------------------------

def reference_forward(x, t, c, p, num_resblks):
    B, Cin, H, W = x.shape
    HW = H * W
    mid = p['w_in'].shape[0]
    Cout = p['f_wout'].shape[0]
    F = p['t_w1'].shape[1]

    def bmat(w, v):          # (O, C) weight applied per batch to (B, C, N)
        return jnp.einsum('oc,bcn->bon', w.astype(BF16), v.astype(BF16),
                          preferred_element_type=F32)

    def conv3x3(v, w, b):    # v (B, Ci, H, W); w (9, Co, Ci); b (Co, 1)
        vp = jnp.pad(v, ((0, 0), (0, 0), (1, 1), (1, 1)))
        acc = jnp.zeros((B, w.shape[1], HW), F32)
        for t9 in range(9):
            ky, kx = t9 // 3, t9 % 3
            tap = vp[:, :, ky:ky + H, kx:kx + W].reshape(B, v.shape[1], HW)
            acc = acc + bmat(w[t9], tap)
        return acc + b[None]

    c3 = c.astype(F32).reshape(B, Cin, HW)
    m0 = _ln_rows(c3, 1e-8, 1) * p['ce_gamma'][None] + p['ce_beta'][None]
    m1 = _silu(conv3x3(m0.reshape(B, Cin, H, W), p['ce_w_mod1'], p['ce_b_mod1']))
    m1 = m1.reshape(B, 2 * Cin, H, W)
    shift = conv3x3(m1, p['ce_w_mod2_sh'], p['ce_b_mod2_sh'])
    scale = conv3x3(m1, p['ce_w_mod2_sc'], p['ce_b_mod2_sc'])
    cm = _ln_rows(c3, 1e-8, 1) * (scale + 1.0) + shift
    c_emb = conv3x3(cm.reshape(B, Cin, H, W), p['ce_w_conv'], p['ce_b_conv'])

    tf = timestep_embedding(t, F)                            # (B, F)
    t1 = _silu(_bdot(p['t_w1'], tf.T) + p['t_b1'])           # (mid, B)
    t_emb = _bdot(p['t_w2'], t1) + p['t_b2']                 # (mid, B)
    sy = _silu(jnp.transpose(t_emb)[:, :, None] + c_emb)     # (B, mid, HW)

    x3 = x.astype(F32).reshape(B, Cin, HW)
    h = bmat(p['w_in'], x3) + p['b_in'][None]
    for r in range(num_resblks):
        mod = bmat(p['rb_wmod'][r], sy) + p['rb_bmod'][r][None]
        sh_r = mod[:, 0:mid]
        sc_r = mod[:, mid:2 * mid]
        gt_r = mod[:, 2 * mid:3 * mid]
        u = _ln_rows(h, 1e-6, 1) * (sc_r + 1.0) + sh_r
        u = _silu(bmat(p['rb_w1'][r], u) + p['rb_b1'][r][None])
        u = bmat(p['rb_w2'][r], u) + p['rb_b2'][r][None]
        h = h + gt_r * u
    fmod = bmat(p['f_wmod'], sy) + p['f_bmod'][None]
    o = _ln_rows(h, 1e-6, 1) * (fmod[:, mid:2 * mid] + 1.0) + fmod[:, 0:mid]
    o = bmat(p['f_wout'], o) + p['f_bout'][None]
    return o.reshape(B, Cout, H, W)


# ----------------------------------- main -----------------------------------

if __name__ == "__main__":
    B, Cin, Cout, mid, R = 2, 4, 4, 32, 2
    H = W = 16

    key = jax.random.PRNGKey(0)
    kx, kt, kc, kp = jax.random.split(key, 4)
    x = jax.random.normal(kx, (B, Cin, H, W), F32)
    t = jax.random.uniform(kt, (B,), F32, 0.0, 1000.0)
    c = jax.random.normal(kc, (B, Cin, H, W), F32)
    p = init_params(kp, Cin, Cout, mid, R, H, W)

    fwd = jax.jit(diffusion_mlp_cond_cnn, static_argnums=(4,))
    out = fwd(x, t, c, p, R)
    jax.block_until_ready(out)
    assert out.shape == (B, Cout, H, W)

    ref = reference_forward(x, t, c, p, R)
    np.testing.assert_allclose(np.asarray(out), np.asarray(ref),
                               rtol=2e-2, atol=2e-2)
    print("KERNEL_OK")
</pallas_src>

<mosaic_0001>
module attributes {stable_mosaic.version = 11 : i64} {
  func.func @kernel(%arg0: i32, %arg1: memref<1x4x256xf32, #tpu.memory_space<vmem>>, %arg2: memref<1x4x256xf32, #tpu.memory_space<vmem>>, %arg3: memref<1x256x1xf32, #tpu.memory_space<vmem>>, %arg4: memref<256x2304xbf16, #tpu.memory_space<vmem>>, %arg5: memref<4x1xf32, #tpu.memory_space<vmem>>, %arg6: memref<4x1xf32, #tpu.memory_space<vmem>>, %arg7: memref<9x8x4xf32, #tpu.memory_space<vmem>>, %arg8: memref<8x1xf32, #tpu.memory_space<vmem>>, %arg9: memref<9x4x8xf32, #tpu.memory_space<vmem>>, %arg10: memref<4x1xf32, #tpu.memory_space<vmem>>, %arg11: memref<9x4x8xf32, #tpu.memory_space<vmem>>, %arg12: memref<4x1xf32, #tpu.memory_space<vmem>>, %arg13: memref<9x32x4xf32, #tpu.memory_space<vmem>>, %arg14: memref<32x1xf32, #tpu.memory_space<vmem>>, %arg15: memref<32x256xf32, #tpu.memory_space<vmem>>, %arg16: memref<32x1xf32, #tpu.memory_space<vmem>>, %arg17: memref<32x32xf32, #tpu.memory_space<vmem>>, %arg18: memref<32x1xf32, #tpu.memory_space<vmem>>, %arg19: memref<32x4xf32, #tpu.memory_space<vmem>>, %arg20: memref<32x1xf32, #tpu.memory_space<vmem>>, %arg21: memref<2x96x32xf32, #tpu.memory_space<vmem>>, %arg22: memref<2x96x1xf32, #tpu.memory_space<vmem>>, %arg23: memref<2x32x32xf32, #tpu.memory_space<vmem>>, %arg24: memref<2x32x1xf32, #tpu.memory_space<vmem>>, %arg25: memref<2x32x32xf32, #tpu.memory_space<vmem>>, %arg26: memref<2x32x1xf32, #tpu.memory_space<vmem>>, %arg27: memref<64x32xf32, #tpu.memory_space<vmem>>, %arg28: memref<64x1xf32, #tpu.memory_space<vmem>>, %arg29: memref<4x32xf32, #tpu.memory_space<vmem>>, %arg30: memref<4x1xf32, #tpu.memory_space<vmem>>, %arg31: memref<1x4x256xf32, #tpu.memory_space<vmem>>) attributes {dimension_semantics = [#tpu.dimension_semantics<parallel>], iteration_bounds = array<i64: 2>, scalar_prefetch = 0 : i64, scratch_operands = 0 : i64, tpu.core_type = #tpu.core_type<tc>, window_params = [{transform_indices = @transform_0, window_bounds = array<i64: 1, 4, 256>}, {transform_indices = @transform_1, window_bounds = array<i64: 1, 4, 256>}, {transform_indices = @transform_2, window_bounds = array<i64: 1, 256, 1>}, {pipeline_mode = #tpu.pipeline_mode<synchronous>, transform_indices = @transform_3, window_bounds = array<i64: 256, 2304>}, {pipeline_mode = #tpu.pipeline_mode<synchronous>, transform_indices = @transform_4, window_bounds = array<i64: 4, 1>}, {pipeline_mode = #tpu.pipeline_mode<synchronous>, transform_indices = @transform_5, window_bounds = array<i64: 4, 1>}, {pipeline_mode = #tpu.pipeline_mode<synchronous>, transform_indices = @transform_6, window_bounds = array<i64: 9, 8, 4>}, {pipeline_mode = #tpu.pipeline_mode<synchronous>, transform_indices = @transform_7, window_bounds = array<i64: 8, 1>}, {pipeline_mode = #tpu.pipeline_mode<synchronous>, transform_indices = @transform_8, window_bounds = array<i64: 9, 4, 8>}, {pipeline_mode = #tpu.pipeline_mode<synchronous>, transform_indices = @transform_9, window_bounds = array<i64: 4, 1>}, {pipeline_mode = #tpu.pipeline_mode<synchronous>, transform_indices = @transform_10, window_bounds = array<i64: 9, 4, 8>}, {pipeline_mode = #tpu.pipeline_mode<synchronous>, transform_indices = @transform_11, window_bounds = array<i64: 4, 1>}, {pipeline_mode = #tpu.pipeline_mode<synchronous>, transform_indices = @transform_12, window_bounds = array<i64: 9, 32, 4>}, {pipeline_mode = #tpu.pipeline_mode<synchronous>, transform_indices = @transform_13, window_bounds = array<i64: 32, 1>}, {pipeline_mode = #tpu.pipeline_mode<synchronous>, transform_indices = @transform_14, window_bounds = array<i64: 32, 256>}, {pipeline_mode = #tpu.pipeline_mode<synchronous>, transform_indices = @transform_15, window_bounds = array<i64: 32, 1>}, {pipeline_mode = #tpu.pipeline_mode<synchronous>, transform_indices = @transform_16, window_bounds = array<i64: 32, 32>}, {pipeline_mode = #tpu.pipeline_mode<synchronous>, transform_indices = @transform_17, window_bounds = array<i64: 32, 1>}, {pipeline_mode = #tpu.pipeline_mode<synchronous>, transform_indices = @transform_18, window_bounds = array<i64: 32, 4>}, {pipeline_mode = #tpu.pipeline_mode<synchronous>, transform_indices = @transform_19, window_bounds = array<i64: 32, 1>}, {pipeline_mode = #tpu.pipeline_mode<synchronous>, transform_indices = @transform_20, window_bounds = array<i64: 2, 96, 32>}, {pipeline_mode = #tpu.pipeline_mode<synchronous>, transform_indices = @transform_21, window_bounds = array<i64: 2, 96, 1>}, {pipeline_mode = #tpu.pipeline_mode<synchronous>, transform_indices = @transform_22, window_bounds = array<i64: 2, 32, 32>}, {pipeline_mode = #tpu.pipeline_mode<synchronous>, transform_indices = @transform_23, window_bounds = array<i64: 2, 32, 1>}, {pipeline_mode = #tpu.pipeline_mode<synchronous>, transform_indices = @transform_24, window_bounds = array<i64: 2, 32, 32>}, {pipeline_mode = #tpu.pipeline_mode<synchronous>, transform_indices = @transform_25, window_bounds = array<i64: 2, 32, 1>}, {pipeline_mode = #tpu.pipeline_mode<synchronous>, transform_indices = @transform_26, window_bounds = array<i64: 64, 32>}, {pipeline_mode = #tpu.pipeline_mode<synchronous>, transform_indices = @transform_27, window_bounds = array<i64: 64, 1>}, {pipeline_mode = #tpu.pipeline_mode<synchronous>, transform_indices = @transform_28, window_bounds = array<i64: 4, 32>}, {pipeline_mode = #tpu.pipeline_mode<synchronous>, transform_indices = @transform_29, window_bounds = array<i64: 4, 1>}, {transform_indices = @transform_30, window_bounds = array<i64: 1, 4, 256>}]} {
    %c0 = arith.constant 0 : index
    %c0_0 = arith.constant 0 : index
    %c0_1 = arith.constant 0 : index
    %0 = vector.load %arg2[%c0, %c0_0, %c0_1] : memref<1x4x256xf32, #tpu.memory_space<vmem>>, vector<1x4x256xf32>
    %1 = vector.shape_cast %0 : vector<1x4x256xf32> to vector<4x256xf32>
    %cst = arith.constant dense<0.000000e+00> : vector<256xf32>
    %2 = vector.multi_reduction <add>, %1, %cst [0] : vector<4x256xf32> to vector<256xf32>
    %3 = vector.shape_cast %2 : vector<256xf32> to vector<1x256xf32>
    %cst_2 = arith.constant 4.000000e+00 : f32
    %4 = vector.broadcast %cst_2 : f32 to vector<1x256xf32>
    %5 = arith.divf %3, %4 : vector<1x256xf32>
    %6 = vector.broadcast %5 : vector<1x256xf32> to vector<4x256xf32>
    %7 = arith.subf %1, %6 : vector<4x256xf32>
    %8 = arith.mulf %7, %7 : vector<4x256xf32>
    %cst_3 = arith.constant dense<0.000000e+00> : vector<256xf32>
    %9 = vector.multi_reduction <add>, %8, %cst_3 [0] : vector<4x256xf32> to vector<256xf32>
    %10 = vector.shape_cast %9 : vector<256xf32> to vector<1x256xf32>
    %cst_4 = arith.constant 4.000000e+00 : f32
    %11 = vector.broadcast %cst_4 : f32 to vector<1x256xf32>
    %12 = arith.divf %10, %11 : vector<1x256xf32>
    %13 = vector.broadcast %5 : vector<1x256xf32> to vector<4x256xf32>
    %14 = arith.subf %1, %13 : vector<4x256xf32>
    %cst_5 = arith.constant 9.99999993E-9 : f32
    %15 = vector.broadcast %cst_5 : f32 to vector<1x256xf32>
    %16 = arith.addf %12, %15 : vector<1x256xf32>
    %17 = math.rsqrt %16 : vector<1x256xf32>
    %18 = vector.broadcast %17 : vector<1x256xf32> to vector<4x256xf32>
    %19 = arith.mulf %14, %18 : vector<4x256xf32>
    %c0_6 = arith.constant 0 : index
    %c0_7 = arith.constant 0 : index
    %20 = vector.load %arg5[%c0_6, %c0_7] : memref<4x1xf32, #tpu.memory_space<vmem>>, vector<4x1xf32>
    %21 = vector.broadcast %20 : vector<4x1xf32> to vector<4x256xf32>
    %22 = arith.mulf %19, %21 : vector<4x256xf32>
    %c0_8 = arith.constant 0 : index
    %c0_9 = arith.constant 0 : index
    %23 = vector.load %arg6[%c0_8, %c0_9] : memref<4x1xf32, #tpu.memory_space<vmem>>, vector<4x1xf32>
    %24 = vector.broadcast %23 : vector<4x1xf32> to vector<4x256xf32>
    %25 = arith.addf %22, %24 : vector<4x256xf32>
    %c0_10 = arith.constant 0 : index
    %c0_11 = arith.constant 0 : index
    %26 = vector.load %arg4[%c0_10, %c0_11] : memref<256x2304xbf16, #tpu.memory_space<vmem>>, vector<256x2304xbf16>
    %27 = arith.truncf %25 : vector<4x256xf32> to vector<4x256xbf16>
    %cst_12 = arith.constant dense<0.000000e+00> : vector<4x2304xf32>
    %28 = tpu.matmul %27, %26, %cst_12 {dimension_numbers = #tpu.dot_dimension_numbers<[1], [0], [0], [1], [0, 0, 1, 1], [], []>} : vector<4x256xbf16>, vector<256x2304xbf16>, vector<4x2304xf32> -> vector<4x2304xf32>
    %c0_13 = arith.constant 0 : index
    %c0_14 = arith.constant 0 : index
    %c0_15 = arith.constant 0 : index
    %29 = vector.load %arg7[%c0_13, %c0_14, %c0_15] : memref<9x8x4xf32, #tpu.memory_space<vmem>>, vector<1x8x4xf32>
    %30 = vector.shape_cast %29 : vector<1x8x4xf32> to vector<8x4xf32>
    %31 = vector.extract_strided_slice %28 {offsets = [0, 0], sizes = [4, 256], strides = [1, 1]} : vector<4x2304xf32> to vector<4x256xf32>
    %32 = arith.truncf %30 : vector<8x4xf32> to vector<8x4xbf16>
    %33 = arith.truncf %31 : vector<4x256xf32> to vector<4x256xbf16>
    %cst_16 = arith.constant dense<0.000000e+00> : vector<8x256xf32>
    %34 = tpu.matmul %32, %33, %cst_16 {dimension_numbers = #tpu.dot_dimension_numbers<[1], [0], [0], [1], [0, 0, 1, 1], [], []>} : vector<8x4xbf16>, vector<4x256xbf16>, vector<8x256xf32> -> vector<8x256xf32>
    %c1 = arith.constant 1 : index
    %c0_17 = arith.constant 0 : index
    %c0_18 = arith.constant 0 : index
    %35 = vector.load %arg7[%c1, %c0_17, %c0_18] : memref<9x8x4xf32, #tpu.memory_space<vmem>>, vector<1x8x4xf32>
    %36 = vector.shape_cast %35 : vector<1x8x4xf32> to vector<8x4xf32>
    %37 = vector.extract_strided_slice %28 {offsets = [0, 256], sizes = [4, 256], strides = [1, 1]} : vector<4x2304xf32> to vector<4x256xf32>
    %38 = arith.truncf %36 : vector<8x4xf32> to vector<8x4xbf16>
    %39 = arith.truncf %37 : vector<4x256xf32> to vector<4x256xbf16>
    %cst_19 = arith.constant dense<0.000000e+00> : vector<8x256xf32>
    %40 = tpu.matmul %38, %39, %cst_19 {dimension_numbers = #tpu.dot_dimension_numbers<[1], [0], [0], [1], [0, 0, 1, 1], [], []>} : vector<8x4xbf16>, vector<4x256xbf16>, vector<8x256xf32> -> vector<8x256xf32>
    %41 = arith.addf %34, %40 : vector<8x256xf32>
    %c2 = arith.constant 2 : index
    %c0_20 = arith.constant 0 : index
    %c0_21 = arith.constant 0 : index
    %42 = vector.load %arg7[%c2, %c0_20, %c0_21] : memref<9x8x4xf32, #tpu.memory_space<vmem>>, vector<1x8x4xf32>
    %43 = vector.shape_cast %42 : vector<1x8x4xf32> to vector<8x4xf32>
    %44 = vector.extract_strided_slice %28 {offsets = [0, 512], sizes = [4, 256], strides = [1, 1]} : vector<4x2304xf32> to vector<4x256xf32>
    %45 = arith.truncf %43 : vector<8x4xf32> to vector<8x4xbf16>
    %46 = arith.truncf %44 : vector<4x256xf32> to vector<4x256xbf16>
    %cst_22 = arith.constant dense<0.000000e+00> : vector<8x256xf32>
    %47 = tpu.matmul %45, %46, %cst_22 {dimension_numbers = #tpu.dot_dimension_numbers<[1], [0], [0], [1], [0, 0, 1, 1], [], []>} : vector<8x4xbf16>, vector<4x256xbf16>, vector<8x256xf32> -> vector<8x256xf32>
    %48 = arith.addf %41, %47 : vector<8x256xf32>
    %c3 = arith.constant 3 : index
    %c0_23 = arith.constant 0 : index
    %c0_24 = arith.constant 0 : index
    %49 = vector.load %arg7[%c3, %c0_23, %c0_24] : memref<9x8x4xf32, #tpu.memory_space<vmem>>, vector<1x8x4xf32>
    %50 = vector.shape_cast %49 : vector<1x8x4xf32> to vector<8x4xf32>
    %51 = vector.extract_strided_slice %28 {offsets = [0, 768], sizes = [4, 256], strides = [1, 1]} : vector<4x2304xf32> to vector<4x256xf32>
    %52 = arith.truncf %50 : vector<8x4xf32> to vector<8x4xbf16>
    %53 = arith.truncf %51 : vector<4x256xf32> to vector<4x256xbf16>
    %cst_25 = arith.constant dense<0.000000e+00> : vector<8x256xf32>
    %54 = tpu.matmul %52, %53, %cst_25 {dimension_numbers = #tpu.dot_dimension_numbers<[1], [0], [0], [1], [0, 0, 1, 1], [], []>} : vector<8x4xbf16>, vector<4x256xbf16>, vector<8x256xf32> -> vector<8x256xf32>
    %55 = arith.addf %48, %54 : vector<8x256xf32>
    %c4 = arith.constant 4 : index
    %c0_26 = arith.constant 0 : index
    %c0_27 = arith.constant 0 : index
    %56 = vector.load %arg7[%c4, %c0_26, %c0_27] : memref<9x8x4xf32, #tpu.memory_space<vmem>>, vector<1x8x4xf32>
    %57 = vector.shape_cast %56 : vector<1x8x4xf32> to vector<8x4xf32>
    %58 = vector.extract_strided_slice %28 {offsets = [0, 1024], sizes = [4, 256], strides = [1, 1]} : vector<4x2304xf32> to vector<4x256xf32>
    %59 = arith.truncf %57 : vector<8x4xf32> to vector<8x4xbf16>
    %60 = arith.truncf %58 : vector<4x256xf32> to vector<4x256xbf16>
    %cst_28 = arith.constant dense<0.000000e+00> : vector<8x256xf32>
    %61 = tpu.matmul %59, %60, %cst_28 {dimension_numbers = #tpu.dot_dimension_numbers<[1], [0], [0], [1], [0, 0, 1, 1], [], []>} : vector<8x4xbf16>, vector<4x256xbf16>, vector<8x256xf32> -> vector<8x256xf32>
    %62 = arith.addf %55, %61 : vector<8x256xf32>
    %c5 = arith.constant 5 : index
    %c0_29 = arith.constant 0 : index
    %c0_30 = arith.constant 0 : index
    %63 = vector.load %arg7[%c5, %c0_29, %c0_30] : memref<9x8x4xf32, #tpu.memory_space<vmem>>, vector<1x8x4xf32>
    %64 = vector.shape_cast %63 : vector<1x8x4xf32> to vector<8x4xf32>
    %65 = vector.extract_strided_slice %28 {offsets = [0, 1280], sizes = [4, 256], strides = [1, 1]} : vector<4x2304xf32> to vector<4x256xf32>
    %66 = arith.truncf %64 : vector<8x4xf32> to vector<8x4xbf16>
    %67 = arith.truncf %65 : vector<4x256xf32> to vector<4x256xbf16>
    %cst_31 = arith.constant dense<0.000000e+00> : vector<8x256xf32>
    %68 = tpu.matmul %66, %67, %cst_31 {dimension_numbers = #tpu.dot_dimension_numbers<[1], [0], [0], [1], [0, 0, 1, 1], [], []>} : vector<8x4xbf16>, vector<4x256xbf16>, vector<8x256xf32> -> vector<8x256xf32>
    %69 = arith.addf %62, %68 : vector<8x256xf32>
    %c6 = arith.constant 6 : index
    %c0_32 = arith.constant 0 : index
    %c0_33 = arith.constant 0 : index
    %70 = vector.load %arg7[%c6, %c0_32, %c0_33] : memref<9x8x4xf32, #tpu.memory_space<vmem>>, vector<1x8x4xf32>
    %71 = vector.shape_cast %70 : vector<1x8x4xf32> to vector<8x4xf32>
    %72 = vector.extract_strided_slice %28 {offsets = [0, 1536], sizes = [4, 256], strides = [1, 1]} : vector<4x2304xf32> to vector<4x256xf32>
    %73 = arith.truncf %71 : vector<8x4xf32> to vector<8x4xbf16>
    %74 = arith.truncf %72 : vector<4x256xf32> to vector<4x256xbf16>
    %cst_34 = arith.constant dense<0.000000e+00> : vector<8x256xf32>
    %75 = tpu.matmul %73, %74, %cst_34 {dimension_numbers = #tpu.dot_dimension_numbers<[1], [0], [0], [1], [0, 0, 1, 1], [], []>} : vector<8x4xbf16>, vector<4x256xbf16>, vector<8x256xf32> -> vector<8x256xf32>
    %76 = arith.addf %69, %75 : vector<8x256xf32>
    %c7 = arith.constant 7 : index
    %c0_35 = arith.constant 0 : index
    %c0_36 = arith.constant 0 : index
    %77 = vector.load %arg7[%c7, %c0_35, %c0_36] : memref<9x8x4xf32, #tpu.memory_space<vmem>>, vector<1x8x4xf32>
    %78 = vector.shape_cast %77 : vector<1x8x4xf32> to vector<8x4xf32>
    %79 = vector.extract_strided_slice %28 {offsets = [0, 1792], sizes = [4, 256], strides = [1, 1]} : vector<4x2304xf32> to vector<4x256xf32>
    %80 = arith.truncf %78 : vector<8x4xf32> to vector<8x4xbf16>
    %81 = arith.truncf %79 : vector<4x256xf32> to vector<4x256xbf16>
    %cst_37 = arith.constant dense<0.000000e+00> : vector<8x256xf32>
    %82 = tpu.matmul %80, %81, %cst_37 {dimension_numbers = #tpu.dot_dimension_numbers<[1], [0], [0], [1], [0, 0, 1, 1], [], []>} : vector<8x4xbf16>, vector<4x256xbf16>, vector<8x256xf32> -> vector<8x256xf32>
    %83 = arith.addf %76, %82 : vector<8x256xf32>
    %c8 = arith.constant 8 : index
    %c0_38 = arith.constant 0 : index
    %c0_39 = arith.constant 0 : index
    %84 = vector.load %arg7[%c8, %c0_38, %c0_39] : memref<9x8x4xf32, #tpu.memory_space<vmem>>, vector<1x8x4xf32>
    %85 = vector.shape_cast %84 : vector<1x8x4xf32> to vector<8x4xf32>
    %86 = vector.extract_strided_slice %28 {offsets = [0, 2048], sizes = [4, 256], strides = [1, 1]} : vector<4x2304xf32> to vector<4x256xf32>
    %87 = arith.truncf %85 : vector<8x4xf32> to vector<8x4xbf16>
    %88 = arith.truncf %86 : vector<4x256xf32> to vector<4x256xbf16>
    %cst_40 = arith.constant dense<0.000000e+00> : vector<8x256xf32>
    %89 = tpu.matmul %87, %88, %cst_40 {dimension_numbers = #tpu.dot_dimension_numbers<[1], [0], [0], [1], [0, 0, 1, 1], [], []>} : vector<8x4xbf16>, vector<4x256xbf16>, vector<8x256xf32> -> vector<8x256xf32>
    %90 = arith.addf %83, %89 : vector<8x256xf32>
    %c0_41 = arith.constant 0 : index
    %c0_42 = arith.constant 0 : index
    %91 = vector.load %arg8[%c0_41, %c0_42] : memref<8x1xf32, #tpu.memory_space<vmem>>, vector<8x1xf32>
    %92 = vector.broadcast %91 : vector<8x1xf32> to vector<8x256xf32>
    %93 = arith.addf %90, %92 : vector<8x256xf32>
    %94 = arith.negf %93 : vector<8x256xf32>
    %95 = math.exp %94 : vector<8x256xf32>
    %cst_43 = arith.constant 1.000000e+00 : f32
    %96 = vector.broadcast %cst_43 : f32 to vector<8x256xf32>
    %97 = arith.addf %96, %95 : vector<8x256xf32>
    %98 = arith.divf %96, %97 : vector<8x256xf32>
    %99 = arith.mulf %93, %98 : vector<8x256xf32>
    %c0_44 = arith.constant 0 : index
    %c0_45 = arith.constant 0 : index
    %100 = vector.load %arg4[%c0_44, %c0_45] : memref<256x2304xbf16, #tpu.memory_space<vmem>>, vector<256x2304xbf16>
    %101 = arith.truncf %99 : vector<8x256xf32> to vector<8x256xbf16>
    %cst_46 = arith.constant dense<0.000000e+00> : vector<8x2304xf32>
    %102 = tpu.matmul %101, %100, %cst_46 {dimension_numbers = #tpu.dot_dimension_numbers<[1], [0], [0], [1], [0, 0, 1, 1], [], []>} : vector<8x256xbf16>, vector<256x2304xbf16>, vector<8x2304xf32> -> vector<8x2304xf32>
    %c0_47 = arith.constant 0 : index
    %c0_48 = arith.constant 0 : index
    %c0_49 = arith.constant 0 : index
    %103 = vector.load %arg9[%c0_47, %c0_48, %c0_49] : memref<9x4x8xf32, #tpu.memory_space<vmem>>, vector<1x4x8xf32>
    %104 = vector.shape_cast %103 : vector<1x4x8xf32> to vector<4x8xf32>
    %105 = vector.extract_strided_slice %102 {offsets = [0, 0], sizes = [8, 256], strides = [1, 1]} : vector<8x2304xf32> to vector<8x256xf32>
    %106 = arith.truncf %104 : vector<4x8xf32> to vector<4x8xbf16>
    %107 = arith.truncf %105 : vector<8x256xf32> to vector<8x256xbf16>
    %cst_50 = arith.constant dense<0.000000e+00> : vector<4x256xf32>
    %108 = tpu.matmul %106, %107, %cst_50 {dimension_numbers = #tpu.dot_dimension_numbers<[1], [0], [0], [1], [0, 0, 1, 1], [], []>} : vector<4x8xbf16>, vector<8x256xbf16>, vector<4x256xf32> -> vector<4x256xf32>
    %c1_51 = arith.constant 1 : index
    %c0_52 = arith.constant 0 : index
    %c0_53 = arith.constant 0 : index
    %109 = vector.load %arg9[%c1_51, %c0_52, %c0_53] : memref<9x4x8xf32, #tpu.memory_space<vmem>>, vector<1x4x8xf32>
    %110 = vector.shape_cast %109 : vector<1x4x8xf32> to vector<4x8xf32>
    %111 = vector.extract_strided_slice %102 {offsets = [0, 256], sizes = [8, 256], strides = [1, 1]} : vector<8x2304xf32> to vector<8x256xf32>
    %112 = arith.truncf %110 : vector<4x8xf32> to vector<4x8xbf16>
    %113 = arith.truncf %111 : vector<8x256xf32> to vector<8x256xbf16>
    %cst_54 = arith.constant dense<0.000000e+00> : vector<4x256xf32>
    %114 = tpu.matmul %112, %113, %cst_54 {dimension_numbers = #tpu.dot_dimension_numbers<[1], [0], [0], [1], [0, 0, 1, 1], [], []>} : vector<4x8xbf16>, vector<8x256xbf16>, vector<4x256xf32> -> vector<4x256xf32>
    %115 = arith.addf %108, %114 : vector<4x256xf32>
    %c2_55 = arith.constant 2 : index
    %c0_56 = arith.constant 0 : index
    %c0_57 = arith.constant 0 : index
    %116 = vector.load %arg9[%c2_55, %c0_56, %c0_57] : memref<9x4x8xf32, #tpu.memory_space<vmem>>, vector<1x4x8xf32>
    %117 = vector.shape_cast %116 : vector<1x4x8xf32> to vector<4x8xf32>
    %118 = vector.extract_strided_slice %102 {offsets = [0, 512], sizes = [8, 256], strides = [1, 1]} : vector<8x2304xf32> to vector<8x256xf32>
    %119 = arith.truncf %117 : vector<4x8xf32> to vector<4x8xbf16>
    %120 = arith.truncf %118 : vector<8x256xf32> to vector<8x256xbf16>
    %cst_58 = arith.constant dense<0.000000e+00> : vector<4x256xf32>
    %121 = tpu.matmul %119, %120, %cst_58 {dimension_numbers = #tpu.dot_dimension_numbers<[1], [0], [0], [1], [0, 0, 1, 1], [], []>} : vector<4x8xbf16>, vector<8x256xbf16>, vector<4x256xf32> -> vector<4x256xf32>
    %122 = arith.addf %115, %121 : vector<4x256xf32>
    %c3_59 = arith.constant 3 : index
    %c0_60 = arith.constant 0 : index
    %c0_61 = arith.constant 0 : index
    %123 = vector.load %arg9[%c3_59, %c0_60, %c0_61] : memref<9x4x8xf32, #tpu.memory_space<vmem>>, vector<1x4x8xf32>
    %124 = vector.shape_cast %123 : vector<1x4x8xf32> to vector<4x8xf32>
    %125 = vector.extract_strided_slice %102 {offsets = [0, 768], sizes = [8, 256], strides = [1, 1]} : vector<8x2304xf32> to vector<8x256xf32>
    %126 = arith.truncf %124 : vector<4x8xf32> to vector<4x8xbf16>
    %127 = arith.truncf %125 : vector<8x256xf32> to vector<8x256xbf16>
    %cst_62 = arith.constant dense<0.000000e+00> : vector<4x256xf32>
    %128 = tpu.matmul %126, %127, %cst_62 {dimension_numbers = #tpu.dot_dimension_numbers<[1], [0], [0], [1], [0, 0, 1, 1], [], []>} : vector<4x8xbf16>, vector<8x256xbf16>, vector<4x256xf32> -> vector<4x256xf32>
    %129 = arith.addf %122, %128 : vector<4x256xf32>
    %c4_63 = arith.constant 4 : index
    %c0_64 = arith.constant 0 : index
    %c0_65 = arith.constant 0 : index
    %130 = vector.load %arg9[%c4_63, %c0_64, %c0_65] : memref<9x4x8xf32, #tpu.memory_space<vmem>>, vector<1x4x8xf32>
    %131 = vector.shape_cast %130 : vector<1x4x8xf32> to vector<4x8xf32>
    %132 = vector.extract_strided_slice %102 {offsets = [0, 1024], sizes = [8, 256], strides = [1, 1]} : vector<8x2304xf32> to vector<8x256xf32>
    %133 = arith.truncf %131 : vector<4x8xf32> to vector<4x8xbf16>
    %134 = arith.truncf %132 : vector<8x256xf32> to vector<8x256xbf16>
    %cst_66 = arith.constant dense<0.000000e+00> : vector<4x256xf32>
    %135 = tpu.matmul %133, %134, %cst_66 {dimension_numbers = #tpu.dot_dimension_numbers<[1], [0], [0], [1], [0, 0, 1, 1], [], []>} : vector<4x8xbf16>, vector<8x256xbf16>, vector<4x256xf32> -> vector<4x256xf32>
    %136 = arith.addf %129, %135 : vector<4x256xf32>
    %c5_67 = arith.constant 5 : index
    %c0_68 = arith.constant 0 : index
    %c0_69 = arith.constant 0 : index
    %137 = vector.load %arg9[%c5_67, %c0_68, %c0_69] : memref<9x4x8xf32, #tpu.memory_space<vmem>>, vector<1x4x8xf32>
    %138 = vector.shape_cast %137 : vector<1x4x8xf32> to vector<4x8xf32>
    %139 = vector.extract_strided_slice %102 {offsets = [0, 1280], sizes = [8, 256], strides = [1, 1]} : vector<8x2304xf32> to vector<8x256xf32>
    %140 = arith.truncf %138 : vector<4x8xf32> to vector<4x8xbf16>
    %141 = arith.truncf %139 : vector<8x256xf32> to vector<8x256xbf16>
    %cst_70 = arith.constant dense<0.000000e+00> : vector<4x256xf32>
    %142 = tpu.matmul %140, %141, %cst_70 {dimension_numbers = #tpu.dot_dimension_numbers<[1], [0], [0], [1], [0, 0, 1, 1], [], []>} : vector<4x8xbf16>, vector<8x256xbf16>, vector<4x256xf32> -> vector<4x256xf32>
    %143 = arith.addf %136, %142 : vector<4x256xf32>
    %c6_71 = arith.constant 6 : index
    %c0_72 = arith.constant 0 : index
    %c0_73 = arith.constant 0 : index
    %144 = vector.load %arg9[%c6_71, %c0_72, %c0_73] : memref<9x4x8xf32, #tpu.memory_space<vmem>>, vector<1x4x8xf32>
    %145 = vector.shape_cast %144 : vector<1x4x8xf32> to vector<4x8xf32>
    %146 = vector.extract_strided_slice %102 {offsets = [0, 1536], sizes = [8, 256], strides = [1, 1]} : vector<8x2304xf32> to vector<8x256xf32>
    %147 = arith.truncf %145 : vector<4x8xf32> to vector<4x8xbf16>
    %148 = arith.truncf %146 : vector<8x256xf32> to vector<8x256xbf16>
    %cst_74 = arith.constant dense<0.000000e+00> : vector<4x256xf32>
    %149 = tpu.matmul %147, %148, %cst_74 {dimension_numbers = #tpu.dot_dimension_numbers<[1], [0], [0], [1], [0, 0, 1, 1], [], []>} : vector<4x8xbf16>, vector<8x256xbf16>, vector<4x256xf32> -> vector<4x256xf32>
    %150 = arith.addf %143, %149 : vector<4x256xf32>
    %c7_75 = arith.constant 7 : index
    %c0_76 = arith.constant 0 : index
    %c0_77 = arith.constant 0 : index
    %151 = vector.load %arg9[%c7_75, %c0_76, %c0_77] : memref<9x4x8xf32, #tpu.memory_space<vmem>>, vector<1x4x8xf32>
    %152 = vector.shape_cast %151 : vector<1x4x8xf32> to vector<4x8xf32>
    %153 = vector.extract_strided_slice %102 {offsets = [0, 1792], sizes = [8, 256], strides = [1, 1]} : vector<8x2304xf32> to vector<8x256xf32>
    %154 = arith.truncf %152 : vector<4x8xf32> to vector<4x8xbf16>
    %155 = arith.truncf %153 : vector<8x256xf32> to vector<8x256xbf16>
    %cst_78 = arith.constant dense<0.000000e+00> : vector<4x256xf32>
    %156 = tpu.matmul %154, %155, %cst_78 {dimension_numbers = #tpu.dot_dimension_numbers<[1], [0], [0], [1], [0, 0, 1, 1], [], []>} : vector<4x8xbf16>, vector<8x256xbf16>, vector<4x256xf32> -> vector<4x256xf32>
    %157 = arith.addf %150, %156 : vector<4x256xf32>
    %c8_79 = arith.constant 8 : index
    %c0_80 = arith.constant 0 : index
    %c0_81 = arith.constant 0 : index
    %158 = vector.load %arg9[%c8_79, %c0_80, %c0_81] : memref<9x4x8xf32, #tpu.memory_space<vmem>>, vector<1x4x8xf32>
    %159 = vector.shape_cast %158 : vector<1x4x8xf32> to vector<4x8xf32>
    %160 = vector.extract_strided_slice %102 {offsets = [0, 2048], sizes = [8, 256], strides = [1, 1]} : vector<8x2304xf32> to vector<8x256xf32>
    %161 = arith.truncf %159 : vector<4x8xf32> to vector<4x8xbf16>
    %162 = arith.truncf %160 : vector<8x256xf32> to vector<8x256xbf16>
    %cst_82 = arith.constant dense<0.000000e+00> : vector<4x256xf32>
    %163 = tpu.matmul %161, %162, %cst_82 {dimension_numbers = #tpu.dot_dimension_numbers<[1], [0], [0], [1], [0, 0, 1, 1], [], []>} : vector<4x8xbf16>, vector<8x256xbf16>, vector<4x256xf32> -> vector<4x256xf32>
    %164 = arith.addf %157, %163 : vector<4x256xf32>
    %c0_83 = arith.constant 0 : index
    %c0_84 = arith.constant 0 : index
    %165 = vector.load %arg10[%c0_83, %c0_84] : memref<4x1xf32, #tpu.memory_space<vmem>>, vector<4x1xf32>
    %166 = vector.broadcast %165 : vector<4x1xf32> to vector<4x256xf32>
    %167 = arith.addf %164, %166 : vector<4x256xf32>
    %c0_85 = arith.constant 0 : index
    %c0_86 = arith.constant 0 : index
    %c0_87 = arith.constant 0 : index
    %168 = vector.load %arg11[%c0_85, %c0_86, %c0_87] : memref<9x4x8xf32, #tpu.memory_space<vmem>>, vector<1x4x8xf32>
    %169 = vector.shape_cast %168 : vector<1x4x8xf32> to vector<4x8xf32>
    %170 = vector.extract_strided_slice %102 {offsets = [0, 0], sizes = [8, 256], strides = [1, 1]} : vector<8x2304xf32> to vector<8x256xf32>
    %171 = arith.truncf %169 : vector<4x8xf32> to vector<4x8xbf16>
    %172 = arith.truncf %170 : vector<8x256xf32> to vector<8x256xbf16>
    %cst_88 = arith.constant dense<0.000000e+00> : vector<4x256xf32>
    %173 = tpu.matmul %171, %172, %cst_88 {dimension_numbers = #tpu.dot_dimension_numbers<[1], [0], [0], [1], [0, 0, 1, 1], [], []>} : vector<4x8xbf16>, vector<8x256xbf16>, vector<4x256xf32> -> vector<4x256xf32>
    %c1_89 = arith.constant 1 : index
    %c0_90 = arith.constant 0 : index
    %c0_91 = arith.constant 0 : index
    %174 = vector.load %arg11[%c1_89, %c0_90, %c0_91] : memref<9x4x8xf32, #tpu.memory_space<vmem>>, vector<1x4x8xf32>
    %175 = vector.shape_cast %174 : vector<1x4x8xf32> to vector<4x8xf32>
    %176 = vector.extract_strided_slice %102 {offsets = [0, 256], sizes = [8, 256], strides = [1, 1]} : vector<8x2304xf32> to vector<8x256xf32>
    %177 = arith.truncf %175 : vector<4x8xf32> to vector<4x8xbf16>
    %178 = arith.truncf %176 : vector<8x256xf32> to vector<8x256xbf16>
    %cst_92 = arith.constant dense<0.000000e+00> : vector<4x256xf32>
    %179 = tpu.matmul %177, %178, %cst_92 {dimension_numbers = #tpu.dot_dimension_numbers<[1], [0], [0], [1], [0, 0, 1, 1], [], []>} : vector<4x8xbf16>, vector<8x256xbf16>, vector<4x256xf32> -> vector<4x256xf32>
    %180 = arith.addf %173, %179 : vector<4x256xf32>
    %c2_93 = arith.constant 2 : index
    %c0_94 = arith.constant 0 : index
    %c0_95 = arith.constant 0 : index
    %181 = vector.load %arg11[%c2_93, %c0_94, %c0_95] : memref<9x4x8xf32, #tpu.memory_space<vmem>>, vector<1x4x8xf32>
    %182 = vector.shape_cast %181 : vector<1x4x8xf32> to vector<4x8xf32>
    %183 = vector.extract_strided_slice %102 {offsets = [0, 512], sizes = [8, 256], strides = [1, 1]} : vector<8x2304xf32> to vector<8x256xf32>
    %184 = arith.truncf %182 : vector<4x8xf32> to vector<4x8xbf16>
    %185 = arith.truncf %183 : vector<8x256xf32> to vector<8x256xbf16>
    %cst_96 = arith.constant dense<0.000000e+00> : vector<4x256xf32>
    %186 = tpu.matmul %184, %185, %cst_96 {dimension_numbers = #tpu.dot_dimension_numbers<[1], [0], [0], [1], [0, 0, 1, 1], [], []>} : vector<4x8xbf16>, vector<8x256xbf16>, vector<4x256xf32> -> vector<4x256xf32>
    %187 = arith.addf %180, %186 : vector<4x256xf32>
    %c3_97 = arith.constant 3 : index
    %c0_98 = arith.constant 0 : index
    %c0_99 = arith.constant 0 : index
    %188 = vector.load %arg11[%c3_97, %c0_98, %c0_99] : memref<9x4x8xf32, #tpu.memory_space<vmem>>, vector<1x4x8xf32>
    %189 = vector.shape_cast %188 : vector<1x4x8xf32> to vector<4x8xf32>
    %190 = vector.extract_strided_slice %102 {offsets = [0, 768], sizes = [8, 256], strides = [1, 1]} : vector<8x2304xf32> to vector<8x256xf32>
    %191 = arith.truncf %189 : vector<4x8xf32> to vector<4x8xbf16>
    %192 = arith.truncf %190 : vector<8x256xf32> to vector<8x256xbf16>
    %cst_100 = arith.constant dense<0.000000e+00> : vector<4x256xf32>
    %193 = tpu.matmul %191, %192, %cst_100 {dimension_numbers = #tpu.dot_dimension_numbers<[1], [0], [0], [1], [0, 0, 1, 1], [], []>} : vector<4x8xbf16>, vector<8x256xbf16>, vector<4x256xf32> -> vector<4x256xf32>
    %194 = arith.addf %187, %193 : vector<4x256xf32>
    %c4_101 = arith.constant 4 : index
    %c0_102 = arith.constant 0 : index
    %c0_103 = arith.constant 0 : index
    %195 = vector.load %arg11[%c4_101, %c0_102, %c0_103] : memref<9x4x8xf32, #tpu.memory_space<vmem>>, vector<1x4x8xf32>
    %196 = vector.shape_cast %195 : vector<1x4x8xf32> to vector<4x8xf32>
    %197 = vector.extract_strided_slice %102 {offsets = [0, 1024], sizes = [8, 256], strides = [1, 1]} : vector<8x2304xf32> to vector<8x256xf32>
    %198 = arith.truncf %196 : vector<4x8xf32> to vector<4x8xbf16>
    %199 = arith.truncf %197 : vector<8x256xf32> to vector<8x256xbf16>
    %cst_104 = arith.constant dense<0.000000e+00> : vector<4x256xf32>
    %200 = tpu.matmul %198, %199, %cst_104 {dimension_numbers = #tpu.dot_dimension_numbers<[1], [0], [0], [1], [0, 0, 1, 1], [], []>} : vector<4x8xbf16>, vector<8x256xbf16>, vector<4x256xf32> -> vector<4x256xf32>
    %201 = arith.addf %194, %200 : vector<4x256xf32>
    %c5_105 = arith.constant 5 : index
    %c0_106 = arith.constant 0 : index
    %c0_107 = arith.constant 0 : index
    %202 = vector.load %arg11[%c5_105, %c0_106, %c0_107] : memref<9x4x8xf32, #tpu.memory_space<vmem>>, vector<1x4x8xf32>
    %203 = vector.shape_cast %202 : vector<1x4x8xf32> to vector<4x8xf32>
    %204 = vector.extract_strided_slice %102 {offsets = [0, 1280], sizes = [8, 256], strides = [1, 1]} : vector<8x2304xf32> to vector<8x256xf32>
    %205 = arith.truncf %203 : vector<4x8xf32> to vector<4x8xbf16>
    %206 = arith.truncf %204 : vector<8x256xf32> to vector<8x256xbf16>
    %cst_108 = arith.constant dense<0.000000e+00> : vector<4x256xf32>
    %207 = tpu.matmul %205, %206, %cst_108 {dimension_numbers = #tpu.dot_dimension_numbers<[1], [0], [0], [1], [0, 0, 1, 1], [], []>} : vector<4x8xbf16>, vector<8x256xbf16>, vector<4x256xf32> -> vector<4x256xf32>
    %208 = arith.addf %201, %207 : vector<4x256xf32>
    %c6_109 = arith.constant 6 : index
    %c0_110 = arith.constant 0 : index
    %c0_111 = arith.constant 0 : index
    %209 = vector.load %arg11[%c6_109, %c0_110, %c0_111] : memref<9x4x8xf32, #tpu.memory_space<vmem>>, vector<1x4x8xf32>
    %210 = vector.shape_cast %209 : vector<1x4x8xf32> to vector<4x8xf32>
    %211 = vector.extract_strided_slice %102 {offsets = [0, 1536], sizes = [8, 256], strides = [1, 1]} : vector<8x2304xf32> to vector<8x256xf32>
    %212 = arith.truncf %210 : vector<4x8xf32> to vector<4x8xbf16>
    %213 = arith.truncf %211 : vector<8x256xf32> to vector<8x256xbf16>
    %cst_112 = arith.constant dense<0.000000e+00> : vector<4x256xf32>
    %214 = tpu.matmul %212, %213, %cst_112 {dimension_numbers = #tpu.dot_dimension_numbers<[1], [0], [0], [1], [0, 0, 1, 1], [], []>} : vector<4x8xbf16>, vector<8x256xbf16>, vector<4x256xf32> -> vector<4x256xf32>
    %215 = arith.addf %208, %214 : vector<4x256xf32>
    %c7_113 = arith.constant 7 : index
    %c0_114 = arith.constant 0 : index
    %c0_115 = arith.constant 0 : index
    %216 = vector.load %arg11[%c7_113, %c0_114, %c0_115] : memref<9x4x8xf32, #tpu.memory_space<vmem>>, vector<1x4x8xf32>
    %217 = vector.shape_cast %216 : vector<1x4x8xf32> to vector<4x8xf32>
    %218 = vector.extract_strided_slice %102 {offsets = [0, 1792], sizes = [8, 256], strides = [1, 1]} : vector<8x2304xf32> to vector<8x256xf32>
    %219 = arith.truncf %217 : vector<4x8xf32> to vector<4x8xbf16>
    %220 = arith.truncf %218 : vector<8x256xf32> to vector<8x256xbf16>
    %cst_116 = arith.constant dense<0.000000e+00> : vector<4x256xf32>
    %221 = tpu.matmul %219, %220, %cst_116 {dimension_numbers = #tpu.dot_dimension_numbers<[1], [0], [0], [1], [0, 0, 1, 1], [], []>} : vector<4x8xbf16>, vector<8x256xbf16>, vector<4x256xf32> -> vector<4x256xf32>
    %222 = arith.addf %215, %221 : vector<4x256xf32>
    %c8_117 = arith.constant 8 : index
    %c0_118 = arith.constant 0 : index
    %c0_119 = arith.constant 0 : index
    %223 = vector.load %arg11[%c8_117, %c0_118, %c0_119] : memref<9x4x8xf32, #tpu.memory_space<vmem>>, vector<1x4x8xf32>
    %224 = vector.shape_cast %223 : vector<1x4x8xf32> to vector<4x8xf32>
    %225 = vector.extract_strided_slice %102 {offsets = [0, 2048], sizes = [8, 256], strides = [1, 1]} : vector<8x2304xf32> to vector<8x256xf32>
    %226 = arith.truncf %224 : vector<4x8xf32> to vector<4x8xbf16>
    %227 = arith.truncf %225 : vector<8x256xf32> to vector<8x256xbf16>
    %cst_120 = arith.constant dense<0.000000e+00> : vector<4x256xf32>
    %228 = tpu.matmul %226, %227, %cst_120 {dimension_numbers = #tpu.dot_dimension_numbers<[1], [0], [0], [1], [0, 0, 1, 1], [], []>} : vector<4x8xbf16>, vector<8x256xbf16>, vector<4x256xf32> -> vector<4x256xf32>
    %229 = arith.addf %222, %228 : vector<4x256xf32>
    %c0_121 = arith.constant 0 : index
    %c0_122 = arith.constant 0 : index
    %230 = vector.load %arg12[%c0_121, %c0_122] : memref<4x1xf32, #tpu.memory_space<vmem>>, vector<4x1xf32>
    %231 = vector.broadcast %230 : vector<4x1xf32> to vector<4x256xf32>
    %232 = arith.addf %229, %231 : vector<4x256xf32>
    %cst_123 = arith.constant dense<0.000000e+00> : vector<256xf32>
    %233 = vector.multi_reduction <add>, %1, %cst_123 [0] : vector<4x256xf32> to vector<256xf32>
    %234 = vector.shape_cast %233 : vector<256xf32> to vector<1x256xf32>
    %cst_124 = arith.constant 4.000000e+00 : f32
    %235 = vector.broadcast %cst_124 : f32 to vector<1x256xf32>
    %236 = arith.divf %234, %235 : vector<1x256xf32>
    %237 = vector.broadcast %236 : vector<1x256xf32> to vector<4x256xf32>
    %238 = arith.subf %1, %237 : vector<4x256xf32>
    %239 = arith.mulf %238, %238 : vector<4x256xf32>
    %cst_125 = arith.constant dense<0.000000e+00> : vector<256xf32>
    %240 = vector.multi_reduction <add>, %239, %cst_125 [0] : vector<4x256xf32> to vector<256xf32>
    %241 = vector.shape_cast %240 : vector<256xf32> to vector<1x256xf32>
    %cst_126 = arith.constant 4.000000e+00 : f32
    %242 = vector.broadcast %cst_126 : f32 to vector<1x256xf32>
    %243 = arith.divf %241, %242 : vector<1x256xf32>
    %244 = vector.broadcast %236 : vector<1x256xf32> to vector<4x256xf32>
    %245 = arith.subf %1, %244 : vector<4x256xf32>
    %cst_127 = arith.constant 9.99999993E-9 : f32
    %246 = vector.broadcast %cst_127 : f32 to vector<1x256xf32>
    %247 = arith.addf %243, %246 : vector<1x256xf32>
    %248 = math.rsqrt %247 : vector<1x256xf32>
    %249 = vector.broadcast %248 : vector<1x256xf32> to vector<4x256xf32>
    %250 = arith.mulf %245, %249 : vector<4x256xf32>
    %cst_128 = arith.constant 1.000000e+00 : f32
    %251 = vector.broadcast %cst_128 : f32 to vector<4x256xf32>
    %252 = arith.addf %232, %251 : vector<4x256xf32>
    %253 = arith.mulf %250, %252 : vector<4x256xf32>
    %254 = arith.addf %253, %167 : vector<4x256xf32>
    %c0_129 = arith.constant 0 : index
    %c0_130 = arith.constant 0 : index
    %255 = vector.load %arg4[%c0_129, %c0_130] : memref<256x2304xbf16, #tpu.memory_space<vmem>>, vector<256x2304xbf16>
    %256 = arith.truncf %254 : vector<4x256xf32> to vector<4x256xbf16>
    %cst_131 = arith.constant dense<0.000000e+00> : vector<4x2304xf32>
    %257 = tpu.matmul %256, %255, %cst_131 {dimension_numbers = #tpu.dot_dimension_numbers<[1], [0], [0], [1], [0, 0, 1, 1], [], []>} : vector<4x256xbf16>, vector<256x2304xbf16>, vector<4x2304xf32> -> vector<4x2304xf32>
    %c0_132 = arith.constant 0 : index
    %c0_133 = arith.constant 0 : index
    %c0_134 = arith.constant 0 : index
    %258 = vector.load %arg13[%c0_132, %c0_133, %c0_134] : memref<9x32x4xf32, #tpu.memory_space<vmem>>, vector<1x32x4xf32>
    %259 = vector.shape_cast %258 : vector<1x32x4xf32> to vector<32x4xf32>
    %260 = vector.extract_strided_slice %257 {offsets = [0, 0], sizes = [4, 256], strides = [1, 1]} : vector<4x2304xf32> to vector<4x256xf32>
    %261 = arith.truncf %259 : vector<32x4xf32> to vector<32x4xbf16>
    %262 = arith.truncf %260 : vector<4x256xf32> to vector<4x256xbf16>
    %cst_135 = arith.constant dense<0.000000e+00> : vector<32x256xf32>
    %263 = tpu.matmul %261, %262, %cst_135 {dimension_numbers = #tpu.dot_dimension_numbers<[1], [0], [0], [1], [0, 0, 1, 1], [], []>} : vector<32x4xbf16>, vector<4x256xbf16>, vector<32x256xf32> -> vector<32x256xf32>
    %c1_136 = arith.constant 1 : index
    %c0_137 = arith.constant 0 : index
    %c0_138 = arith.constant 0 : index
    %264 = vector.load %arg13[%c1_136, %c0_137, %c0_138] : memref<9x32x4xf32, #tpu.memory_space<vmem>>, vector<1x32x4xf32>
    %265 = vector.shape_cast %264 : vector<1x32x4xf32> to vector<32x4xf32>
    %266 = vector.extract_strided_slice %257 {offsets = [0, 256], sizes = [4, 256], strides = [1, 1]} : vector<4x2304xf32> to vector<4x256xf32>
    %267 = arith.truncf %265 : vector<32x4xf32> to vector<32x4xbf16>
    %268 = arith.truncf %266 : vector<4x256xf32> to vector<4x256xbf16>
    %cst_139 = arith.constant dense<0.000000e+00> : vector<32x256xf32>
    %269 = tpu.matmul %267, %268, %cst_139 {dimension_numbers = #tpu.dot_dimension_numbers<[1], [0], [0], [1], [0, 0, 1, 1], [], []>} : vector<32x4xbf16>, vector<4x256xbf16>, vector<32x256xf32> -> vector<32x256xf32>
    %270 = arith.addf %263, %269 : vector<32x256xf32>
    %c2_140 = arith.constant 2 : index
    %c0_141 = arith.constant 0 : index
    %c0_142 = arith.constant 0 : index
    %271 = vector.load %arg13[%c2_140, %c0_141, %c0_142] : memref<9x32x4xf32, #tpu.memory_space<vmem>>, vector<1x32x4xf32>
    %272 = vector.shape_cast %271 : vector<1x32x4xf32> to vector<32x4xf32>
    %273 = vector.extract_strided_slice %257 {offsets = [0, 512], sizes = [4, 256], strides = [1, 1]} : vector<4x2304xf32> to vector<4x256xf32>
    %274 = arith.truncf %272 : vector<32x4xf32> to vector<32x4xbf16>
    %275 = arith.truncf %273 : vector<4x256xf32> to vector<4x256xbf16>
    %cst_143 = arith.constant dense<0.000000e+00> : vector<32x256xf32>
    %276 = tpu.matmul %274, %275, %cst_143 {dimension_numbers = #tpu.dot_dimension_numbers<[1], [0], [0], [1], [0, 0, 1, 1], [], []>} : vector<32x4xbf16>, vector<4x256xbf16>, vector<32x256xf32> -> vector<32x256xf32>
    %277 = arith.addf %270, %276 : vector<32x256xf32>
    %c3_144 = arith.constant 3 : index
    %c0_145 = arith.constant 0 : index
    %c0_146 = arith.constant 0 : index
    %278 = vector.load %arg13[%c3_144, %c0_145, %c0_146] : memref<9x32x4xf32, #tpu.memory_space<vmem>>, vector<1x32x4xf32>
    %279 = vector.shape_cast %278 : vector<1x32x4xf32> to vector<32x4xf32>
    %280 = vector.extract_strided_slice %257 {offsets = [0, 768], sizes = [4, 256], strides = [1, 1]} : vector<4x2304xf32> to vector<4x256xf32>
    %281 = arith.truncf %279 : vector<32x4xf32> to vector<32x4xbf16>
    %282 = arith.truncf %280 : vector<4x256xf32> to vector<4x256xbf16>
    %cst_147 = arith.constant dense<0.000000e+00> : vector<32x256xf32>
    %283 = tpu.matmul %281, %282, %cst_147 {dimension_numbers = #tpu.dot_dimension_numbers<[1], [0], [0], [1], [0, 0, 1, 1], [], []>} : vector<32x4xbf16>, vector<4x256xbf16>, vector<32x256xf32> -> vector<32x256xf32>
    %284 = arith.addf %277, %283 : vector<32x256xf32>
    %c4_148 = arith.constant 4 : index
    %c0_149 = arith.constant 0 : index
    %c0_150 = arith.constant 0 : index
    %285 = vector.load %arg13[%c4_148, %c0_149, %c0_150] : memref<9x32x4xf32, #tpu.memory_space<vmem>>, vector<1x32x4xf32>
    %286 = vector.shape_cast %285 : vector<1x32x4xf32> to vector<32x4xf32>
    %287 = vector.extract_strided_slice %257 {offsets = [0, 1024], sizes = [4, 256], strides = [1, 1]} : vector<4x2304xf32> to vector<4x256xf32>
    %288 = arith.truncf %286 : vector<32x4xf32> to vector<32x4xbf16>
    %289 = arith.truncf %287 : vector<4x256xf32> to vector<4x256xbf16>
    %cst_151 = arith.constant dense<0.000000e+00> : vector<32x256xf32>
    %290 = tpu.matmul %288, %289, %cst_151 {dimension_numbers = #tpu.dot_dimension_numbers<[1], [0], [0], [1], [0, 0, 1, 1], [], []>} : vector<32x4xbf16>, vector<4x256xbf16>, vector<32x256xf32> -> vector<32x256xf32>
    %291 = arith.addf %284, %290 : vector<32x256xf32>
    %c5_152 = arith.constant 5 : index
    %c0_153 = arith.constant 0 : index
    %c0_154 = arith.constant 0 : index
    %292 = vector.load %arg13[%c5_152, %c0_153, %c0_154] : memref<9x32x4xf32, #tpu.memory_space<vmem>>, vector<1x32x4xf32>
    %293 = vector.shape_cast %292 : vector<1x32x4xf32> to vector<32x4xf32>
    %294 = vector.extract_strided_slice %257 {offsets = [0, 1280], sizes = [4, 256], strides = [1, 1]} : vector<4x2304xf32> to vector<4x256xf32>
    %295 = arith.truncf %293 : vector<32x4xf32> to vector<32x4xbf16>
    %296 = arith.truncf %294 : vector<4x256xf32> to vector<4x256xbf16>
    %cst_155 = arith.constant dense<0.000000e+00> : vector<32x256xf32>
    %297 = tpu.matmul %295, %296, %cst_155 {dimension_numbers = #tpu.dot_dimension_numbers<[1], [0], [0], [1], [0, 0, 1, 1], [], []>} : vector<32x4xbf16>, vector<4x256xbf16>, vector<32x256xf32> -> vector<32x256xf32>
    %298 = arith.addf %291, %297 : vector<32x256xf32>
    %c6_156 = arith.constant 6 : index
    %c0_157 = arith.constant 0 : index
    %c0_158 = arith.constant 0 : index
    %299 = vector.load %arg13[%c6_156, %c0_157, %c0_158] : memref<9x32x4xf32, #tpu.memory_space<vmem>>, vector<1x32x4xf32>
    %300 = vector.shape_cast %299 : vector<1x32x4xf32> to vector<32x4xf32>
    %301 = vector.extract_strided_slice %257 {offsets = [0, 1536], sizes = [4, 256], strides = [1, 1]} : vector<4x2304xf32> to vector<4x256xf32>
    %302 = arith.truncf %300 : vector<32x4xf32> to vector<32x4xbf16>
    %303 = arith.truncf %301 : vector<4x256xf32> to vector<4x256xbf16>
    %cst_159 = arith.constant dense<0.000000e+00> : vector<32x256xf32>
    %304 = tpu.matmul %302, %303, %cst_159 {dimension_numbers = #tpu.dot_dimension_numbers<[1], [0], [0], [1], [0, 0, 1, 1], [], []>} : vector<32x4xbf16>, vector<4x256xbf16>, vector<32x256xf32> -> vector<32x256xf32>
    %305 = arith.addf %298, %304 : vector<32x256xf32>
    %c7_160 = arith.constant 7 : index
    %c0_161 = arith.constant 0 : index
    %c0_162 = arith.constant 0 : index
    %306 = vector.load %arg13[%c7_160, %c0_161, %c0_162] : memref<9x32x4xf32, #tpu.memory_space<vmem>>, vector<1x32x4xf32>
    %307 = vector.shape_cast %306 : vector<1x32x4xf32> to vector<32x4xf32>
    %308 = vector.extract_strided_slice %257 {offsets = [0, 1792], sizes = [4, 256], strides = [1, 1]} : vector<4x2304xf32> to vector<4x256xf32>
    %309 = arith.truncf %307 : vector<32x4xf32> to vector<32x4xbf16>
    %310 = arith.truncf %308 : vector<4x256xf32> to vector<4x256xbf16>
    %cst_163 = arith.constant dense<0.000000e+00> : vector<32x256xf32>
    %311 = tpu.matmul %309, %310, %cst_163 {dimension_numbers = #tpu.dot_dimension_numbers<[1], [0], [0], [1], [0, 0, 1, 1], [], []>} : vector<32x4xbf16>, vector<4x256xbf16>, vector<32x256xf32> -> vector<32x256xf32>
    %312 = arith.addf %305, %311 : vector<32x256xf32>
    %c8_164 = arith.constant 8 : index
    %c0_165 = arith.constant 0 : index
    %c0_166 = arith.constant 0 : index
    %313 = vector.load %arg13[%c8_164, %c0_165, %c0_166] : memref<9x32x4xf32, #tpu.memory_space<vmem>>, vector<1x32x4xf32>
    %314 = vector.shape_cast %313 : vector<1x32x4xf32> to vector<32x4xf32>
    %315 = vector.extract_strided_slice %257 {offsets = [0, 2048], sizes = [4, 256], strides = [1, 1]} : vector<4x2304xf32> to vector<4x256xf32>
    %316 = arith.truncf %314 : vector<32x4xf32> to vector<32x4xbf16>
    %317 = arith.truncf %315 : vector<4x256xf32> to vector<4x256xbf16>
    %cst_167 = arith.constant dense<0.000000e+00> : vector<32x256xf32>
    %318 = tpu.matmul %316, %317, %cst_167 {dimension_numbers = #tpu.dot_dimension_numbers<[1], [0], [0], [1], [0, 0, 1, 1], [], []>} : vector<32x4xbf16>, vector<4x256xbf16>, vector<32x256xf32> -> vector<32x256xf32>
    %319 = arith.addf %312, %318 : vector<32x256xf32>
    %c0_168 = arith.constant 0 : index
    %c0_169 = arith.constant 0 : index
    %320 = vector.load %arg14[%c0_168, %c0_169] : memref<32x1xf32, #tpu.memory_space<vmem>>, vector<32x1xf32>
    %321 = vector.broadcast %320 : vector<32x1xf32> to vector<32x256xf32>
    %322 = arith.addf %319, %321 : vector<32x256xf32>
    %c0_170 = arith.constant 0 : index
    %c0_171 = arith.constant 0 : index
    %c0_172 = arith.constant 0 : index
    %323 = vector.load %arg3[%c0_170, %c0_171, %c0_172] : memref<1x256x1xf32, #tpu.memory_space<vmem>>, vector<1x256x1xf32>
    %324 = vector.shape_cast %323 : vector<1x256x1xf32> to vector<256x1xf32>
    %325 = vector.shape_cast %324 : vector<256x1xf32> to vector<256x1xf32>
    %326 = vector.broadcast %325 : vector<256x1xf32> to vector<256x256xf32>
    %c0_173 = arith.constant 0 : index
    %c0_174 = arith.constant 0 : index
    %327 = vector.load %arg15[%c0_173, %c0_174] : memref<32x256xf32, #tpu.memory_space<vmem>>, vector<32x256xf32>
    %328 = arith.truncf %327 : vector<32x256xf32> to vector<32x256xbf16>
    %329 = arith.truncf %326 : vector<256x256xf32> to vector<256x256xbf16>
    %cst_175 = arith.constant dense<0.000000e+00> : vector<32x256xf32>
    %330 = tpu.matmul %328, %329, %cst_175 {dimension_numbers = #tpu.dot_dimension_numbers<[1], [0], [0], [1], [0, 0, 1, 1], [], []>} : vector<32x256xbf16>, vector<256x256xbf16>, vector<32x256xf32> -> vector<32x256xf32>
    %c0_176 = arith.constant 0 : index
    %c0_177 = arith.constant 0 : index
    %331 = vector.load %arg16[%c0_176, %c0_177] : memref<32x1xf32, #tpu.memory_space<vmem>>, vector<32x1xf32>
    %332 = vector.broadcast %331 : vector<32x1xf32> to vector<32x256xf32>
    %333 = arith.addf %330, %332 : vector<32x256xf32>
    %334 = arith.negf %333 : vector<32x256xf32>
    %335 = math.exp %334 : vector<32x256xf32>
    %cst_178 = arith.constant 1.000000e+00 : f32
    %336 = vector.broadcast %cst_178 : f32 to vector<32x256xf32>
    %337 = arith.addf %336, %335 : vector<32x256xf32>
    %338 = arith.divf %336, %337 : vector<32x256xf32>
    %339 = arith.mulf %333, %338 : vector<32x256xf32>
    %c0_179 = arith.constant 0 : index
    %c0_180 = arith.constant 0 : index
    %340 = vector.load %arg17[%c0_179, %c0_180] : memref<32x32xf32, #tpu.memory_space<vmem>>, vector<32x32xf32>
    %341 = arith.truncf %340 : vector<32x32xf32> to vector<32x32xbf16>
    %342 = arith.truncf %339 : vector<32x256xf32> to vector<32x256xbf16>
    %cst_181 = arith.constant dense<0.000000e+00> : vector<32x256xf32>
    %343 = tpu.matmul %341, %342, %cst_181 {dimension_numbers = #tpu.dot_dimension_numbers<[1], [0], [0], [1], [0, 0, 1, 1], [], []>} : vector<32x32xbf16>, vector<32x256xbf16>, vector<32x256xf32> -> vector<32x256xf32>
    %c0_182 = arith.constant 0 : index
    %c0_183 = arith.constant 0 : index
    %344 = vector.load %arg18[%c0_182, %c0_183] : memref<32x1xf32, #tpu.memory_space<vmem>>, vector<32x1xf32>
    %345 = vector.broadcast %344 : vector<32x1xf32> to vector<32x256xf32>
    %346 = arith.addf %343, %345 : vector<32x256xf32>
    %347 = arith.addf %346, %322 : vector<32x256xf32>
    %348 = arith.negf %347 : vector<32x256xf32>
    %349 = math.exp %348 : vector<32x256xf32>
    %cst_184 = arith.constant 1.000000e+00 : f32
    %350 = vector.broadcast %cst_184 : f32 to vector<32x256xf32>
    %351 = arith.addf %350, %349 : vector<32x256xf32>
    %352 = arith.divf %350, %351 : vector<32x256xf32>
    %353 = arith.mulf %347, %352 : vector<32x256xf32>
    %c0_185 = arith.constant 0 : index
    %c0_186 = arith.constant 0 : index
    %354 = vector.load %arg19[%c0_185, %c0_186] : memref<32x4xf32, #tpu.memory_space<vmem>>, vector<32x4xf32>
    %c0_187 = arith.constant 0 : index
    %c0_188 = arith.constant 0 : index
    %c0_189 = arith.constant 0 : index
    %355 = vector.load %arg1[%c0_187, %c0_188, %c0_189] : memref<1x4x256xf32, #tpu.memory_space<vmem>>, vector<1x4x256xf32>
    %356 = vector.shape_cast %355 : vector<1x4x256xf32> to vector<4x256xf32>
    %357 = arith.truncf %354 : vector<32x4xf32> to vector<32x4xbf16>
    %358 = arith.truncf %356 : vector<4x256xf32> to vector<4x256xbf16>
    %cst_190 = arith.constant dense<0.000000e+00> : vector<32x256xf32>
    %359 = tpu.matmul %357, %358, %cst_190 {dimension_numbers = #tpu.dot_dimension_numbers<[1], [0], [0], [1], [0, 0, 1, 1], [], []>} : vector<32x4xbf16>, vector<4x256xbf16>, vector<32x256xf32> -> vector<32x256xf32>
    %c0_191 = arith.constant 0 : index
    %c0_192 = arith.constant 0 : index
    %360 = vector.load %arg20[%c0_191, %c0_192] : memref<32x1xf32, #tpu.memory_space<vmem>>, vector<32x1xf32>
    %361 = vector.broadcast %360 : vector<32x1xf32> to vector<32x256xf32>
    %362 = arith.addf %359, %361 : vector<32x256xf32>
    %c0_193 = arith.constant 0 : index
    %c0_194 = arith.constant 0 : index
    %c0_195 = arith.constant 0 : index
    %363 = vector.load %arg21[%c0_193, %c0_194, %c0_195] : memref<2x96x32xf32, #tpu.memory_space<vmem>>, vector<1x96x32xf32>
    %364 = vector.shape_cast %363 : vector<1x96x32xf32> to vector<96x32xf32>
    %365 = arith.truncf %364 : vector<96x32xf32> to vector<96x32xbf16>
    %366 = arith.truncf %353 : vector<32x256xf32> to vector<32x256xbf16>
    %cst_196 = arith.constant dense<0.000000e+00> : vector<96x256xf32>
    %367 = tpu.matmul %365, %366, %cst_196 {dimension_numbers = #tpu.dot_dimension_numbers<[1], [0], [0], [1], [0, 0, 1, 1], [], []>} : vector<96x32xbf16>, vector<32x256xbf16>, vector<96x256xf32> -> vector<96x256xf32>
    %c0_197 = arith.constant 0 : index
    %c0_198 = arith.constant 0 : index
    %c0_199 = arith.constant 0 : index
    %368 = vector.load %arg22[%c0_197, %c0_198, %c0_199] : memref<2x96x1xf32, #tpu.memory_space<vmem>>, vector<1x96x1xf32>
    %369 = vector.shape_cast %368 : vector<1x96x1xf32> to vector<96x1xf32>
    %370 = vector.broadcast %369 : vector<96x1xf32> to vector<96x256xf32>
    %371 = arith.addf %367, %370 : vector<96x256xf32>
    %372 = vector.extract_strided_slice %371 {offsets = [0, 0], sizes = [32, 256], strides = [1, 1]} : vector<96x256xf32> to vector<32x256xf32>
    %373 = vector.extract_strided_slice %371 {offsets = [32, 0], sizes = [32, 256], strides = [1, 1]} : vector<96x256xf32> to vector<32x256xf32>
    %374 = vector.extract_strided_slice %371 {offsets = [64, 0], sizes = [32, 256], strides = [1, 1]} : vector<96x256xf32> to vector<32x256xf32>
    %cst_200 = arith.constant dense<0.000000e+00> : vector<256xf32>
    %375 = vector.multi_reduction <add>, %362, %cst_200 [0] : vector<32x256xf32> to vector<256xf32>
    %376 = vector.shape_cast %375 : vector<256xf32> to vector<1x256xf32>
    %cst_201 = arith.constant 3.200000e+01 : f32
    %377 = vector.broadcast %cst_201 : f32 to vector<1x256xf32>
    %378 = arith.divf %376, %377 : vector<1x256xf32>
    %379 = vector.broadcast %378 : vector<1x256xf32> to vector<32x256xf32>
    %380 = arith.subf %362, %379 : vector<32x256xf32>
    %381 = arith.mulf %380, %380 : vector<32x256xf32>
    %cst_202 = arith.constant dense<0.000000e+00> : vector<256xf32>
    %382 = vector.multi_reduction <add>, %381, %cst_202 [0] : vector<32x256xf32> to vector<256xf32>
    %383 = vector.shape_cast %382 : vector<256xf32> to vector<1x256xf32>
    %cst_203 = arith.constant 3.200000e+01 : f32
    %384 = vector.broadcast %cst_203 : f32 to vector<1x256xf32>
    %385 = arith.divf %383, %384 : vector<1x256xf32>
    %386 = vector.broadcast %378 : vector<1x256xf32> to vector<32x256xf32>
    %387 = arith.subf %362, %386 : vector<32x256xf32>
    %cst_204 = arith.constant 9.99999997E-7 : f32
    %388 = vector.broadcast %cst_204 : f32 to vector<1x256xf32>
    %389 = arith.addf %385, %388 : vector<1x256xf32>
    %390 = math.rsqrt %389 : vector<1x256xf32>
    %391 = vector.broadcast %390 : vector<1x256xf32> to vector<32x256xf32>
    %392 = arith.mulf %387, %391 : vector<32x256xf32>
    %cst_205 = arith.constant 1.000000e+00 : f32
    %393 = vector.broadcast %cst_205 : f32 to vector<32x256xf32>
    %394 = arith.addf %373, %393 : vector<32x256xf32>
    %395 = arith.mulf %392, %394 : vector<32x256xf32>
    %396 = arith.addf %395, %372 : vector<32x256xf32>
    %c0_206 = arith.constant 0 : index
    %c0_207 = arith.constant 0 : index
    %c0_208 = arith.constant 0 : index
    %397 = vector.load %arg23[%c0_206, %c0_207, %c0_208] : memref<2x32x32xf32, #tpu.memory_space<vmem>>, vector<1x32x32xf32>
    %398 = vector.shape_cast %397 : vector<1x32x32xf32> to vector<32x32xf32>
    %399 = arith.truncf %398 : vector<32x32xf32> to vector<32x32xbf16>
    %400 = arith.truncf %396 : vector<32x256xf32> to vector<32x256xbf16>
    %cst_209 = arith.constant dense<0.000000e+00> : vector<32x256xf32>
    %401 = tpu.matmul %399, %400, %cst_209 {dimension_numbers = #tpu.dot_dimension_numbers<[1], [0], [0], [1], [0, 0, 1, 1], [], []>} : vector<32x32xbf16>, vector<32x256xbf16>, vector<32x256xf32> -> vector<32x256xf32>
    %c0_210 = arith.constant 0 : index
    %c0_211 = arith.constant 0 : index
    %c0_212 = arith.constant 0 : index
    %402 = vector.load %arg24[%c0_210, %c0_211, %c0_212] : memref<2x32x1xf32, #tpu.memory_space<vmem>>, vector<1x32x1xf32>
    %403 = vector.shape_cast %402 : vector<1x32x1xf32> to vector<32x1xf32>
    %404 = vector.broadcast %403 : vector<32x1xf32> to vector<32x256xf32>
    %405 = arith.addf %401, %404 : vector<32x256xf32>
    %406 = arith.negf %405 : vector<32x256xf32>
    %407 = math.exp %406 : vector<32x256xf32>
    %cst_213 = arith.constant 1.000000e+00 : f32
    %408 = vector.broadcast %cst_213 : f32 to vector<32x256xf32>
    %409 = arith.addf %408, %407 : vector<32x256xf32>
    %410 = arith.divf %408, %409 : vector<32x256xf32>
    %411 = arith.mulf %405, %410 : vector<32x256xf32>
    %c0_214 = arith.constant 0 : index
    %c0_215 = arith.constant 0 : index
    %c0_216 = arith.constant 0 : index
    %412 = vector.load %arg25[%c0_214, %c0_215, %c0_216] : memref<2x32x32xf32, #tpu.memory_space<vmem>>, vector<1x32x32xf32>
    %413 = vector.shape_cast %412 : vector<1x32x32xf32> to vector<32x32xf32>
    %414 = arith.truncf %413 : vector<32x32xf32> to vector<32x32xbf16>
    %415 = arith.truncf %411 : vector<32x256xf32> to vector<32x256xbf16>
    %cst_217 = arith.constant dense<0.000000e+00> : vector<32x256xf32>
    %416 = tpu.matmul %414, %415, %cst_217 {dimension_numbers = #tpu.dot_dimension_numbers<[1], [0], [0], [1], [0, 0, 1, 1], [], []>} : vector<32x32xbf16>, vector<32x256xbf16>, vector<32x256xf32> -> vector<32x256xf32>
    %c0_218 = arith.constant 0 : index
    %c0_219 = arith.constant 0 : index
    %c0_220 = arith.constant 0 : index
    %417 = vector.load %arg26[%c0_218, %c0_219, %c0_220] : memref<2x32x1xf32, #tpu.memory_space<vmem>>, vector<1x32x1xf32>
    %418 = vector.shape_cast %417 : vector<1x32x1xf32> to vector<32x1xf32>
    %419 = vector.broadcast %418 : vector<32x1xf32> to vector<32x256xf32>
    %420 = arith.addf %416, %419 : vector<32x256xf32>
    %421 = arith.mulf %374, %420 : vector<32x256xf32>
    %422 = arith.addf %362, %421 : vector<32x256xf32>
    %c1_221 = arith.constant 1 : index
    %c0_222 = arith.constant 0 : index
    %c0_223 = arith.constant 0 : index
    %423 = vector.load %arg21[%c1_221, %c0_222, %c0_223] : memref<2x96x32xf32, #tpu.memory_space<vmem>>, vector<1x96x32xf32>
    %424 = vector.shape_cast %423 : vector<1x96x32xf32> to vector<96x32xf32>
    %425 = arith.truncf %424 : vector<96x32xf32> to vector<96x32xbf16>
    %426 = arith.truncf %353 : vector<32x256xf32> to vector<32x256xbf16>
    %cst_224 = arith.constant dense<0.000000e+00> : vector<96x256xf32>
    %427 = tpu.matmul %425, %426, %cst_224 {dimension_numbers = #tpu.dot_dimension_numbers<[1], [0], [0], [1], [0, 0, 1, 1], [], []>} : vector<96x32xbf16>, vector<32x256xbf16>, vector<96x256xf32> -> vector<96x256xf32>
    %c1_225 = arith.constant 1 : index
    %c0_226 = arith.constant 0 : index
    %c0_227 = arith.constant 0 : index
    %428 = vector.load %arg22[%c1_225, %c0_226, %c0_227] : memref<2x96x1xf32, #tpu.memory_space<vmem>>, vector<1x96x1xf32>
    %429 = vector.shape_cast %428 : vector<1x96x1xf32> to vector<96x1xf32>
    %430 = vector.broadcast %429 : vector<96x1xf32> to vector<96x256xf32>
    %431 = arith.addf %427, %430 : vector<96x256xf32>
    %432 = vector.extract_strided_slice %431 {offsets = [0, 0], sizes = [32, 256], strides = [1, 1]} : vector<96x256xf32> to vector<32x256xf32>
    %433 = vector.extract_strided_slice %431 {offsets = [32, 0], sizes = [32, 256], strides = [1, 1]} : vector<96x256xf32> to vector<32x256xf32>
    %434 = vector.extract_strided_slice %431 {offsets = [64, 0], sizes = [32, 256], strides = [1, 1]} : vector<96x256xf32> to vector<32x256xf32>
    %cst_228 = arith.constant dense<0.000000e+00> : vector<256xf32>
    %435 = vector.multi_reduction <add>, %422, %cst_228 [0] : vector<32x256xf32> to vector<256xf32>
    %436 = vector.shape_cast %435 : vector<256xf32> to vector<1x256xf32>
    %cst_229 = arith.constant 3.200000e+01 : f32
    %437 = vector.broadcast %cst_229 : f32 to vector<1x256xf32>
    %438 = arith.divf %436, %437 : vector<1x256xf32>
    %439 = vector.broadcast %438 : vector<1x256xf32> to vector<32x256xf32>
    %440 = arith.subf %422, %439 : vector<32x256xf32>
    %441 = arith.mulf %440, %440 : vector<32x256xf32>
    %cst_230 = arith.constant dense<0.000000e+00> : vector<256xf32>
    %442 = vector.multi_reduction <add>, %441, %cst_230 [0] : vector<32x256xf32> to vector<256xf32>
    %443 = vector.shape_cast %442 : vector<256xf32> to vector<1x256xf32>
    %cst_231 = arith.constant 3.200000e+01 : f32
    %444 = vector.broadcast %cst_231 : f32 to vector<1x256xf32>
    %445 = arith.divf %443, %444 : vector<1x256xf32>
    %446 = vector.broadcast %438 : vector<1x256xf32> to vector<32x256xf32>
    %447 = arith.subf %422, %446 : vector<32x256xf32>
    %cst_232 = arith.constant 9.99999997E-7 : f32
    %448 = vector.broadcast %cst_232 : f32 to vector<1x256xf32>
    %449 = arith.addf %445, %448 : vector<1x256xf32>
    %450 = math.rsqrt %449 : vector<1x256xf32>
    %451 = vector.broadcast %450 : vector<1x256xf32> to vector<32x256xf32>
    %452 = arith.mulf %447, %451 : vector<32x256xf32>
    %cst_233 = arith.constant 1.000000e+00 : f32
    %453 = vector.broadcast %cst_233 : f32 to vector<32x256xf32>
    %454 = arith.addf %433, %453 : vector<32x256xf32>
    %455 = arith.mulf %452, %454 : vector<32x256xf32>
    %456 = arith.addf %455, %432 : vector<32x256xf32>
    %c1_234 = arith.constant 1 : index
    %c0_235 = arith.constant 0 : index
    %c0_236 = arith.constant 0 : index
    %457 = vector.load %arg23[%c1_234, %c0_235, %c0_236] : memref<2x32x32xf32, #tpu.memory_space<vmem>>, vector<1x32x32xf32>
    %458 = vector.shape_cast %457 : vector<1x32x32xf32> to vector<32x32xf32>
    %459 = arith.truncf %458 : vector<32x32xf32> to vector<32x32xbf16>
    %460 = arith.truncf %456 : vector<32x256xf32> to vector<32x256xbf16>
    %cst_237 = arith.constant dense<0.000000e+00> : vector<32x256xf32>
    %461 = tpu.matmul %459, %460, %cst_237 {dimension_numbers = #tpu.dot_dimension_numbers<[1], [0], [0], [1], [0, 0, 1, 1], [], []>} : vector<32x32xbf16>, vector<32x256xbf16>, vector<32x256xf32> -> vector<32x256xf32>
    %c1_238 = arith.constant 1 : index
    %c0_239 = arith.constant 0 : index
    %c0_240 = arith.constant 0 : index
    %462 = vector.load %arg24[%c1_238, %c0_239, %c0_240] : memref<2x32x1xf32, #tpu.memory_space<vmem>>, vector<1x32x1xf32>
    %463 = vector.shape_cast %462 : vector<1x32x1xf32> to vector<32x1xf32>
    %464 = vector.broadcast %463 : vector<32x1xf32> to vector<32x256xf32>
    %465 = arith.addf %461, %464 : vector<32x256xf32>
    %466 = arith.negf %465 : vector<32x256xf32>
    %467 = math.exp %466 : vector<32x256xf32>
    %cst_241 = arith.constant 1.000000e+00 : f32
    %468 = vector.broadcast %cst_241 : f32 to vector<32x256xf32>
    %469 = arith.addf %468, %467 : vector<32x256xf32>
    %470 = arith.divf %468, %469 : vector<32x256xf32>
    %471 = arith.mulf %465, %470 : vector<32x256xf32>
    %c1_242 = arith.constant 1 : index
    %c0_243 = arith.constant 0 : index
    %c0_244 = arith.constant 0 : index
    %472 = vector.load %arg25[%c1_242, %c0_243, %c0_244] : memref<2x32x32xf32, #tpu.memory_space<vmem>>, vector<1x32x32xf32>
    %473 = vector.shape_cast %472 : vector<1x32x32xf32> to vector<32x32xf32>
    %474 = arith.truncf %473 : vector<32x32xf32> to vector<32x32xbf16>
    %475 = arith.truncf %471 : vector<32x256xf32> to vector<32x256xbf16>
    %cst_245 = arith.constant dense<0.000000e+00> : vector<32x256xf32>
    %476 = tpu.matmul %474, %475, %cst_245 {dimension_numbers = #tpu.dot_dimension_numbers<[1], [0], [0], [1], [0, 0, 1, 1], [], []>} : vector<32x32xbf16>, vector<32x256xbf16>, vector<32x256xf32> -> vector<32x256xf32>
    %c1_246 = arith.constant 1 : index
    %c0_247 = arith.constant 0 : index
    %c0_248 = arith.constant 0 : index
    %477 = vector.load %arg26[%c1_246, %c0_247, %c0_248] : memref<2x32x1xf32, #tpu.memory_space<vmem>>, vector<1x32x1xf32>
    %478 = vector.shape_cast %477 : vector<1x32x1xf32> to vector<32x1xf32>
    %479 = vector.broadcast %478 : vector<32x1xf32> to vector<32x256xf32>
    %480 = arith.addf %476, %479 : vector<32x256xf32>
    %481 = arith.mulf %434, %480 : vector<32x256xf32>
    %482 = arith.addf %422, %481 : vector<32x256xf32>
    %c0_249 = arith.constant 0 : index
    %c0_250 = arith.constant 0 : index
    %483 = vector.load %arg27[%c0_249, %c0_250] : memref<64x32xf32, #tpu.memory_space<vmem>>, vector<64x32xf32>
    %484 = arith.truncf %483 : vector<64x32xf32> to vector<64x32xbf16>
    %485 = arith.truncf %353 : vector<32x256xf32> to vector<32x256xbf16>
    %cst_251 = arith.constant dense<0.000000e+00> : vector<64x256xf32>
    %486 = tpu.matmul %484, %485, %cst_251 {dimension_numbers = #tpu.dot_dimension_numbers<[1], [0], [0], [1], [0, 0, 1, 1], [], []>} : vector<64x32xbf16>, vector<32x256xbf16>, vector<64x256xf32> -> vector<64x256xf32>
    %c0_252 = arith.constant 0 : index
    %c0_253 = arith.constant 0 : index
    %487 = vector.load %arg28[%c0_252, %c0_253] : memref<64x1xf32, #tpu.memory_space<vmem>>, vector<64x1xf32>
    %488 = vector.broadcast %487 : vector<64x1xf32> to vector<64x256xf32>
    %489 = arith.addf %486, %488 : vector<64x256xf32>
    %cst_254 = arith.constant dense<0.000000e+00> : vector<256xf32>
    %490 = vector.multi_reduction <add>, %482, %cst_254 [0] : vector<32x256xf32> to vector<256xf32>
    %491 = vector.shape_cast %490 : vector<256xf32> to vector<1x256xf32>
    %cst_255 = arith.constant 3.200000e+01 : f32
    %492 = vector.broadcast %cst_255 : f32 to vector<1x256xf32>
    %493 = arith.divf %491, %492 : vector<1x256xf32>
    %494 = vector.broadcast %493 : vector<1x256xf32> to vector<32x256xf32>
    %495 = arith.subf %482, %494 : vector<32x256xf32>
    %496 = arith.mulf %495, %495 : vector<32x256xf32>
    %cst_256 = arith.constant dense<0.000000e+00> : vector<256xf32>
    %497 = vector.multi_reduction <add>, %496, %cst_256 [0] : vector<32x256xf32> to vector<256xf32>
    %498 = vector.shape_cast %497 : vector<256xf32> to vector<1x256xf32>
    %cst_257 = arith.constant 3.200000e+01 : f32
    %499 = vector.broadcast %cst_257 : f32 to vector<1x256xf32>
    %500 = arith.divf %498, %499 : vector<1x256xf32>
    %501 = vector.broadcast %493 : vector<1x256xf32> to vector<32x256xf32>
    %502 = arith.subf %482, %501 : vector<32x256xf32>
    %cst_258 = arith.constant 9.99999997E-7 : f32
    %503 = vector.broadcast %cst_258 : f32 to vector<1x256xf32>
    %504 = arith.addf %500, %503 : vector<1x256xf32>
    %505 = math.rsqrt %504 : vector<1x256xf32>
    %506 = vector.broadcast %505 : vector<1x256xf32> to vector<32x256xf32>
    %507 = arith.mulf %502, %506 : vector<32x256xf32>
    %508 = vector.extract_strided_slice %489 {offsets = [32, 0], sizes = [32, 256], strides = [1, 1]} : vector<64x256xf32> to vector<32x256xf32>
    %cst_259 = arith.constant 1.000000e+00 : f32
    %509 = vector.broadcast %cst_259 : f32 to vector<32x256xf32>
    %510 = arith.addf %508, %509 : vector<32x256xf32>
    %511 = arith.mulf %507, %510 : vector<32x256xf32>
    %512 = vector.extract_strided_slice %489 {offsets = [0, 0], sizes = [32, 256], strides = [1, 1]} : vector<64x256xf32> to vector<32x256xf32>
    %513 = arith.addf %511, %512 : vector<32x256xf32>
    %c0_260 = arith.constant 0 : index
    %c0_261 = arith.constant 0 : index
    %514 = vector.load %arg29[%c0_260, %c0_261] : memref<4x32xf32, #tpu.memory_space<vmem>>, vector<4x32xf32>
    %515 = arith.truncf %514 : vector<4x32xf32> to vector<4x32xbf16>
    %516 = arith.truncf %513 : vector<32x256xf32> to vector<32x256xbf16>
    %cst_262 = arith.constant dense<0.000000e+00> : vector<4x256xf32>
    %517 = tpu.matmul %515, %516, %cst_262 {dimension_numbers = #tpu.dot_dimension_numbers<[1], [0], [0], [1], [0, 0, 1, 1], [], []>} : vector<4x32xbf16>, vector<32x256xbf16>, vector<4x256xf32> -> vector<4x256xf32>
    %c0_263 = arith.constant 0 : index
    %c0_264 = arith.constant 0 : index
    %518 = vector.load %arg30[%c0_263, %c0_264] : memref<4x1xf32, #tpu.memory_space<vmem>>, vector<4x1xf32>
    %519 = vector.broadcast %518 : vector<4x1xf32> to vector<4x256xf32>
    %520 = arith.addf %517, %519 : vector<4x256xf32>
    %521 = vector.shape_cast %520 : vector<4x256xf32> to vector<1x4x256xf32>
    %c0_265 = arith.constant 0 : index
    %c0_266 = arith.constant 0 : index
    %c0_267 = arith.constant 0 : index
    %522 = vector.load %arg31[%c0_265, %c0_266, %c0_267] : memref<1x4x256xf32, #tpu.memory_space<vmem>>, vector<1x4x256xf32>
    tpu.vector_store %arg31[%c0_265, %c0_266, %c0_267], %521 {strides = array<i32>} : memref<1x4x256xf32, #tpu.memory_space<vmem>>, vector<1x4x256xf32>,
    return
  }
  func.func @transform_0(%arg0: i32) -> (i32, i32, i32) {
    %c0_i32 = arith.constant 0 : i32
    %c0_i32_0 = arith.constant 0 : i32
    %c0_i32_1 = arith.constant 0 : i32
    return %arg0, %c0_i32, %c0_i32_0 : i32, i32, i32
  }
  func.func @transform_1(%arg0: i32) -> (i32, i32, i32) {
    %c0_i32 = arith.constant 0 : i32
    %c0_i32_0 = arith.constant 0 : i32
    %c0_i32_1 = arith.constant 0 : i32
    return %arg0, %c0_i32, %c0_i32_0 : i32, i32, i32
  }
  func.func @transform_2(%arg0: i32) -> (i32, i32, i32) {
    %c0_i32 = arith.constant 0 : i32
    %c0_i32_0 = arith.constant 0 : i32
    %c0_i32_1 = arith.constant 0 : i32
    return %arg0, %c0_i32, %c0_i32_0 : i32, i32, i32
  }
  func.func @transform_3(%arg0: i32) -> (i32, i32) {
    %c0_i32 = arith.constant 0 : i32
    %c0_i32_0 = arith.constant 0 : i32
    %c0_i32_1 = arith.constant 0 : i32
    return %c0_i32, %c0_i32_0 : i32, i32
  }
  func.func @transform_4(%arg0: i32) -> (i32, i32) {
    %c0_i32 = arith.constant 0 : i32
    %c0_i32_0 = arith.constant 0 : i32
    %c0_i32_1 = arith.constant 0 : i32
    return %c0_i32, %c0_i32_0 : i32, i32
  }
  func.func @transform_5(%arg0: i32) -> (i32, i32) {
    %c0_i32 = arith.constant 0 : i32
    %c0_i32_0 = arith.constant 0 : i32
    %c0_i32_1 = arith.constant 0 : i32
    return %c0_i32, %c0_i32_0 : i32, i32
  }
  func.func @transform_6(%arg0: i32) -> (i32, i32, i32) {
    %c0_i32 = arith.constant 0 : i32
    %c0_i32_0 = arith.constant 0 : i32
    %c0_i32_1 = arith.constant 0 : i32
    %c0_i32_2 = arith.constant 0 : i32
    return %c0_i32, %c0_i32_0, %c0_i32_1 : i32, i32, i32
  }
  func.func @transform_7(%arg0: i32) -> (i32, i32) {
    %c0_i32 = arith.constant 0 : i32
    %c0_i32_0 = arith.constant 0 : i32
    %c0_i32_1 = arith.constant 0 : i32
    return %c0_i32, %c0_i32_0 : i32, i32
  }
  func.func @transform_8(%arg0: i32) -> (i32, i32, i32) {
    %c0_i32 = arith.constant 0 : i32
    %c0_i32_0 = arith.constant 0 : i32
    %c0_i32_1 = arith.constant 0 : i32
    %c0_i32_2 = arith.constant 0 : i32
    return %c0_i32, %c0_i32_0, %c0_i32_1 : i32, i32, i32
  }
  func.func @transform_9(%arg0: i32) -> (i32, i32) {
    %c0_i32 = arith.constant 0 : i32
    %c0_i32_0 = arith.constant 0 : i32
    %c0_i32_1 = arith.constant 0 : i32
    return %c0_i32, %c0_i32_0 : i32, i32
  }
  func.func @transform_10(%arg0: i32) -> (i32, i32, i32) {
    %c0_i32 = arith.constant 0 : i32
    %c0_i32_0 = arith.constant 0 : i32
    %c0_i32_1 = arith.constant 0 : i32
    %c0_i32_2 = arith.constant 0 : i32
    return %c0_i32, %c0_i32_0, %c0_i32_1 : i32, i32, i32
  }
  func.func @transform_11(%arg0: i32) -> (i32, i32) {
    %c0_i32 = arith.constant 0 : i32
    %c0_i32_0 = arith.constant 0 : i32
    %c0_i32_1 = arith.constant 0 : i32
    return %c0_i32, %c0_i32_0 : i32, i32
  }
  func.func @transform_12(%arg0: i32) -> (i32, i32, i32) {
    %c0_i32 = arith.constant 0 : i32
    %c0_i32_0 = arith.constant 0 : i32
    %c0_i32_1 = arith.constant 0 : i32
    %c0_i32_2 = arith.constant 0 : i32
    return %c0_i32, %c0_i32_0, %c0_i32_1 : i32, i32, i32
  }
  func.func @transform_13(%arg0: i32) -> (i32, i32) {
    %c0_i32 = arith.constant 0 : i32
    %c0_i32_0 = arith.constant 0 : i32
    %c0_i32_1 = arith.constant 0 : i32
    return %c0_i32, %c0_i32_0 : i32, i32
  }
  func.func @transform_14(%arg0: i32) -> (i32, i32) {
    %c0_i32 = arith.constant 0 : i32
    %c0_i32_0 = arith.constant 0 : i32
    %c0_i32_1 = arith.constant 0 : i32
    return %c0_i32, %c0_i32_0 : i32, i32
  }
  func.func @transform_15(%arg0: i32) -> (i32, i32) {
    %c0_i32 = arith.constant 0 : i32
    %c0_i32_0 = arith.constant 0 : i32
    %c0_i32_1 = arith.constant 0 : i32
    return %c0_i32, %c0_i32_0 : i32, i32
  }
  func.func @transform_16(%arg0: i32) -> (i32, i32) {
    %c0_i32 = arith.constant 0 : i32
    %c0_i32_0 = arith.constant 0 : i32
    %c0_i32_1 = arith.constant 0 : i32
    return %c0_i32, %c0_i32_0 : i32, i32
  }
  func.func @transform_17(%arg0: i32) -> (i32, i32) {
    %c0_i32 = arith.constant 0 : i32
    %c0_i32_0 = arith.constant 0 : i32
    %c0_i32_1 = arith.constant 0 : i32
    return %c0_i32, %c0_i32_0 : i32, i32
  }
  func.func @transform_18(%arg0: i32) -> (i32, i32) {
    %c0_i32 = arith.constant 0 : i32
    %c0_i32_0 = arith.constant 0 : i32
    %c0_i32_1 = arith.constant 0 : i32
    return %c0_i32, %c0_i32_0 : i32, i32
  }
  func.func @transform_19(%arg0: i32) -> (i32, i32) {
    %c0_i32 = arith.constant 0 : i32
    %c0_i32_0 = arith.constant 0 : i32
    %c0_i32_1 = arith.constant 0 : i32
    return %c0_i32, %c0_i32_0 : i32, i32
  }
  func.func @transform_20(%arg0: i32) -> (i32, i32, i32) {
    %c0_i32 = arith.constant 0 : i32
    %c0_i32_0 = arith.constant 0 : i32
    %c0_i32_1 = arith.constant 0 : i32
    %c0_i32_2 = arith.constant 0 : i32
    return %c0_i32, %c0_i32_0, %c0_i32_1 : i32, i32, i32
  }
  func.func @transform_21(%arg0: i32) -> (i32, i32, i32) {
    %c0_i32 = arith.constant 0 : i32
    %c0_i32_0 = arith.constant 0 : i32
    %c0_i32_1 = arith.constant 0 : i32
    %c0_i32_2 = arith.constant 0 : i32
    return %c0_i32, %c0_i32_0, %c0_i32_1 : i32, i32, i32
  }
  func.func @transform_22(%arg0: i32) -> (i32, i32, i32) {
    %c0_i32 = arith.constant 0 : i32
    %c0_i32_0 = arith.constant 0 : i32
    %c0_i32_1 = arith.constant 0 : i32
    %c0_i32_2 = arith.constant 0 : i32
    return %c0_i32, %c0_i32_0, %c0_i32_1 : i32, i32, i32
  }
  func.func @transform_23(%arg0: i32) -> (i32, i32, i32) {
    %c0_i32 = arith.constant 0 : i32
    %c0_i32_0 = arith.constant 0 : i32
    %c0_i32_1 = arith.constant 0 : i32
    %c0_i32_2 = arith.constant 0 : i32
    return %c0_i32, %c0_i32_0, %c0_i32_1 : i32, i32, i32
  }
  func.func @transform_24(%arg0: i32) -> (i32, i32, i32) {
    %c0_i32 = arith.constant 0 : i32
    %c0_i32_0 = arith.constant 0 : i32
    %c0_i32_1 = arith.constant 0 : i32
    %c0_i32_2 = arith.constant 0 : i32
    return %c0_i32, %c0_i32_0, %c0_i32_1 : i32, i32, i32
  }
  func.func @transform_25(%arg0: i32) -> (i32, i32, i32) {
    %c0_i32 = arith.constant 0 : i32
    %c0_i32_0 = arith.constant 0 : i32
    %c0_i32_1 = arith.constant 0 : i32
    %c0_i32_2 = arith.constant 0 : i32
    return %c0_i32, %c0_i32_0, %c0_i32_1 : i32, i32, i32
  }
  func.func @transform_26(%arg0: i32) -> (i32, i32) {
    %c0_i32 = arith.constant 0 : i32
    %c0_i32_0 = arith.constant 0 : i32
    %c0_i32_1 = arith.constant 0 : i32
    return %c0_i32, %c0_i32_0 : i32, i32
  }
  func.func @transform_27(%arg0: i32) -> (i32, i32) {
    %c0_i32 = arith.constant 0 : i32
    %c0_i32_0 = arith.constant 0 : i32
    %c0_i32_1 = arith.constant 0 : i32
    return %c0_i32, %c0_i32_0 : i32, i32
  }
  func.func @transform_28(%arg0: i32) -> (i32, i32) {
    %c0_i32 = arith.constant 0 : i32
    %c0_i32_0 = arith.constant 0 : i32
    %c0_i32_1 = arith.constant 0 : i32
    return %c0_i32, %c0_i32_0 : i32, i32
  }
  func.func @transform_29(%arg0: i32) -> (i32, i32) {
    %c0_i32 = arith.constant 0 : i32
    %c0_i32_0 = arith.constant 0 : i32
    %c0_i32_1 = arith.constant 0 : i32
    return %c0_i32, %c0_i32_0 : i32, i32
  }
  func.func @transform_30(%arg0: i32) -> (i32, i32, i32) {
    %c0_i32 = arith.constant 0 : i32
    %c0_i32_0 = arith.constant 0 : i32
    %c0_i32_1 = arith.constant 0 : i32
    return %arg0, %c0_i32, %c0_i32_0 : i32, i32, i32
  }
}

</mosaic_0001>

<llo_original>
// kernel: diffusion_mlp_cond_cnn.1
$region0: #{diffusion_mlp_cond_cnn.1}
  #allocation0 [shape = 'u32[]', space=smem, size = 0x4, offset = 0x4, fixed_abs, tag = 'smem constant byte address 0x4 - core index']
  #allocation1 [shape = 'u32[144,128]{1,0:T(1,128)}', space=vmem, size = 0x12000, scoped, tag = 'internal scratch']
  %s0 = inlined_call_operand.smem [shape: u32[31], index: -1, kind: input, shape index: {}]
  %s1 = sld [smem:[%s0]]
  %s2 = scalar_lea.smem %s0, 1
  %s3 = sld [smem:[%s2]]
  %s4 = scalar_lea.smem %s0, 2
  %s5 = sld [smem:[%s4]]
  %s6 = scalar_lea.smem %s0, 3
  %s7 = sld [smem:[%s6]]
  %s8 = scalar_lea.smem %s0, 4
  %s9 = sld [smem:[%s8]]
  %s10 = scalar_lea.smem %s0, 5
  %s11 = sld [smem:[%s10]]
  %s12 = scalar_lea.smem %s0, 6
  %s13 = sld [smem:[%s12]]
  %s14 = scalar_lea.smem %s0, 7
  %s15 = sld [smem:[%s14]]
  %s16 = scalar_lea.smem %s0, 8
  %s17 = sld [smem:[%s16]]
  %s18 = scalar_lea.smem %s0, 9
  %s19 = sld [smem:[%s18]]
  %s20 = scalar_lea.smem %s0, 10
  %s21 = sld [smem:[%s20]]
  %s22 = scalar_lea.smem %s0, 11
  %s23 = sld [smem:[%s22]]
  %s24 = scalar_lea.smem %s0, 12
  %s25 = sld [smem:[%s24]]
  %s26 = scalar_lea.smem %s0, 13
  %s27 = sld [smem:[%s26]]
  %s28 = scalar_lea.smem %s0, 14
  %s29 = sld [smem:[%s28]]
  %s30 = scalar_lea.smem %s0, 15
  %s31 = sld [smem:[%s30]]
  %s32 = scalar_lea.smem %s0, 16
  %s33 = sld [smem:[%s32]]
  %s34 = scalar_lea.smem %s0, 17
  %s35 = sld [smem:[%s34]]
  %s36 = scalar_lea.smem %s0, 18
  %s37 = sld [smem:[%s36]]
  %s38 = scalar_lea.smem %s0, 19
  %s39 = sld [smem:[%s38]]
  %s40 = scalar_lea.smem %s0, 20
  %s41 = sld [smem:[%s40]]
  %s42 = scalar_lea.smem %s0, 21
  %s43 = sld [smem:[%s42]]
  %s44 = scalar_lea.smem %s0, 22
  %s45 = sld [smem:[%s44]]
  %s46 = scalar_lea.smem %s0, 23
  %s47 = sld [smem:[%s46]]
  %s48 = scalar_lea.smem %s0, 24
  %s49 = sld [smem:[%s48]]
  %s50 = scalar_lea.smem %s0, 25
  %s51 = sld [smem:[%s50]]
  %s52 = scalar_lea.smem %s0, 26
  %s53 = sld [smem:[%s52]]
  %s54 = scalar_lea.smem %s0, 27
  %s55 = sld [smem:[%s54]]
  %s56 = scalar_lea.smem %s0, 28
  %s57 = sld [smem:[%s56]]
  %s58 = scalar_lea.smem %s0, 29
  %s59 = sld [smem:[%s58]]
  %s60 = scalar_lea.smem %s0, 30
  %s61 = sld [smem:[%s60]]
  %s62 = sld [smem:[#allocation0]]
  $region161: #{diffusion_mlp_cond_cnn.1} parent=0
    _
  %s64 = ssub.s32 1, %s62
  %s65 = scalar_select 0, %s64, %s62
  $region1: #{diffusion_mlp_cond_cnn.1} parent=0
    #allocation2 [shape = 'u8[16384]{0}', space=vmem, size = 0x4000, scoped, tag = 'input window, operand 16, single buffered']
    #allocation3 [shape = 's32[2]{0}', space=sflag, size = 0x8, scoped, tag = 'scoped memory for diffusion_mlp_cond_cnn.1']
    #allocation4 [shape = 'u8[32768]{0}', space=vmem, size = 0x8000, scoped, tag = 'input window, operand 24, single buffered']
    #allocation5 [shape = 's32[1]{0}', space=sflag, size = 0x4, scoped, tag = 'scoped memory for diffusion_mlp_cond_cnn.1']
    %66 = vsyncpa [#allocation3], 0
    %67 = vsyncpa [#allocation5], 0
    loop: start=0, step=1, limit=4
    $region2: #{diffusion_mlp_cond_cnn.1} parent=1 // loop_pre_header
      _
    $region3: #{diffusion_mlp_cond_cnn.1} parent=1 // loop_header
      %s69 = sphi 0, %s73
      %p70 = scmp.ge.s32.totalorder %s69, 4
      %s79 = sphi 0, %s81
      %s82 = sphi 0, %s79
      %s83 = sphi 0, %s82
      %s99 = sphi 0, %s83
      %s105 = sphi 0, %s107
      %s108 = sphi 0, %s105
      %s109 = sphi 0, %s108
      %s125 = sphi 0, %s109
      %s131 = sphi 0, %s133
      %s134 = sphi 0, %s131
      %s135 = sphi 0, %s134
      %s151 = sphi 0, %s135
      %s155 = sphi 0, %s155
      %s157 = sphi 0, %s155
      %s158 = sphi 0, %s157
      %s172 = sphi 0, %s158
      %s176 = sphi 0, %s176
      %s178 = sphi 0, %s176
      %s179 = sphi 0, %s178
      %s193 = sphi 0, %s179
      %s197 = sphi 0, %s197
      %s199 = sphi 0, %s197
      %s200 = sphi 0, %s199
      %s214 = sphi 0, %s200
      %s218 = sphi 0, %s218
      %s220 = sphi 0, %s218
      %s221 = sphi 0, %s220
      %s235 = sphi 0, %s221
      %s239 = sphi 0, %s239
      %s241 = sphi 0, %s239
      %s242 = sphi 0, %s241
      %s256 = sphi 0, %s242
      %s260 = sphi 0, %s260
      %s262 = sphi 0, %s260
      %s263 = sphi 0, %s262
      %s277 = sphi 0, %s263
      %s281 = sphi 0, %s281
      %s283 = sphi 0, %s281
      %s284 = sphi 0, %s283
      %s298 = sphi 0, %s284
      %s302 = sphi 0, %s302
      %s304 = sphi 0, %s302
      %s305 = sphi 0, %s304
      %s319 = sphi 0, %s305
      %s323 = sphi 0, %s323
      %s325 = sphi 0, %s323
      %s326 = sphi 0, %s325
      %s340 = sphi 0, %s326
      %s344 = sphi 0, %s344
      %s346 = sphi 0, %s344
      %s347 = sphi 0, %s346
      %s361 = sphi 0, %s347
      %s365 = sphi 0, %s365
      %s367 = sphi 0, %s365
      %s368 = sphi 0, %s367
      %s382 = sphi 0, %s368
      %s386 = sphi 0, %s386
      %s388 = sphi 0, %s386
      %s389 = sphi 0, %s388
      %s403 = sphi 0, %s389
      %s407 = sphi 0, %s407
      %s409 = sphi 0, %s407
      %s410 = sphi 0, %s409
      %s424 = sphi 0, %s410
      %s428 = sphi 0, %s428
      %s430 = sphi 0, %s428
      %s431 = sphi 0, %s430
      %s445 = sphi 0, %s431
      %s449 = sphi 0, %s449
      %s451 = sphi 0, %s449
      %s452 = sphi 0, %s451
      %s466 = sphi 0, %s452
      %s470 = sphi 0, %s470
      %s472 = sphi 0, %s470
      %s473 = sphi 0, %s472
      %s487 = sphi 0, %s473
      %s491 = sphi 0, %s491
      %s493 = sphi 0, %s491
      %s494 = sphi 0, %s493
      %s508 = sphi 0, %s494
      %s512 = sphi 0, %s512
      %s514 = sphi 0, %s512
      %s515 = sphi 0, %s514
      %s529 = sphi 0, %s515
      %s533 = sphi 0, %s533
      %s535 = sphi 0, %s533
      %s536 = sphi 0, %s535
      %s550 = sphi 0, %s536
      %s554 = sphi 0, %s554
      %s556 = sphi 0, %s554
      %s557 = sphi 0, %s556
      %s571 = sphi 0, %s557
      %s575 = sphi 0, %s575
      %s577 = sphi 0, %s575
      %s578 = sphi 0, %s577
      %s592 = sphi 0, %s578
      %s596 = sphi 0, %s596
      %s598 = sphi 0, %s596
      %s599 = sphi 0, %s598
      %s613 = sphi 0, %s599
      %s617 = sphi 0, %s617
      %s619 = sphi 0, %s617
      %s620 = sphi 0, %s619
      %s634 = sphi 0, %s620
      %s638 = sphi 0, %s638
      %s640 = sphi 0, %s638
      %s641 = sphi 0, %s640
      %s655 = sphi 0, %s641
      %s659 = sphi 0, %s659
      %s661 = sphi 0, %s659
      %s662 = sphi 0, %s661
      %s676 = sphi 0, %s662
      %s680 = sphi 0, %s680
      %s682 = sphi 0, %s680
      %s683 = sphi 0, %s682
      %s697 = sphi 0, %s683
      %s701 = sphi 0, %s701
      %s703 = sphi 0, %s701
      %s704 = sphi 0, %s703
      %s718 = sphi 0, %s704
      %s724 = sphi 0, %s726
      %s727 = sphi 0, %s724
      %s728 = sphi 0, %s727
      %s744 = sphi 0, %s728
    $region4: #{diffusion_mlp_cond_cnn.1} parent=1 // loop_header_branch
      %72 = sbr.rel (%p70) target = $region8
    $region5: #{diffusion_mlp_cond_cnn.1} parent=1 // loop_body
      %s74 = ssub.s32 %s69, 1
      %s75 = ssub.s32 %s69, 2
      %s76 = sadd.s32 %s69, 1
      %s77 = ssub.s32 %s69, %s76
      %p78 = scmp.eq.s32.totalorder %s77, 0
      %s80 = sadd.s32 %s79, 1
      %s81 = scalar_select %p78, %s79, %s80
      %p84 = pneg %p78
      %p85 = scmp.eq.s32.totalorder %s69, 1
      %p86 = por %p84, %p85
      %p87 = scmp.ne.s32.totalorder %s79, %s82
      %p88 = scmp.eq.s32.totalorder %s69, 0
      %p89 = por %p87, %p88
      %p90 = scmp.ne.s32.totalorder %s79, %s82
      %p91 = scmp.eq.s32.totalorder %s74, 1
      %p92 = por %p90, %p91
      %p93 = scmp.ne.s32.totalorder %s82, %s83
      %p94 = scmp.eq.s32.totalorder %s74, 0
      %p95 = por %p93, %p94
      %p96 = scmp.ne.s32.totalorder %s82, %s83
      %p97 = scmp.eq.s32.totalorder %s75, 1
      %p98 = por %p96, %p97
      %p100 = scmp.ne.s32.totalorder %s83, %s99
      %p101 = scmp.eq.s32.totalorder %s75, 0
      %p102 = por %p100, %p101
      %s103 = ssub.s32 %s69, %s76
      %p104 = scmp.eq.s32.totalorder %s103, 0
      %s106 = sadd.s32 %s105, 1
      %s107 = scalar_select %p104, %s105, %s106
      %p110 = pneg %p104
      %p111 = scmp.eq.s32.totalorder %s69, 1
      %p112 = por %p110, %p111
      %p113 = scmp.ne.s32.totalorder %s105, %s108
      %p114 = scmp.eq.s32.totalorder %s69, 0
      %p115 = por %p113, %p114
      %p116 = scmp.ne.s32.totalorder %s105, %s108
      %p117 = scmp.eq.s32.totalorder %s74, 1
      %p118 = por %p116, %p117
      %p119 = scmp.ne.s32.totalorder %s108, %s109
      %p120 = scmp.eq.s32.totalorder %s74, 0
      %p121 = por %p119, %p120
      %p122 = scmp.ne.s32.totalorder %s108, %s109
      %p123 = scmp.eq.s32.totalorder %s75, 1
      %p124 = por %p122, %p123
      %p126 = scmp.ne.s32.totalorder %s109, %s125
      %p127 = scmp.eq.s32.totalorder %s75, 0
      %p128 = por %p126, %p127
      %s129 = ssub.s32 %s69, %s76
      %p130 = scmp.eq.s32.totalorder %s129, 0
      %s132 = sadd.s32 %s131, 1
      %s133 = scalar_select %p130, %s131, %s132
      %p136 = pneg %p130
      %p137 = scmp.eq.s32.totalorder %s69, 1
      %p138 = por %p136, %p137
      %p139 = scmp.ne.s32.totalorder %s131, %s134
      %p140 = scmp.eq.s32.totalorder %s69, 0
      %p141 = por %p139, %p140
      %p142 = scmp.ne.s32.totalorder %s131, %s134
      %p143 = scmp.eq.s32.totalorder %s74, 1
      %p144 = por %p142, %p143
      %p145 = scmp.ne.s32.totalorder %s134, %s135
      %p146 = scmp.eq.s32.totalorder %s74, 0
      %p147 = por %p145, %p146
      %p148 = scmp.ne.s32.totalorder %s134, %s135
      %p149 = scmp.eq.s32.totalorder %s75, 1
      %p150 = por %p148, %p149
      %p152 = scmp.ne.s32.totalorder %s135, %s151
      %p153 = scmp.eq.s32.totalorder %s75, 0
      %p154 = por %p152, %p153
      %s156 = sadd.s32 %s155, 1
      %p159 = scmp.eq.s32.totalorder %s69, 1
      %p160 = scmp.ne.s32.totalorder %s155, %s157
      %p161 = scmp.eq.s32.totalorder %s69, 0
      %p162 = por %p160, %p161
      %p163 = scmp.ne.s32.totalorder %s155, %s157
      %p164 = scmp.eq.s32.totalorder %s74, 1
      %p165 = por %p163, %p164
      %p166 = scmp.ne.s32.totalorder %s157, %s158
      %p167 = scmp.eq.s32.totalorder %s74, 0
      %p168 = por %p166, %p167
      %p169 = scmp.ne.s32.totalorder %s157, %s158
      %p170 = scmp.eq.s32.totalorder %s75, 1
      %p171 = por %p169, %p170
      %p173 = scmp.ne.s32.totalorder %s158, %s172
      %p174 = scmp.eq.s32.totalorder %s75, 0
      %p175 = por %p173, %p174
      %s177 = sadd.s32 %s176, 1
      %p180 = scmp.eq.s32.totalorder %s69, 1
      %p181 = scmp.ne.s32.totalorder %s176, %s178
      %p182 = scmp.eq.s32.totalorder %s69, 0
      %p183 = por %p181, %p182
      %p184 = scmp.ne.s32.totalorder %s176, %s178
      %p185 = scmp.eq.s32.totalorder %s74, 1
      %p186 = por %p184, %p185
      %p187 = scmp.ne.s32.totalorder %s178, %s179
      %p188 = scmp.eq.s32.totalorder %s74, 0
      %p189 = por %p187, %p188
      %p190 = scmp.ne.s32.totalorder %s178, %s179
      %p191 = scmp.eq.s32.totalorder %s75, 1
      %p192 = por %p190, %p191
      %p194 = scmp.ne.s32.totalorder %s179, %s193
      %p195 = scmp.eq.s32.totalorder %s75, 0
      %p196 = por %p194, %p195
      %s198 = sadd.s32 %s197, 1
      %p201 = scmp.eq.s32.totalorder %s69, 1
      %p202 = scmp.ne.s32.totalorder %s197, %s199
      %p203 = scmp.eq.s32.totalorder %s69, 0
      %p204 = por %p202, %p203
      %p205 = scmp.ne.s32.totalorder %s197, %s199
      %p206 = scmp.eq.s32.totalorder %s74, 1
      %p207 = por %p205, %p206
      %p208 = scmp.ne.s32.totalorder %s199, %s200
      %p209 = scmp.eq.s32.totalorder %s74, 0
      %p210 = por %p208, %p209
      %p211 = scmp.ne.s32.totalorder %s199, %s200
      %p212 = scmp.eq.s32.totalorder %s75, 1
      %p213 = por %p211, %p212
      %p215 = scmp.ne.s32.totalorder %s200, %s214
      %p216 = scmp.eq.s32.totalorder %s75, 0
      %p217 = por %p215, %p216
      %s219 = sadd.s32 %s218, 1
      %p222 = scmp.eq.s32.totalorder %s69, 1
      %p223 = scmp.ne.s32.totalorder %s218, %s220
      %p224 = scmp.eq.s32.totalorder %s69, 0
      %p225 = por %p223, %p224
      %p226 = scmp.ne.s32.totalorder %s218, %s220
      %p227 = scmp.eq.s32.totalorder %s74, 1
      %p228 = por %p226, %p227
      %p229 = scmp.ne.s32.totalorder %s220, %s221
      %p230 = scmp.eq.s32.totalorder %s74, 0
      %p231 = por %p229, %p230
      %p232 = scmp.ne.s32.totalorder %s220, %s221
      %p233 = scmp.eq.s32.totalorder %s75, 1
      %p234 = por %p232, %p233
      %p236 = scmp.ne.s32.totalorder %s221, %s235
      %p237 = scmp.eq.s32.totalorder %s75, 0
      %p238 = por %p236, %p237
      %s240 = sadd.s32 %s239, 1
      %p243 = scmp.eq.s32.totalorder %s69, 1
      %p244 = scmp.ne.s32.totalorder %s239, %s241
      %p245 = scmp.eq.s32.totalorder %s69, 0
      %p246 = por %p244, %p245
      %p247 = scmp.ne.s32.totalorder %s239, %s241
      %p248 = scmp.eq.s32.totalorder %s74, 1
      %p249 = por %p247, %p248
      %p250 = scmp.ne.s32.totalorder %s241, %s242
      %p251 = scmp.eq.s32.totalorder %s74, 0
      %p252 = por %p250, %p251
      %p253 = scmp.ne.s32.totalorder %s241, %s242
      %p254 = scmp.eq.s32.totalorder %s75, 1
      %p255 = por %p253, %p254
      %p257 = scmp.ne.s32.totalorder %s242, %s256
      %p258 = scmp.eq.s32.totalorder %s75, 0
      %p259 = por %p257, %p258
      %s261 = sadd.s32 %s260, 1
      %p264 = scmp.eq.s32.totalorder %s69, 1
      %p265 = scmp.ne.s32.totalorder %s260, %s262
      %p266 = scmp.eq.s32.totalorder %s69, 0
      %p267 = por %p265, %p266
      %p268 = scmp.ne.s32.totalorder %s260, %s262
      %p269 = scmp.eq.s32.totalorder %s74, 1
      %p270 = por %p268, %p269
      %p271 = scmp.ne.s32.totalorder %s262, %s263
      %p272 = scmp.eq.s32.totalorder %s74, 0
      %p273 = por %p271, %p272
      %p274 = scmp.ne.s32.totalorder %s262, %s263
      %p275 = scmp.eq.s32.totalorder %s75, 1
      %p276 = por %p274, %p275
      %p278 = scmp.ne.s32.totalorder %s263, %s277
      %p279 = scmp.eq.s32.totalorder %s75, 0
      %p280 = por %p278, %p279
      %s282 = sadd.s32 %s281, 1
      %p285 = scmp.eq.s32.totalorder %s69, 1
      %p286 = scmp.ne.s32.totalorder %s281, %s283
      %p287 = scmp.eq.s32.totalorder %s69, 0
      %p288 = por %p286, %p287
      %p289 = scmp.ne.s32.totalorder %s281, %s283
      %p290 = scmp.eq.s32.totalorder %s74, 1
      %p291 = por %p289, %p290
      %p292 = scmp.ne.s32.totalorder %s283, %s284
      %p293 = scmp.eq.s32.totalorder %s74, 0
      %p294 = por %p292, %p293
      %p295 = scmp.ne.s32.totalorder %s283, %s284
      %p296 = scmp.eq.s32.totalorder %s75, 1
      %p297 = por %p295, %p296
      %p299 = scmp.ne.s32.totalorder %s284, %s298
      %p300 = scmp.eq.s32.totalorder %s75, 0
      %p301 = por %p299, %p300
      %s303 = sadd.s32 %s302, 1
      %p306 = scmp.eq.s32.totalorder %s69, 1
      %p307 = scmp.ne.s32.totalorder %s302, %s304
      %p308 = scmp.eq.s32.totalorder %s69, 0
      %p309 = por %p307, %p308
      %p310 = scmp.ne.s32.totalorder %s302, %s304
      %p311 = scmp.eq.s32.totalorder %s74, 1
      %p312 = por %p310, %p311
      %p313 = scmp.ne.s32.totalorder %s304, %s305
      %p314 = scmp.eq.s32.totalorder %s74, 0
      %p315 = por %p313, %p314
      %p316 = scmp.ne.s32.totalorder %s304, %s305
      %p317 = scmp.eq.s32.totalorder %s75, 1
      %p318 = por %p316, %p317
      %p320 = scmp.ne.s32.totalorder %s305, %s319
      %p321 = scmp.eq.s32.totalorder %s75, 0
      %p322 = por %p320, %p321
      %s324 = sadd.s32 %s323, 1
      %p327 = scmp.eq.s32.totalorder %s69, 1
      %p328 = scmp.ne.s32.totalorder %s323, %s325
      %p329 = scmp.eq.s32.totalorder %s69, 0
      %p330 = por %p328, %p329
      %p331 = scmp.ne.s32.totalorder %s323, %s325
      %p332 = scmp.eq.s32.totalorder %s74, 1
      %p333 = por %p331, %p332
      %p334 = scmp.ne.s32.totalorder %s325, %s326
      %p335 = scmp.eq.s32.totalorder %s74, 0
      %p336 = por %p334, %p335
      %p337 = scmp.ne.s32.totalorder %s325, %s326
      %p338 = scmp.eq.s32.totalorder %s75, 1
      %p339 = por %p337, %p338
      %p341 = scmp.ne.s32.totalorder %s326, %s340
      %p342 = scmp.eq.s32.totalorder %s75, 0
      %p343 = por %p341, %p342
      %s345 = sadd.s32 %s344, 1
      %p348 = scmp.eq.s32.totalorder %s69, 1
      %p349 = scmp.ne.s32.totalorder %s344, %s346
      %p350 = scmp.eq.s32.totalorder %s69, 0
      %p351 = por %p349, %p350
      %p352 = scmp.ne.s32.totalorder %s344, %s346
      %p353 = scmp.eq.s32.totalorder %s74, 1
      %p354 = por %p352, %p353
      %p355 = scmp.ne.s32.totalorder %s346, %s347
      %p356 = scmp.eq.s32.totalorder %s74, 0
      %p357 = por %p355, %p356
      %p358 = scmp.ne.s32.totalorder %s346, %s347
      %p359 = scmp.eq.s32.totalorder %s75, 1
      %p360 = por %p358, %p359
      %p362 = scmp.ne.s32.totalorder %s347, %s361
      %p363 = scmp.eq.s32.totalorder %s75, 0
      %p364 = por %p362, %p363
      %s366 = sadd.s32 %s365, 1
      %p369 = scmp.eq.s32.totalorder %s69, 1
      %p370 = scmp.ne.s32.totalorder %s365, %s367
      %p371 = scmp.eq.s32.totalorder %s69, 0
      %p372 = por %p370, %p371
      %p373 = scmp.ne.s32.totalorder %s365, %s367
      %p374 = scmp.eq.s32.totalorder %s74, 1
      %p375 = por %p373, %p374
      %p376 = scmp.ne.s32.totalorder %s367, %s368
      %p377 = scmp.eq.s32.totalorder %s74, 0
      %p378 = por %p376, %p377
      %p379 = scmp.ne.s32.totalorder %s367, %s368
      %p380 = scmp.eq.s32.totalorder %s75, 1
      %p381 = por %p379, %p380
      %p383 = scmp.ne.s32.totalorder %s368, %s382
      %p384 = scmp.eq.s32.totalorder %s75, 0
      %p385 = por %p383, %p384
      %s387 = sadd.s32 %s386, 1
      %p390 = scmp.eq.s32.totalorder %s69, 1
      %p391 = scmp.ne.s32.totalorder %s386, %s388
      %p392 = scmp.eq.s32.totalorder %s69, 0
      %p393 = por %p391, %p392
      %p394 = scmp.ne.s32.totalorder %s386, %s388
      %p395 = scmp.eq.s32.totalorder %s74, 1
      %p396 = por %p394, %p395
      %p397 = scmp.ne.s32.totalorder %s388, %s389
      %p398 = scmp.eq.s32.totalorder %s74, 0
      %p399 = por %p397, %p398
      %p400 = scmp.ne.s32.totalorder %s388, %s389
      %p401 = scmp.eq.s32.totalorder %s75, 1
      %p402 = por %p400, %p401
      %p404 = scmp.ne.s32.totalorder %s389, %s403
      %p405 = scmp.eq.s32.totalorder %s75, 0
      %p406 = por %p404, %p405
      %s408 = sadd.s32 %s407, 1
      %p411 = scmp.eq.s32.totalorder %s69, 1
      %p412 = scmp.ne.s32.totalorder %s407, %s409
      %p413 = scmp.eq.s32.totalorder %s69, 0
      %p414 = por %p412, %p413
      %p415 = scmp.ne.s32.totalorder %s407, %s409
      %p416 = scmp.eq.s32.totalorder %s74, 1
      %p417 = por %p415, %p416
      %p418 = scmp.ne.s32.totalorder %s409, %s410
      %p419 = scmp.eq.s32.totalorder %s74, 0
      %p420 = por %p418, %p419
      %p421 = scmp.ne.s32.totalorder %s409, %s410
      %p422 = scmp.eq.s32.totalorder %s75, 1
      %p423 = por %p421, %p422
      %p425 = scmp.ne.s32.totalorder %s410, %s424
      %p426 = scmp.eq.s32.totalorder %s75, 0
      %p427 = por %p425, %p426
      %s429 = sadd.s32 %s428, 1
      %p432 = scmp.eq.s32.totalorder %s69, 1
      %p433 = scmp.ne.s32.totalorder %s428, %s430
      %p434 = scmp.eq.s32.totalorder %s69, 0
      %p435 = por %p433, %p434
      %p436 = scmp.ne.s32.totalorder %s428, %s430
      %p437 = scmp.eq.s32.totalorder %s74, 1
      %p438 = por %p436, %p437
      %p439 = scmp.ne.s32.totalorder %s430, %s431
      %p440 = scmp.eq.s32.totalorder %s74, 0
      %p441 = por %p439, %p440
      %p442 = scmp.ne.s32.totalorder %s430, %s431
      %p443 = scmp.eq.s32.totalorder %s75, 1
      %p444 = por %p442, %p443
      %p446 = scmp.ne.s32.totalorder %s431, %s445
      %p447 = scmp.eq.s32.totalorder %s75, 0
      %p448 = por %p446, %p447
      %s450 = sadd.s32 %s449, 1
      %p453 = scmp.eq.s32.totalorder %s69, 1
      %p454 = scmp.ne.s32.totalorder %s449, %s451
      %p455 = scmp.eq.s32.totalorder %s69, 0
      %p456 = por %p454, %p455
      %p457 = scmp.ne.s32.totalorder %s449, %s451
      %p458 = scmp.eq.s32.totalorder %s74, 1
      %p459 = por %p457, %p458
      %p460 = scmp.ne.s32.totalorder %s451, %s452
      %p461 = scmp.eq.s32.totalorder %s74, 0
      %p462 = por %p460, %p461
      %p463 = scmp.ne.s32.totalorder %s451, %s452
      %p464 = scmp.eq.s32.totalorder %s75, 1
      %p465 = por %p463, %p464
      %p467 = scmp.ne.s32.totalorder %s452, %s466
      %p468 = scmp.eq.s32.totalorder %s75, 0
      %p469 = por %p467, %p468
      %s471 = sadd.s32 %s470, 1
      %p474 = scmp.eq.s32.totalorder %s69, 1
      %p475 = scmp.ne.s32.totalorder %s470, %s472
      %p476 = scmp.eq.s32.totalorder %s69, 0
      %p477 = por %p475, %p476
      %p478 = scmp.ne.s32.totalorder %s470, %s472
      %p479 = scmp.eq.s32.totalorder %s74, 1
      %p480 = por %p478, %p479
      %p481 = scmp.ne.s32.totalorder %s472, %s473
      %p482 = scmp.eq.s32.totalorder %s74, 0
      %p483 = por %p481, %p482
      %p484 = scmp.ne.s32.totalorder %s472, %s473
      %p485 = scmp.eq.s32.totalorder %s75, 1
      %p486 = por %p484, %p485
      %p488 = scmp.ne.s32.totalorder %s473, %s487
      %p489 = scmp.eq.s32.totalorder %s75, 0
      %p490 = por %p488, %p489
      %s492 = sadd.s32 %s491, 1
      %p495 = scmp.eq.s32.totalorder %s69, 1
      %p496 = scmp.ne.s32.totalorder %s491, %s493
      %p497 = scmp.eq.s32.totalorder %s69, 0
      %p498 = por %p496, %p497
      %p499 = scmp.ne.s32.totalorder %s491, %s493
      %p500 = scmp.eq.s32.totalorder %s74, 1
      %p501 = por %p499, %p500
      %p502 = scmp.ne.s32.totalorder %s493, %s494
      %p503 = scmp.eq.s32.totalorder %s74, 0
      %p504 = por %p502, %p503
      %p505 = scmp.ne.s32.totalorder %s493, %s494
      %p506 = scmp.eq.s32.totalorder %s75, 1
      %p507 = por %p505, %p506
      %p509 = scmp.ne.s32.totalorder %s494, %s508
      %p510 = scmp.eq.s32.totalorder %s75, 0
      %p511 = por %p509, %p510
      %s513 = sadd.s32 %s512, 1
      %p516 = scmp.eq.s32.totalorder %s69, 1
      %p517 = scmp.ne.s32.totalorder %s512, %s514
      %p518 = scmp.eq.s32.totalorder %s69, 0
      %p519 = por %p517, %p518
      %p520 = scmp.ne.s32.totalorder %s512, %s514
      %p521 = scmp.eq.s32.totalorder %s74, 1
      %p522 = por %p520, %p521
      %p523 = scmp.ne.s32.totalorder %s514, %s515
      %p524 = scmp.eq.s32.totalorder %s74, 0
      %p525 = por %p523, %p524
      %p526 = scmp.ne.s32.totalorder %s514, %s515
      %p527 = scmp.eq.s32.totalorder %s75, 1
      %p528 = por %p526, %p527
      %p530 = scmp.ne.s32.totalorder %s515, %s529
      %p531 = scmp.eq.s32.totalorder %s75, 0
      %p532 = por %p530, %p531
      %s534 = sadd.s32 %s533, 1
      %p537 = scmp.eq.s32.totalorder %s69, 1
      %p538 = scmp.ne.s32.totalorder %s533, %s535
      %p539 = scmp.eq.s32.totalorder %s69, 0
      %p540 = por %p538, %p539
      %p541 = scmp.ne.s32.totalorder %s533, %s535
      %p542 = scmp.eq.s32.totalorder %s74, 1
      %p543 = por %p541, %p542
      %p544 = scmp.ne.s32.totalorder %s535, %s536
      %p545 = scmp.eq.s32.totalorder %s74, 0
      %p546 = por %p544, %p545
      %p547 = scmp.ne.s32.totalorder %s535, %s536
      %p548 = scmp.eq.s32.totalorder %s75, 1
      %p549 = por %p547, %p548
      %p551 = scmp.ne.s32.totalorder %s536, %s550
      %p552 = scmp.eq.s32.totalorder %s75, 0
      %p553 = por %p551, %p552
      %s555 = sadd.s32 %s554, 1
      %p558 = scmp.eq.s32.totalorder %s69, 1
      %p559 = scmp.ne.s32.totalorder %s554, %s556
      %p560 = scmp.eq.s32.totalorder %s69, 0
      %p561 = por %p559, %p560
      %p562 = scmp.ne.s32.totalorder %s554, %s556
      %p563 = scmp.eq.s32.totalorder %s74, 1
      %p564 = por %p562, %p563
      %p565 = scmp.ne.s32.totalorder %s556, %s557
      %p566 = scmp.eq.s32.totalorder %s74, 0
      %p567 = por %p565, %p566
      %p568 = scmp.ne.s32.totalorder %s556, %s557
      %p569 = scmp.eq.s32.totalorder %s75, 1
      %p570 = por %p568, %p569
      %p572 = scmp.ne.s32.totalorder %s557, %s571
      %p573 = scmp.eq.s32.totalorder %s75, 0
      %p574 = por %p572, %p573
      %s576 = sadd.s32 %s575, 1
      %p579 = scmp.eq.s32.totalorder %s69, 1
      %p580 = scmp.ne.s32.totalorder %s575, %s577
      %p581 = scmp.eq.s32.totalorder %s69, 0
      %p582 = por %p580, %p581
      %p583 = scmp.ne.s32.totalorder %s575, %s577
      %p584 = scmp.eq.s32.totalorder %s74, 1
      %p585 = por %p583, %p584
      %p586 = scmp.ne.s32.totalorder %s577, %s578
      %p587 = scmp.eq.s32.totalorder %s74, 0
      %p588 = por %p586, %p587
      %p589 = scmp.ne.s32.totalorder %s577, %s578
      %p590 = scmp.eq.s32.totalorder %s75, 1
      %p591 = por %p589, %p590
      %p593 = scmp.ne.s32.totalorder %s578, %s592
      %p594 = scmp.eq.s32.totalorder %s75, 0
      %p595 = por %p593, %p594
      %s597 = sadd.s32 %s596, 1
      %p600 = scmp.eq.s32.totalorder %s69, 1
      %p601 = scmp.ne.s32.totalorder %s596, %s598
      %p602 = scmp.eq.s32.totalorder %s69, 0
      %p603 = por %p601, %p602
      %p604 = scmp.ne.s32.totalorder %s596, %s598
      %p605 = scmp.eq.s32.totalorder %s74, 1
      %p606 = por %p604, %p605
      %p607 = scmp.ne.s32.totalorder %s598, %s599
      %p608 = scmp.eq.s32.totalorder %s74, 0
      %p609 = por %p607, %p608
      %p610 = scmp.ne.s32.totalorder %s598, %s599
      %p611 = scmp.eq.s32.totalorder %s75, 1
      %p612 = por %p610, %p611
      %p614 = scmp.ne.s32.totalorder %s599, %s613
      %p615 = scmp.eq.s32.totalorder %s75, 0
      %p616 = por %p614, %p615
      %s618 = sadd.s32 %s617, 1
      %p621 = scmp.eq.s32.totalorder %s69, 1
      %p622 = scmp.ne.s32.totalorder %s617, %s619
      %p623 = scmp.eq.s32.totalorder %s69, 0
      %p624 = por %p622, %p623
      %p625 = scmp.ne.s32.totalorder %s617, %s619
      %p626 = scmp.eq.s32.totalorder %s74, 1
      %p627 = por %p625, %p626
      %p628 = scmp.ne.s32.totalorder %s619, %s620
      %p629 = scmp.eq.s32.totalorder %s74, 0
      %p630 = por %p628, %p629
      %p631 = scmp.ne.s32.totalorder %s619, %s620
      %p632 = scmp.eq.s32.totalorder %s75, 1
      %p633 = por %p631, %p632
      %p635 = scmp.ne.s32.totalorder %s620, %s634
      %p636 = scmp.eq.s32.totalorder %s75, 0
      %p637 = por %p635, %p636
      %s639 = sadd.s32 %s638, 1
      %p642 = scmp.eq.s32.totalorder %s69, 1
      %p643 = scmp.ne.s32.totalorder %s638, %s640
      %p644 = scmp.eq.s32.totalorder %s69, 0
      %p645 = por %p643, %p644
      %p646 = scmp.ne.s32.totalorder %s638, %s640
      %p647 = scmp.eq.s32.totalorder %s74, 1
      %p648 = por %p646, %p647
      %p649 = scmp.ne.s32.totalorder %s640, %s641
      %p650 = scmp.eq.s32.totalorder %s74, 0
      %p651 = por %p649, %p650
      %p652 = scmp.ne.s32.totalorder %s640, %s641
      %p653 = scmp.eq.s32.totalorder %s75, 1
      %p654 = por %p652, %p653
      %p656 = scmp.ne.s32.totalorder %s641, %s655
      %p657 = scmp.eq.s32.totalorder %s75, 0
      %p658 = por %p656, %p657
      %s660 = sadd.s32 %s659, 1
      %p663 = scmp.eq.s32.totalorder %s69, 1
      %p664 = scmp.ne.s32.totalorder %s659, %s661
      %p665 = scmp.eq.s32.totalorder %s69, 0
      %p666 = por %p664, %p665
      %p667 = scmp.ne.s32.totalorder %s659, %s661
      %p668 = scmp.eq.s32.totalorder %s74, 1
      %p669 = por %p667, %p668
      %p670 = scmp.ne.s32.totalorder %s661, %s662
      %p671 = scmp.eq.s32.totalorder %s74, 0
      %p672 = por %p670, %p671
      %p673 = scmp.ne.s32.totalorder %s661, %s662
      %p674 = scmp.eq.s32.totalorder %s75, 1
      %p675 = por %p673, %p674
      %p677 = scmp.ne.s32.totalorder %s662, %s676
      %p678 = scmp.eq.s32.totalorder %s75, 0
      %p679 = por %p677, %p678
      %s681 = sadd.s32 %s680, 1
      %p684 = scmp.eq.s32.totalorder %s69, 1
      %p685 = scmp.ne.s32.totalorder %s680, %s682
      %p686 = scmp.eq.s32.totalorder %s69, 0
      %p687 = por %p685, %p686
      %p688 = scmp.ne.s32.totalorder %s680, %s682
      %p689 = scmp.eq.s32.totalorder %s74, 1
      %p690 = por %p688, %p689
      %p691 = scmp.ne.s32.totalorder %s682, %s683
      %p692 = scmp.eq.s32.totalorder %s74, 0
      %p693 = por %p691, %p692
      %p694 = scmp.ne.s32.totalorder %s682, %s683
      %p695 = scmp.eq.s32.totalorder %s75, 1
      %p696 = por %p694, %p695
      %p698 = scmp.ne.s32.totalorder %s683, %s697
      %p699 = scmp.eq.s32.totalorder %s75, 0
      %p700 = por %p698, %p699
      %s702 = sadd.s32 %s701, 1
      %p705 = scmp.eq.s32.totalorder %s69, 1
      %p706 = scmp.ne.s32.totalorder %s701, %s703
      %p707 = scmp.eq.s32.totalorder %s69, 0
      %p708 = por %p706, %p707
      %p709 = scmp.ne.s32.totalorder %s701, %s703
      %p710 = scmp.eq.s32.totalorder %s74, 1
      %p711 = por %p709, %p710
      %p712 = scmp.ne.s32.totalorder %s703, %s704
      %p713 = scmp.eq.s32.totalorder %s74, 0
      %p714 = por %p712, %p713
      %p715 = scmp.ne.s32.totalorder %s703, %s704
      %p716 = scmp.eq.s32.totalorder %s75, 1
      %p717 = por %p715, %p716
      %p719 = scmp.ne.s32.totalorder %s704, %s718
      %p720 = scmp.eq.s32.totalorder %s75, 0
      %p721 = por %p719, %p720
      %s722 = ssub.s32 %s69, %s76
      %p723 = scmp.eq.s32.totalorder %s722, 0
      %s725 = sadd.s32 %s724, 1
      %s726 = scalar_select %p723, %s724, %s725
      %p729 = pneg %p723
      %p730 = scmp.eq.s32.totalorder %s69, 1
      %p731 = por %p729, %p730
      %p732 = scmp.ne.s32.totalorder %s724, %s727
      %p733 = scmp.eq.s32.totalorder %s69, 0
      %p734 = por %p732, %p733
      %p735 = scmp.ne.s32.totalorder %s724, %s727
      %p736 = scmp.eq.s32.totalorder %s74, 1
      %p737 = por %p735, %p736
      %p738 = scmp.ne.s32.totalorder %s727, %s728
      %p739 = scmp.eq.s32.totalorder %s74, 0
      %p740 = por %p738, %p739
      %p741 = scmp.ne.s32.totalorder %s727, %s728
      %p742 = scmp.eq.s32.totalorder %s75, 1
      %p743 = por %p741, %p742
      %p745 = scmp.ne.s32.totalorder %s728, %s744
      %p746 = scmp.eq.s32.totalorder %s75, 0
      %p747 = por %p745, %p746
      %p748 = scmp.le.s32.totalorder 1, %s69
      %p749 = scmp.lt.s32.totalorder %s69, 3
      %p750 = pnand %p748, %p749
      %p751 = pneg %p750
      // Predicated region
      $region9: #{diffusion_mlp_cond_cnn.1} parent=5 // pred_check
        _
      $region10: #{diffusion_mlp_cond_cnn.1} parent=5 // pred_check_branch
        %753 = sbr.rel (%p750) target = $region12
      $region11: #{diffusion_mlp_cond_cnn.1} parent=5 // pred_region
        %s754 = ssub.s32 %s69, 1
        // Predicated region
        $region13: #{diffusion_mlp_cond_cnn.1} parent=11 // pred_check
          %p755 = pneg %p168
        $region14: #{diffusion_mlp_cond_cnn.1} parent=11 // pred_check_branch
          %757 = sbr.rel (%p755) target = $region16
        $region15: #{diffusion_mlp_cond_cnn.1} parent=11 // pred_region
          _
        $region16: #{diffusion_mlp_cond_cnn.1} parent=11 // pred_fallthru
          _
        // Predicated region
        $region17: #{diffusion_mlp_cond_cnn.1} parent=11 // pred_check
          %p758 = pneg %p189
        $region18: #{diffusion_mlp_cond_cnn.1} parent=11 // pred_check_branch
          %760 = sbr.rel (%p758) target = $region20
        $region19: #{diffusion_mlp_cond_cnn.1} parent=11 // pred_region
          _
        $region20: #{diffusion_mlp_cond_cnn.1} parent=11 // pred_fallthru
          _
        // Predicated region
        $region21: #{diffusion_mlp_cond_cnn.1} parent=11 // pred_check
          %p761 = pneg %p210
        $region22: #{diffusion_mlp_cond_cnn.1} parent=11 // pred_check_branch
          %763 = sbr.rel (%p761) target = $region24
        $region23: #{diffusion_mlp_cond_cnn.1} parent=11 // pred_region
          _
        $region24: #{diffusion_mlp_cond_cnn.1} parent=11 // pred_fallthru
          _
        // Predicated region
        $region25: #{diffusion_mlp_cond_cnn.1} parent=11 // pred_check
          %p764 = pneg %p231
        $region26: #{diffusion_mlp_cond_cnn.1} parent=11 // pred_check_branch
          %766 = sbr.rel (%p764) target = $region28
        $region27: #{diffusion_mlp_cond_cnn.1} parent=11 // pred_region
          _
        $region28: #{diffusion_mlp_cond_cnn.1} parent=11 // pred_fallthru
          _
        // Predicated region
        $region29: #{diffusion_mlp_cond_cnn.1} parent=11 // pred_check
          %p767 = pneg %p252
        $region30: #{diffusion_mlp_cond_cnn.1} parent=11 // pred_check_branch
          %769 = sbr.rel (%p767) target = $region32
        $region31: #{diffusion_mlp_cond_cnn.1} parent=11 // pred_region
          _
        $region32: #{diffusion_mlp_cond_cnn.1} parent=11 // pred_fallthru
          _
        // Predicated region
        $region33: #{diffusion_mlp_cond_cnn.1} parent=11 // pred_check
          %p770 = pneg %p273
        $region34: #{diffusion_mlp_cond_cnn.1} parent=11 // pred_check_branch
          %772 = sbr.rel (%p770) target = $region36
        $region35: #{diffusion_mlp_cond_cnn.1} parent=11 // pred_region
          _
        $region36: #{diffusion_mlp_cond_cnn.1} parent=11 // pred_fallthru
          _
        // Predicated region
        $region37: #{diffusion_mlp_cond_cnn.1} parent=11 // pred_check
          %p773 = pneg %p294
        $region38: #{diffusion_mlp_cond_cnn.1} parent=11 // pred_check_branch
          %775 = sbr.rel (%p773) target = $region40
        $region39: #{diffusion_mlp_cond_cnn.1} parent=11 // pred_region
          _
        $region40: #{diffusion_mlp_cond_cnn.1} parent=11 // pred_fallthru
          _
        // Predicated region
        $region41: #{diffusion_mlp_cond_cnn.1} parent=11 // pred_check
          %p776 = pneg %p315
        $region42: #{diffusion_mlp_cond_cnn.1} parent=11 // pred_check_branch
          %778 = sbr.rel (%p776) target = $region44
        $region43: #{diffusion_mlp_cond_cnn.1} parent=11 // pred_region
          _
        $region44: #{diffusion_mlp_cond_cnn.1} parent=11 // pred_fallthru
          _
        // Predicated region
        $region45: #{diffusion_mlp_cond_cnn.1} parent=11 // pred_check
          %p779 = pneg %p336
        $region46: #{diffusion_mlp_cond_cnn.1} parent=11 // pred_check_branch
          %781 = sbr.rel (%p779) target = $region48
        $region47: #{diffusion_mlp_cond_cnn.1} parent=11 // pred_region
          _
        $region48: #{diffusion_mlp_cond_cnn.1} parent=11 // pred_fallthru
          _
        // Predicated region
        $region49: #{diffusion_mlp_cond_cnn.1} parent=11 // pred_check
          %p782 = pneg %p357
        $region50: #{diffusion_mlp_cond_cnn.1} parent=11 // pred_check_branch
          %784 = sbr.rel (%p782) target = $region52
        $region51: #{diffusion_mlp_cond_cnn.1} parent=11 // pred_region
          _
        $region52: #{diffusion_mlp_cond_cnn.1} parent=11 // pred_fallthru
          _
        // Predicated region
        $region53: #{diffusion_mlp_cond_cnn.1} parent=11 // pred_check
          %p785 = pneg %p378
        $region54: #{diffusion_mlp_cond_cnn.1} parent=11 // pred_check_branch
          %787 = sbr.rel (%p785) target = $region56
        $region55: #{diffusion_mlp_cond_cnn.1} parent=11 // pred_region
          _
        $region56: #{diffusion_mlp_cond_cnn.1} parent=11 // pred_fallthru
          _
        // Predicated region
        $region57: #{diffusion_mlp_cond_cnn.1} parent=11 // pred_check
          %p788 = pneg %p399
        $region58: #{diffusion_mlp_cond_cnn.1} parent=11 // pred_check_branch
          %790 = sbr.rel (%p788) target = $region60
        $region59: #{diffusion_mlp_cond_cnn.1} parent=11 // pred_region
          _
        $region60: #{diffusion_mlp_cond_cnn.1} parent=11 // pred_fallthru
          _
        // Predicated region
        $region61: #{diffusion_mlp_cond_cnn.1} parent=11 // pred_check
          %p791 = pneg %p420
        $region62: #{diffusion_mlp_cond_cnn.1} parent=11 // pred_check_branch
          %793 = sbr.rel (%p791) target = $region64
        $region63: #{diffusion_mlp_cond_cnn.1} parent=11 // pred_region
          _
        $region64: #{diffusion_mlp_cond_cnn.1} parent=11 // pred_fallthru
          _
        // Predicated region
        $region65: #{diffusion_mlp_cond_cnn.1} parent=11 // pred_check
          %p794 = pneg %p441
        $region66: #{diffusion_mlp_cond_cnn.1} parent=11 // pred_check_branch
          %796 = sbr.rel (%p794) target = $region68
        $region67: #{diffusion_mlp_cond_cnn.1} parent=11 // pred_region
          %s798 = ssub.s32 512, 512
          %799 = vsyncadd [#allocation3], %s798
          %s800 = sshll.u32 [#allocation2], 4
          %s801 = int_to_ptr.vmem [resolvable:$true] %s800
          %806 = dma.hbm_to_vmem [thread:$0]  %s33, 512, %s801, [#allocation3], 128, 128, 8
        $region68: #{diffusion_mlp_cond_cnn.1} parent=11 // pred_fallthru
          _
        // Predicated region
        $region69: #{diffusion_mlp_cond_cnn.1} parent=11 // pred_check
          %p807 = pneg %p462
        $region70: #{diffusion_mlp_cond_cnn.1} parent=11 // pred_check_branch
          %809 = sbr.rel (%p807) target = $region72
        $region71: #{diffusion_mlp_cond_cnn.1} parent=11 // pred_region
          _
        $region72: #{diffusion_mlp_cond_cnn.1} parent=11 // pred_fallthru
          _
        // Predicated region
        $region73: #{diffusion_mlp_cond_cnn.1} parent=11 // pred_check
          %p810 = pneg %p483
        $region74: #{diffusion_mlp_cond_cnn.1} parent=11 // pred_check_branch
          %812 = sbr.rel (%p810) target = $region76
        $region75: #{diffusion_mlp_cond_cnn.1} parent=11 // pred_region
          _
        $region76: #{diffusion_mlp_cond_cnn.1} parent=11 // pred_fallthru
          _
        // Predicated region
        $region77: #{diffusion_mlp_cond_cnn.1} parent=11 // pred_check
          %p813 = pneg %p504
        $region78: #{diffusion_mlp_cond_cnn.1} parent=11 // pred_check_branch
          %815 = sbr.rel (%p813) target = $region80
        $region79: #{diffusion_mlp_cond_cnn.1} parent=11 // pred_region
          _
        $region80: #{diffusion_mlp_cond_cnn.1} parent=11 // pred_fallthru
          _
        // Predicated region
        $region81: #{diffusion_mlp_cond_cnn.1} parent=11 // pred_check
          %p816 = pneg %p525
        $region82: #{diffusion_mlp_cond_cnn.1} parent=11 // pred_check_branch
          %818 = sbr.rel (%p816) target = $region84
        $region83: #{diffusion_mlp_cond_cnn.1} parent=11 // pred_region
          _
        $region84: #{diffusion_mlp_cond_cnn.1} parent=11 // pred_fallthru
          _
        // Predicated region
        $region85: #{diffusion_mlp_cond_cnn.1} parent=11 // pred_check
          %p819 = pneg %p546
        $region86: #{diffusion_mlp_cond_cnn.1} parent=11 // pred_check_branch
          %821 = sbr.rel (%p819) target = $region88
        $region87: #{diffusion_mlp_cond_cnn.1} parent=11 // pred_region
          _
        $region88: #{diffusion_mlp_cond_cnn.1} parent=11 // pred_fallthru
          _
        // Predicated region
        $region89: #{diffusion_mlp_cond_cnn.1} parent=11 // pred_check
          %p822 = pneg %p567
        $region90: #{diffusion_mlp_cond_cnn.1} parent=11 // pred_check_branch
          %824 = sbr.rel (%p822) target = $region92
        $region91: #{diffusion_mlp_cond_cnn.1} parent=11 // pred_region
          _
        $region92: #{diffusion_mlp_cond_cnn.1} parent=11 // pred_fallthru
          _
        // Predicated region
        $region93: #{diffusion_mlp_cond_cnn.1} parent=11 // pred_check
          %p825 = pneg %p588
        $region94: #{diffusion_mlp_cond_cnn.1} parent=11 // pred_check_branch
          %827 = sbr.rel (%p825) target = $region96
        $region95: #{diffusion_mlp_cond_cnn.1} parent=11 // pred_region
          _
        $region96: #{diffusion_mlp_cond_cnn.1} parent=11 // pred_fallthru
          _
        // Predicated region
        $region97: #{diffusion_mlp_cond_cnn.1} parent=11 // pred_check
          %p828 = pneg %p609
        $region98: #{diffusion_mlp_cond_cnn.1} parent=11 // pred_check_branch
          %830 = sbr.rel (%p828) target = $region100
        $region99: #{diffusion_mlp_cond_cnn.1} parent=11 // pred_region
          %s832 = ssub.s32 1024, 1024
          %833 = vsyncadd [#allocation5], %s832
          %s834 = sshll.u32 [#allocation4], 4
          %s835 = int_to_ptr.vmem [resolvable:$true] %s834
          %840 = dma.hbm_to_vmem [thread:$0]  %s49, 1024, %s835, [#allocation5], 128, 128, 8
        $region100: #{diffusion_mlp_cond_cnn.1} parent=11 // pred_fallthru
          _
        // Predicated region
        $region101: #{diffusion_mlp_cond_cnn.1} parent=11 // pred_check
          %p841 = pneg %p630
        $region102: #{diffusion_mlp_cond_cnn.1} parent=11 // pred_check_branch
          %843 = sbr.rel (%p841) target = $region104
        $region103: #{diffusion_mlp_cond_cnn.1} parent=11 // pred_region
          _
        $region104: #{diffusion_mlp_cond_cnn.1} parent=11 // pred_fallthru
          _
        // Predicated region
        $region105: #{diffusion_mlp_cond_cnn.1} parent=11 // pred_check
          %p844 = pneg %p651
        $region106: #{diffusion_mlp_cond_cnn.1} parent=11 // pred_check_branch
          %846 = sbr.rel (%p844) target = $region108
        $region107: #{diffusion_mlp_cond_cnn.1} parent=11 // pred_region
          _
        $region108: #{diffusion_mlp_cond_cnn.1} parent=11 // pred_fallthru
          _
        // Predicated region
        $region109: #{diffusion_mlp_cond_cnn.1} parent=11 // pred_check
          %p847 = pneg %p672
        $region110: #{diffusion_mlp_cond_cnn.1} parent=11 // pred_check_branch
          %849 = sbr.rel (%p847) target = $region112
        $region111: #{diffusion_mlp_cond_cnn.1} parent=11 // pred_region
          _
        $region112: #{diffusion_mlp_cond_cnn.1} parent=11 // pred_fallthru
          _
        // Predicated region
        $region113: #{diffusion_mlp_cond_cnn.1} parent=11 // pred_check
          %p850 = pneg %p693
        $region114: #{diffusion_mlp_cond_cnn.1} parent=11 // pred_check_branch
          %852 = sbr.rel (%p850) target = $region116
        $region115: #{diffusion_mlp_cond_cnn.1} parent=11 // pred_region
          _
        $region116: #{diffusion_mlp_cond_cnn.1} parent=11 // pred_fallthru
          _
        // Predicated region
        $region117: #{diffusion_mlp_cond_cnn.1} parent=11 // pred_check
          %p853 = pneg %p714
        $region118: #{diffusion_mlp_cond_cnn.1} parent=11 // pred_check_branch
          %855 = sbr.rel (%p853) target = $region120
        $region119: #{diffusion_mlp_cond_cnn.1} parent=11 // pred_region
          _
        $region120: #{diffusion_mlp_cond_cnn.1} parent=11 // pred_fallthru
          _
      $region12: #{diffusion_mlp_cond_cnn.1} parent=5 // pred_fallthru
        _
      %p856 = scmp.lt.s32.totalorder %s69, 2
      // Predicated region
      $region121: #{diffusion_mlp_cond_cnn.1} parent=5 // pred_check
        %p857 = pneg %p856
      $region122: #{diffusion_mlp_cond_cnn.1} parent=5 // pred_check_branch
        %859 = sbr.rel (%p857) target = $region124
      $region123: #{diffusion_mlp_cond_cnn.1} parent=5 // pred_region
        // Predicated region
        $region125: #{diffusion_mlp_cond_cnn.1} parent=123 // pred_check
          %p860 = pneg %p89
        $region126: #{diffusion_mlp_cond_cnn.1} parent=123 // pred_check_branch
          %862 = sbr.rel (%p860) target = $region128
        $region127: #{diffusion_mlp_cond_cnn.1} parent=123 // pred_region
          %p863 = scmp.lt.s32.totalorder %s69, 1
          %s864 = scalar_select %p863, %s69, 1
          %s865 = smul.addr %s864, 2
          %s866 = smul.addr %s865, 4
          %s867 = scalar_lea.vmem %s1, %s866
        $region128: #{diffusion_mlp_cond_cnn.1} parent=123 // pred_fallthru
          _
        // Predicated region
        $region129: #{diffusion_mlp_cond_cnn.1} parent=123 // pred_check
          %p868 = pneg %p115
        $region130: #{diffusion_mlp_cond_cnn.1} parent=123 // pred_check_branch
          %870 = sbr.rel (%p868) target = $region132
        $region131: #{diffusion_mlp_cond_cnn.1} parent=123 // pred_region
          %p871 = scmp.lt.s32.totalorder %s69, 1
          %s872 = scalar_select %p871, %s69, 1
          %s873 = smul.addr %s872, 2
          %s874 = smul.addr %s873, 4
          %s875 = scalar_lea.vmem %s3, %s874
        $region132: #{diffusion_mlp_cond_cnn.1} parent=123 // pred_fallthru
          _
        // Predicated region
        $region133: #{diffusion_mlp_cond_cnn.1} parent=123 // pred_check
          %p876 = pneg %p141
        $region134: #{diffusion_mlp_cond_cnn.1} parent=123 // pred_check_branch
          %878 = sbr.rel (%p876) target = $region136
        $region135: #{diffusion_mlp_cond_cnn.1} parent=123 // pred_region
          %p879 = scmp.lt.s32.totalorder %s69, 1
          %s880 = scalar_select %p879, %s69, 1
          %s881 = smul.addr %s880, 32
          %s882 = smul.addr %s881, 8
          %s883 = scalar_lea.vmem %s5, %s882
        $region136: #{diffusion_mlp_cond_cnn.1} parent=123 // pred_fallthru
          _
      $region124: #{diffusion_mlp_cond_cnn.1} parent=5 // pred_fallthru
        _
      %p884 = scmp.le.s32.totalorder 1, %s69
      %p885 = scmp.lt.s32.totalorder %s69, 3
      %p886 = pnand %p884, %p885
      %p887 = pneg %p886
      // Predicated region
      $region137: #{diffusion_mlp_cond_cnn.1} parent=5 // pred_check
        _
      $region138: #{diffusion_mlp_cond_cnn.1} parent=5 // pred_check_branch
        %889 = sbr.rel (%p886) target = $region140
      $region139: #{diffusion_mlp_cond_cnn.1} parent=5 // pred_region
        %s890 = ssub.s32 %s69, 1
        // Predicated region
        $region141: #{diffusion_mlp_cond_cnn.1} parent=139 // pred_check
          %p891 = pneg %p441
        $region142: #{diffusion_mlp_cond_cnn.1} parent=139 // pred_check_branch
          %893 = sbr.rel (%p891) target = $region144
        $region143: #{diffusion_mlp_cond_cnn.1} parent=139 // pred_region
          %894 = dma.done [#allocation3], 512
        $region144: #{diffusion_mlp_cond_cnn.1} parent=139 // pred_fallthru
          _
        // Predicated region
        $region145: #{diffusion_mlp_cond_cnn.1} parent=139 // pred_check
          %p895 = pneg %p609
        $region146: #{diffusion_mlp_cond_cnn.1} parent=139 // pred_check_branch
          %897 = sbr.rel (%p895) target = $region148
        $region147: #{diffusion_mlp_cond_cnn.1} parent=139 // pred_region
          %898 = dma.done [#allocation5], 1024
        $region148: #{diffusion_mlp_cond_cnn.1} parent=139 // pred_fallthru
          _
        %p899 = scmp.lt.s32.totalorder %s74, 1
        %s900 = scalar_select %p899, %s74, 1
        %s901 = smul.addr %s900, 2
        %s902 = smul.addr %s901, 4
        %s903 = scalar_lea.vmem %s1, %s902
        %p904 = pneg %p95
        %p905 = pneg %p92
        %p906 = scmp.lt.s32.totalorder %s74, 1
        %s907 = scalar_select %p906, %s74, 1
        %s908 = smul.addr %s907, 2
        %s909 = smul.addr %s908, 4
        %s910 = scalar_lea.vmem %s3, %s909
        %p911 = pneg %p121
        %p912 = pneg %p118
        %p913 = scmp.lt.s32.totalorder %s74, 1
        %s914 = scalar_select %p913, %s74, 1
        %s915 = smul.addr %s914, 32
        %s916 = smul.addr %s915, 8
        %s917 = scalar_lea.vmem %s5, %s916
        %p918 = pneg %p147
        %p919 = pneg %p144
        %p920 = pneg %p168
        %p921 = pneg %p165
        %p922 = pneg %p189
        %p923 = pneg %p186
        %p924 = pneg %p210
        %p925 = pneg %p207
        %p926 = pneg %p231
        %p927 = pneg %p228
        %p928 = pneg %p252
        %p929 = pneg %p249
        %p930 = pneg %p273
        %p931 = pneg %p270
        %p932 = pneg %p294
        %p933 = pneg %p291
        %p934 = pneg %p315
        %p935 = pneg %p312
        %p936 = pneg %p336
        %p937 = pneg %p333
        %p938 = pneg %p357
        %p939 = pneg %p354
        %p940 = pneg %p378
        %p941 = pneg %p375
        %p942 = pneg %p399
        %p943 = pneg %p396
        %p944 = pneg %p420
        %p945 = pneg %p417
        %p946 = pneg %p441
        %p947 = pneg %p438
        %p948 = pneg %p462
        %p949 = pneg %p459
        %p950 = pneg %p483
        %p951 = pneg %p480
        %p952 = pneg %p504
        %p953 = pneg %p501
        %p954 = pneg %p525
        %p955 = pneg %p522
        %p956 = pneg %p546
        %p957 = pneg %p543
        %p958 = pneg %p567
        %p959 = pneg %p564
        %p960 = pneg %p588
        %p961 = pneg %p585
        %p962 = pneg %p609
        %p963 = pneg %p606
        %p964 = pneg %p630
        %p965 = pneg %p627
        %p966 = pneg %p651
        %p967 = pneg %p648
        %p968 = pneg %p672
        %p969 = pneg %p669
        %p970 = pneg %p693
        %p971 = pneg %p690
        %p972 = pneg %p714
        %p973 = pneg %p711
        %p974 = pneg %p740
        %p975 = pneg %p737
        %p976 = scmp.lt.s32.totalorder %s74, 1
        %s977 = scalar_select %p976, %s74, 1
        %s978 = smul.addr %s977, 2
        %s979 = smul.addr %s978, 4
        %s980 = scalar_lea.vmem %s61, %s979
        %p981 = scmp.lt.s32.totalorder %s74, 1
        %s982 = scalar_select %p981, %s74, 1
        %s983 = smul.addr %s982, 2
        %s984 = smul.addr %s983, 4
        %s985 = scalar_lea.vmem %s1, %s984
        %p986 = scmp.lt.s32.totalorder %s74, 1
        %s987 = scalar_select %p986, %s74, 1
        %s988 = smul.addr %s987, 2
        %s989 = smul.addr %s988, 4
        %s990 = scalar_lea.vmem %s3, %s989
        %p991 = scmp.lt.s32.totalorder %s74, 1
        %s992 = scalar_select %p991, %s74, 1
        %s993 = smul.addr %s992, 32
        %s994 = smul.addr %s993, 8
        %s995 = scalar_lea.vmem %s5, %s994
        %p996 = scmp.lt.s32.totalorder %s74, 1
        %s997 = scalar_select %p996, %s74, 1
        %s998 = smul.addr %s997, 2
        %s999 = smul.addr %s998, 4
        %s1000 = scalar_lea.vmem %s61, %s999
        %v1002 = vld [vmem:[%s990] sm:$0xff]
        %v1004 = vcombine.high %v1002, %v1002
        %vm1006 = vcmask 1043456
        %v1007 = vsel %vm1006, %v1002, 0.0
        %v1008 = vrot.slane %v1007, 4
        %v1009 = vadd.f32 %v1007, %v1008
        %v1010 = vrot.slane %v1009, 2
        %v1011 = vadd.f32 %v1009, %v1010
        %v1012 = vrot.slane %v1011, 1
        %v1013 = vadd.f32 %v1011, %v1012
        %v1014 = vsel %vm1006, %v1004, 0.0
        %v1015 = vrot.slane %v1014, 4
        %v1016 = vadd.f32 %v1014, %v1015
        %v1017 = vrot.slane %v1016, 2
        %v1018 = vadd.f32 %v1016, %v1017
        %v1019 = vrot.slane %v1018, 1
        %v1020 = vadd.f32 %v1018, %v1019
        %v1021 = vrcp.pop 4.0
        %v1022 = vmul.f32 %v1013, %v1021
        %v1023 = vmul.f32 %v1020, %v1021
        %v1026 = vcombine.low %v1022, %v1023
        %v1028 = vsub.f32 %v1002, %v1026
        %v1029 = vmul.f32 %v1028, %v1028
        %v1031 = vcombine.high %v1029, %v1029
        %v1033 = vsel %vm1006, %v1029, 0.0
        %v1034 = vrot.slane %v1033, 4
        %v1035 = vadd.f32 %v1033, %v1034
        %v1036 = vrot.slane %v1035, 2
        %v1037 = vadd.f32 %v1035, %v1036
        %v1038 = vrot.slane %v1037, 1
        %v1039 = vadd.f32 %v1037, %v1038
        %v1040 = vsel %vm1006, %v1031, 0.0
        %v1041 = vrot.slane %v1040, 4
        %v1042 = vadd.f32 %v1040, %v1041
        %v1043 = vrot.slane %v1042, 2
        %v1044 = vadd.f32 %v1042, %v1043
        %v1045 = vrot.slane %v1044, 1
        %v1046 = vadd.f32 %v1044, %v1045
        %v1047 = vmul.f32 %v1039, %v1021
        %v1048 = vmul.f32 %v1046, %v1021
        %v1049 = vadd.f32 %v1047, 1e-08
        %v1050 = vadd.f32 %v1048, 1e-08
        %v1051 = vrsqrt.pop %v1049
        %v1052 = vrsqrt.pop %v1050
        %v1055 = vcombine.low %v1051, %v1052
        %v1057 = vmul.f32 %v1028, %v1055
        %v1058 = vld [vmem:[%s9] sm:$0xf]
        %1060 = vset.pattern.permute.xlu0 0
        %1061 = vperm.xlu0 %1060, %v1058
        %v1062 = vpop.permute.xlu0 %1061
        %v1064 = vunpack.c.l.s4 839922192
        %v1065 = vunpack.c.0.s8 %v1064
        %v1066 = vlaneseq
        %v1067 = vshrl.u32 %v1066, 7
        %v1068 = vsub.s32 %v1065, %v1067
        %v1069 = vrot.slane %v1062, %v1068
        %v1071 = vmul.f32 %v1057, %v1069
        %v1072 = vld [vmem:[%s11] sm:$0xf]
        %1074 = vset.pattern.permute.xlu0 0
        %1075 = vperm.xlu0 %1074, %v1072
        %v1076 = vpop.permute.xlu0 %1075
        %v1078 = vunpack.c.l.s4 839922192
        %v1079 = vunpack.c.0.s8 %v1078
        %v1080 = vlaneseq
        %v1081 = vshrl.u32 %v1080, 7
        %v1082 = vsub.s32 %v1079, %v1081
        %v1083 = vrot.slane %v1076, %v1082
        %v1085 = vadd.f32 %v1071, %v1083
        %v1086 = vld [vmem:[%s7] sm:$0xff]
        %v1087 = vld [vmem:[%s7 + $0x8] sm:$0xff]
        %v1088 = vld [vmem:[%s7 + $0x10] sm:$0xff]
        %v1089 = vld [vmem:[%s7 + $0x18] sm:$0xff]
        %v1090 = vld [vmem:[%s7 + $0x20] sm:$0xff]
        %v1091 = vld [vmem:[%s7 + $0x28] sm:$0xff]
        %v1092 = vld [vmem:[%s7 + $0x30] sm:$0xff]
        %v1093 = vld [vmem:[%s7 + $0x38] sm:$0xff]
        %v1094 = vld [vmem:[%s7 + $0x40] sm:$0xff]
        %v1095 = vld [vmem:[%s7 + $0x48] sm:$0xff]
        %v1096 = vld [vmem:[%s7 + $0x50] sm:$0xff]
        %v1097 = vld [vmem:[%s7 + $0x58] sm:$0xff]
        %v1098 = vld [vmem:[%s7 + $0x60] sm:$0xff]
        %v1099 = vld [vmem:[%s7 + $0x68] sm:$0xff]
        %v1100 = vld [vmem:[%s7 + $0x70] sm:$0xff]
        %v1101 = vld [vmem:[%s7 + $0x78] sm:$0xff]
        %v1102 = vld [vmem:[%s7 + $0x80] sm:$0xff]
        %v1103 = vld [vmem:[%s7 + $0x88] sm:$0xff]
        %v1104 = vld [vmem:[%s7 + $0x90] sm:$0xff]
        %v1105 = vld [vmem:[%s7 + $0x98] sm:$0xff]
        %v1106 = vld [vmem:[%s7 + $0xa0] sm:$0xff]
        %v1107 = vld [vmem:[%s7 + $0xa8] sm:$0xff]
        %v1108 = vld [vmem:[%s7 + $0xb0] sm:$0xff]
        %v1109 = vld [vmem:[%s7 + $0xb8] sm:$0xff]
        %v1110 = vld [vmem:[%s7 + $0xc0] sm:$0xff]
        %v1111 = vld [vmem:[%s7 + $0xc8] sm:$0xff]
        %v1112 = vld [vmem:[%s7 + $0xd0] sm:$0xff]
        %v1113 = vld [vmem:[%s7 + $0xd8] sm:$0xff]
        %v1114 = vld [vmem:[%s7 + $0xe0] sm:$0xff]
        %v1115 = vld [vmem:[%s7 + $0xe8] sm:$0xff]
        %v1116 = vld [vmem:[%s7 + $0xf0] sm:$0xff]
        %v1117 = vld [vmem:[%s7 + $0xf8] sm:$0xff]
        %v1118 = vld [vmem:[%s7 + $0x100] sm:$0xff]
        %v1119 = vld [vmem:[%s7 + $0x108] sm:$0xff]
        %v1120 = vld [vmem:[%s7 + $0x110] sm:$0xff]
        %v1121 = vld [vmem:[%s7 + $0x118] sm:$0xff]
        %v1122 = vld [vmem:[%s7 + $0x120] sm:$0xff]
        %v1123 = vld [vmem:[%s7 + $0x128] sm:$0xff]
        %v1124 = vld [vmem:[%s7 + $0x130] sm:$0xff]
        %v1125 = vld [vmem:[%s7 + $0x138] sm:$0xff]
        %v1126 = vld [vmem:[%s7 + $0x140] sm:$0xff]
        %v1127 = vld [vmem:[%s7 + $0x148] sm:$0xff]
        %v1128 = vld [vmem:[%s7 + $0x150] sm:$0xff]
        %v1129 = vld [vmem:[%s7 + $0x158] sm:$0xff]
        %v1130 = vld [vmem:[%s7 + $0x160] sm:$0xff]
        %v1131 = vld [vmem:[%s7 + $0x168] sm:$0xff]
        %v1132 = vld [vmem:[%s7 + $0x170] sm:$0xff]
        %v1133 = vld [vmem:[%s7 + $0x178] sm:$0xff]
        %v1134 = vld [vmem:[%s7 + $0x180] sm:$0xff]
        %v1135 = vld [vmem:[%s7 + $0x188] sm:$0xff]
        %v1136 = vld [vmem:[%s7 + $0x190] sm:$0xff]
        %v1137 = vld [vmem:[%s7 + $0x198] sm:$0xff]
        %v1138 = vld [vmem:[%s7 + $0x1a0] sm:$0xff]
        %v1139 = vld [vmem:[%s7 + $0x1a8] sm:$0xff]
        %v1140 = vld [vmem:[%s7 + $0x1b0] sm:$0xff]
        %v1141 = vld [vmem:[%s7 + $0x1b8] sm:$0xff]
        %v1142 = vld [vmem:[%s7 + $0x1c0] sm:$0xff]
        %v1143 = vld [vmem:[%s7 + $0x1c8] sm:$0xff]
        %v1144 = vld [vmem:[%s7 + $0x1d0] sm:$0xff]
        %v1145 = vld [vmem:[%s7 + $0x1d8] sm:$0xff]
        %v1146 = vld [vmem:[%s7 + $0x1e0] sm:$0xff]
        %v1147 = vld [vmem:[%s7 + $0x1e8] sm:$0xff]
        %v1148 = vld [vmem:[%s7 + $0x1f0] sm:$0xff]
        %v1149 = vld [vmem:[%s7 + $0x1f8] sm:$0xff]
        %v1150 = vld [vmem:[%s7 + $0x200] sm:$0xff]
        %v1151 = vld [vmem:[%s7 + $0x208] sm:$0xff]
        %v1152 = vld [vmem:[%s7 + $0x210] sm:$0xff]
        %v1153 = vld [vmem:[%s7 + $0x218] sm:$0xff]
        %v1154 = vld [vmem:[%s7 + $0x220] sm:$0xff]
        %v1155 = vld [vmem:[%s7 + $0x228] sm:$0xff]
        %v1156 = vld [vmem:[%s7 + $0x230] sm:$0xff]
        %v1157 = vld [vmem:[%s7 + $0x238] sm:$0xff]
        %v1158 = vld [vmem:[%s7 + $0x240] sm:$0xff]
        %v1159 = vld [vmem:[%s7 + $0x248] sm:$0xff]
        %v1160 = vld [vmem:[%s7 + $0x250] sm:$0xff]
        %v1161 = vld [vmem:[%s7 + $0x258] sm:$0xff]
        %v1162 = vld [vmem:[%s7 + $0x260] sm:$0xff]
        %v1163 = vld [vmem:[%s7 + $0x268] sm:$0xff]
        %v1164 = vld [vmem:[%s7 + $0x270] sm:$0xff]
        %v1165 = vld [vmem:[%s7 + $0x278] sm:$0xff]
        %v1166 = vld [vmem:[%s7 + $0x280] sm:$0xff]
        %v1167 = vld [vmem:[%s7 + $0x288] sm:$0xff]
        %v1168 = vld [vmem:[%s7 + $0x290] sm:$0xff]
        %v1169 = vld [vmem:[%s7 + $0x298] sm:$0xff]
        %v1170 = vld [vmem:[%s7 + $0x2a0] sm:$0xff]
        %v1171 = vld [vmem:[%s7 + $0x2a8] sm:$0xff]
        %v1172 = vld [vmem:[%s7 + $0x2b0] sm:$0xff]
        %v1173 = vld [vmem:[%s7 + $0x2b8] sm:$0xff]
        %v1174 = vld [vmem:[%s7 + $0x2c0] sm:$0xff]
        %v1175 = vld [vmem:[%s7 + $0x2c8] sm:$0xff]
        %v1176 = vld [vmem:[%s7 + $0x2d0] sm:$0xff]
        %v1177 = vld [vmem:[%s7 + $0x2d8] sm:$0xff]
        %v1178 = vld [vmem:[%s7 + $0x2e0] sm:$0xff]
        %v1179 = vld [vmem:[%s7 + $0x2e8] sm:$0xff]
        %v1180 = vld [vmem:[%s7 + $0x2f0] sm:$0xff]
        %v1181 = vld [vmem:[%s7 + $0x2f8] sm:$0xff]
        %v1182 = vld [vmem:[%s7 + $0x300] sm:$0xff]
        %v1183 = vld [vmem:[%s7 + $0x308] sm:$0xff]
        %v1184 = vld [vmem:[%s7 + $0x310] sm:$0xff]
        %v1185 = vld [vmem:[%s7 + $0x318] sm:$0xff]
        %v1186 = vld [vmem:[%s7 + $0x320] sm:$0xff]
        %v1187 = vld [vmem:[%s7 + $0x328] sm:$0xff]
        %v1188 = vld [vmem:[%s7 + $0x330] sm:$0xff]
        %v1189 = vld [vmem:[%s7 + $0x338] sm:$0xff]
        %v1190 = vld [vmem:[%s7 + $0x340] sm:$0xff]
        %v1191 = vld [vmem:[%s7 + $0x348] sm:$0xff]
        %v1192 = vld [vmem:[%s7 + $0x350] sm:$0xff]
        %v1193 = vld [vmem:[%s7 + $0x358] sm:$0xff]
        %v1194 = vld [vmem:[%s7 + $0x360] sm:$0xff]
        %v1195 = vld [vmem:[%s7 + $0x368] sm:$0xff]
        %v1196 = vld [vmem:[%s7 + $0x370] sm:$0xff]
        %v1197 = vld [vmem:[%s7 + $0x378] sm:$0xff]
        %v1198 = vld [vmem:[%s7 + $0x380] sm:$0xff]
        %v1199 = vld [vmem:[%s7 + $0x388] sm:$0xff]
        %v1200 = vld [vmem:[%s7 + $0x390] sm:$0xff]
        %v1201 = vld [vmem:[%s7 + $0x398] sm:$0xff]
        %v1202 = vld [vmem:[%s7 + $0x3a0] sm:$0xff]
        %v1203 = vld [vmem:[%s7 + $0x3a8] sm:$0xff]
        %v1204 = vld [vmem:[%s7 + $0x3b0] sm:$0xff]
        %v1205 = vld [vmem:[%s7 + $0x3b8] sm:$0xff]
        %v1206 = vld [vmem:[%s7 + $0x3c0] sm:$0xff]
        %v1207 = vld [vmem:[%s7 + $0x3c8] sm:$0xff]
        %v1208 = vld [vmem:[%s7 + $0x3d0] sm:$0xff]
        %v1209 = vld [vmem:[%s7 + $0x3d8] sm:$0xff]
        %v1210 = vld [vmem:[%s7 + $0x3e0] sm:$0xff]
        %v1211 = vld [vmem:[%s7 + $0x3e8] sm:$0xff]
        %v1212 = vld [vmem:[%s7 + $0x3f0] sm:$0xff]
        %v1213 = vld [vmem:[%s7 + $0x3f8] sm:$0xff]
        %v1214 = vld [vmem:[%s7 + $0x400] sm:$0xff]
        %v1215 = vld [vmem:[%s7 + $0x408] sm:$0xff]
        %v1216 = vld [vmem:[%s7 + $0x410] sm:$0xff]
        %v1217 = vld [vmem:[%s7 + $0x418] sm:$0xff]
        %v1218 = vld [vmem:[%s7 + $0x420] sm:$0xff]
        %v1219 = vld [vmem:[%s7 + $0x428] sm:$0xff]
        %v1220 = vld [vmem:[%s7 + $0x430] sm:$0xff]
        %v1221 = vld [vmem:[%s7 + $0x438] sm:$0xff]
        %v1222 = vld [vmem:[%s7 + $0x440] sm:$0xff]
        %v1223 = vld [vmem:[%s7 + $0x448] sm:$0xff]
        %v1224 = vld [vmem:[%s7 + $0x450] sm:$0xff]
        %v1225 = vld [vmem:[%s7 + $0x458] sm:$0xff]
        %v1226 = vld [vmem:[%s7 + $0x460] sm:$0xff]
        %v1227 = vld [vmem:[%s7 + $0x468] sm:$0xff]
        %v1228 = vld [vmem:[%s7 + $0x470] sm:$0xff]
        %v1229 = vld [vmem:[%s7 + $0x478] sm:$0xff]
        %v1230 = vld [vmem:[%s7 + $0x480] sm:$0xff]
        %v1231 = vld [vmem:[%s7 + $0x488] sm:$0xff]
        %v1232 = vld [vmem:[%s7 + $0x490] sm:$0xff]
        %v1233 = vld [vmem:[%s7 + $0x498] sm:$0xff]
        %v1234 = vld [vmem:[%s7 + $0x4a0] sm:$0xff]
        %v1235 = vld [vmem:[%s7 + $0x4a8] sm:$0xff]
        %v1236 = vld [vmem:[%s7 + $0x4b0] sm:$0xff]
        %v1237 = vld [vmem:[%s7 + $0x4b8] sm:$0xff]
        %v1238 = vld [vmem:[%s7 + $0x4c0] sm:$0xff]
        %v1239 = vld [vmem:[%s7 + $0x4c8] sm:$0xff]
        %v1240 = vld [vmem:[%s7 + $0x4d0] sm:$0xff]
        %v1241 = vld [vmem:[%s7 + $0x4d8] sm:$0xff]
        %v1242 = vld [vmem:[%s7 + $0x4e0] sm:$0xff]
        %v1243 = vld [vmem:[%s7 + $0x4e8] sm:$0xff]
        %v1244 = vld [vmem:[%s7 + $0x4f0] sm:$0xff]
        %v1245 = vld [vmem:[%s7 + $0x4f8] sm:$0xff]
        %v1246 = vld [vmem:[%s7 + $0x500] sm:$0xff]
        %v1247 = vld [vmem:[%s7 + $0x508] sm:$0xff]
        %v1248 = vld [vmem:[%s7 + $0x510] sm:$0xff]
        %v1249 = vld [vmem:[%s7 + $0x518] sm:$0xff]
        %v1250 = vld [vmem:[%s7 + $0x520] sm:$0xff]
        %v1251 = vld [vmem:[%s7 + $0x528] sm:$0xff]
        %v1252 = vld [vmem:[%s7 + $0x530] sm:$0xff]
        %v1253 = vld [vmem:[%s7 + $0x538] sm:$0xff]
        %v1254 = vld [vmem:[%s7 + $0x540] sm:$0xff]
        %v1255 = vld [vmem:[%s7 + $0x548] sm:$0xff]
        %v1256 = vld [vmem:[%s7 + $0x550] sm:$0xff]
        %v1257 = vld [vmem:[%s7 + $0x558] sm:$0xff]
        %v1258 = vld [vmem:[%s7 + $0x560] sm:$0xff]
        %v1259 = vld [vmem:[%s7 + $0x568] sm:$0xff]
        %v1260 = vld [vmem:[%s7 + $0x570] sm:$0xff]
        %v1261 = vld [vmem:[%s7 + $0x578] sm:$0xff]
        %v1262 = vld [vmem:[%s7 + $0x580] sm:$0xff]
        %v1263 = vld [vmem:[%s7 + $0x588] sm:$0xff]
        %v1264 = vld [vmem:[%s7 + $0x590] sm:$0xff]
        %v1265 = vld [vmem:[%s7 + $0x598] sm:$0xff]
        %v1266 = vld [vmem:[%s7 + $0x5a0] sm:$0xff]
        %v1267 = vld [vmem:[%s7 + $0x5a8] sm:$0xff]
        %v1268 = vld [vmem:[%s7 + $0x5b0] sm:$0xff]
        %v1269 = vld [vmem:[%s7 + $0x5b8] sm:$0xff]
        %v1270 = vld [vmem:[%s7 + $0x5c0] sm:$0xff]
        %v1271 = vld [vmem:[%s7 + $0x5c8] sm:$0xff]
        %v1272 = vld [vmem:[%s7 + $0x5d0] sm:$0xff]
        %v1273 = vld [vmem:[%s7 + $0x5d8] sm:$0xff]
        %v1274 = vld [vmem:[%s7 + $0x5e0] sm:$0xff]
        %v1275 = vld [vmem:[%s7 + $0x5e8] sm:$0xff]
        %v1276 = vld [vmem:[%s7 + $0x5f0] sm:$0xff]
        %v1277 = vld [vmem:[%s7 + $0x5f8] sm:$0xff]
        %v1278 = vld [vmem:[%s7 + $0x600] sm:$0xff]
        %v1279 = vld [vmem:[%s7 + $0x608] sm:$0xff]
        %v1280 = vld [vmem:[%s7 + $0x610] sm:$0xff]
        %v1281 = vld [vmem:[%s7 + $0x618] sm:$0xff]
        %v1282 = vld [vmem:[%s7 + $0x620] sm:$0xff]
        %v1283 = vld [vmem:[%s7 + $0x628] sm:$0xff]
        %v1284 = vld [vmem:[%s7 + $0x630] sm:$0xff]
        %v1285 = vld [vmem:[%s7 + $0x638] sm:$0xff]
        %v1286 = vld [vmem:[%s7 + $0x640] sm:$0xff]
        %v1287 = vld [vmem:[%s7 + $0x648] sm:$0xff]
        %v1288 = vld [vmem:[%s7 + $0x650] sm:$0xff]
        %v1289 = vld [vmem:[%s7 + $0x658] sm:$0xff]
        %v1290 = vld [vmem:[%s7 + $0x660] sm:$0xff]
        %v1291 = vld [vmem:[%s7 + $0x668] sm:$0xff]
        %v1292 = vld [vmem:[%s7 + $0x670] sm:$0xff]
        %v1293 = vld [vmem:[%s7 + $0x678] sm:$0xff]
        %v1294 = vld [vmem:[%s7 + $0x680] sm:$0xff]
        %v1295 = vld [vmem:[%s7 + $0x688] sm:$0xff]
        %v1296 = vld [vmem:[%s7 + $0x690] sm:$0xff]
        %v1297 = vld [vmem:[%s7 + $0x698] sm:$0xff]
        %v1298 = vld [vmem:[%s7 + $0x6a0] sm:$0xff]
        %v1299 = vld [vmem:[%s7 + $0x6a8] sm:$0xff]
        %v1300 = vld [vmem:[%s7 + $0x6b0] sm:$0xff]
        %v1301 = vld [vmem:[%s7 + $0x6b8] sm:$0xff]
        %v1302 = vld [vmem:[%s7 + $0x6c0] sm:$0xff]
        %v1303 = vld [vmem:[%s7 + $0x6c8] sm:$0xff]
        %v1304 = vld [vmem:[%s7 + $0x6d0] sm:$0xff]
        %v1305 = vld [vmem:[%s7 + $0x6d8] sm:$0xff]
        %v1306 = vld [vmem:[%s7 + $0x6e0] sm:$0xff]
        %v1307 = vld [vmem:[%s7 + $0x6e8] sm:$0xff]
        %v1308 = vld [vmem:[%s7 + $0x6f0] sm:$0xff]
        %v1309 = vld [vmem:[%s7 + $0x6f8] sm:$0xff]
        %v1310 = vld [vmem:[%s7 + $0x700] sm:$0xff]
        %v1311 = vld [vmem:[%s7 + $0x708] sm:$0xff]
        %v1312 = vld [vmem:[%s7 + $0x710] sm:$0xff]
        %v1313 = vld [vmem:[%s7 + $0x718] sm:$0xff]
        %v1314 = vld [vmem:[%s7 + $0x720] sm:$0xff]
        %v1315 = vld [vmem:[%s7 + $0x728] sm:$0xff]
        %v1316 = vld [vmem:[%s7 + $0x730] sm:$0xff]
        %v1317 = vld [vmem:[%s7 + $0x738] sm:$0xff]
        %v1318 = vld [vmem:[%s7 + $0x740] sm:$0xff]
        %v1319 = vld [vmem:[%s7 + $0x748] sm:$0xff]
        %v1320 = vld [vmem:[%s7 + $0x750] sm:$0xff]
        %v1321 = vld [vmem:[%s7 + $0x758] sm:$0xff]
        %v1322 = vld [vmem:[%s7 + $0x760] sm:$0xff]
        %v1323 = vld [vmem:[%s7 + $0x768] sm:$0xff]
        %v1324 = vld [vmem:[%s7 + $0x770] sm:$0xff]
        %v1325 = vld [vmem:[%s7 + $0x778] sm:$0xff]
        %v1326 = vld [vmem:[%s7 + $0x780] sm:$0xff]
        %v1327 = vld [vmem:[%s7 + $0x788] sm:$0xff]
        %v1328 = vld [vmem:[%s7 + $0x790] sm:$0xff]
        %v1329 = vld [vmem:[%s7 + $0x798] sm:$0xff]
        %v1330 = vld [vmem:[%s7 + $0x7a0] sm:$0xff]
        %v1331 = vld [vmem:[%s7 + $0x7a8] sm:$0xff]
        %v1332 = vld [vmem:[%s7 + $0x7b0] sm:$0xff]
        %v1333 = vld [vmem:[%s7 + $0x7b8] sm:$0xff]
        %v1334 = vld [vmem:[%s7 + $0x7c0] sm:$0xff]
        %v1335 = vld [vmem:[%s7 + $0x7c8] sm:$0xff]
        %v1336 = vld [vmem:[%s7 + $0x7d0] sm:$0xff]
        %v1337 = vld [vmem:[%s7 + $0x7d8] sm:$0xff]
        %v1338 = vld [vmem:[%s7 + $0x7e0] sm:$0xff]
        %v1339 = vld [vmem:[%s7 + $0x7e8] sm:$0xff]
        %v1340 = vld [vmem:[%s7 + $0x7f0] sm:$0xff]
        %v1341 = vld [vmem:[%s7 + $0x7f8] sm:$0xff]
        %v1342 = vld [vmem:[%s7 + $0x800] sm:$0xff]
        %v1343 = vld [vmem:[%s7 + $0x808] sm:$0xff]
        %v1344 = vld [vmem:[%s7 + $0x810] sm:$0xff]
        %v1345 = vld [vmem:[%s7 + $0x818] sm:$0xff]
        %v1346 = vld [vmem:[%s7 + $0x820] sm:$0xff]
        %v1347 = vld [vmem:[%s7 + $0x828] sm:$0xff]
        %v1348 = vld [vmem:[%s7 + $0x830] sm:$0xff]
        %v1349 = vld [vmem:[%s7 + $0x838] sm:$0xff]
        %v1350 = vld [vmem:[%s7 + $0x840] sm:$0xff]
        %v1351 = vld [vmem:[%s7 + $0x848] sm:$0xff]
        %v1352 = vld [vmem:[%s7 + $0x850] sm:$0xff]
        %v1353 = vld [vmem:[%s7 + $0x858] sm:$0xff]
        %v1354 = vld [vmem:[%s7 + $0x860] sm:$0xff]
        %v1355 = vld [vmem:[%s7 + $0x868] sm:$0xff]
        %v1356 = vld [vmem:[%s7 + $0x870] sm:$0xff]
        %v1357 = vld [vmem:[%s7 + $0x878] sm:$0xff]
        %v1358 = vld [vmem:[%s7 + $0x880] sm:$0xff]
        %v1359 = vld [vmem:[%s7 + $0x888] sm:$0xff]
        %v1360 = vld [vmem:[%s7 + $0x890] sm:$0xff]
        %v1361 = vld [vmem:[%s7 + $0x898] sm:$0xff]
        %v1362 = vld [vmem:[%s7 + $0x8a0] sm:$0xff]
        %v1363 = vld [vmem:[%s7 + $0x8a8] sm:$0xff]
        %v1364 = vld [vmem:[%s7 + $0x8b0] sm:$0xff]
        %v1365 = vld [vmem:[%s7 + $0x8b8] sm:$0xff]
        %v1366 = vld [vmem:[%s7 + $0x8c0] sm:$0xff]
        %v1367 = vld [vmem:[%s7 + $0x8c8] sm:$0xff]
        %v1368 = vld [vmem:[%s7 + $0x8d0] sm:$0xff]
        %v1369 = vld [vmem:[%s7 + $0x8d8] sm:$0xff]
        %v1370 = vld [vmem:[%s7 + $0x8e0] sm:$0xff]
        %v1371 = vld [vmem:[%s7 + $0x8e8] sm:$0xff]
        %v1372 = vld [vmem:[%s7 + $0x8f0] sm:$0xff]
        %v1373 = vld [vmem:[%s7 + $0x8f8] sm:$0xff]
        %v1375 = vcombine.high %v1085, %v1085
        %v1377 = vpack.c.bf16 %v1085, %v1085
        %v1378 = vpack.c.bf16 %v1375, %v1375
        %v1667 = vunpack.c.l.b16 %v1086
        %v1668 = vunpack.c.h.b16 %v1086
        %v1669 = vunpack.c.l.b16 %v1087
        %v1670 = vunpack.c.h.b16 %v1087
        %v1671 = vunpack.c.l.b16 %v1088
        %v1672 = vunpack.c.h.b16 %v1088
        %v1673 = vunpack.c.l.b16 %v1089
        %v1674 = vunpack.c.h.b16 %v1089
        %v1675 = vunpack.c.l.b16 %v1090
        %v1676 = vunpack.c.h.b16 %v1090
        %v1677 = vunpack.c.l.b16 %v1091
        %v1678 = vunpack.c.h.b16 %v1091
        %v1679 = vunpack.c.l.b16 %v1092
        %v1680 = vunpack.c.h.b16 %v1092
        %v1681 = vunpack.c.l.b16 %v1093
        %v1682 = vunpack.c.h.b16 %v1093
        %v1683 = vunpack.c.l.b16 %v1094
        %v1684 = vunpack.c.h.b16 %v1094
        %v1685 = vunpack.c.l.b16 %v1095
        %v1686 = vunpack.c.h.b16 %v1095
        %v1687 = vunpack.c.l.b16 %v1096
        %v1688 = vunpack.c.h.b16 %v1096
        %v1689 = vunpack.c.l.b16 %v1097
        %v1690 = vunpack.c.h.b16 %v1097
        %v1691 = vunpack.c.l.b16 %v1098
        %v1692 = vunpack.c.h.b16 %v1098
        %v1693 = vunpack.c.l.b16 %v1099
        %v1694 = vunpack.c.h.b16 %v1099
        %v1695 = vunpack.c.l.b16 %v1100
        %v1696 = vunpack.c.h.b16 %v1100
        %v1697 = vunpack.c.l.b16 %v1101
        %v1698 = vunpack.c.h.b16 %v1101
        %v1699 = vunpack.c.l.b16 %v1102
        %v1700 = vunpack.c.h.b16 %v1102
        %v1701 = vunpack.c.l.b16 %v1103
        %v1702 = vunpack.c.h.b16 %v1103
        %v1703 = vunpack.c.l.b16 %v1104
        %v1704 = vunpack.c.h.b16 %v1104
        %v1705 = vunpack.c.l.b16 %v1105
        %v1706 = vunpack.c.h.b16 %v1105
        %v1707 = vunpack.c.l.b16 %v1106
        %v1708 = vunpack.c.h.b16 %v1106
        %v1709 = vunpack.c.l.b16 %v1107
        %v1710 = vunpack.c.h.b16 %v1107
        %v1711 = vunpack.c.l.b16 %v1108
        %v1712 = vunpack.c.h.b16 %v1108
        %v1713 = vunpack.c.l.b16 %v1109
        %v1714 = vunpack.c.h.b16 %v1109
        %v1715 = vunpack.c.l.b16 %v1110
        %v1716 = vunpack.c.h.b16 %v1110
        %v1717 = vunpack.c.l.b16 %v1111
        %v1718 = vunpack.c.h.b16 %v1111
        %v1719 = vunpack.c.l.b16 %v1112
        %v1720 = vunpack.c.h.b16 %v1112
        %v1721 = vunpack.c.l.b16 %v1113
        %v1722 = vunpack.c.h.b16 %v1113
        %v1723 = vunpack.c.l.b16 %v1114
        %v1724 = vunpack.c.h.b16 %v1114
        %v1725 = vunpack.c.l.b16 %v1115
        %v1726 = vunpack.c.h.b16 %v1115
        %v1727 = vunpack.c.l.b16 %v1116
        %v1728 = vunpack.c.h.b16 %v1116
        %v1729 = vunpack.c.l.b16 %v1117
        %v1730 = vunpack.c.h.b16 %v1117
        %v1731 = vunpack.c.l.b16 %v1118
        %v1732 = vunpack.c.h.b16 %v1118
        %v1733 = vunpack.c.l.b16 %v1119
        %v1734 = vunpack.c.h.b16 %v1119
        %v1735 = vunpack.c.l.b16 %v1120
        %v1736 = vunpack.c.h.b16 %v1120
        %v1737 = vunpack.c.l.b16 %v1121
        %v1738 = vunpack.c.h.b16 %v1121
        %v1739 = vunpack.c.l.b16 %v1122
        %v1740 = vunpack.c.h.b16 %v1122
        %v1741 = vunpack.c.l.b16 %v1123
        %v1742 = vunpack.c.h.b16 %v1123
        %v1743 = vunpack.c.l.b16 %v1124
        %v1744 = vunpack.c.h.b16 %v1124
        %v1745 = vunpack.c.l.b16 %v1125
        %v1746 = vunpack.c.h.b16 %v1125
        %v1747 = vunpack.c.l.b16 %v1126
        %v1748 = vunpack.c.h.b16 %v1126
        %v1749 = vunpack.c.l.b16 %v1127
        %v1750 = vunpack.c.h.b16 %v1127
        %v1751 = vunpack.c.l.b16 %v1128
        %v1752 = vunpack.c.h.b16 %v1128
        %v1753 = vunpack.c.l.b16 %v1129
        %v1754 = vunpack.c.h.b16 %v1129
        %v1755 = vunpack.c.l.b16 %v1130
        %v1756 = vunpack.c.h.b16 %v1130
        %v1757 = vunpack.c.l.b16 %v1131
        %v1758 = vunpack.c.h.b16 %v1131
        %v1759 = vunpack.c.l.b16 %v1132
        %v1760 = vunpack.c.h.b16 %v1132
        %v1761 = vunpack.c.l.b16 %v1133
        %v1762 = vunpack.c.h.b16 %v1133
        %v1763 = vunpack.c.l.b16 %v1134
        %v1764 = vunpack.c.h.b16 %v1134
        %v1765 = vunpack.c.l.b16 %v1135
        %v1766 = vunpack.c.h.b16 %v1135
        %v1767 = vunpack.c.l.b16 %v1136
        %v1768 = vunpack.c.h.b16 %v1136
        %v1769 = vunpack.c.l.b16 %v1137
        %v1770 = vunpack.c.h.b16 %v1137
        %v1771 = vunpack.c.l.b16 %v1138
        %v1772 = vunpack.c.h.b16 %v1138
        %v1773 = vunpack.c.l.b16 %v1139
        %v1774 = vunpack.c.h.b16 %v1139
        %v1775 = vunpack.c.l.b16 %v1140
        %v1776 = vunpack.c.h.b16 %v1140
        %v1777 = vunpack.c.l.b16 %v1141
        %v1778 = vunpack.c.h.b16 %v1141
        %v1779 = vunpack.c.l.b16 %v1142
        %v1780 = vunpack.c.h.b16 %v1142
        %v1781 = vunpack.c.l.b16 %v1143
        %v1782 = vunpack.c.h.b16 %v1143
        %v1783 = vunpack.c.l.b16 %v1144
        %v1784 = vunpack.c.h.b16 %v1144
        %v1785 = vunpack.c.l.b16 %v1145
        %v1786 = vunpack.c.h.b16 %v1145
        %v1787 = vunpack.c.l.b16 %v1146
        %v1788 = vunpack.c.h.b16 %v1146
        %v1789 = vunpack.c.l.b16 %v1147
        %v1790 = vunpack.c.h.b16 %v1147
        %v1791 = vunpack.c.l.b16 %v1148
        %v1792 = vunpack.c.h.b16 %v1148
        %v1793 = vunpack.c.l.b16 %v1149
        %v1794 = vunpack.c.h.b16 %v1149
        %v1795 = vunpack.c.l.b16 %v1150
        %v1796 = vunpack.c.h.b16 %v1150
        %v1797 = vunpack.c.l.b16 %v1151
        %v1798 = vunpack.c.h.b16 %v1151
        %v1799 = vunpack.c.l.b16 %v1152
        %v1800 = vunpack.c.h.b16 %v1152
        %v1801 = vunpack.c.l.b16 %v1153
        %v1802 = vunpack.c.h.b16 %v1153
        %v1803 = vunpack.c.l.b16 %v1154
        %v1804 = vunpack.c.h.b16 %v1154
        %v1805 = vunpack.c.l.b16 %v1155
        %v1806 = vunpack.c.h.b16 %v1155
        %v1807 = vunpack.c.l.b16 %v1156
        %v1808 = vunpack.c.h.b16 %v1156
        %v1809 = vunpack.c.l.b16 %v1157
        %v1810 = vunpack.c.h.b16 %v1157
        %v1811 = vunpack.c.l.b16 %v1158
        %v1812 = vunpack.c.h.b16 %v1158
        %v1813 = vunpack.c.l.b16 %v1159
        %v1814 = vunpack.c.h.b16 %v1159
        %v1815 = vunpack.c.l.b16 %v1160
        %v1816 = vunpack.c.h.b16 %v1160
        %v1817 = vunpack.c.l.b16 %v1161
        %v1818 = vunpack.c.h.b16 %v1161
        %v1819 = vunpack.c.l.b16 %v1162
        %v1820 = vunpack.c.h.b16 %v1162
        %v1821 = vunpack.c.l.b16 %v1163
        %v1822 = vunpack.c.h.b16 %v1163
        %v1823 = vunpack.c.l.b16 %v1164
        %v1824 = vunpack.c.h.b16 %v1164
        %v1825 = vunpack.c.l.b16 %v1165
        %v1826 = vunpack.c.h.b16 %v1165
        %v1827 = vunpack.c.l.b16 %v1166
        %v1828 = vunpack.c.h.b16 %v1166
        %v1829 = vunpack.c.l.b16 %v1167
        %v1830 = vunpack.c.h.b16 %v1167
        %v1831 = vunpack.c.l.b16 %v1168
        %v1832 = vunpack.c.h.b16 %v1168
        %v1833 = vunpack.c.l.b16 %v1169
        %v1834 = vunpack.c.h.b16 %v1169
        %v1835 = vunpack.c.l.b16 %v1170
        %v1836 = vunpack.c.h.b16 %v1170
        %v1837 = vunpack.c.l.b16 %v1171
        %v1838 = vunpack.c.h.b16 %v1171
        %v1839 = vunpack.c.l.b16 %v1172
        %v1840 = vunpack.c.h.b16 %v1172
        %v1841 = vunpack.c.l.b16 %v1173
        %v1842 = vunpack.c.h.b16 %v1173
        %v1843 = vunpack.c.l.b16 %v1174
        %v1844 = vunpack.c.h.b16 %v1174
        %v1845 = vunpack.c.l.b16 %v1175
        %v1846 = vunpack.c.h.b16 %v1175
        %v1847 = vunpack.c.l.b16 %v1176
        %v1848 = vunpack.c.h.b16 %v1176
        %v1849 = vunpack.c.l.b16 %v1177
        %v1850 = vunpack.c.h.b16 %v1177
        %v1851 = vunpack.c.l.b16 %v1178
        %v1852 = vunpack.c.h.b16 %v1178
        %v1853 = vunpack.c.l.b16 %v1179
        %v1854 = vunpack.c.h.b16 %v1179
        %v1855 = vunpack.c.l.b16 %v1180
        %v1856 = vunpack.c.h.b16 %v1180
        %v1857 = vunpack.c.l.b16 %v1181
        %v1858 = vunpack.c.h.b16 %v1181
        %v1859 = vunpack.c.l.b16 %v1182
        %v1860 = vunpack.c.h.b16 %v1182
        %v1861 = vunpack.c.l.b16 %v1183
        %v1862 = vunpack.c.h.b16 %v1183
        %v1863 = vunpack.c.l.b16 %v1184
        %v1864 = vunpack.c.h.b16 %v1184
        %v1865 = vunpack.c.l.b16 %v1185
        %v1866 = vunpack.c.h.b16 %v1185
        %v1867 = vunpack.c.l.b16 %v1186
        %v1868 = vunpack.c.h.b16 %v1186
        %v1869 = vunpack.c.l.b16 %v1187
        %v1870 = vunpack.c.h.b16 %v1187
        %v1871 = vunpack.c.l.b16 %v1188
        %v1872 = vunpack.c.h.b16 %v1188
        %v1873 = vunpack.c.l.b16 %v1189
        %v1874 = vunpack.c.h.b16 %v1189
        %v1875 = vunpack.c.l.b16 %v1190
        %v1876 = vunpack.c.h.b16 %v1190
        %v1877 = vunpack.c.l.b16 %v1191
        %v1878 = vunpack.c.h.b16 %v1191
        %v1879 = vunpack.c.l.b16 %v1192
        %v1880 = vunpack.c.h.b16 %v1192
        %v1881 = vunpack.c.l.b16 %v1193
        %v1882 = vunpack.c.h.b16 %v1193
        %v1883 = vunpack.c.l.b16 %v1194
        %v1884 = vunpack.c.h.b16 %v1194
        %v1885 = vunpack.c.l.b16 %v1195
        %v1886 = vunpack.c.h.b16 %v1195
        %v1887 = vunpack.c.l.b16 %v1196
        %v1888 = vunpack.c.h.b16 %v1196
        %v1889 = vunpack.c.l.b16 %v1197
        %v1890 = vunpack.c.h.b16 %v1197
        %v1891 = vunpack.c.l.b16 %v1198
        %v1892 = vunpack.c.h.b16 %v1198
        %v1893 = vunpack.c.l.b16 %v1199
        %v1894 = vunpack.c.h.b16 %v1199
        %v1895 = vunpack.c.l.b16 %v1200
        %v1896 = vunpack.c.h.b16 %v1200
        %v1897 = vunpack.c.l.b16 %v1201
        %v1898 = vunpack.c.h.b16 %v1201
        %v1899 = vunpack.c.l.b16 %v1202
        %v1900 = vunpack.c.h.b16 %v1202
        %v1901 = vunpack.c.l.b16 %v1203
        %v1902 = vunpack.c.h.b16 %v1203
        %v1903 = vunpack.c.l.b16 %v1204
        %v1904 = vunpack.c.h.b16 %v1204
        %v1905 = vunpack.c.l.b16 %v1205
        %v1906 = vunpack.c.h.b16 %v1205
        %v1907 = vunpack.c.l.b16 %v1206
        %v1908 = vunpack.c.h.b16 %v1206
        %v1909 = vunpack.c.l.b16 %v1207
        %v1910 = vunpack.c.h.b16 %v1207
        %v1911 = vunpack.c.l.b16 %v1208
        %v1912 = vunpack.c.h.b16 %v1208
        %v1913 = vunpack.c.l.b16 %v1209
        %v1914 = vunpack.c.h.b16 %v1209
        %v1915 = vunpack.c.l.b16 %v1210
        %v1916 = vunpack.c.h.b16 %v1210
        %v1917 = vunpack.c.l.b16 %v1211
        %v1918 = vunpack.c.h.b16 %v1211
        %v1919 = vunpack.c.l.b16 %v1212
        %v1920 = vunpack.c.h.b16 %v1212
        %v1921 = vunpack.c.l.b16 %v1213
        %v1922 = vunpack.c.h.b16 %v1213
        %v1923 = vunpack.c.l.b16 %v1214
        %v1924 = vunpack.c.h.b16 %v1214
        %v1925 = vunpack.c.l.b16 %v1215
        %v1926 = vunpack.c.h.b16 %v1215
        %v1927 = vunpack.c.l.b16 %v1216
        %v1928 = vunpack.c.h.b16 %v1216
        %v1929 = vunpack.c.l.b16 %v1217
        %v1930 = vunpack.c.h.b16 %v1217
        %v1931 = vunpack.c.l.b16 %v1218
        %v1932 = vunpack.c.h.b16 %v1218
        %v1933 = vunpack.c.l.b16 %v1219
        %v1934 = vunpack.c.h.b16 %v1219
        %v1935 = vunpack.c.l.b16 %v1220
        %v1936 = vunpack.c.h.b16 %v1220
        %v1937 = vunpack.c.l.b16 %v1221
        %v1938 = vunpack.c.h.b16 %v1221
        %v1939 = vunpack.c.l.b16 %v1222
        %v1940 = vunpack.c.h.b16 %v1222
        %v1941 = vunpack.c.l.b16 %v1223
        %v1942 = vunpack.c.h.b16 %v1223
        %v1943 = vunpack.c.l.b16 %v1224
        %v1944 = vunpack.c.h.b16 %v1224
        %v1945 = vunpack.c.l.b16 %v1225
        %v1946 = vunpack.c.h.b16 %v1225
        %v1947 = vunpack.c.l.b16 %v1226
        %v1948 = vunpack.c.h.b16 %v1226
        %v1949 = vunpack.c.l.b16 %v1227
        %v1950 = vunpack.c.h.b16 %v1227
        %v1951 = vunpack.c.l.b16 %v1228
        %v1952 = vunpack.c.h.b16 %v1228
        %v1953 = vunpack.c.l.b16 %v1229
        %v1954 = vunpack.c.h.b16 %v1229
        %v1955 = vunpack.c.l.b16 %v1230
        %v1956 = vunpack.c.h.b16 %v1230
        %v1957 = vunpack.c.l.b16 %v1231
        %v1958 = vunpack.c.h.b16 %v1231
        %v1959 = vunpack.c.l.b16 %v1232
        %v1960 = vunpack.c.h.b16 %v1232
        %v1961 = vunpack.c.l.b16 %v1233
        %v1962 = vunpack.c.h.b16 %v1233
        %v1963 = vunpack.c.l.b16 %v1234
        %v1964 = vunpack.c.h.b16 %v1234
        %v1965 = vunpack.c.l.b16 %v1235
        %v1966 = vunpack.c.h.b16 %v1235
        %v1967 = vunpack.c.l.b16 %v1236
        %v1968 = vunpack.c.h.b16 %v1236
        %v1969 = vunpack.c.l.b16 %v1237
        %v1970 = vunpack.c.h.b16 %v1237
        %v1971 = vunpack.c.l.b16 %v1238
        %v1972 = vunpack.c.h.b16 %v1238
        %v1973 = vunpack.c.l.b16 %v1239
        %v1974 = vunpack.c.h.b16 %v1239
        %v1975 = vunpack.c.l.b16 %v1240
        %v1976 = vunpack.c.h.b16 %v1240
        %v1977 = vunpack.c.l.b16 %v1241
        %v1978 = vunpack.c.h.b16 %v1241
        %v1979 = vunpack.c.l.b16 %v1242
        %v1980 = vunpack.c.h.b16 %v1242
        %v1981 = vunpack.c.l.b16 %v1243
        %v1982 = vunpack.c.h.b16 %v1243
        %v1983 = vunpack.c.l.b16 %v1244
        %v1984 = vunpack.c.h.b16 %v1244
        %v1985 = vunpack.c.l.b16 %v1245
        %v1986 = vunpack.c.h.b16 %v1245
        %v1987 = vunpack.c.l.b16 %v1246
        %v1988 = vunpack.c.h.b16 %v1246
        %v1989 = vunpack.c.l.b16 %v1247
        %v1990 = vunpack.c.h.b16 %v1247
        %v1991 = vunpack.c.l.b16 %v1248
        %v1992 = vunpack.c.h.b16 %v1248
        %v1993 = vunpack.c.l.b16 %v1249
        %v1994 = vunpack.c.h.b16 %v1249
        %v1995 = vunpack.c.l.b16 %v1250
        %v1996 = vunpack.c.h.b16 %v1250
        %v1997 = vunpack.c.l.b16 %v1251
        %v1998 = vunpack.c.h.b16 %v1251
        %v1999 = vunpack.c.l.b16 %v1252
        %v2000 = vunpack.c.h.b16 %v1252
        %v2001 = vunpack.c.l.b16 %v1253
        %v2002 = vunpack.c.h.b16 %v1253
        %v2003 = vunpack.c.l.b16 %v1254
        %v2004 = vunpack.c.h.b16 %v1254
        %v2005 = vunpack.c.l.b16 %v1255
        %v2006 = vunpack.c.h.b16 %v1255
        %v2007 = vunpack.c.l.b16 %v1256
        %v2008 = vunpack.c.h.b16 %v1256
        %v2009 = vunpack.c.l.b16 %v1257
        %v2010 = vunpack.c.h.b16 %v1257
        %v2011 = vunpack.c.l.b16 %v1258
        %v2012 = vunpack.c.h.b16 %v1258
        %v2013 = vunpack.c.l.b16 %v1259
        %v2014 = vunpack.c.h.b16 %v1259
        %v2015 = vunpack.c.l.b16 %v1260
        %v2016 = vunpack.c.h.b16 %v1260
        %v2017 = vunpack.c.l.b16 %v1261
        %v2018 = vunpack.c.h.b16 %v1261
        %v2019 = vunpack.c.l.b16 %v1262
        %v2020 = vunpack.c.h.b16 %v1262
        %v2021 = vunpack.c.l.b16 %v1263
        %v2022 = vunpack.c.h.b16 %v1263
        %v2023 = vunpack.c.l.b16 %v1264
        %v2024 = vunpack.c.h.b16 %v1264
        %v2025 = vunpack.c.l.b16 %v1265
        %v2026 = vunpack.c.h.b16 %v1265
        %v2027 = vunpack.c.l.b16 %v1266
        %v2028 = vunpack.c.h.b16 %v1266
        %v2029 = vunpack.c.l.b16 %v1267
        %v2030 = vunpack.c.h.b16 %v1267
        %v2031 = vunpack.c.l.b16 %v1268
        %v2032 = vunpack.c.h.b16 %v1268
        %v2033 = vunpack.c.l.b16 %v1269
        %v2034 = vunpack.c.h.b16 %v1269
        %v2035 = vunpack.c.l.b16 %v1270
        %v2036 = vunpack.c.h.b16 %v1270
        %v2037 = vunpack.c.l.b16 %v1271
        %v2038 = vunpack.c.h.b16 %v1271
        %v2039 = vunpack.c.l.b16 %v1272
        %v2040 = vunpack.c.h.b16 %v1272
        %v2041 = vunpack.c.l.b16 %v1273
        %v2042 = vunpack.c.h.b16 %v1273
        %v2043 = vunpack.c.l.b16 %v1274
        %v2044 = vunpack.c.h.b16 %v1274
        %v2045 = vunpack.c.l.b16 %v1275
        %v2046 = vunpack.c.h.b16 %v1275
        %v2047 = vunpack.c.l.b16 %v1276
        %v2048 = vunpack.c.h.b16 %v1276
        %v2049 = vunpack.c.l.b16 %v1277
        %v2050 = vunpack.c.h.b16 %v1277
        %v2051 = vunpack.c.l.b16 %v1278
        %v2052 = vunpack.c.h.b16 %v1278
        %v2053 = vunpack.c.l.b16 %v1279
        %v2054 = vunpack.c.h.b16 %v1279
        %v2055 = vunpack.c.l.b16 %v1280
        %v2056 = vunpack.c.h.b16 %v1280
        %v2057 = vunpack.c.l.b16 %v1281
        %v2058 = vunpack.c.h.b16 %v1281
        %v2059 = vunpack.c.l.b16 %v1282
        %v2060 = vunpack.c.h.b16 %v1282
        %v2061 = vunpack.c.l.b16 %v1283
        %v2062 = vunpack.c.h.b16 %v1283
        %v2063 = vunpack.c.l.b16 %v1284
        %v2064 = vunpack.c.h.b16 %v1284
        %v2065 = vunpack.c.l.b16 %v1285
        %v2066 = vunpack.c.h.b16 %v1285
        %v2067 = vunpack.c.l.b16 %v1286
        %v2068 = vunpack.c.h.b16 %v1286
        %v2069 = vunpack.c.l.b16 %v1287
        %v2070 = vunpack.c.h.b16 %v1287
        %v2071 = vunpack.c.l.b16 %v1288
        %v2072 = vunpack.c.h.b16 %v1288
        %v2073 = vunpack.c.l.b16 %v1289
        %v2074 = vunpack.c.h.b16 %v1289
        %v2075 = vunpack.c.l.b16 %v1290
        %v2076 = vunpack.c.h.b16 %v1290
        %v2077 = vunpack.c.l.b16 %v1291
        %v2078 = vunpack.c.h.b16 %v1291
        %v2079 = vunpack.c.l.b16 %v1292
        %v2080 = vunpack.c.h.b16 %v1292
        %v2081 = vunpack.c.l.b16 %v1293
        %v2082 = vunpack.c.h.b16 %v1293
        %v2083 = vunpack.c.l.b16 %v1294
        %v2084 = vunpack.c.h.b16 %v1294
        %v2085 = vunpack.c.l.b16 %v1295
        %v2086 = vunpack.c.h.b16 %v1295
        %v2087 = vunpack.c.l.b16 %v1296
        %v2088 = vunpack.c.h.b16 %v1296
        %v2089 = vunpack.c.l.b16 %v1297
        %v2090 = vunpack.c.h.b16 %v1297
        %v2091 = vunpack.c.l.b16 %v1298
        %v2092 = vunpack.c.h.b16 %v1298
        %v2093 = vunpack.c.l.b16 %v1299
        %v2094 = vunpack.c.h.b16 %v1299
        %v2095 = vunpack.c.l.b16 %v1300
        %v2096 = vunpack.c.h.b16 %v1300
        %v2097 = vunpack.c.l.b16 %v1301
        %v2098 = vunpack.c.h.b16 %v1301
        %v2099 = vunpack.c.l.b16 %v1302
        %v2100 = vunpack.c.h.b16 %v1302
        %v2101 = vunpack.c.l.b16 %v1303
        %v2102 = vunpack.c.h.b16 %v1303
        %v2103 = vunpack.c.l.b16 %v1304
        %v2104 = vunpack.c.h.b16 %v1304
        %v2105 = vunpack.c.l.b16 %v1305
        %v2106 = vunpack.c.h.b16 %v1305
        %v2107 = vunpack.c.l.b16 %v1306
        %v2108 = vunpack.c.h.b16 %v1306
        %v2109 = vunpack.c.l.b16 %v1307
        %v2110 = vunpack.c.h.b16 %v1307
        %v2111 = vunpack.c.l.b16 %v1308
        %v2112 = vunpack.c.h.b16 %v1308
        %v2113 = vunpack.c.l.b16 %v1309
        %v2114 = vunpack.c.h.b16 %v1309
        %v2115 = vunpack.c.l.b16 %v1310
        %v2116 = vunpack.c.h.b16 %v1310
        %v2117 = vunpack.c.l.b16 %v1311
        %v2118 = vunpack.c.h.b16 %v1311
        %v2119 = vunpack.c.l.b16 %v1312
        %v2120 = vunpack.c.h.b16 %v1312
        %v2121 = vunpack.c.l.b16 %v1313
        %v2122 = vunpack.c.h.b16 %v1313
        %v2123 = vunpack.c.l.b16 %v1314
        %v2124 = vunpack.c.h.b16 %v1314
        %v2125 = vunpack.c.l.b16 %v1315
        %v2126 = vunpack.c.h.b16 %v1315
        %v2127 = vunpack.c.l.b16 %v1316
        %v2128 = vunpack.c.h.b16 %v1316
        %v2129 = vunpack.c.l.b16 %v1317
        %v2130 = vunpack.c.h.b16 %v1317
        %v2131 = vunpack.c.l.b16 %v1318
        %v2132 = vunpack.c.h.b16 %v1318
        %v2133 = vunpack.c.l.b16 %v1319
        %v2134 = vunpack.c.h.b16 %v1319
        %v2135 = vunpack.c.l.b16 %v1320
        %v2136 = vunpack.c.h.b16 %v1320
        %v2137 = vunpack.c.l.b16 %v1321
        %v2138 = vunpack.c.h.b16 %v1321
        %v2139 = vunpack.c.l.b16 %v1322
        %v2140 = vunpack.c.h.b16 %v1322
        %v2141 = vunpack.c.l.b16 %v1323
        %v2142 = vunpack.c.h.b16 %v1323
        %v2143 = vunpack.c.l.b16 %v1324
        %v2144 = vunpack.c.h.b16 %v1324
        %v2145 = vunpack.c.l.b16 %v1325
        %v2146 = vunpack.c.h.b16 %v1325
        %v2147 = vunpack.c.l.b16 %v1326
        %v2148 = vunpack.c.h.b16 %v1326
        %v2149 = vunpack.c.l.b16 %v1327
        %v2150 = vunpack.c.h.b16 %v1327
        %v2151 = vunpack.c.l.b16 %v1328
        %v2152 = vunpack.c.h.b16 %v1328
        %v2153 = vunpack.c.l.b16 %v1329
        %v2154 = vunpack.c.h.b16 %v1329
        %v2155 = vunpack.c.l.b16 %v1330
        %v2156 = vunpack.c.h.b16 %v1330
        %v2157 = vunpack.c.l.b16 %v1331
        %v2158 = vunpack.c.h.b16 %v1331
        %v2159 = vunpack.c.l.b16 %v1332
        %v2160 = vunpack.c.h.b16 %v1332
        %v2161 = vunpack.c.l.b16 %v1333
        %v2162 = vunpack.c.h.b16 %v1333
        %v2163 = vunpack.c.l.b16 %v1334
        %v2164 = vunpack.c.h.b16 %v1334
        %v2165 = vunpack.c.l.b16 %v1335
        %v2166 = vunpack.c.h.b16 %v1335
        %v2167 = vunpack.c.l.b16 %v1336
        %v2168 = vunpack.c.h.b16 %v1336
        %v2169 = vunpack.c.l.b16 %v1337
        %v2170 = vunpack.c.h.b16 %v1337
        %v2171 = vunpack.c.l.b16 %v1338
        %v2172 = vunpack.c.h.b16 %v1338
        %v2173 = vunpack.c.l.b16 %v1339
        %v2174 = vunpack.c.h.b16 %v1339
        %v2175 = vunpack.c.l.b16 %v1340
        %v2176 = vunpack.c.h.b16 %v1340
        %v2177 = vunpack.c.l.b16 %v1341
        %v2178 = vunpack.c.h.b16 %v1341
        %v2179 = vunpack.c.l.b16 %v1342
        %v2180 = vunpack.c.h.b16 %v1342
        %v2181 = vunpack.c.l.b16 %v1343
        %v2182 = vunpack.c.h.b16 %v1343
        %v2183 = vunpack.c.l.b16 %v1344
        %v2184 = vunpack.c.h.b16 %v1344
        %v2185 = vunpack.c.l.b16 %v1345
        %v2186 = vunpack.c.h.b16 %v1345
        %v2187 = vunpack.c.l.b16 %v1346
        %v2188 = vunpack.c.h.b16 %v1346
        %v2189 = vunpack.c.l.b16 %v1347
        %v2190 = vunpack.c.h.b16 %v1347
        %v2191 = vunpack.c.l.b16 %v1348
        %v2192 = vunpack.c.h.b16 %v1348
        %v2193 = vunpack.c.l.b16 %v1349
        %v2194 = vunpack.c.h.b16 %v1349
        %v2195 = vunpack.c.l.b16 %v1350
        %v2196 = vunpack.c.h.b16 %v1350
        %v2197 = vunpack.c.l.b16 %v1351
        %v2198 = vunpack.c.h.b16 %v1351
        %v2199 = vunpack.c.l.b16 %v1352
        %v2200 = vunpack.c.h.b16 %v1352
        %v2201 = vunpack.c.l.b16 %v1353
        %v2202 = vunpack.c.h.b16 %v1353
        %v2203 = vunpack.c.l.b16 %v1354
        %v2204 = vunpack.c.h.b16 %v1354
        %v2205 = vunpack.c.l.b16 %v1355
        %v2206 = vunpack.c.h.b16 %v1355
        %v2207 = vunpack.c.l.b16 %v1356
        %v2208 = vunpack.c.h.b16 %v1356
        %v2209 = vunpack.c.l.b16 %v1357
        %v2210 = vunpack.c.h.b16 %v1357
        %v2211 = vunpack.c.l.b16 %v1358
        %v2212 = vunpack.c.h.b16 %v1358
        %v2213 = vunpack.c.l.b16 %v1359
        %v2214 = vunpack.c.h.b16 %v1359
        %v2215 = vunpack.c.l.b16 %v1360
        %v2216 = vunpack.c.h.b16 %v1360
        %v2217 = vunpack.c.l.b16 %v1361
        %v2218 = vunpack.c.h.b16 %v1361
        %v2219 = vunpack.c.l.b16 %v1362
        %v2220 = vunpack.c.h.b16 %v1362
        %v2221 = vunpack.c.l.b16 %v1363
        %v2222 = vunpack.c.h.b16 %v1363
        %v2223 = vunpack.c.l.b16 %v1364
        %v2224 = vunpack.c.h.b16 %v1364
        %v2225 = vunpack.c.l.b16 %v1365
        %v2226 = vunpack.c.h.b16 %v1365
        %v2227 = vunpack.c.l.b16 %v1366
        %v2228 = vunpack.c.h.b16 %v1366
        %v2229 = vunpack.c.l.b16 %v1367
        %v2230 = vunpack.c.h.b16 %v1367
        %v2231 = vunpack.c.l.b16 %v1368
        %v2232 = vunpack.c.h.b16 %v1368
        %v2233 = vunpack.c.l.b16 %v1369
        %v2234 = vunpack.c.h.b16 %v1369
        %v2235 = vunpack.c.l.b16 %v1370
        %v2236 = vunpack.c.h.b16 %v1370
        %v2237 = vunpack.c.l.b16 %v1371
        %v2238 = vunpack.c.h.b16 %v1371
        %v2239 = vunpack.c.l.b16 %v1372
        %v2240 = vunpack.c.h.b16 %v1372
        %v2241 = vunpack.c.l.b16 %v1373
        %v2242 = vunpack.c.h.b16 %v1373
        %v2243 = vpack.c.b16 %v1685, %v1667
        %v2244 = vpack.c.b16 %v1686, %v1668
        %v2245 = vpack.c.b16 %v1687, %v1669
        %v2246 = vpack.c.b16 %v1688, %v1670
        %v2247 = vpack.c.b16 %v1689, %v1671
        %v2248 = vpack.c.b16 %v1690, %v1672
        %v2249 = vpack.c.b16 %v1691, %v1673
        %v2250 = vpack.c.b16 %v1692, %v1674
        %v2251 = vpack.c.b16 %v1693, %v1675
        %v2252 = vpack.c.b16 %v1694, %v1676
        %v2253 = vpack.c.b16 %v1695, %v1677
        %v2254 = vpack.c.b16 %v1696, %v1678
        %v2255 = vpack.c.b16 %v1697, %v1679
        %v2256 = vpack.c.b16 %v1698, %v1680
        %v2257 = vpack.c.b16 %v1699, %v1681
        %v2258 = vpack.c.b16 %v1700, %v1682
        %v2259 = vpack.c.b16 %v1701, %v1683
        %v2260 = vpack.c.b16 %v1702, %v1684
        %v2261 = vpack.c.b16 %v1721, %v1703
        %v2262 = vpack.c.b16 %v1722, %v1704
        %v2263 = vpack.c.b16 %v1723, %v1705
        %v2264 = vpack.c.b16 %v1724, %v1706
        %v2265 = vpack.c.b16 %v1725, %v1707
        %v2266 = vpack.c.b16 %v1726, %v1708
        %v2267 = vpack.c.b16 %v1727, %v1709
        %v2268 = vpack.c.b16 %v1728, %v1710
        %v2269 = vpack.c.b16 %v1729, %v1711
        %v2270 = vpack.c.b16 %v1730, %v1712
        %v2271 = vpack.c.b16 %v1731, %v1713
        %v2272 = vpack.c.b16 %v1732, %v1714
        %v2273 = vpack.c.b16 %v1733, %v1715
        %v2274 = vpack.c.b16 %v1734, %v1716
        %v2275 = vpack.c.b16 %v1735, %v1717
        %v2276 = vpack.c.b16 %v1736, %v1718
        %v2277 = vpack.c.b16 %v1737, %v1719
        %v2278 = vpack.c.b16 %v1738, %v1720
        %v2279 = vpack.c.b16 %v1757, %v1739
        %v2280 = vpack.c.b16 %v1758, %v1740
        %v2281 = vpack.c.b16 %v1759, %v1741
        %v2282 = vpack.c.b16 %v1760, %v1742
        %v2283 = vpack.c.b16 %v1761, %v1743
        %v2284 = vpack.c.b16 %v1762, %v1744
        %v2285 = vpack.c.b16 %v1763, %v1745
        %v2286 = vpack.c.b16 %v1764, %v1746
        %v2287 = vpack.c.b16 %v1765, %v1747
        %v2288 = vpack.c.b16 %v1766, %v1748
        %v2289 = vpack.c.b16 %v1767, %v1749
        %v2290 = vpack.c.b16 %v1768, %v1750
        %v2291 = vpack.c.b16 %v1769, %v1751
        %v2292 = vpack.c.b16 %v1770, %v1752
        %v2293 = vpack.c.b16 %v1771, %v1753
        %v2294 = vpack.c.b16 %v1772, %v1754
        %v2295 = vpack.c.b16 %v1773, %v1755
        %v2296 = vpack.c.b16 %v1774, %v1756
        %v2297 = vpack.c.b16 %v1793, %v1775
        %v2298 = vpack.c.b16 %v1794, %v1776
        %v2299 = vpack.c.b16 %v1795, %v1777
        %v2300 = vpack.c.b16 %v1796, %v1778
        %v2301 = vpack.c.b16 %v1797, %v1779
        %v2302 = vpack.c.b16 %v1798, %v1780
        %v2303 = vpack.c.b16 %v1799, %v1781
        %v2304 = vpack.c.b16 %v1800, %v1782
        %v2305 = vpack.c.b16 %v1801, %v1783
        %v2306 = vpack.c.b16 %v1802, %v1784
        %v2307 = vpack.c.b16 %v1803, %v1785
        %v2308 = vpack.c.b16 %v1804, %v1786
        %v2309 = vpack.c.b16 %v1805, %v1787
        %v2310 = vpack.c.b16 %v1806, %v1788
        %v2311 = vpack.c.b16 %v1807, %v1789
        %v2312 = vpack.c.b16 %v1808, %v1790
        %v2313 = vpack.c.b16 %v1809, %v1791
        %v2314 = vpack.c.b16 %v1810, %v1792
        %v2315 = vpack.c.b16 %v1829, %v1811
        %v2316 = vpack.c.b16 %v1830, %v1812
        %v2317 = vpack.c.b16 %v1831, %v1813
        %v2318 = vpack.c.b16 %v1832, %v1814
        %v2319 = vpack.c.b16 %v1833, %v1815
        %v2320 = vpack.c.b16 %v1834, %v1816
        %v2321 = vpack.c.b16 %v1835, %v1817
        %v2322 = vpack.c.b16 %v1836, %v1818
        %v2323 = vpack.c.b16 %v1837, %v1819
        %v2324 = vpack.c.b16 %v1838, %v1820
        %v2325 = vpack.c.b16 %v1839, %v1821
        %v2326 = vpack.c.b16 %v1840, %v1822
        %v2327 = vpack.c.b16 %v1841, %v1823
        %v2328 = vpack.c.b16 %v1842, %v1824
        %v2329 = vpack.c.b16 %v1843, %v1825
        %v2330 = vpack.c.b16 %v1844, %v1826
        %v2331 = vpack.c.b16 %v1845, %v1827
        %v2332 = vpack.c.b16 %v1846, %v1828
        %v2333 = vpack.c.b16 %v1865, %v1847
        %v2334 = vpack.c.b16 %v1866, %v1848
        %v2335 = vpack.c.b16 %v1867, %v1849
        %v2336 = vpack.c.b16 %v1868, %v1850
        %v2337 = vpack.c.b16 %v1869, %v1851
        %v2338 = vpack.c.b16 %v1870, %v1852
        %v2339 = vpack.c.b16 %v1871, %v1853
        %v2340 = vpack.c.b16 %v1872, %v1854
        %v2341 = vpack.c.b16 %v1873, %v1855
        %v2342 = vpack.c.b16 %v1874, %v1856
        %v2343 = vpack.c.b16 %v1875, %v1857
        %v2344 = vpack.c.b16 %v1876, %v1858
        %v2345 = vpack.c.b16 %v1877, %v1859
        %v2346 = vpack.c.b16 %v1878, %v1860
        %v2347 = vpack.c.b16 %v1879, %v1861
        %v2348 = vpack.c.b16 %v1880, %v1862
        %v2349 = vpack.c.b16 %v1881, %v1863
        %v2350 = vpack.c.b16 %v1882, %v1864
        %v2351 = vpack.c.b16 %v1901, %v1883
        %v2352 = vpack.c.b16 %v1902, %v1884
        %v2353 = vpack.c.b16 %v1903, %v1885
        %v2354 = vpack.c.b16 %v1904, %v1886
        %v2355 = vpack.c.b16 %v1905, %v1887
        %v2356 = vpack.c.b16 %v1906, %v1888
        %v2357 = vpack.c.b16 %v1907, %v1889
        %v2358 = vpack.c.b16 %v1908, %v1890
        %v2359 = vpack.c.b16 %v1909, %v1891
        %v2360 = vpack.c.b16 %v1910, %v1892
        %v2361 = vpack.c.b16 %v1911, %v1893
        %v2362 = vpack.c.b16 %v1912, %v1894
        %v2363 = vpack.c.b16 %v1913, %v1895
        %v2364 = vpack.c.b16 %v1914, %v1896
        %v2365 = vpack.c.b16 %v1915, %v1897
        %v2366 = vpack.c.b16 %v1916, %v1898
        %v2367 = vpack.c.b16 %v1917, %v1899
        %v2368 = vpack.c.b16 %v1918, %v1900
        %v2369 = vpack.c.b16 %v1937, %v1919
        %v2370 = vpack.c.b16 %v1938, %v1920
        %v2371 = vpack.c.b16 %v1939, %v1921
        %v2372 = vpack.c.b16 %v1940, %v1922
        %v2373 = vpack.c.b16 %v1941, %v1923
        %v2374 = vpack.c.b16 %v1942, %v1924
        %v2375 = vpack.c.b16 %v1943, %v1925
        %v2376 = vpack.c.b16 %v1944, %v1926
        %v2377 = vpack.c.b16 %v1945, %v1927
        %v2378 = vpack.c.b16 %v1946, %v1928
        %v2379 = vpack.c.b16 %v1947, %v1929
        %v2380 = vpack.c.b16 %v1948, %v1930
        %v2381 = vpack.c.b16 %v1949, %v1931
        %v2382 = vpack.c.b16 %v1950, %v1932
        %v2383 = vpack.c.b16 %v1951, %v1933
        %v2384 = vpack.c.b16 %v1952, %v1934
        %v2385 = vpack.c.b16 %v1953, %v1935
        %v2386 = vpack.c.b16 %v1954, %v1936
        %v2387 = vpack.c.b16 %v1973, %v1955
        %v2388 = vpack.c.b16 %v1974, %v1956
        %v2389 = vpack.c.b16 %v1975, %v1957
        %v2390 = vpack.c.b16 %v1976, %v1958
        %v2391 = vpack.c.b16 %v1977, %v1959
        %v2392 = vpack.c.b16 %v1978, %v1960
        %v2393 = vpack.c.b16 %v1979, %v1961
        %v2394 = vpack.c.b16 %v1980, %v1962
        %v2395 = vpack.c.b16 %v1981, %v1963
        %v2396 = vpack.c.b16 %v1982, %v1964
        %v2397 = vpack.c.b16 %v1983, %v1965
        %v2398 = vpack.c.b16 %v1984, %v1966
        %v2399 = vpack.c.b16 %v1985, %v1967
        %v2400 = vpack.c.b16 %v1986, %v1968
        %v2401 = vpack.c.b16 %v1987, %v1969
        %v2402 = vpack.c.b16 %v1988, %v1970
        %v2403 = vpack.c.b16 %v1989, %v1971
        %v2404 = vpack.c.b16 %v1990, %v1972
        %v2405 = vpack.c.b16 %v2009, %v1991
        %v2406 = vpack.c.b16 %v2010, %v1992
        %v2407 = vpack.c.b16 %v2011, %v1993
        %v2408 = vpack.c.b16 %v2012, %v1994
        %v2409 = vpack.c.b16 %v2013, %v1995
        %v2410 = vpack.c.b16 %v2014, %v1996
        %v2411 = vpack.c.b16 %v2015, %v1997
        %v2412 = vpack.c.b16 %v2016, %v1998
        %v2413 = vpack.c.b16 %v2017, %v1999
        %v2414 = vpack.c.b16 %v2018, %v2000
        %v2415 = vpack.c.b16 %v2019, %v2001
        %v2416 = vpack.c.b16 %v2020, %v2002
        %v2417 = vpack.c.b16 %v2021, %v2003
        %v2418 = vpack.c.b16 %v2022, %v2004
        %v2419 = vpack.c.b16 %v2023, %v2005
        %v2420 = vpack.c.b16 %v2024, %v2006
        %v2421 = vpack.c.b16 %v2025, %v2007
        %v2422 = vpack.c.b16 %v2026, %v2008
        %v2423 = vpack.c.b16 %v2045, %v2027
        %v2424 = vpack.c.b16 %v2046, %v2028
        %v2425 = vpack.c.b16 %v2047, %v2029
        %v2426 = vpack.c.b16 %v2048, %v2030
        %v2427 = vpack.c.b16 %v2049, %v2031
        %v2428 = vpack.c.b16 %v2050, %v2032
        %v2429 = vpack.c.b16 %v2051, %v2033
        %v2430 = vpack.c.b16 %v2052, %v2034
        %v2431 = vpack.c.b16 %v2053, %v2035
        %v2432 = vpack.c.b16 %v2054, %v2036
        %v2433 = vpack.c.b16 %v2055, %v2037
        %v2434 = vpack.c.b16 %v2056, %v2038
        %v2435 = vpack.c.b16 %v2057, %v2039
        %v2436 = vpack.c.b16 %v2058, %v2040
        %v2437 = vpack.c.b16 %v2059, %v2041
        %v2438 = vpack.c.b16 %v2060, %v2042
        %v2439 = vpack.c.b16 %v2061, %v2043
        %v2440 = vpack.c.b16 %v2062, %v2044
        %v2441 = vpack.c.b16 %v2081, %v2063
        %v2442 = vpack.c.b16 %v2082, %v2064
        %v2443 = vpack.c.b16 %v2083, %v2065
        %v2444 = vpack.c.b16 %v2084, %v2066
        %v2445 = vpack.c.b16 %v2085, %v2067
        %v2446 = vpack.c.b16 %v2086, %v2068
        %v2447 = vpack.c.b16 %v2087, %v2069
        %v2448 = vpack.c.b16 %v2088, %v2070
        %v2449 = vpack.c.b16 %v2089, %v2071
        %v2450 = vpack.c.b16 %v2090, %v2072
        %v2451 = vpack.c.b16 %v2091, %v2073
        %v2452 = vpack.c.b16 %v2092, %v2074
        %v2453 = vpack.c.b16 %v2093, %v2075
        %v2454 = vpack.c.b16 %v2094, %v2076
        %v2455 = vpack.c.b16 %v2095, %v2077
        %v2456 = vpack.c.b16 %v2096, %v2078
        %v2457 = vpack.c.b16 %v2097, %v2079
        %v2458 = vpack.c.b16 %v2098, %v2080
        %v2459 = vpack.c.b16 %v2117, %v2099
        %v2460 = vpack.c.b16 %v2118, %v2100
        %v2461 = vpack.c.b16 %v2119, %v2101
        %v2462 = vpack.c.b16 %v2120, %v2102
        %v2463 = vpack.c.b16 %v2121, %v2103
        %v2464 = vpack.c.b16 %v2122, %v2104
        %v2465 = vpack.c.b16 %v2123, %v2105
        %v2466 = vpack.c.b16 %v2124, %v2106
        %v2467 = vpack.c.b16 %v2125, %v2107
        %v2468 = vpack.c.b16 %v2126, %v2108
        %v2469 = vpack.c.b16 %v2127, %v2109
        %v2470 = vpack.c.b16 %v2128, %v2110
        %v2471 = vpack.c.b16 %v2129, %v2111
        %v2472 = vpack.c.b16 %v2130, %v2112
        %v2473 = vpack.c.b16 %v2131, %v2113
        %v2474 = vpack.c.b16 %v2132, %v2114
        %v2475 = vpack.c.b16 %v2133, %v2115
        %v2476 = vpack.c.b16 %v2134, %v2116
        %v2477 = vpack.c.b16 %v2153, %v2135
        %v2478 = vpack.c.b16 %v2154, %v2136
        %v2479 = vpack.c.b16 %v2155, %v2137
        %v2480 = vpack.c.b16 %v2156, %v2138
        %v2481 = vpack.c.b16 %v2157, %v2139
        %v2482 = vpack.c.b16 %v2158, %v2140
        %v2483 = vpack.c.b16 %v2159, %v2141
        %v2484 = vpack.c.b16 %v2160, %v2142
        %v2485 = vpack.c.b16 %v2161, %v2143
        %v2486 = vpack.c.b16 %v2162, %v2144
        %v2487 = vpack.c.b16 %v2163, %v2145
        %v2488 = vpack.c.b16 %v2164, %v2146
        %v2489 = vpack.c.b16 %v2165, %v2147
        %v2490 = vpack.c.b16 %v2166, %v2148
        %v2491 = vpack.c.b16 %v2167, %v2149
        %v2492 = vpack.c.b16 %v2168, %v2150
        %v2493 = vpack.c.b16 %v2169, %v2151
        %v2494 = vpack.c.b16 %v2170, %v2152
        %v2495 = vpack.c.b16 %v2189, %v2171
        %v2496 = vpack.c.b16 %v2190, %v2172
        %v2497 = vpack.c.b16 %v2191, %v2173
        %v2498 = vpack.c.b16 %v2192, %v2174
        %v2499 = vpack.c.b16 %v2193, %v2175
        %v2500 = vpack.c.b16 %v2194, %v2176
        %v2501 = vpack.c.b16 %v2195, %v2177
        %v2502 = vpack.c.b16 %v2196, %v2178
        %v2503 = vpack.c.b16 %v2197, %v2179
        %v2504 = vpack.c.b16 %v2198, %v2180
        %v2505 = vpack.c.b16 %v2199, %v2181
        %v2506 = vpack.c.b16 %v2200, %v2182
        %v2507 = vpack.c.b16 %v2201, %v2183
        %v2508 = vpack.c.b16 %v2202, %v2184
        %v2509 = vpack.c.b16 %v2203, %v2185
        %v2510 = vpack.c.b16 %v2204, %v2186
        %v2511 = vpack.c.b16 %v2205, %v2187
        %v2512 = vpack.c.b16 %v2206, %v2188
        %v2513 = vpack.c.b16 %v2225, %v2207
        %v2514 = vpack.c.b16 %v2226, %v2208
        %v2515 = vpack.c.b16 %v2227, %v2209
        %v2516 = vpack.c.b16 %v2228, %v2210
        %v2517 = vpack.c.b16 %v2229, %v2211
        %v2518 = vpack.c.b16 %v2230, %v2212
        %v2519 = vpack.c.b16 %v2231, %v2213
        %v2520 = vpack.c.b16 %v2232, %v2214
        %v2521 = vpack.c.b16 %v2233, %v2215
        %v2522 = vpack.c.b16 %v2234, %v2216
        %v2523 = vpack.c.b16 %v2235, %v2217
        %v2524 = vpack.c.b16 %v2236, %v2218
        %v2525 = vpack.c.b16 %v2237, %v2219
        %v2526 = vpack.c.b16 %v2238, %v2220
        %v2527 = vpack.c.b16 %v2239, %v2221
        %v2528 = vpack.c.b16 %v2240, %v2222
        %v2529 = vpack.c.b16 %v2241, %v2223
        %v2530 = vpack.c.b16 %v2242, %v2224
        %2819 = vmatprep.subr.bf16.mxu0 %v2244
        %2820 = vmatpush1.bf16.msra.mxu0 %v2243
        %2821 = vmatprep.subr.bf16.mxu0 %v2262
        %2822 = vmatpush1.bf16.msra.mxu0 %v2261
        %2823 = vmatprep.subr.bf16.mxu0 %v2280
        %2824 = vmatpush1.bf16.msra.mxu0 %v2279
        %2825 = vmatprep.subr.bf16.mxu0 %v2298
        %2826 = vmatpush1.bf16.msra.mxu0 %v2297
        %2827 = vmatprep.subr.bf16.mxu0 %v2316
        %2828 = vmatpush1.bf16.msra.mxu0 %v2315
        %2829 = vmatprep.subr.bf16.mxu0 %v2334
        %2830 = vmatpush1.bf16.msra.mxu0 %v2333
        %2831 = vmatprep.subr.bf16.mxu0 %v2352
        %2832 = vmatpush1.bf16.msra.mxu0 %v2351
        %2833 = vmatprep.subr.bf16.mxu0 %v2370
        %2834 = vmatpush1.bf16.msra.mxu0 %v2369
        %2835 = vmatprep.subr.bf16.mxu0 %v2388
        %2836 = vmatpush1.bf16.msra.mxu0 %v2387
        %2837 = vmatprep.subr.bf16.mxu0 %v2406
        %2838 = vmatpush1.bf16.msra.mxu0 %v2405
        %2839 = vmatprep.subr.bf16.mxu0 %v2424
        %2840 = vmatpush1.bf16.msra.mxu0 %v2423
        %2841 = vmatprep.subr.bf16.mxu0 %v2442
        %2842 = vmatpush1.bf16.msra.mxu0 %v2441
        %2843 = vmatprep.subr.bf16.mxu0 %v2460
        %2844 = vmatpush1.bf16.msra.mxu0 %v2459
        %2845 = vmatprep.subr.bf16.mxu0 %v2478
        %2846 = vmatpush1.bf16.msra.mxu0 %v2477
        %2847 = vmatprep.subr.bf16.mxu0 %v2496
        %2848 = vmatpush1.bf16.msra.mxu0 %v2495
        %2849 = vmatprep.subr.bf16.mxu0 %v2514
        %2850 = vmatpush1.bf16.msra.mxu0 %v2513
        %2851 = vmatprep.mubr.bf16.mxu0 %v1378
        %2852 = vmatmul.mubr.bf16.gmra.mrb[0].mxu0 %v1377
        %v2853 = vpop.f32.mrb[0].mxu0
        %v2854 = vadd.f32 0.0, %v2853
        %v2855 = vpop.f32.mrb[0].mxu0
        %v2856 = vadd.f32 0.0, %v2855
        %v2857 = vpop.f32.mrb[0].mxu0
        %v2858 = vpop.f32.mrb[0].mxu0
        %2859 = vdwg.mxu0
        %2860 = vmatprep.subr.bf16.mxu0 %v2246
        %2861 = vmatpush1.bf16.msra.mxu0 %v2245
        %2862 = vmatprep.subr.bf16.mxu0 %v2264
        %2863 = vmatpush1.bf16.msra.mxu0 %v2263
        %2864 = vmatprep.subr.bf16.mxu0 %v2282
        %2865 = vmatpush1.bf16.msra.mxu0 %v2281
        %2866 = vmatprep.subr.bf16.mxu0 %v2300
        %2867 = vmatpush1.bf16.msra.mxu0 %v2299
        %2868 = vmatprep.subr.bf16.mxu0 %v2318
        %2869 = vmatpush1.bf16.msra.mxu0 %v2317
        %2870 = vmatprep.subr.bf16.mxu0 %v2336
        %2871 = vmatpush1.bf16.msra.mxu0 %v2335
        %2872 = vmatprep.subr.bf16.mxu0 %v2354
        %2873 = vmatpush1.bf16.msra.mxu0 %v2353
        %2874 = vmatprep.subr.bf16.mxu0 %v2372
        %2875 = vmatpush1.bf16.msra.mxu0 %v2371
        %2876 = vmatprep.subr.bf16.mxu0 %v2390
        %2877 = vmatpush1.bf16.msra.mxu0 %v2389
        %2878 = vmatprep.subr.bf16.mxu0 %v2408
        %2879 = vmatpush1.bf16.msra.mxu0 %v2407
        %2880 = vmatprep.subr.bf16.mxu0 %v2426
        %2881 = vmatpush1.bf16.msra.mxu0 %v2425
        %2882 = vmatprep.subr.bf16.mxu0 %v2444
        %2883 = vmatpush1.bf16.msra.mxu0 %v2443
        %2884 = vmatprep.subr.bf16.mxu0 %v2462
        %2885 = vmatpush1.bf16.msra.mxu0 %v2461
        %2886 = vmatprep.subr.bf16.mxu0 %v2480
        %2887 = vmatpush1.bf16.msra.mxu0 %v2479
        %2888 = vmatprep.subr.bf16.mxu0 %v2498
        %2889 = vmatpush1.bf16.msra.mxu0 %v2497
        %2890 = vmatprep.subr.bf16.mxu0 %v2516
        %2891 = vmatpush1.bf16.msra.mxu0 %v2515
        %2892 = vmatprep.mubr.bf16.mxu0 %v1378
        %2893 = vmatmul.mubr.bf16.gmra.mrb[0].mxu0 %v1377
        %v2894 = vpop.f32.mrb[0].mxu0
        %v2895 = vadd.f32 0.0, %v2894
        %v2896 = vpop.f32.mrb[0].mxu0
        %v2897 = vadd.f32 0.0, %v2896
        %v2898 = vpop.f32.mrb[0].mxu0
        %v2899 = vpop.f32.mrb[0].mxu0
        %2900 = vdwg.mxu0
        %2901 = vmatprep.subr.bf16.mxu0 %v2248
        %2902 = vmatpush1.bf16.msra.mxu0 %v2247
        %2903 = vmatprep.subr.bf16.mxu0 %v2266
        %2904 = vmatpush1.bf16.msra.mxu0 %v2265
        %2905 = vmatprep.subr.bf16.mxu0 %v2284
        %2906 = vmatpush1.bf16.msra.mxu0 %v2283
        %2907 = vmatprep.subr.bf16.mxu0 %v2302
        %2908 = vmatpush1.bf16.msra.mxu0 %v2301
        %2909 = vmatprep.subr.bf16.mxu0 %v2320
        %2910 = vmatpush1.bf16.msra.mxu0 %v2319
        %2911 = vmatprep.subr.bf16.mxu0 %v2338
        %2912 = vmatpush1.bf16.msra.mxu0 %v2337
        %2913 = vmatprep.subr.bf16.mxu0 %v2356
        %2914 = vmatpush1.bf16.msra.mxu0 %v2355
        %2915 = vmatprep.subr.bf16.mxu0 %v2374
        %2916 = vmatpush1.bf16.msra.mxu0 %v2373
        %2917 = vmatprep.subr.bf16.mxu0 %v2392
        %2918 = vmatpush1.bf16.msra.mxu0 %v2391
        %2919 = vmatprep.subr.bf16.mxu0 %v2410
        %2920 = vmatpush1.bf16.msra.mxu0 %v2409
        %2921 = vmatprep.subr.bf16.mxu0 %v2428
        %2922 = vmatpush1.bf16.msra.mxu0 %v2427
        %2923 = vmatprep.subr.bf16.mxu0 %v2446
        %2924 = vmatpush1.bf16.msra.mxu0 %v2445
        %2925 = vmatprep.subr.bf16.mxu0 %v2464
        %2926 = vmatpush1.bf16.msra.mxu0 %v2463
        %2927 = vmatprep.subr.bf16.mxu0 %v2482
        %2928 = vmatpush1.bf16.msra.mxu0 %v2481
        %2929 = vmatprep.subr.bf16.mxu0 %v2500
        %2930 = vmatpush1.bf16.msra.mxu0 %v2499
        %2931 = vmatprep.subr.bf16.mxu0 %v2518
        %2932 = vmatpush1.bf16.msra.mxu0 %v2517
        %2933 = vmatprep.mubr.bf16.mxu0 %v1378
        %2934 = vmatmul.mubr.bf16.gmra.mrb[0].mxu0 %v1377
        %v2935 = vpop.f32.mrb[0].mxu0
        %v2936 = vadd.f32 0.0, %v2935
        %v2937 = vpop.f32.mrb[0].mxu0
        %v2938 = vadd.f32 0.0, %v2937
        %v2939 = vpop.f32.mrb[0].mxu0
        %v2940 = vpop.f32.mrb[0].mxu0
        %2941 = vdwg.mxu0
        %2942 = vmatprep.subr.bf16.mxu0 %v2250
        %2943 = vmatpush1.bf16.msra.mxu0 %v2249
        %2944 = vmatprep.subr.bf16.mxu0 %v2268
        %2945 = vmatpush1.bf16.msra.mxu0 %v2267
        %2946 = vmatprep.subr.bf16.mxu0 %v2286
        %2947 = vmatpush1.bf16.msra.mxu0 %v2285
        %2948 = vmatprep.subr.bf16.mxu0 %v2304
        %2949 = vmatpush1.bf16.msra.mxu0 %v2303
        %2950 = vmatprep.subr.bf16.mxu0 %v2322
        %2951 = vmatpush1.bf16.msra.mxu0 %v2321
        %2952 = vmatprep.subr.bf16.mxu0 %v2340
        %2953 = vmatpush1.bf16.msra.mxu0 %v2339
        %2954 = vmatprep.subr.bf16.mxu0 %v2358
        %2955 = vmatpush1.bf16.msra.mxu0 %v2357
        %2956 = vmatprep.subr.bf16.mxu0 %v2376
        %2957 = vmatpush1.bf16.msra.mxu0 %v2375
        %2958 = vmatprep.subr.bf16.mxu0 %v2394
        %2959 = vmatpush1.bf16.msra.mxu0 %v2393
        %2960 = vmatprep.subr.bf16.mxu0 %v2412
        %2961 = vmatpush1.bf16.msra.mxu0 %v2411
        %2962 = vmatprep.subr.bf16.mxu0 %v2430
        %2963 = vmatpush1.bf16.msra.mxu0 %v2429
        %2964 = vmatprep.subr.bf16.mxu0 %v2448
        %2965 = vmatpush1.bf16.msra.mxu0 %v2447
        %2966 = vmatprep.subr.bf16.mxu0 %v2466
        %2967 = vmatpush1.bf16.msra.mxu0 %v2465
        %2968 = vmatprep.subr.bf16.mxu0 %v2484
        %2969 = vmatpush1.bf16.msra.mxu0 %v2483
        %2970 = vmatprep.subr.bf16.mxu0 %v2502
        %2971 = vmatpush1.bf16.msra.mxu0 %v2501
        %2972 = vmatprep.subr.bf16.mxu0 %v2520
        %2973 = vmatpush1.bf16.msra.mxu0 %v2519
        %2974 = vmatprep.mubr.bf16.mxu0 %v1378
        %2975 = vmatmul.mubr.bf16.gmra.mrb[0].mxu0 %v1377
        %v2976 = vpop.f32.mrb[0].mxu0
        %v2977 = vadd.f32 0.0, %v2976
        %v2978 = vpop.f32.mrb[0].mxu0
        %v2979 = vadd.f32 0.0, %v2978
        %v2980 = vpop.f32.mrb[0].mxu0
        %v2981 = vpop.f32.mrb[0].mxu0
        %2982 = vdwg.mxu0
        %2983 = vmatprep.subr.bf16.mxu0 %v2252
        %2984 = vmatpush1.bf16.msra.mxu0 %v2251
        %2985 = vmatprep.subr.bf16.mxu0 %v2270
        %2986 = vmatpush1.bf16.msra.mxu0 %v2269
        %2987 = vmatprep.subr.bf16.mxu0 %v2288
        %2988 = vmatpush1.bf16.msra.mxu0 %v2287
        %2989 = vmatprep.subr.bf16.mxu0 %v2306
        %2990 = vmatpush1.bf16.msra.mxu0 %v2305
        %2991 = vmatprep.subr.bf16.mxu0 %v2324
        %2992 = vmatpush1.bf16.msra.mxu0 %v2323
        %2993 = vmatprep.subr.bf16.mxu0 %v2342
        %2994 = vmatpush1.bf16.msra.mxu0 %v2341
        %2995 = vmatprep.subr.bf16.mxu0 %v2360
        %2996 = vmatpush1.bf16.msra.mxu0 %v2359
        %2997 = vmatprep.subr.bf16.mxu0 %v2378
        %2998 = vmatpush1.bf16.msra.mxu0 %v2377
        %2999 = vmatprep.subr.bf16.mxu0 %v2396
        %3000 = vmatpush1.bf16.msra.mxu0 %v2395
        %3001 = vmatprep.subr.bf16.mxu0 %v2414
        %3002 = vmatpush1.bf16.msra.mxu0 %v2413
        %3003 = vmatprep.subr.bf16.mxu0 %v2432
        %3004 = vmatpush1.bf16.msra.mxu0 %v2431
        %3005 = vmatprep.subr.bf16.mxu0 %v2450
        %3006 = vmatpush1.bf16.msra.mxu0 %v2449
        %3007 = vmatprep.subr.bf16.mxu0 %v2468
        %3008 = vmatpush1.bf16.msra.mxu0 %v2467
        %3009 = vmatprep.subr.bf16.mxu0 %v2486
        %3010 = vmatpush1.bf16.msra.mxu0 %v2485
        %3011 = vmatprep.subr.bf16.mxu0 %v2504
        %3012 = vmatpush1.bf16.msra.mxu0 %v2503
        %3013 = vmatprep.subr.bf16.mxu0 %v2522
        %3014 = vmatpush1.bf16.msra.mxu0 %v2521
        %3015 = vmatprep.mubr.bf16.mxu0 %v1378
        %3016 = vmatmul.mubr.bf16.gmra.mrb[0].mxu0 %v1377
        %v3017 = vpop.f32.mrb[0].mxu0
        %v3018 = vadd.f32 0.0, %v3017
        %v3019 = vpop.f32.mrb[0].mxu0
        %v3020 = vadd.f32 0.0, %v3019
        %v3021 = vpop.f32.mrb[0].mxu0
        %v3022 = vpop.f32.mrb[0].mxu0
        %3023 = vdwg.mxu0
        %3024 = vmatprep.subr.bf16.mxu0 %v2254
        %3025 = vmatpush1.bf16.msra.mxu0 %v2253
        %3026 = vmatprep.subr.bf16.mxu0 %v2272
        %3027 = vmatpush1.bf16.msra.mxu0 %v2271
        %3028 = vmatprep.subr.bf16.mxu0 %v2290
        %3029 = vmatpush1.bf16.msra.mxu0 %v2289
        %3030 = vmatprep.subr.bf16.mxu0 %v2308
        %3031 = vmatpush1.bf16.msra.mxu0 %v2307
        %3032 = vmatprep.subr.bf16.mxu0 %v2326
        %3033 = vmatpush1.bf16.msra.mxu0 %v2325
        %3034 = vmatprep.subr.bf16.mxu0 %v2344
        %3035 = vmatpush1.bf16.msra.mxu0 %v2343
        %3036 = vmatprep.subr.bf16.mxu0 %v2362
        %3037 = vmatpush1.bf16.msra.mxu0 %v2361
        %3038 = vmatprep.subr.bf16.mxu0 %v2380
        %3039 = vmatpush1.bf16.msra.mxu0 %v2379
        %3040 = vmatprep.subr.bf16.mxu0 %v2398
        %3041 = vmatpush1.bf16.msra.mxu0 %v2397
        %3042 = vmatprep.subr.bf16.mxu0 %v2416
        %3043 = vmatpush1.bf16.msra.mxu0 %v2415
        %3044 = vmatprep.subr.bf16.mxu0 %v2434
        %3045 = vmatpush1.bf16.msra.mxu0 %v2433
        %3046 = vmatprep.subr.bf16.mxu0 %v2452
        %3047 = vmatpush1.bf16.msra.mxu0 %v2451
        %3048 = vmatprep.subr.bf16.mxu0 %v2470
        %3049 = vmatpush1.bf16.msra.mxu0 %v2469
        %3050 = vmatprep.subr.bf16.mxu0 %v2488
        %3051 = vmatpush1.bf16.msra.mxu0 %v2487
        %3052 = vmatprep.subr.bf16.mxu0 %v2506
        %3053 = vmatpush1.bf16.msra.mxu0 %v2505
        %3054 = vmatprep.subr.bf16.mxu0 %v2524
        %3055 = vmatpush1.bf16.msra.mxu0 %v2523
        %3056 = vmatprep.mubr.bf16.mxu0 %v1378
        %3057 = vmatmul.mubr.bf16.gmra.mrb[0].mxu0 %v1377
        %v3058 = vpop.f32.mrb[0].mxu0
        %v3059 = vadd.f32 0.0, %v3058
        %v3060 = vpop.f32.mrb[0].mxu0
        %v3061 = vadd.f32 0.0, %v3060
        %v3062 = vpop.f32.mrb[0].mxu0
        %v3063 = vpop.f32.mrb[0].mxu0
        %3064 = vdwg.mxu0
        %3065 = vmatprep.subr.bf16.mxu0 %v2256
        %3066 = vmatpush1.bf16.msra.mxu0 %v2255
        %3067 = vmatprep.subr.bf16.mxu0 %v2274
        %3068 = vmatpush1.bf16.msra.mxu0 %v2273
        %3069 = vmatprep.subr.bf16.mxu0 %v2292
        %3070 = vmatpush1.bf16.msra.mxu0 %v2291
        %3071 = vmatprep.subr.bf16.mxu0 %v2310
        %3072 = vmatpush1.bf16.msra.mxu0 %v2309
        %3073 = vmatprep.subr.bf16.mxu0 %v2328
        %3074 = vmatpush1.bf16.msra.mxu0 %v2327
        %3075 = vmatprep.subr.bf16.mxu0 %v2346
        %3076 = vmatpush1.bf16.msra.mxu0 %v2345
        %3077 = vmatprep.subr.bf16.mxu0 %v2364
        %3078 = vmatpush1.bf16.msra.mxu0 %v2363
        %3079 = vmatprep.subr.bf16.mxu0 %v2382
        %3080 = vmatpush1.bf16.msra.mxu0 %v2381
        %3081 = vmatprep.subr.bf16.mxu0 %v2400
        %3082 = vmatpush1.bf16.msra.mxu0 %v2399
        %3083 = vmatprep.subr.bf16.mxu0 %v2418
        %3084 = vmatpush1.bf16.msra.mxu0 %v2417
        %3085 = vmatprep.subr.bf16.mxu0 %v2436
        %3086 = vmatpush1.bf16.msra.mxu0 %v2435
        %3087 = vmatprep.subr.bf16.mxu0 %v2454
        %3088 = vmatpush1.bf16.msra.mxu0 %v2453
        %3089 = vmatprep.subr.bf16.mxu0 %v2472
        %3090 = vmatpush1.bf16.msra.mxu0 %v2471
        %3091 = vmatprep.subr.bf16.mxu0 %v2490
        %3092 = vmatpush1.bf16.msra.mxu0 %v2489
        %3093 = vmatprep.subr.bf16.mxu0 %v2508
        %3094 = vmatpush1.bf16.msra.mxu0 %v2507
        %3095 = vmatprep.subr.bf16.mxu0 %v2526
        %3096 = vmatpush1.bf16.msra.mxu0 %v2525
        %3097 = vmatprep.mubr.bf16.mxu0 %v1378
        %3098 = vmatmul.mubr.bf16.gmra.mrb[0].mxu0 %v1377
        %v3099 = vpop.f32.mrb[0].mxu0
        %v3100 = vadd.f32 0.0, %v3099
        %v3101 = vpop.f32.mrb[0].mxu0
        %v3102 = vadd.f32 0.0, %v3101
        %v3103 = vpop.f32.mrb[0].mxu0
        %v3104 = vpop.f32.mrb[0].mxu0
        %3105 = vdwg.mxu0
        %3106 = vmatprep.subr.bf16.mxu0 %v2258
        %3107 = vmatpush1.bf16.msra.mxu0 %v2257
        %3108 = vmatprep.subr.bf16.mxu0 %v2276
        %3109 = vmatpush1.bf16.msra.mxu0 %v2275
        %3110 = vmatprep.subr.bf16.mxu0 %v2294
        %3111 = vmatpush1.bf16.msra.mxu0 %v2293
        %3112 = vmatprep.subr.bf16.mxu0 %v2312
        %3113 = vmatpush1.bf16.msra.mxu0 %v2311
        %3114 = vmatprep.subr.bf16.mxu0 %v2330
        %3115 = vmatpush1.bf16.msra.mxu0 %v2329
        %3116 = vmatprep.subr.bf16.mxu0 %v2348
        %3117 = vmatpush1.bf16.msra.mxu0 %v2347
        %3118 = vmatprep.subr.bf16.mxu0 %v2366
        %3119 = vmatpush1.bf16.msra.mxu0 %v2365
        %3120 = vmatprep.subr.bf16.mxu0 %v2384
        %3121 = vmatpush1.bf16.msra.mxu0 %v2383
        %3122 = vmatprep.subr.bf16.mxu0 %v2402
        %3123 = vmatpush1.bf16.msra.mxu0 %v2401
        %3124 = vmatprep.subr.bf16.mxu0 %v2420
        %3125 = vmatpush1.bf16.msra.mxu0 %v2419
        %3126 = vmatprep.subr.bf16.mxu0 %v2438
        %3127 = vmatpush1.bf16.msra.mxu0 %v2437
        %3128 = vmatprep.subr.bf16.mxu0 %v2456
        %3129 = vmatpush1.bf16.msra.mxu0 %v2455
        %3130 = vmatprep.subr.bf16.mxu0 %v2474
        %3131 = vmatpush1.bf16.msra.mxu0 %v2473
        %3132 = vmatprep.subr.bf16.mxu0 %v2492
        %3133 = vmatpush1.bf16.msra.mxu0 %v2491
        %3134 = vmatprep.subr.bf16.mxu0 %v2510
        %3135 = vmatpush1.bf16.msra.mxu0 %v2509
        %3136 = vmatprep.subr.bf16.mxu0 %v2528
        %3137 = vmatpush1.bf16.msra.mxu0 %v2527
        %3138 = vmatprep.mubr.bf16.mxu0 %v1378
        %3139 = vmatmul.mubr.bf16.gmra.mrb[0].mxu0 %v1377
        %v3140 = vpop.f32.mrb[0].mxu0
        %v3141 = vadd.f32 0.0, %v3140
        %v3142 = vpop.f32.mrb[0].mxu0
        %v3143 = vadd.f32 0.0, %v3142
        %v3144 = vpop.f32.mrb[0].mxu0
        %v3145 = vpop.f32.mrb[0].mxu0
        %3146 = vdwg.mxu0
        %3147 = vmatprep.subr.bf16.mxu0 %v2260
        %3148 = vmatpush1.bf16.msra.mxu0 %v2259
        %3149 = vmatprep.subr.bf16.mxu0 %v2278
        %3150 = vmatpush1.bf16.msra.mxu0 %v2277
        %3151 = vmatprep.subr.bf16.mxu0 %v2296
        %3152 = vmatpush1.bf16.msra.mxu0 %v2295
        %3153 = vmatprep.subr.bf16.mxu0 %v2314
        %3154 = vmatpush1.bf16.msra.mxu0 %v2313
        %3155 = vmatprep.subr.bf16.mxu0 %v2332
        %3156 = vmatpush1.bf16.msra.mxu0 %v2331
        %3157 = vmatprep.subr.bf16.mxu0 %v2350
        %3158 = vmatpush1.bf16.msra.mxu0 %v2349
        %3159 = vmatprep.subr.bf16.mxu0 %v2368
        %3160 = vmatpush1.bf16.msra.mxu0 %v2367
        %3161 = vmatprep.subr.bf16.mxu0 %v2386
        %3162 = vmatpush1.bf16.msra.mxu0 %v2385
        %3163 = vmatprep.subr.bf16.mxu0 %v2404
        %3164 = vmatpush1.bf16.msra.mxu0 %v2403
        %3165 = vmatprep.subr.bf16.mxu0 %v2422
        %3166 = vmatpush1.bf16.msra.mxu0 %v2421
        %3167 = vmatprep.subr.bf16.mxu0 %v2440
        %3168 = vmatpush1.bf16.msra.mxu0 %v2439
        %3169 = vmatprep.subr.bf16.mxu0 %v2458
        %3170 = vmatpush1.bf16.msra.mxu0 %v2457
        %3171 = vmatprep.subr.bf16.mxu0 %v2476
        %3172 = vmatpush1.bf16.msra.mxu0 %v2475
        %3173 = vmatprep.subr.bf16.mxu0 %v2494
        %3174 = vmatpush1.bf16.msra.mxu0 %v2493
        %3175 = vmatprep.subr.bf16.mxu0 %v2512
        %3176 = vmatpush1.bf16.msra.mxu0 %v2511
        %3177 = vmatprep.subr.bf16.mxu0 %v2530
        %3178 = vmatpush1.bf16.msra.mxu0 %v2529
        %3179 = vmatprep.mubr.bf16.mxu0 %v1378
        %3180 = vmatmul.mubr.bf16.gmra.mrb[0].mxu0 %v1377
        %v3181 = vpop.f32.mrb[0].mxu0
        %v3182 = vadd.f32 0.0, %v3181
        %v3183 = vpop.f32.mrb[0].mxu0
        %v3184 = vadd.f32 0.0, %v3183
        %v3185 = vpop.f32.mrb[0].mxu0
        %v3186 = vpop.f32.mrb[0].mxu0
        %3187 = vdwg.mxu0
        %v3188 = vld [vmem:[%s13] sm:$0xff]
        %v3189 = vpack.c.bf16 %v3188, %v3188
        %v3190 = vpack.c.bf16 %v2854, %v2854
        %v3191 = vpack.c.bf16 %v2856, %v2856
        %s3192 = scalar_lea.vmem %s13, 8
        %v3193 = vld [vmem:[%s3192] sm:$0xff]
        %v3194 = vpack.c.bf16 %v3193, %v3193
        %v3195 = vpack.c.bf16 %v2895, %v2895
        %v3196 = vpack.c.bf16 %v2897, %v2897
        %vm3197 = vcmask 31744
        %v3199 = vsel %vm3197, %v3194, 0
        %vm3201 = vcmask 1041408
        %v3203 = vsel %vm3201, %v3195, 0
        %v3206 = vsel %vm3201, %v3196, 0
        %3208 = vmatprep.subr.bf16.mxu0 %v3206
        %3209 = vmatpush1.bf16.msra.mxu0 %v3203
        %3210 = vmatprep.subr.bf16.mxu0 0
        %3211 = vmatpush1.bf16.msra.mxu0 0
        %3212 = vmatprep.subr.bf16.mxu0 0
        %3213 = vmatpush1.bf16.msra.mxu0 0
        %3214 = vmatprep.subr.bf16.mxu0 0
        %3215 = vmatpush1.bf16.msra.mxu0 0
        %3216 = vmatprep.subr.bf16.mxu0 0
        %3217 = vmatpush1.bf16.msra.mxu0 0
        %3218 = vmatprep.subr.bf16.mxu0 0
        %3219 = vmatpush1.bf16.msra.mxu0 0
        %3220 = vmatprep.subr.bf16.mxu0 0
        %3221 = vmatpush1.bf16.msra.mxu0 0
        %3222 = vmatprep.subr.bf16.mxu0 0
        %3223 = vmatpush1.bf16.msra.mxu0 0
        %3224 = vmatprep.subr.bf16.mxu0 0
        %3225 = vmatpush1.bf16.msra.mxu0 0
        %3226 = vmatprep.subr.bf16.mxu0 0
        %3227 = vmatpush1.bf16.msra.mxu0 0
        %3228 = vmatprep.subr.bf16.mxu0 0
        %3229 = vmatpush1.bf16.msra.mxu0 0
        %3230 = vmatprep.subr.bf16.mxu0 0
        %3231 = vmatpush1.bf16.msra.mxu0 0
        %3232 = vmatprep.subr.bf16.mxu0 0
        %3233 = vmatpush1.bf16.msra.mxu0 0
        %3234 = vmatprep.subr.bf16.mxu0 0
        %3235 = vmatpush1.bf16.msra.mxu0 0
        %3236 = vmatprep.subr.bf16.mxu0 0
        %3237 = vmatpush1.bf16.msra.mxu0 0
        %3238 = vmatprep.subr.bf16.mxu0 0
        %3239 = vmatpush1.bf16.msra.mxu0 0
        %3240 = vmatprep.mubr.bf16.mxu0 0
        %3241 = vmatmul.mubr.bf16.gmra.mrb[0].mxu0 %v3199
        %v3242 = vpop.f32.mrb[0].mxu0
        %v3243 = vadd.f32 0.0, %v3242
        %v3244 = vpop.f32.mrb[0].mxu0
        %v3245 = vadd.f32 0.0, %v3244
        %v3246 = vpop.f32.mrb[0].mxu0
        %v3247 = vpop.f32.mrb[0].mxu0
        %3248 = vdwg.mxu0
        %v3250 = vsel %vm3197, %v3189, 0
        %v3253 = vsel %vm3201, %v3190, 0
        %v3256 = vsel %vm3201, %v3191, 0
        %3258 = vmatprep.subr.bf16.mxu0 %v3256
        %3259 = vmatpush1.bf16.msra.mxu0 %v3253
        %3260 = vmatprep.subr.bf16.mxu0 0
        %3261 = vmatpush1.bf16.msra.mxu0 0
        %3262 = vmatprep.subr.bf16.mxu0 0
        %3263 = vmatpush1.bf16.msra.mxu0 0
        %3264 = vmatprep.subr.bf16.mxu0 0
        %3265 = vmatpush1.bf16.msra.mxu0 0
        %3266 = vmatprep.subr.bf16.mxu0 0
        %3267 = vmatpush1.bf16.msra.mxu0 0
        %3268 = vmatprep.subr.bf16.mxu0 0
        %3269 = vmatpush1.bf16.msra.mxu0 0
        %3270 = vmatprep.subr.bf16.mxu0 0
        %3271 = vmatpush1.bf16.msra.mxu0 0
        %3272 = vmatprep.subr.bf16.mxu0 0
        %3273 = vmatpush1.bf16.msra.mxu0 0
        %3274 = vmatprep.subr.bf16.mxu0 0
        %3275 = vmatpush1.bf16.msra.mxu0 0
        %3276 = vmatprep.subr.bf16.mxu0 0
        %3277 = vmatpush1.bf16.msra.mxu0 0
        %3278 = vmatprep.subr.bf16.mxu0 0
        %3279 = vmatpush1.bf16.msra.mxu0 0
        %3280 = vmatprep.subr.bf16.mxu0 0
        %3281 = vmatpush1.bf16.msra.mxu0 0
        %3282 = vmatprep.subr.bf16.mxu0 0
        %3283 = vmatpush1.bf16.msra.mxu0 0
        %3284 = vmatprep.subr.bf16.mxu0 0
        %3285 = vmatpush1.bf16.msra.mxu0 0
        %3286 = vmatprep.subr.bf16.mxu0 0
        %3287 = vmatpush1.bf16.msra.mxu0 0
        %3288 = vmatprep.subr.bf16.mxu0 0
        %3289 = vmatpush1.bf16.msra.mxu0 0
        %3290 = vmatprep.mubr.bf16.mxu0 0
        %3291 = vmatmul.mubr.bf16.gmra.mrb[0].mxu0 %v3250
        %v3292 = vpop.f32.mrb[0].mxu0
        %v3293 = vadd.f32 %v3243, %v3292
        %v3294 = vpop.f32.mrb[0].mxu0
        %v3295 = vadd.f32 %v3245, %v3294
        %v3296 = vpop.f32.mrb[0].mxu0
        %v3297 = vpop.f32.mrb[0].mxu0
        %3298 = vdwg.mxu0
        %s3299 = scalar_lea.vmem %s13, 16
        %v3300 = vld [vmem:[%s3299] sm:$0xff]
        %v3301 = vpack.c.bf16 %v3300, %v3300
        %v3302 = vpack.c.bf16 %v2936, %v2936
        %v3303 = vpack.c.bf16 %v2938, %v2938
        %v3305 = vsel %vm3197, %v3301, 0
        %v3308 = vsel %vm3201, %v3302, 0
        %v3311 = vsel %vm3201, %v3303, 0
        %3313 = vmatprep.subr.bf16.mxu0 %v3311
        %3314 = vmatpush1.bf16.msra.mxu0 %v3308
        %3315 = vmatprep.subr.bf16.mxu0 0
        %3316 = vmatpush1.bf16.msra.mxu0 0
        %3317 = vmatprep.subr.bf16.mxu0 0
        %3318 = vmatpush1.bf16.msra.mxu0 0
        %3319 = vmatprep.subr.bf16.mxu0 0
        %3320 = vmatpush1.bf16.msra.mxu0 0
        %3321 = vmatprep.subr.bf16.mxu0 0
        %3322 = vmatpush1.bf16.msra.mxu0 0
        %3323 = vmatprep.subr.bf16.mxu0 0
        %3324 = vmatpush1.bf16.msra.mxu0 0
        %3325 = vmatprep.subr.bf16.mxu0 0
        %3326 = vmatpush1.bf16.msra.mxu0 0
        %3327 = vmatprep.subr.bf16.mxu0 0
        %3328 = vmatpush1.bf16.msra.mxu0 0
        %3329 = vmatprep.subr.bf16.mxu0 0
        %3330 = vmatpush1.bf16.msra.mxu0 0
        %3331 = vmatprep.subr.bf16.mxu0 0
        %3332 = vmatpush1.bf16.msra.mxu0 0
        %3333 = vmatprep.subr.bf16.mxu0 0
        %3334 = vmatpush1.bf16.msra.mxu0 0
        %3335 = vmatprep.subr.bf16.mxu0 0
        %3336 = vmatpush1.bf16.msra.mxu0 0
        %3337 = vmatprep.subr.bf16.mxu0 0
        %3338 = vmatpush1.bf16.msra.mxu0 0
        %3339 = vmatprep.subr.bf16.mxu0 0
        %3340 = vmatpush1.bf16.msra.mxu0 0
        %3341 = vmatprep.subr.bf16.mxu0 0
        %3342 = vmatpush1.bf16.msra.mxu0 0
        %3343 = vmatprep.subr.bf16.mxu0 0
        %3344 = vmatpush1.bf16.msra.mxu0 0
        %3345 = vmatprep.mubr.bf16.mxu0 0
        %3346 = vmatmul.mubr.bf16.gmra.mrb[0].mxu0 %v3305
        %v3347 = vpop.f32.mrb[0].mxu0
        %v3348 = vadd.f32 0.0, %v3347
        %v3349 = vpop.f32.mrb[0].mxu0
        %v3350 = vadd.f32 0.0, %v3349
        %v3351 = vpop.f32.mrb[0].mxu0
        %v3352 = vpop.f32.mrb[0].mxu0
        %3353 = vdwg.mxu0
        %v3354 = vadd.f32 %v3293, %v3348
        %v3355 = vadd.f32 %v3295, %v3350
        %s3356 = scalar_lea.vmem %s13, 24
        %v3357 = vld [vmem:[%s3356] sm:$0xff]
        %v3358 = vpack.c.bf16 %v3357, %v3357
        %v3359 = vpack.c.bf16 %v2977, %v2977
        %v3360 = vpack.c.bf16 %v2979, %v2979
        %v3362 = vsel %vm3197, %v3358, 0
        %v3365 = vsel %vm3201, %v3359, 0
        %v3368 = vsel %vm3201, %v3360, 0
        %3370 = vmatprep.subr.bf16.mxu0 %v3368
        %3371 = vmatpush1.bf16.msra.mxu0 %v3365
        %3372 = vmatprep.subr.bf16.mxu0 0
        %3373 = vmatpush1.bf16.msra.mxu0 0
        %3374 = vmatprep.subr.bf16.mxu0 0
        %3375 = vmatpush1.bf16.msra.mxu0 0
        %3376 = vmatprep.subr.bf16.mxu0 0
        %3377 = vmatpush1.bf16.msra.mxu0 0
        %3378 = vmatprep.subr.bf16.mxu0 0
        %3379 = vmatpush1.bf16.msra.mxu0 0
        %3380 = vmatprep.subr.bf16.mxu0 0
        %3381 = vmatpush1.bf16.msra.mxu0 0
        %3382 = vmatprep.subr.bf16.mxu0 0
        %3383 = vmatpush1.bf16.msra.mxu0 0
        %3384 = vmatprep.subr.bf16.mxu0 0
        %3385 = vmatpush1.bf16.msra.mxu0 0
        %3386 = vmatprep.subr.bf16.mxu0 0
        %3387 = vmatpush1.bf16.msra.mxu0 0
        %3388 = vmatprep.subr.bf16.mxu0 0
        %3389 = vmatpush1.bf16.msra.mxu0 0
        %3390 = vmatprep.subr.bf16.mxu0 0
        %3391 = vmatpush1.bf16.msra.mxu0 0
        %3392 = vmatprep.subr.bf16.mxu0 0
        %3393 = vmatpush1.bf16.msra.mxu0 0
        %3394 = vmatprep.subr.bf16.mxu0 0
        %3395 = vmatpush1.bf16.msra.mxu0 0
        %3396 = vmatprep.subr.bf16.mxu0 0
        %3397 = vmatpush1.bf16.msra.mxu0 0
        %3398 = vmatprep.subr.bf16.mxu0 0
        %3399 = vmatpush1.bf16.msra.mxu0 0
        %3400 = vmatprep.subr.bf16.mxu0 0
        %3401 = vmatpush1.bf16.msra.mxu0 0
        %3402 = vmatprep.mubr.bf16.mxu0 0
        %3403 = vmatmul.mubr.bf16.gmra.mrb[0].mxu0 %v3362
        %v3404 = vpop.f32.mrb[0].mxu0
        %v3405 = vadd.f32 0.0, %v3404
        %v3406 = vpop.f32.mrb[0].mxu0
        %v3407 = vadd.f32 0.0, %v3406
        %v3408 = vpop.f32.mrb[0].mxu0
        %v3409 = vpop.f32.mrb[0].mxu0
        %3410 = vdwg.mxu0
        %v3411 = vadd.f32 %v3354, %v3405
        %v3412 = vadd.f32 %v3355, %v3407
        %s3413 = scalar_lea.vmem %s13, 32
        %v3414 = vld [vmem:[%s3413] sm:$0xff]
        %v3415 = vpack.c.bf16 %v3414, %v3414
        %v3416 = vpack.c.bf16 %v3018, %v3018
        %v3417 = vpack.c.bf16 %v3020, %v3020
        %v3419 = vsel %vm3197, %v3415, 0
        %v3422 = vsel %vm3201, %v3416, 0
        %v3425 = vsel %vm3201, %v3417, 0
        %3427 = vmatprep.subr.bf16.mxu0 %v3425
        %3428 = vmatpush1.bf16.msra.mxu0 %v3422
        %3429 = vmatprep.subr.bf16.mxu0 0
        %3430 = vmatpush1.bf16.msra.mxu0 0
        %3431 = vmatprep.subr.bf16.mxu0 0
        %3432 = vmatpush1.bf16.msra.mxu0 0
        %3433 = vmatprep.subr.bf16.mxu0 0
        %3434 = vmatpush1.bf16.msra.mxu0 0
        %3435 = vmatprep.subr.bf16.mxu0 0
        %3436 = vmatpush1.bf16.msra.mxu0 0
        %3437 = vmatprep.subr.bf16.mxu0 0
        %3438 = vmatpush1.bf16.msra.mxu0 0
        %3439 = vmatprep.subr.bf16.mxu0 0
        %3440 = vmatpush1.bf16.msra.mxu0 0
        %3441 = vmatprep.subr.bf16.mxu0 0
        %3442 = vmatpush1.bf16.msra.mxu0 0
        %3443 = vmatprep.subr.bf16.mxu0 0
        %3444 = vmatpush1.bf16.msra.mxu0 0
        %3445 = vmatprep.subr.bf16.mxu0 0
        %3446 = vmatpush1.bf16.msra.mxu0 0
        %3447 = vmatprep.subr.bf16.mxu0 0
        %3448 = vmatpush1.bf16.msra.mxu0 0
        %3449 = vmatprep.subr.bf16.mxu0 0
        %3450 = vmatpush1.bf16.msra.mxu0 0
        %3451 = vmatprep.subr.bf16.mxu0 0
        %3452 = vmatpush1.bf16.msra.mxu0 0
        %3453 = vmatprep.subr.bf16.mxu0 0
        %3454 = vmatpush1.bf16.msra.mxu0 0
        %3455 = vmatprep.subr.bf16.mxu0 0
        %3456 = vmatpush1.bf16.msra.mxu0 0
        %3457 = vmatprep.subr.bf16.mxu0 0
        %3458 = vmatpush1.bf16.msra.mxu0 0
        %3459 = vmatprep.mubr.bf16.mxu0 0
        %3460 = vmatmul.mubr.bf16.gmra.mrb[0].mxu0 %v3419
        %v3461 = vpop.f32.mrb[0].mxu0
        %v3462 = vadd.f32 0.0, %v3461
        %v3463 = vpop.f32.mrb[0].mxu0
        %v3464 = vadd.f32 0.0, %v3463
        %v3465 = vpop.f32.mrb[0].mxu0
        %v3466 = vpop.f32.mrb[0].mxu0
        %3467 = vdwg.mxu0
        %v3468 = vadd.f32 %v3411, %v3462
        %v3469 = vadd.f32 %v3412, %v3464
        %s3470 = scalar_lea.vmem %s13, 40
        %v3471 = vld [vmem:[%s3470] sm:$0xff]
        %v3472 = vpack.c.bf16 %v3471, %v3471
        %v3473 = vpack.c.bf16 %v3059, %v3059
        %v3474 = vpack.c.bf16 %v3061, %v3061
        %v3476 = vsel %vm3197, %v3472, 0
        %v3479 = vsel %vm3201, %v3473, 0
        %v3482 = vsel %vm3201, %v3474, 0
        %3484 = vmatprep.subr.bf16.mxu0 %v3482
        %3485 = vmatpush1.bf16.msra.mxu0 %v3479
        %3486 = vmatprep.subr.bf16.mxu0 0
        %3487 = vmatpush1.bf16.msra.mxu0 0
        %3488 = vmatprep.subr.bf16.mxu0 0
        %3489 = vmatpush1.bf16.msra.mxu0 0
        %3490 = vmatprep.subr.bf16.mxu0 0
        %3491 = vmatpush1.bf16.msra.mxu0 0
        %3492 = vmatprep.subr.bf16.mxu0 0
        %3493 = vmatpush1.bf16.msra.mxu0 0
        %3494 = vmatprep.subr.bf16.mxu0 0
        %3495 = vmatpush1.bf16.msra.mxu0 0
        %3496 = vmatprep.subr.bf16.mxu0 0
        %3497 = vmatpush1.bf16.msra.mxu0 0
        %3498 = vmatprep.subr.bf16.mxu0 0
        %3499 = vmatpush1.bf16.msra.mxu0 0
        %3500 = vmatprep.subr.bf16.mxu0 0
        %3501 = vmatpush1.bf16.msra.mxu0 0
        %3502 = vmatprep.subr.bf16.mxu0 0
        %3503 = vmatpush1.bf16.msra.mxu0 0
        %3504 = vmatprep.subr.bf16.mxu0 0
        %3505 = vmatpush1.bf16.msra.mxu0 0
        %3506 = vmatprep.subr.bf16.mxu0 0
        %3507 = vmatpush1.bf16.msra.mxu0 0
        %3508 = vmatprep.subr.bf16.mxu0 0
        %3509 = vmatpush1.bf16.msra.mxu0 0
        %3510 = vmatprep.subr.bf16.mxu0 0
        %3511 = vmatpush1.bf16.msra.mxu0 0
        %3512 = vmatprep.subr.bf16.mxu0 0
        %3513 = vmatpush1.bf16.msra.mxu0 0
        %3514 = vmatprep.subr.bf16.mxu0 0
        %3515 = vmatpush1.bf16.msra.mxu0 0
        %3516 = vmatprep.mubr.bf16.mxu0 0
        %3517 = vmatmul.mubr.bf16.gmra.mrb[0].mxu0 %v3476
        %v3518 = vpop.f32.mrb[0].mxu0
        %v3519 = vadd.f32 0.0, %v3518
        %v3520 = vpop.f32.mrb[0].mxu0
        %v3521 = vadd.f32 0.0, %v3520
        %v3522 = vpop.f32.mrb[0].mxu0
        %v3523 = vpop.f32.mrb[0].mxu0
        %3524 = vdwg.mxu0
        %v3525 = vadd.f32 %v3468, %v3519
        %v3526 = vadd.f32 %v3469, %v3521
        %s3527 = scalar_lea.vmem %s13, 48
        %v3528 = vld [vmem:[%s3527] sm:$0xff]
        %v3529 = vpack.c.bf16 %v3528, %v3528
        %v3530 = vpack.c.bf16 %v3100, %v3100
        %v3531 = vpack.c.bf16 %v3102, %v3102
        %v3533 = vsel %vm3197, %v3529, 0
        %v3536 = vsel %vm3201, %v3530, 0
        %v3539 = vsel %vm3201, %v3531, 0
        %3541 = vmatprep.subr.bf16.mxu0 %v3539
        %3542 = vmatpush1.bf16.msra.mxu0 %v3536
        %3543 = vmatprep.subr.bf16.mxu0 0
        %3544 = vmatpush1.bf16.msra.mxu0 0
        %3545 = vmatprep.subr.bf16.mxu0 0
        %3546 = vmatpush1.bf16.msra.mxu0 0
        %3547 = vmatprep.subr.bf16.mxu0 0
        %3548 = vmatpush1.bf16.msra.mxu0 0
        %3549 = vmatprep.subr.bf16.mxu0 0
        %3550 = vmatpush1.bf16.msra.mxu0 0
        %3551 = vmatprep.subr.bf16.mxu0 0
        %3552 = vmatpush1.bf16.msra.mxu0 0
        %3553 = vmatprep.subr.bf16.mxu0 0
        %3554 = vmatpush1.bf16.msra.mxu0 0
        %3555 = vmatprep.subr.bf16.mxu0 0
        %3556 = vmatpush1.bf16.msra.mxu0 0
        %3557 = vmatprep.subr.bf16.mxu0 0
        %3558 = vmatpush1.bf16.msra.mxu0 0
        %3559 = vmatprep.subr.bf16.mxu0 0
        %3560 = vmatpush1.bf16.msra.mxu0 0
        %3561 = vmatprep.subr.bf16.mxu0 0
        %3562 = vmatpush1.bf16.msra.mxu0 0
        %3563 = vmatprep.subr.bf16.mxu0 0
        %3564 = vmatpush1.bf16.msra.mxu0 0
        %3565 = vmatprep.subr.bf16.mxu0 0
        %3566 = vmatpush1.bf16.msra.mxu0 0
        %3567 = vmatprep.subr.bf16.mxu0 0
        %3568 = vmatpush1.bf16.msra.mxu0 0
        %3569 = vmatprep.subr.bf16.mxu0 0
        %3570 = vmatpush1.bf16.msra.mxu0 0
        %3571 = vmatprep.subr.bf16.mxu0 0
        %3572 = vmatpush1.bf16.msra.mxu0 0
        %3573 = vmatprep.mubr.bf16.mxu0 0
        %3574 = vmatmul.mubr.bf16.gmra.mrb[0].mxu0 %v3533
        %v3575 = vpop.f32.mrb[0].mxu0
        %v3576 = vadd.f32 0.0, %v3575
        %v3577 = vpop.f32.mrb[0].mxu0
        %v3578 = vadd.f32 0.0, %v3577
        %v3579 = vpop.f32.mrb[0].mxu0
        %v3580 = vpop.f32.mrb[0].mxu0
        %3581 = vdwg.mxu0
        %v3582 = vadd.f32 %v3525, %v3576
        %v3583 = vadd.f32 %v3526, %v3578
        %s3584 = scalar_lea.vmem %s13, 56
        %v3585 = vld [vmem:[%s3584] sm:$0xff]
        %v3586 = vpack.c.bf16 %v3585, %v3585
        %v3587 = vpack.c.bf16 %v3141, %v3141
        %v3588 = vpack.c.bf16 %v3143, %v3143
        %v3590 = vsel %vm3197, %v3586, 0
        %v3593 = vsel %vm3201, %v3587, 0
        %v3596 = vsel %vm3201, %v3588, 0
        %3598 = vmatprep.subr.bf16.mxu0 %v3596
        %3599 = vmatpush1.bf16.msra.mxu0 %v3593
        %3600 = vmatprep.subr.bf16.mxu0 0
        %3601 = vmatpush1.bf16.msra.mxu0 0
        %3602 = vmatprep.subr.bf16.mxu0 0
        %3603 = vmatpush1.bf16.msra.mxu0 0
        %3604 = vmatprep.subr.bf16.mxu0 0
        %3605 = vmatpush1.bf16.msra.mxu0 0
        %3606 = vmatprep.subr.bf16.mxu0 0
        %3607 = vmatpush1.bf16.msra.mxu0 0
        %3608 = vmatprep.subr.bf16.mxu0 0
        %3609 = vmatpush1.bf16.msra.mxu0 0
        %3610 = vmatprep.subr.bf16.mxu0 0
        %3611 = vmatpush1.bf16.msra.mxu0 0
        %3612 = vmatprep.subr.bf16.mxu0 0
        %3613 = vmatpush1.bf16.msra.mxu0 0
        %3614 = vmatprep.subr.bf16.mxu0 0
        %3615 = vmatpush1.bf16.msra.mxu0 0
        %3616 = vmatprep.subr.bf16.mxu0 0
        %3617 = vmatpush1.bf16.msra.mxu0 0
        %3618 = vmatprep.subr.bf16.mxu0 0
        %3619 = vmatpush1.bf16.msra.mxu0 0
        %3620 = vmatprep.subr.bf16.mxu0 0
        %3621 = vmatpush1.bf16.msra.mxu0 0
        %3622 = vmatprep.subr.bf16.mxu0 0
        %3623 = vmatpush1.bf16.msra.mxu0 0
        %3624 = vmatprep.subr.bf16.mxu0 0
        %3625 = vmatpush1.bf16.msra.mxu0 0
        %3626 = vmatprep.subr.bf16.mxu0 0
        %3627 = vmatpush1.bf16.msra.mxu0 0
        %3628 = vmatprep.subr.bf16.mxu0 0
        %3629 = vmatpush1.bf16.msra.mxu0 0
        %3630 = vmatprep.mubr.bf16.mxu0 0
        %3631 = vmatmul.mubr.bf16.gmra.mrb[0].mxu0 %v3590
        %v3632 = vpop.f32.mrb[0].mxu0
        %v3633 = vadd.f32 0.0, %v3632
        %v3634 = vpop.f32.mrb[0].mxu0
        %v3635 = vadd.f32 0.0, %v3634
        %v3636 = vpop.f32.mrb[0].mxu0
        %v3637 = vpop.f32.mrb[0].mxu0
        %3638 = vdwg.mxu0
        %v3639 = vadd.f32 %v3582, %v3633
        %v3640 = vadd.f32 %v3583, %v3635
        %s3641 = scalar_lea.vmem %s13, 64
        %v3642 = vld [vmem:[%s3641] sm:$0xff]
        %v3643 = vpack.c.bf16 %v3642, %v3642
        %v3644 = vpack.c.bf16 %v3182, %v3182
        %v3645 = vpack.c.bf16 %v3184, %v3184
        %v3647 = vsel %vm3197, %v3643, 0
        %v3650 = vsel %vm3201, %v3644, 0
        %v3653 = vsel %vm3201, %v3645, 0
        %3655 = vmatprep.subr.bf16.mxu0 %v3653
        %3656 = vmatpush1.bf16.msra.mxu0 %v3650
        %3657 = vmatprep.subr.bf16.mxu0 0
        %3658 = vmatpush1.bf16.msra.mxu0 0
        %3659 = vmatprep.subr.bf16.mxu0 0
        %3660 = vmatpush1.bf16.msra.mxu0 0
        %3661 = vmatprep.subr.bf16.mxu0 0
        %3662 = vmatpush1.bf16.msra.mxu0 0
        %3663 = vmatprep.subr.bf16.mxu0 0
        %3664 = vmatpush1.bf16.msra.mxu0 0
        %3665 = vmatprep.subr.bf16.mxu0 0
        %3666 = vmatpush1.bf16.msra.mxu0 0
        %3667 = vmatprep.subr.bf16.mxu0 0
        %3668 = vmatpush1.bf16.msra.mxu0 0
        %3669 = vmatprep.subr.bf16.mxu0 0
        %3670 = vmatpush1.bf16.msra.mxu0 0
        %3671 = vmatprep.subr.bf16.mxu0 0
        %3672 = vmatpush1.bf16.msra.mxu0 0
        %3673 = vmatprep.subr.bf16.mxu0 0
        %3674 = vmatpush1.bf16.msra.mxu0 0
        %3675 = vmatprep.subr.bf16.mxu0 0
        %3676 = vmatpush1.bf16.msra.mxu0 0
        %3677 = vmatprep.subr.bf16.mxu0 0
        %3678 = vmatpush1.bf16.msra.mxu0 0
        %3679 = vmatprep.subr.bf16.mxu0 0
        %3680 = vmatpush1.bf16.msra.mxu0 0
        %3681 = vmatprep.subr.bf16.mxu0 0
        %3682 = vmatpush1.bf16.msra.mxu0 0
        %3683 = vmatprep.subr.bf16.mxu0 0
        %3684 = vmatpush1.bf16.msra.mxu0 0
        %3685 = vmatprep.subr.bf16.mxu0 0
        %3686 = vmatpush1.bf16.msra.mxu0 0
        %3687 = vmatprep.mubr.bf16.mxu0 0
        %3688 = vmatmul.mubr.bf16.gmra.mrb[0].mxu0 %v3647
        %v3689 = vpop.f32.mrb[0].mxu0
        %v3690 = vadd.f32 0.0, %v3689
        %v3691 = vpop.f32.mrb[0].mxu0
        %v3692 = vadd.f32 0.0, %v3691
        %v3693 = vpop.f32.mrb[0].mxu0
        %v3694 = vpop.f32.mrb[0].mxu0
        %3695 = vdwg.mxu0
        %v3696 = vadd.f32 %v3639, %v3690
        %v3697 = vadd.f32 %v3640, %v3692
        %v3698 = vld [vmem:[%s15] sm:$0xff]
        %3700 = vset.pattern.permute.xlu0 0
        %3701 = vperm.xlu0 %3700, %v3698
        %v3702 = vpop.permute.xlu0 %3701
        %v3704 = vadd.f32 %v3696, %v3702
        %v3705 = vadd.f32 %v3697, %v3702
        %v3706 = vxor.u32 %v3704, 2147483648
        %v3707 = vxor.u32 %v3705, 2147483648
        %v3708 = vmul.f32 %v3706, 1.442695
        %v3709 = vpow.pop %v3708
        %v3710 = vmul.f32 %v3707, 1.442695
        %v3711 = vpow.pop %v3710
        %v3712 = vadd.f32 %v3709, 1.0
        %v3713 = vadd.f32 %v3711, 1.0
        %v3714 = vrcp.pop %v3712
        %v3715 = vmul.f32 1.0, %v3714
        %v3716 = vrcp.pop %v3713
        %v3717 = vmul.f32 1.0, %v3716
        %v3718 = vmul.f32 %v3704, %v3715
        %v3719 = vmul.f32 %v3705, %v3717
        %v3720 = vpack.c.bf16 %v3718, %v3718
        %v3721 = vpack.c.bf16 %v3719, %v3719
        %3722 = vmatprep.subr.bf16.mxu0 %v2244
        %3723 = vmatpush1.bf16.msra.mxu0 %v2243
        %3724 = vmatprep.subr.bf16.mxu0 %v2262
        %3725 = vmatpush1.bf16.msra.mxu0 %v2261
        %3726 = vmatprep.subr.bf16.mxu0 %v2280
        %3727 = vmatpush1.bf16.msra.mxu0 %v2279
        %3728 = vmatprep.subr.bf16.mxu0 %v2298
        %3729 = vmatpush1.bf16.msra.mxu0 %v2297
        %3730 = vmatprep.subr.bf16.mxu0 %v2316
        %3731 = vmatpush1.bf16.msra.mxu0 %v2315
        %3732 = vmatprep.subr.bf16.mxu0 %v2334
        %3733 = vmatpush1.bf16.msra.mxu0 %v2333
        %3734 = vmatprep.subr.bf16.mxu0 %v2352
        %3735 = vmatpush1.bf16.msra.mxu0 %v2351
        %3736 = vmatprep.subr.bf16.mxu0 %v2370
        %3737 = vmatpush1.bf16.msra.mxu0 %v2369
        %3738 = vmatprep.subr.bf16.mxu0 %v2388
        %3739 = vmatpush1.bf16.msra.mxu0 %v2387
        %3740 = vmatprep.subr.bf16.mxu0 %v2406
        %3741 = vmatpush1.bf16.msra.mxu0 %v2405
        %3742 = vmatprep.subr.bf16.mxu0 %v2424
        %3743 = vmatpush1.bf16.msra.mxu0 %v2423
        %3744 = vmatprep.subr.bf16.mxu0 %v2442
        %3745 = vmatpush1.bf16.msra.mxu0 %v2441
        %3746 = vmatprep.subr.bf16.mxu0 %v2460
        %3747 = vmatpush1.bf16.msra.mxu0 %v2459
        %3748 = vmatprep.subr.bf16.mxu0 %v2478
        %3749 = vmatpush1.bf16.msra.mxu0 %v2477
        %3750 = vmatprep.subr.bf16.mxu0 %v2496
        %3751 = vmatpush1.bf16.msra.mxu0 %v2495
        %3752 = vmatprep.subr.bf16.mxu0 %v2514
        %3753 = vmatpush1.bf16.msra.mxu0 %v2513
        %3754 = vmatprep.mubr.bf16.mxu0 %v3721
        %3755 = vmatmul.mubr.bf16.gmra.mrb[0].mxu0 %v3720
        %v3756 = vpop.f32.mrb[0].mxu0
        %v3757 = vadd.f32 0.0, %v3756
        %v3758 = vpop.f32.mrb[0].mxu0
        %v3759 = vadd.f32 0.0, %v3758
        %v3760 = vpop.f32.mrb[0].mxu0
        %v3761 = vpop.f32.mrb[0].mxu0
        %3762 = vdwg.mxu0
        %3763 = vmatprep.subr.bf16.mxu0 %v2246
        %3764 = vmatpush1.bf16.msra.mxu0 %v2245
        %3765 = vmatprep.subr.bf16.mxu0 %v2264
        %3766 = vmatpush1.bf16.msra.mxu0 %v2263
        %3767 = vmatprep.subr.bf16.mxu0 %v2282
        %3768 = vmatpush1.bf16.msra.mxu0 %v2281
        %3769 = vmatprep.subr.bf16.mxu0 %v2300
        %3770 = vmatpush1.bf16.msra.mxu0 %v2299
        %3771 = vmatprep.subr.bf16.mxu0 %v2318
        %3772 = vmatpush1.bf16.msra.mxu0 %v2317
        %3773 = vmatprep.subr.bf16.mxu0 %v2336
        %3774 = vmatpush1.bf16.msra.mxu0 %v2335
        %3775 = vmatprep.subr.bf16.mxu0 %v2354
        %3776 = vmatpush1.bf16.msra.mxu0 %v2353
        %3777 = vmatprep.subr.bf16.mxu0 %v2372
        %3778 = vmatpush1.bf16.msra.mxu0 %v2371
        %3779 = vmatprep.subr.bf16.mxu0 %v2390
        %3780 = vmatpush1.bf16.msra.mxu0 %v2389
        %3781 = vmatprep.subr.bf16.mxu0 %v2408
        %3782 = vmatpush1.bf16.msra.mxu0 %v2407
        %3783 = vmatprep.subr.bf16.mxu0 %v2426
        %3784 = vmatpush1.bf16.msra.mxu0 %v2425
        %3785 = vmatprep.subr.bf16.mxu0 %v2444
        %3786 = vmatpush1.bf16.msra.mxu0 %v2443
        %3787 = vmatprep.subr.bf16.mxu0 %v2462
        %3788 = vmatpush1.bf16.msra.mxu0 %v2461
        %3789 = vmatprep.subr.bf16.mxu0 %v2480
        %3790 = vmatpush1.bf16.msra.mxu0 %v2479
        %3791 = vmatprep.subr.bf16.mxu0 %v2498
        %3792 = vmatpush1.bf16.msra.mxu0 %v2497
        %3793 = vmatprep.subr.bf16.mxu0 %v2516
        %3794 = vmatpush1.bf16.msra.mxu0 %v2515
        %3795 = vmatprep.mubr.bf16.mxu0 %v3721
        %3796 = vmatmul.mubr.bf16.gmra.mrb[0].mxu0 %v3720
        %v3797 = vpop.f32.mrb[0].mxu0
        %v3798 = vadd.f32 0.0, %v3797
        %v3799 = vpop.f32.mrb[0].mxu0
        %v3800 = vadd.f32 0.0, %v3799
        %v3801 = vpop.f32.mrb[0].mxu0
        %v3802 = vpop.f32.mrb[0].mxu0
        %3803 = vdwg.mxu0
        %3804 = vmatprep.subr.bf16.mxu0 %v2248
        %3805 = vmatpush1.bf16.msra.mxu0 %v2247
        %3806 = vmatprep.subr.bf16.mxu0 %v2266
        %3807 = vmatpush1.bf16.msra.mxu0 %v2265
        %3808 = vmatprep.subr.bf16.mxu0 %v2284
        %3809 = vmatpush1.bf16.msra.mxu0 %v2283
        %3810 = vmatprep.subr.bf16.mxu0 %v2302
        %3811 = vmatpush1.bf16.msra.mxu0 %v2301
        %3812 = vmatprep.subr.bf16.mxu0 %v2320
        %3813 = vmatpush1.bf16.msra.mxu0 %v2319
        %3814 = vmatprep.subr.bf16.mxu0 %v2338
        %3815 = vmatpush1.bf16.msra.mxu0 %v2337
        %3816 = vmatprep.subr.bf16.mxu0 %v2356
        %3817 = vmatpush1.bf16.msra.mxu0 %v2355
        %3818 = vmatprep.subr.bf16.mxu0 %v2374
        %3819 = vmatpush1.bf16.msra.mxu0 %v2373
        %3820 = vmatprep.subr.bf16.mxu0 %v2392
        %3821 = vmatpush1.bf16.msra.mxu0 %v2391
        %3822 = vmatprep.subr.bf16.mxu0 %v2410
        %3823 = vmatpush1.bf16.msra.mxu0 %v2409
        %3824 = vmatprep.subr.bf16.mxu0 %v2428
        %3825 = vmatpush1.bf16.msra.mxu0 %v2427
        %3826 = vmatprep.subr.bf16.mxu0 %v2446
        %3827 = vmatpush1.bf16.msra.mxu0 %v2445
        %3828 = vmatprep.subr.bf16.mxu0 %v2464
        %3829 = vmatpush1.bf16.msra.mxu0 %v2463
        %3830 = vmatprep.subr.bf16.mxu0 %v2482
        %3831 = vmatpush1.bf16.msra.mxu0 %v2481
        %3832 = vmatprep.subr.bf16.mxu0 %v2500
        %3833 = vmatpush1.bf16.msra.mxu0 %v2499
        %3834 = vmatprep.subr.bf16.mxu0 %v2518
        %3835 = vmatpush1.bf16.msra.mxu0 %v2517
        %3836 = vmatprep.mubr.bf16.mxu0 %v3721
        %3837 = vmatmul.mubr.bf16.gmra.mrb[0].mxu0 %v3720
        %v3838 = vpop.f32.mrb[0].mxu0
        %v3839 = vadd.f32 0.0, %v3838
        %v3840 = vpop.f32.mrb[0].mxu0
        %v3841 = vadd.f32 0.0, %v3840
        %v3842 = vpop.f32.mrb[0].mxu0
        %v3843 = vpop.f32.mrb[0].mxu0
        %3844 = vdwg.mxu0
        %3845 = vmatprep.subr.bf16.mxu0 %v2250
        %3846 = vmatpush1.bf16.msra.mxu0 %v2249
        %3847 = vmatprep.subr.bf16.mxu0 %v2268
        %3848 = vmatpush1.bf16.msra.mxu0 %v2267
        %3849 = vmatprep.subr.bf16.mxu0 %v2286
        %3850 = vmatpush1.bf16.msra.mxu0 %v2285
        %3851 = vmatprep.subr.bf16.mxu0 %v2304
        %3852 = vmatpush1.bf16.msra.mxu0 %v2303
        %3853 = vmatprep.subr.bf16.mxu0 %v2322
        %3854 = vmatpush1.bf16.msra.mxu0 %v2321
        %3855 = vmatprep.subr.bf16.mxu0 %v2340
        %3856 = vmatpush1.bf16.msra.mxu0 %v2339
        %3857 = vmatprep.subr.bf16.mxu0 %v2358
        %3858 = vmatpush1.bf16.msra.mxu0 %v2357
        %3859 = vmatprep.subr.bf16.mxu0 %v2376
        %3860 = vmatpush1.bf16.msra.mxu0 %v2375
        %3861 = vmatprep.subr.bf16.mxu0 %v2394
        %3862 = vmatpush1.bf16.msra.mxu0 %v2393
        %3863 = vmatprep.subr.bf16.mxu0 %v2412
        %3864 = vmatpush1.bf16.msra.mxu0 %v2411
        %3865 = vmatprep.subr.bf16.mxu0 %v2430
        %3866 = vmatpush1.bf16.msra.mxu0 %v2429
        %3867 = vmatprep.subr.bf16.mxu0 %v2448
        %3868 = vmatpush1.bf16.msra.mxu0 %v2447
        %3869 = vmatprep.subr.bf16.mxu0 %v2466
        %3870 = vmatpush1.bf16.msra.mxu0 %v2465
        %3871 = vmatprep.subr.bf16.mxu0 %v2484
        %3872 = vmatpush1.bf16.msra.mxu0 %v2483
        %3873 = vmatprep.subr.bf16.mxu0 %v2502
        %3874 = vmatpush1.bf16.msra.mxu0 %v2501
        %3875 = vmatprep.subr.bf16.mxu0 %v2520
        %3876 = vmatpush1.bf16.msra.mxu0 %v2519
        %3877 = vmatprep.mubr.bf16.mxu0 %v3721
        %3878 = vmatmul.mubr.bf16.gmra.mrb[0].mxu0 %v3720
        %v3879 = vpop.f32.mrb[0].mxu0
        %v3880 = vadd.f32 0.0, %v3879
        %v3881 = vpop.f32.mrb[0].mxu0
        %v3882 = vadd.f32 0.0, %v3881
        %v3883 = vpop.f32.mrb[0].mxu0
        %v3884 = vpop.f32.mrb[0].mxu0
        %3885 = vdwg.mxu0
        %3886 = vmatprep.subr.bf16.mxu0 %v2252
        %3887 = vmatpush1.bf16.msra.mxu0 %v2251
        %3888 = vmatprep.subr.bf16.mxu0 %v2270
        %3889 = vmatpush1.bf16.msra.mxu0 %v2269
        %3890 = vmatprep.subr.bf16.mxu0 %v2288
        %3891 = vmatpush1.bf16.msra.mxu0 %v2287
        %3892 = vmatprep.subr.bf16.mxu0 %v2306
        %3893 = vmatpush1.bf16.msra.mxu0 %v2305
        %3894 = vmatprep.subr.bf16.mxu0 %v2324
        %3895 = vmatpush1.bf16.msra.mxu0 %v2323
        %3896 = vmatprep.subr.bf16.mxu0 %v2342
        %3897 = vmatpush1.bf16.msra.mxu0 %v2341
        %3898 = vmatprep.subr.bf16.mxu0 %v2360
        %3899 = vmatpush1.bf16.msra.mxu0 %v2359
        %3900 = vmatprep.subr.bf16.mxu0 %v2378
        %3901 = vmatpush1.bf16.msra.mxu0 %v2377
        %3902 = vmatprep.subr.bf16.mxu0 %v2396
        %3903 = vmatpush1.bf16.msra.mxu0 %v2395
        %3904 = vmatprep.subr.bf16.mxu0 %v2414
        %3905 = vmatpush1.bf16.msra.mxu0 %v2413
        %3906 = vmatprep.subr.bf16.mxu0 %v2432
        %3907 = vmatpush1.bf16.msra.mxu0 %v2431
        %3908 = vmatprep.subr.bf16.mxu0 %v2450
        %3909 = vmatpush1.bf16.msra.mxu0 %v2449
        %3910 = vmatprep.subr.bf16.mxu0 %v2468
        %3911 = vmatpush1.bf16.msra.mxu0 %v2467
        %3912 = vmatprep.subr.bf16.mxu0 %v2486
        %3913 = vmatpush1.bf16.msra.mxu0 %v2485
        %3914 = vmatprep.subr.bf16.mxu0 %v2504
        %3915 = vmatpush1.bf16.msra.mxu0 %v2503
        %3916 = vmatprep.subr.bf16.mxu0 %v2522
        %3917 = vmatpush1.bf16.msra.mxu0 %v2521
        %3918 = vmatprep.mubr.bf16.mxu0 %v3721
        %3919 = vmatmul.mubr.bf16.gmra.mrb[0].mxu0 %v3720
        %v3920 = vpop.f32.mrb[0].mxu0
        %v3921 = vadd.f32 0.0, %v3920
        %v3922 = vpop.f32.mrb[0].mxu0
        %v3923 = vadd.f32 0.0, %v3922
        %v3924 = vpop.f32.mrb[0].mxu0
        %v3925 = vpop.f32.mrb[0].mxu0
        %3926 = vdwg.mxu0
        %3927 = vmatprep.subr.bf16.mxu0 %v2254
        %3928 = vmatpush1.bf16.msra.mxu0 %v2253
        %3929 = vmatprep.subr.bf16.mxu0 %v2272
        %3930 = vmatpush1.bf16.msra.mxu0 %v2271
        %3931 = vmatprep.subr.bf16.mxu0 %v2290
        %3932 = vmatpush1.bf16.msra.mxu0 %v2289
        %3933 = vmatprep.subr.bf16.mxu0 %v2308
        %3934 = vmatpush1.bf16.msra.mxu0 %v2307
        %3935 = vmatprep.subr.bf16.mxu0 %v2326
        %3936 = vmatpush1.bf16.msra.mxu0 %v2325
        %3937 = vmatprep.subr.bf16.mxu0 %v2344
        %3938 = vmatpush1.bf16.msra.mxu0 %v2343
        %3939 = vmatprep.subr.bf16.mxu0 %v2362
        %3940 = vmatpush1.bf16.msra.mxu0 %v2361
        %3941 = vmatprep.subr.bf16.mxu0 %v2380
        %3942 = vmatpush1.bf16.msra.mxu0 %v2379
        %3943 = vmatprep.subr.bf16.mxu0 %v2398
        %3944 = vmatpush1.bf16.msra.mxu0 %v2397
        %3945 = vmatprep.subr.bf16.mxu0 %v2416
        %3946 = vmatpush1.bf16.msra.mxu0 %v2415
        %3947 = vmatprep.subr.bf16.mxu0 %v2434
        %3948 = vmatpush1.bf16.msra.mxu0 %v2433
        %3949 = vmatprep.subr.bf16.mxu0 %v2452
        %3950 = vmatpush1.bf16.msra.mxu0 %v2451
        %3951 = vmatprep.subr.bf16.mxu0 %v2470
        %3952 = vmatpush1.bf16.msra.mxu0 %v2469
        %3953 = vmatprep.subr.bf16.mxu0 %v2488
        %3954 = vmatpush1.bf16.msra.mxu0 %v2487
        %3955 = vmatprep.subr.bf16.mxu0 %v2506
        %3956 = vmatpush1.bf16.msra.mxu0 %v2505
        %3957 = vmatprep.subr.bf16.mxu0 %v2524
        %3958 = vmatpush1.bf16.msra.mxu0 %v2523
        %3959 = vmatprep.mubr.bf16.mxu0 %v3721
        %3960 = vmatmul.mubr.bf16.gmra.mrb[0].mxu0 %v3720
        %v3961 = vpop.f32.mrb[0].mxu0
        %v3962 = vadd.f32 0.0, %v3961
        %v3963 = vpop.f32.mrb[0].mxu0
        %v3964 = vadd.f32 0.0, %v3963
        %v3965 = vpop.f32.mrb[0].mxu0
        %v3966 = vpop.f32.mrb[0].mxu0
        %3967 = vdwg.mxu0
        %3968 = vmatprep.subr.bf16.mxu0 %v2256
        %3969 = vmatpush1.bf16.msra.mxu0 %v2255
        %3970 = vmatprep.subr.bf16.mxu0 %v2274
        %3971 = vmatpush1.bf16.msra.mxu0 %v2273
        %3972 = vmatprep.subr.bf16.mxu0 %v2292
        %3973 = vmatpush1.bf16.msra.mxu0 %v2291
        %3974 = vmatprep.subr.bf16.mxu0 %v2310
        %3975 = vmatpush1.bf16.msra.mxu0 %v2309
        %3976 = vmatprep.subr.bf16.mxu0 %v2328
        %3977 = vmatpush1.bf16.msra.mxu0 %v2327
        %3978 = vmatprep.subr.bf16.mxu0 %v2346
        %3979 = vmatpush1.bf16.msra.mxu0 %v2345
        %3980 = vmatprep.subr.bf16.mxu0 %v2364
        %3981 = vmatpush1.bf16.msra.mxu0 %v2363
        %3982 = vmatprep.subr.bf16.mxu0 %v2382
        %3983 = vmatpush1.bf16.msra.mxu0 %v2381
        %3984 = vmatprep.subr.bf16.mxu0 %v2400
        %3985 = vmatpush1.bf16.msra.mxu0 %v2399
        %3986 = vmatprep.subr.bf16.mxu0 %v2418
        %3987 = vmatpush1.bf16.msra.mxu0 %v2417
        %3988 = vmatprep.subr.bf16.mxu0 %v2436
        %3989 = vmatpush1.bf16.msra.mxu0 %v2435
        %3990 = vmatprep.subr.bf16.mxu0 %v2454
        %3991 = vmatpush1.bf16.msra.mxu0 %v2453
        %3992 = vmatprep.subr.bf16.mxu0 %v2472
        %3993 = vmatpush1.bf16.msra.mxu0 %v2471
        %3994 = vmatprep.subr.bf16.mxu0 %v2490
        %3995 = vmatpush1.bf16.msra.mxu0 %v2489
        %3996 = vmatprep.subr.bf16.mxu0 %v2508
        %3997 = vmatpush1.bf16.msra.mxu0 %v2507
        %3998 = vmatprep.subr.bf16.mxu0 %v2526
        %3999 = vmatpush1.bf16.msra.mxu0 %v2525
        %4000 = vmatprep.mubr.bf16.mxu0 %v3721
        %4001 = vmatmul.mubr.bf16.gmra.mrb[0].mxu0 %v3720
        %v4002 = vpop.f32.mrb[0].mxu0
        %v4003 = vadd.f32 0.0, %v4002
        %v4004 = vpop.f32.mrb[0].mxu0
        %v4005 = vadd.f32 0.0, %v4004
        %v4006 = vpop.f32.mrb[0].mxu0
        %v4007 = vpop.f32.mrb[0].mxu0
        %4008 = vdwg.mxu0
        %4009 = vmatprep.subr.bf16.mxu0 %v2258
        %4010 = vmatpush1.bf16.msra.mxu0 %v2257
        %4011 = vmatprep.subr.bf16.mxu0 %v2276
        %4012 = vmatpush1.bf16.msra.mxu0 %v2275
        %4013 = vmatprep.subr.bf16.mxu0 %v2294
        %4014 = vmatpush1.bf16.msra.mxu0 %v2293
        %4015 = vmatprep.subr.bf16.mxu0 %v2312
        %4016 = vmatpush1.bf16.msra.mxu0 %v2311
        %4017 = vmatprep.subr.bf16.mxu0 %v2330
        %4018 = vmatpush1.bf16.msra.mxu0 %v2329
        %4019 = vmatprep.subr.bf16.mxu0 %v2348
        %4020 = vmatpush1.bf16.msra.mxu0 %v2347
        %4021 = vmatprep.subr.bf16.mxu0 %v2366
        %4022 = vmatpush1.bf16.msra.mxu0 %v2365
        %4023 = vmatprep.subr.bf16.mxu0 %v2384
        %4024 = vmatpush1.bf16.msra.mxu0 %v2383
        %4025 = vmatprep.subr.bf16.mxu0 %v2402
        %4026 = vmatpush1.bf16.msra.mxu0 %v2401
        %4027 = vmatprep.subr.bf16.mxu0 %v2420
        %4028 = vmatpush1.bf16.msra.mxu0 %v2419
        %4029 = vmatprep.subr.bf16.mxu0 %v2438
        %4030 = vmatpush1.bf16.msra.mxu0 %v2437
        %4031 = vmatprep.subr.bf16.mxu0 %v2456
        %4032 = vmatpush1.bf16.msra.mxu0 %v2455
        %4033 = vmatprep.subr.bf16.mxu0 %v2474
        %4034 = vmatpush1.bf16.msra.mxu0 %v2473
        %4035 = vmatprep.subr.bf16.mxu0 %v2492
        %4036 = vmatpush1.bf16.msra.mxu0 %v2491
        %4037 = vmatprep.subr.bf16.mxu0 %v2510
        %4038 = vmatpush1.bf16.msra.mxu0 %v2509
        %4039 = vmatprep.subr.bf16.mxu0 %v2528
        %4040 = vmatpush1.bf16.msra.mxu0 %v2527
        %4041 = vmatprep.mubr.bf16.mxu0 %v3721
        %4042 = vmatmul.mubr.bf16.gmra.mrb[0].mxu0 %v3720
        %v4043 = vpop.f32.mrb[0].mxu0
        %v4044 = vadd.f32 0.0, %v4043
        %v4045 = vpop.f32.mrb[0].mxu0
        %v4046 = vadd.f32 0.0, %v4045
        %v4047 = vpop.f32.mrb[0].mxu0
        %v4048 = vpop.f32.mrb[0].mxu0
        %4049 = vdwg.mxu0
        %4050 = vmatprep.subr.bf16.mxu0 %v2260
        %4051 = vmatpush1.bf16.msra.mxu0 %v2259
        %4052 = vmatprep.subr.bf16.mxu0 %v2278
        %4053 = vmatpush1.bf16.msra.mxu0 %v2277
        %4054 = vmatprep.subr.bf16.mxu0 %v2296
        %4055 = vmatpush1.bf16.msra.mxu0 %v2295
        %4056 = vmatprep.subr.bf16.mxu0 %v2314
        %4057 = vmatpush1.bf16.msra.mxu0 %v2313
        %4058 = vmatprep.subr.bf16.mxu0 %v2332
        %4059 = vmatpush1.bf16.msra.mxu0 %v2331
        %4060 = vmatprep.subr.bf16.mxu0 %v2350
        %4061 = vmatpush1.bf16.msra.mxu0 %v2349
        %4062 = vmatprep.subr.bf16.mxu0 %v2368
        %4063 = vmatpush1.bf16.msra.mxu0 %v2367
        %4064 = vmatprep.subr.bf16.mxu0 %v2386
        %4065 = vmatpush1.bf16.msra.mxu0 %v2385
        %4066 = vmatprep.subr.bf16.mxu0 %v2404
        %4067 = vmatpush1.bf16.msra.mxu0 %v2403
        %4068 = vmatprep.subr.bf16.mxu0 %v2422
        %4069 = vmatpush1.bf16.msra.mxu0 %v2421
        %4070 = vmatprep.subr.bf16.mxu0 %v2440
        %4071 = vmatpush1.bf16.msra.mxu0 %v2439
        %4072 = vmatprep.subr.bf16.mxu0 %v2458
        %4073 = vmatpush1.bf16.msra.mxu0 %v2457
        %4074 = vmatprep.subr.bf16.mxu0 %v2476
        %4075 = vmatpush1.bf16.msra.mxu0 %v2475
        %4076 = vmatprep.subr.bf16.mxu0 %v2494
        %4077 = vmatpush1.bf16.msra.mxu0 %v2493
        %4078 = vmatprep.subr.bf16.mxu0 %v2512
        %4079 = vmatpush1.bf16.msra.mxu0 %v2511
        %4080 = vmatprep.subr.bf16.mxu0 %v2530
        %4081 = vmatpush1.bf16.msra.mxu0 %v2529
        %4082 = vmatprep.mubr.bf16.mxu0 %v3721
        %4083 = vmatmul.mubr.bf16.gmra.mrb[0].mxu0 %v3720
        %v4084 = vpop.f32.mrb[0].mxu0
        %v4085 = vadd.f32 0.0, %v4084
        %v4086 = vpop.f32.mrb[0].mxu0
        %v4087 = vadd.f32 0.0, %v4086
        %v4088 = vpop.f32.mrb[0].mxu0
        %v4089 = vpop.f32.mrb[0].mxu0
        %4090 = vdwg.mxu0
        %v4091 = vld [vmem:[%s17] sm:$0xf]
        %v4092 = vpack.c.bf16 %v4091, %v4091
        %v4093 = vpack.c.bf16 %v3757, %v3757
        %v4094 = vpack.c.bf16 %v3759, %v3759
        %s4095 = scalar_lea.vmem %s17, 4
        %v4096 = vld [vmem:[%s4095] sm:$0xf]
        %v4097 = vpack.c.bf16 %v4096, %v4096
        %v4098 = vpack.c.bf16 %v3798, %v3798
        %v4099 = vpack.c.bf16 %v3800, %v3800
        %vm4100 = vcmask 64512
        %v4102 = vsel %vm4100, %v4097, 0
        %v4105 = vsel %vm1006, %v4098, 0
        %v4108 = vsel %vm1006, %v4099, 0
        %4110 = vmatprep.subr.bf16.mxu0 %v4108
        %4111 = vmatpush1.bf16.msra.mxu0 %v4105
        %4112 = vmatprep.subr.bf16.mxu0 0
        %4113 = vmatpush1.bf16.msra.mxu0 0
        %4114 = vmatprep.subr.bf16.mxu0 0
        %4115 = vmatpush1.bf16.msra.mxu0 0
        %4116 = vmatprep.subr.bf16.mxu0 0
        %4117 = vmatpush1.bf16.msra.mxu0 0
        %4118 = vmatprep.subr.bf16.mxu0 0
        %4119 = vmatpush1.bf16.msra.mxu0 0
        %4120 = vmatprep.subr.bf16.mxu0 0
        %4121 = vmatpush1.bf16.msra.mxu0 0
        %4122 = vmatprep.subr.bf16.mxu0 0
        %4123 = vmatpush1.bf16.msra.mxu0 0
        %4124 = vmatprep.subr.bf16.mxu0 0
        %4125 = vmatpush1.bf16.msra.mxu0 0
        %4126 = vmatprep.subr.bf16.mxu0 0
        %4127 = vmatpush1.bf16.msra.mxu0 0
        %4128 = vmatprep.subr.bf16.mxu0 0
        %4129 = vmatpush1.bf16.msra.mxu0 0
        %4130 = vmatprep.subr.bf16.mxu0 0
        %4131 = vmatpush1.bf16.msra.mxu0 0
        %4132 = vmatprep.subr.bf16.mxu0 0
        %4133 = vmatpush1.bf16.msra.mxu0 0
        %4134 = vmatprep.subr.bf16.mxu0 0
        %4135 = vmatpush1.bf16.msra.mxu0 0
        %4136 = vmatprep.subr.bf16.mxu0 0
        %4137 = vmatpush1.bf16.msra.mxu0 0
        %4138 = vmatprep.subr.bf16.mxu0 0
        %4139 = vmatpush1.bf16.msra.mxu0 0
        %4140 = vmatprep.subr.bf16.mxu0 0
        %4141 = vmatpush1.bf16.msra.mxu0 0
        %4142 = vmatprep.mubr.bf16.mxu0 0
        %4143 = vmatmul.mubr.bf16.gmra.mrb[0].mxu0 %v4102
        %v4144 = vpop.f32.mrb[0].mxu0
        %v4145 = vadd.f32 0.0, %v4144
        %v4146 = vpop.f32.mrb[0].mxu0
        %v4147 = vadd.f32 0.0, %v4146
        %v4148 = vpop.f32.mrb[0].mxu0
        %v4149 = vpop.f32.mrb[0].mxu0
        %4150 = vdwg.mxu0
        %v4152 = vsel %vm4100, %v4092, 0
        %v4155 = vsel %vm1006, %v4093, 0
        %v4158 = vsel %vm1006, %v4094, 0
        %4160 = vmatprep.subr.bf16.mxu0 %v4158
        %4161 = vmatpush1.bf16.msra.mxu0 %v4155
        %4162 = vmatprep.subr.bf16.mxu0 0
        %4163 = vmatpush1.bf16.msra.mxu0 0
        %4164 = vmatprep.subr.bf16.mxu0 0
        %4165 = vmatpush1.bf16.msra.mxu0 0
        %4166 = vmatprep.subr.bf16.mxu0 0
        %4167 = vmatpush1.bf16.msra.mxu0 0
        %4168 = vmatprep.subr.bf16.mxu0 0
        %4169 = vmatpush1.bf16.msra.mxu0 0
        %4170 = vmatprep.subr.bf16.mxu0 0
        %4171 = vmatpush1.bf16.msra.mxu0 0
        %4172 = vmatprep.subr.bf16.mxu0 0
        %4173 = vmatpush1.bf16.msra.mxu0 0
        %4174 = vmatprep.subr.bf16.mxu0 0
        %4175 = vmatpush1.bf16.msra.mxu0 0
        %4176 = vmatprep.subr.bf16.mxu0 0
        %4177 = vmatpush1.bf16.msra.mxu0 0
        %4178 = vmatprep.subr.bf16.mxu0 0
        %4179 = vmatpush1.bf16.msra.mxu0 0
        %4180 = vmatprep.subr.bf16.mxu0 0
        %4181 = vmatpush1.bf16.msra.mxu0 0
        %4182 = vmatprep.subr.bf16.mxu0 0
        %4183 = vmatpush1.bf16.msra.mxu0 0
        %4184 = vmatprep.subr.bf16.mxu0 0
        %4185 = vmatpush1.bf16.msra.mxu0 0
        %4186 = vmatprep.subr.bf16.mxu0 0
        %4187 = vmatpush1.bf16.msra.mxu0 0
        %4188 = vmatprep.subr.bf16.mxu0 0
        %4189 = vmatpush1.bf16.msra.mxu0 0
        %4190 = vmatprep.subr.bf16.mxu0 0
        %4191 = vmatpush1.bf16.msra.mxu0 0
        %4192 = vmatprep.mubr.bf16.mxu0 0
        %4193 = vmatmul.mubr.bf16.gmra.mrb[0].mxu0 %v4152
        %v4194 = vpop.f32.mrb[0].mxu0
        %v4195 = vadd.f32 %v4145, %v4194
        %v4196 = vpop.f32.mrb[0].mxu0
        %v4197 = vadd.f32 %v4147, %v4196
        %v4198 = vpop.f32.mrb[0].mxu0
        %v4199 = vpop.f32.mrb[0].mxu0
        %4200 = vdwg.mxu0
        %s4201 = scalar_lea.vmem %s17, 8
        %v4202 = vld [vmem:[%s4201] sm:$0xf]
        %v4203 = vpack.c.bf16 %v4202, %v4202
        %v4204 = vpack.c.bf16 %v3839, %v3839
        %v4205 = vpack.c.bf16 %v3841, %v3841
        %v4207 = vsel %vm4100, %v4203, 0
        %v4210 = vsel %vm1006, %v4204, 0
        %v4213 = vsel %vm1006, %v4205, 0
        %4215 = vmatprep.subr.bf16.mxu0 %v4213
        %4216 = vmatpush1.bf16.msra.mxu0 %v4210
        %4217 = vmatprep.subr.bf16.mxu0 0
        %4218 = vmatpush1.bf16.msra.mxu0 0
        %4219 = vmatprep.subr.bf16.mxu0 0
        %4220 = vmatpush1.bf16.msra.mxu0 0
        %4221 = vmatprep.subr.bf16.mxu0 0
        %4222 = vmatpush1.bf16.msra.mxu0 0
        %4223 = vmatprep.subr.bf16.mxu0 0
        %4224 = vmatpush1.bf16.msra.mxu0 0
        %4225 = vmatprep.subr.bf16.mxu0 0
        %4226 = vmatpush1.bf16.msra.mxu0 0
        %4227 = vmatprep.subr.bf16.mxu0 0
        %4228 = vmatpush1.bf16.msra.mxu0 0
        %4229 = vmatprep.subr.bf16.mxu0 0
        %4230 = vmatpush1.bf16.msra.mxu0 0
        %4231 = vmatprep.subr.bf16.mxu0 0
        %4232 = vmatpush1.bf16.msra.mxu0 0
        %4233 = vmatprep.subr.bf16.mxu0 0
        %4234 = vmatpush1.bf16.msra.mxu0 0
        %4235 = vmatprep.subr.bf16.mxu0 0
        %4236 = vmatpush1.bf16.msra.mxu0 0
        %4237 = vmatprep.subr.bf16.mxu0 0
        %4238 = vmatpush1.bf16.msra.mxu0 0
        %4239 = vmatprep.subr.bf16.mxu0 0
        %4240 = vmatpush1.bf16.msra.mxu0 0
        %4241 = vmatprep.subr.bf16.mxu0 0
        %4242 = vmatpush1.bf16.msra.mxu0 0
        %4243 = vmatprep.subr.bf16.mxu0 0
        %4244 = vmatpush1.bf16.msra.mxu0 0
        %4245 = vmatprep.subr.bf16.mxu0 0
        %4246 = vmatpush1.bf16.msra.mxu0 0
        %4247 = vmatprep.mubr.bf16.mxu0 0
        %4248 = vmatmul.mubr.bf16.gmra.mrb[0].mxu0 %v4207
        %v4249 = vpop.f32.mrb[0].mxu0
        %v4250 = vadd.f32 0.0, %v4249
        %v4251 = vpop.f32.mrb[0].mxu0
        %v4252 = vadd.f32 0.0, %v4251
        %v4253 = vpop.f32.mrb[0].mxu0
        %v4254 = vpop.f32.mrb[0].mxu0
        %4255 = vdwg.mxu0
        %v4256 = vadd.f32 %v4195, %v4250
        %v4257 = vadd.f32 %v4197, %v4252
        %s4258 = scalar_lea.vmem %s17, 12
        %v4259 = vld [vmem:[%s4258] sm:$0xf]
        %v4260 = vpack.c.bf16 %v4259, %v4259
        %v4261 = vpack.c.bf16 %v3880, %v3880
        %v4262 = vpack.c.bf16 %v3882, %v3882
        %v4264 = vsel %vm4100, %v4260, 0
        %v4267 = vsel %vm1006, %v4261, 0
        %v4270 = vsel %vm1006, %v4262, 0
        %4272 = vmatprep.subr.bf16.mxu0 %v4270
        %4273 = vmatpush1.bf16.msra.mxu0 %v4267
        %4274 = vmatprep.subr.bf16.mxu0 0
        %4275 = vmatpush1.bf16.msra.mxu0 0
        %4276 = vmatprep.subr.bf16.mxu0 0
        %4277 = vmatpush1.bf16.msra.mxu0 0
        %4278 = vmatprep.subr.bf16.mxu0 0
        %4279 = vmatpush1.bf16.msra.mxu0 0
        %4280 = vmatprep.subr.bf16.mxu0 0
        %4281 = vmatpush1.bf16.msra.mxu0 0
        %4282 = vmatprep.subr.bf16.mxu0 0
        %4283 = vmatpush1.bf16.msra.mxu0 0
        %4284 = vmatprep.subr.bf16.mxu0 0
        %4285 = vmatpush1.bf16.msra.mxu0 0
        %4286 = vmatprep.subr.bf16.mxu0 0
        %4287 = vmatpush1.bf16.msra.mxu0 0
        %4288 = vmatprep.subr.bf16.mxu0 0
        %4289 = vmatpush1.bf16.msra.mxu0 0
        %4290 = vmatprep.subr.bf16.mxu0 0
        %4291 = vmatpush1.bf16.msra.mxu0 0
        %4292 = vmatprep.subr.bf16.mxu0 0
        %4293 = vmatpush1.bf16.msra.mxu0 0
        %4294 = vmatprep.subr.bf16.mxu0 0
        %4295 = vmatpush1.bf16.msra.mxu0 0
        %4296 = vmatprep.subr.bf16.mxu0 0
        %4297 = vmatpush1.bf16.msra.mxu0 0
        %4298 = vmatprep.subr.bf16.mxu0 0
        %4299 = vmatpush1.bf16.msra.mxu0 0
        %4300 = vmatprep.subr.bf16.mxu0 0
        %4301 = vmatpush1.bf16.msra.mxu0 0
        %4302 = vmatprep.subr.bf16.mxu0 0
        %4303 = vmatpush1.bf16.msra.mxu0 0
        %4304 = vmatprep.mubr.bf16.mxu0 0
        %4305 = vmatmul.mubr.bf16.gmra.mrb[0].mxu0 %v4264
        %v4306 = vpop.f32.mrb[0].mxu0
        %v4307 = vadd.f32 0.0, %v4306
        %v4308 = vpop.f32.mrb[0].mxu0
        %v4309 = vadd.f32 0.0, %v4308
        %v4310 = vpop.f32.mrb[0].mxu0
        %v4311 = vpop.f32.mrb[0].mxu0
        %4312 = vdwg.mxu0
        %v4313 = vadd.f32 %v4256, %v4307
        %v4314 = vadd.f32 %v4257, %v4309
        %s4315 = scalar_lea.vmem %s17, 16
        %v4316 = vld [vmem:[%s4315] sm:$0xf]
        %v4317 = vpack.c.bf16 %v4316, %v4316
        %v4318 = vpack.c.bf16 %v3921, %v3921
        %v4319 = vpack.c.bf16 %v3923, %v3923
        %v4321 = vsel %vm4100, %v4317, 0
        %v4324 = vsel %vm1006, %v4318, 0
        %v4327 = vsel %vm1006, %v4319, 0
        %4329 = vmatprep.subr.bf16.mxu0 %v4327
        %4330 = vmatpush1.bf16.msra.mxu0 %v4324
        %4331 = vmatprep.subr.bf16.mxu0 0
        %4332 = vmatpush1.bf16.msra.mxu0 0
        %4333 = vmatprep.subr.bf16.mxu0 0
        %4334 = vmatpush1.bf16.msra.mxu0 0
        %4335 = vmatprep.subr.bf16.mxu0 0
        %4336 = vmatpush1.bf16.msra.mxu0 0
        %4337 = vmatprep.subr.bf16.mxu0 0
        %4338 = vmatpush1.bf16.msra.mxu0 0
        %4339 = vmatprep.subr.bf16.mxu0 0
        %4340 = vmatpush1.bf16.msra.mxu0 0
        %4341 = vmatprep.subr.bf16.mxu0 0
        %4342 = vmatpush1.bf16.msra.mxu0 0
        %4343 = vmatprep.subr.bf16.mxu0 0
        %4344 = vmatpush1.bf16.msra.mxu0 0
        %4345 = vmatprep.subr.bf16.mxu0 0
        %4346 = vmatpush1.bf16.msra.mxu0 0
        %4347 = vmatprep.subr.bf16.mxu0 0
        %4348 = vmatpush1.bf16.msra.mxu0 0
        %4349 = vmatprep.subr.bf16.mxu0 0
        %4350 = vmatpush1.bf16.msra.mxu0 0
        %4351 = vmatprep.subr.bf16.mxu0 0
        %4352 = vmatpush1.bf16.msra.mxu0 0
        %4353 = vmatprep.subr.bf16.mxu0 0
        %4354 = vmatpush1.bf16.msra.mxu0 0
        %4355 = vmatprep.subr.bf16.mxu0 0
        %4356 = vmatpush1.bf16.msra.mxu0 0
        %4357 = vmatprep.subr.bf16.mxu0 0
        %4358 = vmatpush1.bf16.msra.mxu0 0
        %4359 = vmatprep.subr.bf16.mxu0 0
        %4360 = vmatpush1.bf16.msra.mxu0 0
        %4361 = vmatprep.mubr.bf16.mxu0 0
        %4362 = vmatmul.mubr.bf16.gmra.mrb[0].mxu0 %v4321
        %v4363 = vpop.f32.mrb[0].mxu0
        %v4364 = vadd.f32 0.0, %v4363
        %v4365 = vpop.f32.mrb[0].mxu0
        %v4366 = vadd.f32 0.0, %v4365
        %v4367 = vpop.f32.mrb[0].mxu0
        %v4368 = vpop.f32.mrb[0].mxu0
        %4369 = vdwg.mxu0
        %v4370 = vadd.f32 %v4313, %v4364
        %v4371 = vadd.f32 %v4314, %v4366
        %s4372 = scalar_lea.vmem %s17, 20
        %v4373 = vld [vmem:[%s4372] sm:$0xf]
        %v4374 = vpack.c.bf16 %v4373, %v4373
        %v4375 = vpack.c.bf16 %v3962, %v3962
        %v4376 = vpack.c.bf16 %v3964, %v3964
        %v4378 = vsel %vm4100, %v4374, 0
        %v4381 = vsel %vm1006, %v4375, 0
        %v4384 = vsel %vm1006, %v4376, 0
        %4386 = vmatprep.subr.bf16.mxu0 %v4384
        %4387 = vmatpush1.bf16.msra.mxu0 %v4381
        %4388 = vmatprep.subr.bf16.mxu0 0
        %4389 = vmatpush1.bf16.msra.mxu0 0
        %4390 = vmatprep.subr.bf16.mxu0 0
        %4391 = vmatpush1.bf16.msra.mxu0 0
        %4392 = vmatprep.subr.bf16.mxu0 0
        %4393 = vmatpush1.bf16.msra.mxu0 0
        %4394 = vmatprep.subr.bf16.mxu0 0
        %4395 = vmatpush1.bf16.msra.mxu0 0
        %4396 = vmatprep.subr.bf16.mxu0 0
        %4397 = vmatpush1.bf16.msra.mxu0 0
        %4398 = vmatprep.subr.bf16.mxu0 0
        %4399 = vmatpush1.bf16.msra.mxu0 0
        %4400 = vmatprep.subr.bf16.mxu0 0
        %4401 = vmatpush1.bf16.msra.mxu0 0
        %4402 = vmatprep.subr.bf16.mxu0 0
        %4403 = vmatpush1.bf16.msra.mxu0 0
        %4404 = vmatprep.subr.bf16.mxu0 0
        %4405 = vmatpush1.bf16.msra.mxu0 0
        %4406 = vmatprep.subr.bf16.mxu0 0
        %4407 = vmatpush1.bf16.msra.mxu0 0
        %4408 = vmatprep.subr.bf16.mxu0 0
        %4409 = vmatpush1.bf16.msra.mxu0 0
        %4410 = vmatprep.subr.bf16.mxu0 0
        %4411 = vmatpush1.bf16.msra.mxu0 0
        %4412 = vmatprep.subr.bf16.mxu0 0
        %4413 = vmatpush1.bf16.msra.mxu0 0
        %4414 = vmatprep.subr.bf16.mxu0 0
        %4415 = vmatpush1.bf16.msra.mxu0 0
        %4416 = vmatprep.subr.bf16.mxu0 0
        %4417 = vmatpush1.bf16.msra.mxu0 0
        %4418 = vmatprep.mubr.bf16.mxu0 0
        %4419 = vmatmul.mubr.bf16.gmra.mrb[0].mxu0 %v4378
        %v4420 = vpop.f32.mrb[0].mxu0
        %v4421 = vadd.f32 0.0, %v4420
        %v4422 = vpop.f32.mrb[0].mxu0
        %v4423 = vadd.f32 0.0, %v4422
        %v4424 = vpop.f32.mrb[0].mxu0
        %v4425 = vpop.f32.mrb[0].mxu0
        %4426 = vdwg.mxu0
        %v4427 = vadd.f32 %v4370, %v4421
        %v4428 = vadd.f32 %v4371, %v4423
        %s4429 = scalar_lea.vmem %s17, 24
        %v4430 = vld [vmem:[%s4429] sm:$0xf]
        %v4431 = vpack.c.bf16 %v4430, %v4430
        %v4432 = vpack.c.bf16 %v4003, %v4003
        %v4433 = vpack.c.bf16 %v4005, %v4005
        %v4435 = vsel %vm4100, %v4431, 0
        %v4438 = vsel %vm1006, %v4432, 0
        %v4441 = vsel %vm1006, %v4433, 0
        %4443 = vmatprep.subr.bf16.mxu0 %v4441
        %4444 = vmatpush1.bf16.msra.mxu0 %v4438
        %4445 = vmatprep.subr.bf16.mxu0 0
        %4446 = vmatpush1.bf16.msra.mxu0 0
        %4447 = vmatprep.subr.bf16.mxu0 0
        %4448 = vmatpush1.bf16.msra.mxu0 0
        %4449 = vmatprep.subr.bf16.mxu0 0
        %4450 = vmatpush1.bf16.msra.mxu0 0
        %4451 = vmatprep.subr.bf16.mxu0 0
        %4452 = vmatpush1.bf16.msra.mxu0 0
        %4453 = vmatprep.subr.bf16.mxu0 0
        %4454 = vmatpush1.bf16.msra.mxu0 0
        %4455 = vmatprep.subr.bf16.mxu0 0
        %4456 = vmatpush1.bf16.msra.mxu0 0
        %4457 = vmatprep.subr.bf16.mxu0 0
        %4458 = vmatpush1.bf16.msra.mxu0 0
        %4459 = vmatprep.subr.bf16.mxu0 0
        %4460 = vmatpush1.bf16.msra.mxu0 0
        %4461 = vmatprep.subr.bf16.mxu0 0
        %4462 = vmatpush1.bf16.msra.mxu0 0
        %4463 = vmatprep.subr.bf16.mxu0 0
        %4464 = vmatpush1.bf16.msra.mxu0 0
        %4465 = vmatprep.subr.bf16.mxu0 0
        %4466 = vmatpush1.bf16.msra.mxu0 0
        %4467 = vmatprep.subr.bf16.mxu0 0
        %4468 = vmatpush1.bf16.msra.mxu0 0
        %4469 = vmatprep.subr.bf16.mxu0 0
        %4470 = vmatpush1.bf16.msra.mxu0 0
        %4471 = vmatprep.subr.bf16.mxu0 0
        %4472 = vmatpush1.bf16.msra.mxu0 0
        %4473 = vmatprep.subr.bf16.mxu0 0
        %4474 = vmatpush1.bf16.msra.mxu0 0
        %4475 = vmatprep.mubr.bf16.mxu0 0
        %4476 = vmatmul.mubr.bf16.gmra.mrb[0].mxu0 %v4435
        %v4477 = vpop.f32.mrb[0].mxu0
        %v4478 = vadd.f32 0.0, %v4477
        %v4479 = vpop.f32.mrb[0].mxu0
        %v4480 = vadd.f32 0.0, %v4479
        %v4481 = vpop.f32.mrb[0].mxu0
        %v4482 = vpop.f32.mrb[0].mxu0
        %4483 = vdwg.mxu0
        %v4484 = vadd.f32 %v4427, %v4478
        %v4485 = vadd.f32 %v4428, %v4480
        %s4486 = scalar_lea.vmem %s17, 28
        %v4487 = vld [vmem:[%s4486] sm:$0xf]
        %v4488 = vpack.c.bf16 %v4487, %v4487
        %v4489 = vpack.c.bf16 %v4044, %v4044
        %v4490 = vpack.c.bf16 %v4046, %v4046
        %v4492 = vsel %vm4100, %v4488, 0
        %v4495 = vsel %vm1006, %v4489, 0
        %v4498 = vsel %vm1006, %v4490, 0
        %4500 = vmatprep.subr.bf16.mxu0 %v4498
        %4501 = vmatpush1.bf16.msra.mxu0 %v4495
        %4502 = vmatprep.subr.bf16.mxu0 0
        %4503 = vmatpush1.bf16.msra.mxu0 0
        %4504 = vmatprep.subr.bf16.mxu0 0
        %4505 = vmatpush1.bf16.msra.mxu0 0
        %4506 = vmatprep.subr.bf16.mxu0 0
        %4507 = vmatpush1.bf16.msra.mxu0 0
        %4508 = vmatprep.subr.bf16.mxu0 0
        %4509 = vmatpush1.bf16.msra.mxu0 0
        %4510 = vmatprep.subr.bf16.mxu0 0
        %4511 = vmatpush1.bf16.msra.mxu0 0
        %4512 = vmatprep.subr.bf16.mxu0 0
        %4513 = vmatpush1.bf16.msra.mxu0 0
        %4514 = vmatprep.subr.bf16.mxu0 0
        %4515 = vmatpush1.bf16.msra.mxu0 0
        %4516 = vmatprep.subr.bf16.mxu0 0
        %4517 = vmatpush1.bf16.msra.mxu0 0
        %4518 = vmatprep.subr.bf16.mxu0 0
        %4519 = vmatpush1.bf16.msra.mxu0 0
        %4520 = vmatprep.subr.bf16.mxu0 0
        %4521 = vmatpush1.bf16.msra.mxu0 0
        %4522 = vmatprep.subr.bf16.mxu0 0
        %4523 = vmatpush1.bf16.msra.mxu0 0
        %4524 = vmatprep.subr.bf16.mxu0 0
        %4525 = vmatpush1.bf16.msra.mxu0 0
        %4526 = vmatprep.subr.bf16.mxu0 0
        %4527 = vmatpush1.bf16.msra.mxu0 0
        %4528 = vmatprep.subr.bf16.mxu0 0
        %4529 = vmatpush1.bf16.msra.mxu0 0
        %4530 = vmatprep.subr.bf16.mxu0 0
        %4531 = vmatpush1.bf16.msra.mxu0 0
        %4532 = vmatprep.mubr.bf16.mxu0 0
        %4533 = vmatmul.mubr.bf16.gmra.mrb[0].mxu0 %v4492
        %v4534 = vpop.f32.mrb[0].mxu0
        %v4535 = vadd.f32 0.0, %v4534
        %v4536 = vpop.f32.mrb[0].mxu0
        %v4537 = vadd.f32 0.0, %v4536
        %v4538 = vpop.f32.mrb[0].mxu0
        %v4539 = vpop.f32.mrb[0].mxu0
        %4540 = vdwg.mxu0
        %v4541 = vadd.f32 %v4484, %v4535
        %v4542 = vadd.f32 %v4485, %v4537
        %s4543 = scalar_lea.vmem %s17, 32
        %v4544 = vld [vmem:[%s4543] sm:$0xf]
        %v4545 = vpack.c.bf16 %v4544, %v4544
        %v4546 = vpack.c.bf16 %v4085, %v4085
        %v4547 = vpack.c.bf16 %v4087, %v4087
        %v4549 = vsel %vm4100, %v4545, 0
        %v4552 = vsel %vm1006, %v4546, 0
        %v4555 = vsel %vm1006, %v4547, 0
        %4557 = vmatprep.subr.bf16.mxu0 %v4555
        %4558 = vmatpush1.bf16.msra.mxu0 %v4552
        %4559 = vmatprep.subr.bf16.mxu0 0
        %4560 = vmatpush1.bf16.msra.mxu0 0
        %4561 = vmatprep.subr.bf16.mxu0 0
        %4562 = vmatpush1.bf16.msra.mxu0 0
        %4563 = vmatprep.subr.bf16.mxu0 0
        %4564 = vmatpush1.bf16.msra.mxu0 0
        %4565 = vmatprep.subr.bf16.mxu0 0
        %4566 = vmatpush1.bf16.msra.mxu0 0
        %4567 = vmatprep.subr.bf16.mxu0 0
        %4568 = vmatpush1.bf16.msra.mxu0 0
        %4569 = vmatprep.subr.bf16.mxu0 0
        %4570 = vmatpush1.bf16.msra.mxu0 0
        %4571 = vmatprep.subr.bf16.mxu0 0
        %4572 = vmatpush1.bf16.msra.mxu0 0
        %4573 = vmatprep.subr.bf16.mxu0 0
        %4574 = vmatpush1.bf16.msra.mxu0 0
        %4575 = vmatprep.subr.bf16.mxu0 0
        %4576 = vmatpush1.bf16.msra.mxu0 0
        %4577 = vmatprep.subr.bf16.mxu0 0
        %4578 = vmatpush1.bf16.msra.mxu0 0
        %4579 = vmatprep.subr.bf16.mxu0 0
        %4580 = vmatpush1.bf16.msra.mxu0 0
        %4581 = vmatprep.subr.bf16.mxu0 0
        %4582 = vmatpush1.bf16.msra.mxu0 0
        %4583 = vmatprep.subr.bf16.mxu0 0
        %4584 = vmatpush1.bf16.msra.mxu0 0
        %4585 = vmatprep.subr.bf16.mxu0 0
        %4586 = vmatpush1.bf16.msra.mxu0 0
        %4587 = vmatprep.subr.bf16.mxu0 0
        %4588 = vmatpush1.bf16.msra.mxu0 0
        %4589 = vmatprep.mubr.bf16.mxu0 0
        %4590 = vmatmul.mubr.bf16.gmra.mrb[0].mxu0 %v4549
        %v4591 = vpop.f32.mrb[0].mxu0
        %v4592 = vadd.f32 0.0, %v4591
        %v4593 = vpop.f32.mrb[0].mxu0
        %v4594 = vadd.f32 0.0, %v4593
        %v4595 = vpop.f32.mrb[0].mxu0
        %v4596 = vpop.f32.mrb[0].mxu0
        %4597 = vdwg.mxu0
        %v4598 = vadd.f32 %v4541, %v4592
        %v4599 = vadd.f32 %v4542, %v4594
        %v4600 = vld [vmem:[%s19] sm:$0xf]
        %4602 = vset.pattern.permute.xlu0 0
        %4603 = vperm.xlu0 %4602, %v4600
        %v4604 = vpop.permute.xlu0 %4603
        %v4606 = vadd.f32 %v4598, %v4604
        %v4607 = vadd.f32 %v4599, %v4604
        %v4608 = vld [vmem:[%s21] sm:$0xf]
        %v4609 = vpack.c.bf16 %v4608, %v4608
        %s4610 = scalar_lea.vmem %s21, 4
        %v4611 = vld [vmem:[%s4610] sm:$0xf]
        %v4612 = vpack.c.bf16 %v4611, %v4611
        %v4614 = vsel %vm4100, %v4612, 0
        %4616 = vmatprep.subr.bf16.mxu0 %v4108
        %4617 = vmatpush1.bf16.msra.mxu0 %v4105
        %4618 = vmatprep.subr.bf16.mxu0 0
        %4619 = vmatpush1.bf16.msra.mxu0 0
        %4620 = vmatprep.subr.bf16.mxu0 0
        %4621 = vmatpush1.bf16.msra.mxu0 0
        %4622 = vmatprep.subr.bf16.mxu0 0
        %4623 = vmatpush1.bf16.msra.mxu0 0
        %4624 = vmatprep.subr.bf16.mxu0 0
        %4625 = vmatpush1.bf16.msra.mxu0 0
        %4626 = vmatprep.subr.bf16.mxu0 0
        %4627 = vmatpush1.bf16.msra.mxu0 0
        %4628 = vmatprep.subr.bf16.mxu0 0
        %4629 = vmatpush1.bf16.msra.mxu0 0
        %4630 = vmatprep.subr.bf16.mxu0 0
        %4631 = vmatpush1.bf16.msra.mxu0 0
        %4632 = vmatprep.subr.bf16.mxu0 0
        %4633 = vmatpush1.bf16.msra.mxu0 0
        %4634 = vmatprep.subr.bf16.mxu0 0
        %4635 = vmatpush1.bf16.msra.mxu0 0
        %4636 = vmatprep.subr.bf16.mxu0 0
        %4637 = vmatpush1.bf16.msra.mxu0 0
        %4638 = vmatprep.subr.bf16.mxu0 0
        %4639 = vmatpush1.bf16.msra.mxu0 0
        %4640 = vmatprep.subr.bf16.mxu0 0
        %4641 = vmatpush1.bf16.msra.mxu0 0
        %4642 = vmatprep.subr.bf16.mxu0 0
        %4643 = vmatpush1.bf16.msra.mxu0 0
        %4644 = vmatprep.subr.bf16.mxu0 0
        %4645 = vmatpush1.bf16.msra.mxu0 0
        %4646 = vmatprep.subr.bf16.mxu0 0
        %4647 = vmatpush1.bf16.msra.mxu0 0
        %4648 = vmatprep.mubr.bf16.mxu0 0
        %4649 = vmatmul.mubr.bf16.gmra.mrb[0].mxu0 %v4614
        %v4650 = vpop.f32.mrb[0].mxu0
        %v4651 = vadd.f32 0.0, %v4650
        %v4652 = vpop.f32.mrb[0].mxu0
        %v4653 = vadd.f32 0.0, %v4652
        %v4654 = vpop.f32.mrb[0].mxu0
        %v4655 = vpop.f32.mrb[0].mxu0
        %4656 = vdwg.mxu0
        %v4658 = vsel %vm4100, %v4609, 0
        %4660 = vmatprep.subr.bf16.mxu0 %v4158
        %4661 = vmatpush1.bf16.msra.mxu0 %v4155
        %4662 = vmatprep.subr.bf16.mxu0 0
        %4663 = vmatpush1.bf16.msra.mxu0 0
        %4664 = vmatprep.subr.bf16.mxu0 0
        %4665 = vmatpush1.bf16.msra.mxu0 0
        %4666 = vmatprep.subr.bf16.mxu0 0
        %4667 = vmatpush1.bf16.msra.mxu0 0
        %4668 = vmatprep.subr.bf16.mxu0 0
        %4669 = vmatpush1.bf16.msra.mxu0 0
        %4670 = vmatprep.subr.bf16.mxu0 0
        %4671 = vmatpush1.bf16.msra.mxu0 0
        %4672 = vmatprep.subr.bf16.mxu0 0
        %4673 = vmatpush1.bf16.msra.mxu0 0
        %4674 = vmatprep.subr.bf16.mxu0 0
        %4675 = vmatpush1.bf16.msra.mxu0 0
        %4676 = vmatprep.subr.bf16.mxu0 0
        %4677 = vmatpush1.bf16.msra.mxu0 0
        %4678 = vmatprep.subr.bf16.mxu0 0
        %4679 = vmatpush1.bf16.msra.mxu0 0
        %4680 = vmatprep.subr.bf16.mxu0 0
        %4681 = vmatpush1.bf16.msra.mxu0 0
        %4682 = vmatprep.subr.bf16.mxu0 0
        %4683 = vmatpush1.bf16.msra.mxu0 0
        %4684 = vmatprep.subr.bf16.mxu0 0
        %4685 = vmatpush1.bf16.msra.mxu0 0
        %4686 = vmatprep.subr.bf16.mxu0 0
        %4687 = vmatpush1.bf16.msra.mxu0 0
        %4688 = vmatprep.subr.bf16.mxu0 0
        %4689 = vmatpush1.bf16.msra.mxu0 0
        %4690 = vmatprep.subr.bf16.mxu0 0
        %4691 = vmatpush1.bf16.msra.mxu0 0
        %4692 = vmatprep.mubr.bf16.mxu0 0
        %4693 = vmatmul.mubr.bf16.gmra.mrb[0].mxu0 %v4658
        %v4694 = vpop.f32.mrb[0].mxu0
        %v4695 = vadd.f32 %v4651, %v4694
        %v4696 = vpop.f32.mrb[0].mxu0
        %v4697 = vadd.f32 %v4653, %v4696
        %v4698 = vpop.f32.mrb[0].mxu0
        %v4699 = vpop.f32.mrb[0].mxu0
        %4700 = vdwg.mxu0
        %s4701 = scalar_lea.vmem %s21, 8
        %v4702 = vld [vmem:[%s4701] sm:$0xf]
        %v4703 = vpack.c.bf16 %v4702, %v4702
        %v4705 = vsel %vm4100, %v4703, 0
        %4707 = vmatprep.subr.bf16.mxu0 %v4213
        %4708 = vmatpush1.bf16.msra.mxu0 %v4210
        %4709 = vmatprep.subr.bf16.mxu0 0
        %4710 = vmatpush1.bf16.msra.mxu0 0
        %4711 = vmatprep.subr.bf16.mxu0 0
        %4712 = vmatpush1.bf16.msra.mxu0 0
        %4713 = vmatprep.subr.bf16.mxu0 0
        %4714 = vmatpush1.bf16.msra.mxu0 0
        %4715 = vmatprep.subr.bf16.mxu0 0
        %4716 = vmatpush1.bf16.msra.mxu0 0
        %4717 = vmatprep.subr.bf16.mxu0 0
        %4718 = vmatpush1.bf16.msra.mxu0 0
        %4719 = vmatprep.subr.bf16.mxu0 0
        %4720 = vmatpush1.bf16.msra.mxu0 0
        %4721 = vmatprep.subr.bf16.mxu0 0
        %4722 = vmatpush1.bf16.msra.mxu0 0
        %4723 = vmatprep.subr.bf16.mxu0 0
        %4724 = vmatpush1.bf16.msra.mxu0 0
        %4725 = vmatprep.subr.bf16.mxu0 0
        %4726 = vmatpush1.bf16.msra.mxu0 0
        %4727 = vmatprep.subr.bf16.mxu0 0
        %4728 = vmatpush1.bf16.msra.mxu0 0
        %4729 = vmatprep.subr.bf16.mxu0 0
        %4730 = vmatpush1.bf16.msra.mxu0 0
        %4731 = vmatprep.subr.bf16.mxu0 0
        %4732 = vmatpush1.bf16.msra.mxu0 0
        %4733 = vmatprep.subr.bf16.mxu0 0
        %4734 = vmatpush1.bf16.msra.mxu0 0
        %4735 = vmatprep.subr.bf16.mxu0 0
        %4736 = vmatpush1.bf16.msra.mxu0 0
        %4737 = vmatprep.subr.bf16.mxu0 0
        %4738 = vmatpush1.bf16.msra.mxu0 0
        %4739 = vmatprep.mubr.bf16.mxu0 0
        %4740 = vmatmul.mubr.bf16.gmra.mrb[0].mxu0 %v4705
        %v4741 = vpop.f32.mrb[0].mxu0
        %v4742 = vadd.f32 0.0, %v4741
        %v4743 = vpop.f32.mrb[0].mxu0
        %v4744 = vadd.f32 0.0, %v4743
        %v4745 = vpop.f32.mrb[0].mxu0
        %v4746 = vpop.f32.mrb[0].mxu0
        %4747 = vdwg.mxu0
        %v4748 = vadd.f32 %v4695, %v4742
        %v4749 = vadd.f32 %v4697, %v4744
        %s4750 = scalar_lea.vmem %s21, 12
        %v4751 = vld [vmem:[%s4750] sm:$0xf]
        %v4752 = vpack.c.bf16 %v4751, %v4751
        %v4754 = vsel %vm4100, %v4752, 0
        %4756 = vmatprep.subr.bf16.mxu0 %v4270
        %4757 = vmatpush1.bf16.msra.mxu0 %v4267
        %4758 = vmatprep.subr.bf16.mxu0 0
        %4759 = vmatpush1.bf16.msra.mxu0 0
        %4760 = vmatprep.subr.bf16.mxu0 0
        %4761 = vmatpush1.bf16.msra.mxu0 0
        %4762 = vmatprep.subr.bf16.mxu0 0
        %4763 = vmatpush1.bf16.msra.mxu0 0
        %4764 = vmatprep.subr.bf16.mxu0 0
        %4765 = vmatpush1.bf16.msra.mxu0 0
        %4766 = vmatprep.subr.bf16.mxu0 0
        %4767 = vmatpush1.bf16.msra.mxu0 0
        %4768 = vmatprep.subr.bf16.mxu0 0
        %4769 = vmatpush1.bf16.msra.mxu0 0
        %4770 = vmatprep.subr.bf16.mxu0 0
        %4771 = vmatpush1.bf16.msra.mxu0 0
        %4772 = vmatprep.subr.bf16.mxu0 0
        %4773 = vmatpush1.bf16.msra.mxu0 0
        %4774 = vmatprep.subr.bf16.mxu0 0
        %4775 = vmatpush1.bf16.msra.mxu0 0
        %4776 = vmatprep.subr.bf16.mxu0 0
        %4777 = vmatpush1.bf16.msra.mxu0 0
        %4778 = vmatprep.subr.bf16.mxu0 0
        %4779 = vmatpush1.bf16.msra.mxu0 0
        %4780 = vmatprep.subr.bf16.mxu0 0
        %4781 = vmatpush1.bf16.msra.mxu0 0
        %4782 = vmatprep.subr.bf16.mxu0 0
        %4783 = vmatpush1.bf16.msra.mxu0 0
        %4784 = vmatprep.subr.bf16.mxu0 0
        %4785 = vmatpush1.bf16.msra.mxu0 0
        %4786 = vmatprep.subr.bf16.mxu0 0
        %4787 = vmatpush1.bf16.msra.mxu0 0
        %4788 = vmatprep.mubr.bf16.mxu0 0
        %4789 = vmatmul.mubr.bf16.gmra.mrb[0].mxu0 %v4754
        %v4790 = vpop.f32.mrb[0].mxu0
        %v4791 = vadd.f32 0.0, %v4790
        %v4792 = vpop.f32.mrb[0].mxu0
        %v4793 = vadd.f32 0.0, %v4792
        %v4794 = vpop.f32.mrb[0].mxu0
        %v4795 = vpop.f32.mrb[0].mxu0
        %4796 = vdwg.mxu0
        %v4797 = vadd.f32 %v4748, %v4791
        %v4798 = vadd.f32 %v4749, %v4793
        %s4799 = scalar_lea.vmem %s21, 16
        %v4800 = vld [vmem:[%s4799] sm:$0xf]
        %v4801 = vpack.c.bf16 %v4800, %v4800
        %v4803 = vsel %vm4100, %v4801, 0
        %4805 = vmatprep.subr.bf16.mxu0 %v4327
        %4806 = vmatpush1.bf16.msra.mxu0 %v4324
        %4807 = vmatprep.subr.bf16.mxu0 0
        %4808 = vmatpush1.bf16.msra.mxu0 0
        %4809 = vmatprep.subr.bf16.mxu0 0
        %4810 = vmatpush1.bf16.msra.mxu0 0
        %4811 = vmatprep.subr.bf16.mxu0 0
        %4812 = vmatpush1.bf16.msra.mxu0 0
        %4813 = vmatprep.subr.bf16.mxu0 0
        %4814 = vmatpush1.bf16.msra.mxu0 0
        %4815 = vmatprep.subr.bf16.mxu0 0
        %4816 = vmatpush1.bf16.msra.mxu0 0
        %4817 = vmatprep.subr.bf16.mxu0 0
        %4818 = vmatpush1.bf16.msra.mxu0 0
        %4819 = vmatprep.subr.bf16.mxu0 0
        %4820 = vmatpush1.bf16.msra.mxu0 0
        %4821 = vmatprep.subr.bf16.mxu0 0
        %4822 = vmatpush1.bf16.msra.mxu0 0
        %4823 = vmatprep.subr.bf16.mxu0 0
        %4824 = vmatpush1.bf16.msra.mxu0 0
        %4825 = vmatprep.subr.bf16.mxu0 0
        %4826 = vmatpush1.bf16.msra.mxu0 0
        %4827 = vmatprep.subr.bf16.mxu0 0
        %4828 = vmatpush1.bf16.msra.mxu0 0
        %4829 = vmatprep.subr.bf16.mxu0 0
        %4830 = vmatpush1.bf16.msra.mxu0 0
        %4831 = vmatprep.subr.bf16.mxu0 0
        %4832 = vmatpush1.bf16.msra.mxu0 0
        %4833 = vmatprep.subr.bf16.mxu0 0
        %4834 = vmatpush1.bf16.msra.mxu0 0
        %4835 = vmatprep.subr.bf16.mxu0 0
        %4836 = vmatpush1.bf16.msra.mxu0 0
        %4837 = vmatprep.mubr.bf16.mxu0 0
        %4838 = vmatmul.mubr.bf16.gmra.mrb[0].mxu0 %v4803
        %v4839 = vpop.f32.mrb[0].mxu0
        %v4840 = vadd.f32 0.0, %v4839
        %v4841 = vpop.f32.mrb[0].mxu0
        %v4842 = vadd.f32 0.0, %v4841
        %v4843 = vpop.f32.mrb[0].mxu0
        %v4844 = vpop.f32.mrb[0].mxu0
        %4845 = vdwg.mxu0
        %v4846 = vadd.f32 %v4797, %v4840
        %v4847 = vadd.f32 %v4798, %v4842
        %s4848 = scalar_lea.vmem %s21, 20
        %v4849 = vld [vmem:[%s4848] sm:$0xf]
        %v4850 = vpack.c.bf16 %v4849, %v4849
        %v4852 = vsel %vm4100, %v4850, 0
        %4854 = vmatprep.subr.bf16.mxu0 %v4384
        %4855 = vmatpush1.bf16.msra.mxu0 %v4381
        %4856 = vmatprep.subr.bf16.mxu0 0
        %4857 = vmatpush1.bf16.msra.mxu0 0
        %4858 = vmatprep.subr.bf16.mxu0 0
        %4859 = vmatpush1.bf16.msra.mxu0 0
        %4860 = vmatprep.subr.bf16.mxu0 0
        %4861 = vmatpush1.bf16.msra.mxu0 0
        %4862 = vmatprep.subr.bf16.mxu0 0
        %4863 = vmatpush1.bf16.msra.mxu0 0
        %4864 = vmatprep.subr.bf16.mxu0 0
        %4865 = vmatpush1.bf16.msra.mxu0 0
        %4866 = vmatprep.subr.bf16.mxu0 0
        %4867 = vmatpush1.bf16.msra.mxu0 0
        %4868 = vmatprep.subr.bf16.mxu0 0
        %4869 = vmatpush1.bf16.msra.mxu0 0
        %4870 = vmatprep.subr.bf16.mxu0 0
        %4871 = vmatpush1.bf16.msra.mxu0 0
        %4872 = vmatprep.subr.bf16.mxu0 0
        %4873 = vmatpush1.bf16.msra.mxu0 0
        %4874 = vmatprep.subr.bf16.mxu0 0
        %4875 = vmatpush1.bf16.msra.mxu0 0
        %4876 = vmatprep.subr.bf16.mxu0 0
        %4877 = vmatpush1.bf16.msra.mxu0 0
        %4878 = vmatprep.subr.bf16.mxu0 0
        %4879 = vmatpush1.bf16.msra.mxu0 0
        %4880 = vmatprep.subr.bf16.mxu0 0
        %4881 = vmatpush1.bf16.msra.mxu0 0
        %4882 = vmatprep.subr.bf16.mxu0 0
        %4883 = vmatpush1.bf16.msra.mxu0 0
        %4884 = vmatprep.subr.bf16.mxu0 0
        %4885 = vmatpush1.bf16.msra.mxu0 0
        %4886 = vmatprep.mubr.bf16.mxu0 0
        %4887 = vmatmul.mubr.bf16.gmra.mrb[0].mxu0 %v4852
        %v4888 = vpop.f32.mrb[0].mxu0
        %v4889 = vadd.f32 0.0, %v4888
        %v4890 = vpop.f32.mrb[0].mxu0
        %v4891 = vadd.f32 0.0, %v4890
        %v4892 = vpop.f32.mrb[0].mxu0
        %v4893 = vpop.f32.mrb[0].mxu0
        %4894 = vdwg.mxu0
        %v4895 = vadd.f32 %v4846, %v4889
        %v4896 = vadd.f32 %v4847, %v4891
        %s4897 = scalar_lea.vmem %s21, 24
        %v4898 = vld [vmem:[%s4897] sm:$0xf]
        %v4899 = vpack.c.bf16 %v4898, %v4898
        %v4901 = vsel %vm4100, %v4899, 0
        %4903 = vmatprep.subr.bf16.mxu0 %v4441
        %4904 = vmatpush1.bf16.msra.mxu0 %v4438
        %4905 = vmatprep.subr.bf16.mxu0 0
        %4906 = vmatpush1.bf16.msra.mxu0 0
        %4907 = vmatprep.subr.bf16.mxu0 0
        %4908 = vmatpush1.bf16.msra.mxu0 0
        %4909 = vmatprep.subr.bf16.mxu0 0
        %4910 = vmatpush1.bf16.msra.mxu0 0
        %4911 = vmatprep.subr.bf16.mxu0 0
        %4912 = vmatpush1.bf16.msra.mxu0 0
        %4913 = vmatprep.subr.bf16.mxu0 0
        %4914 = vmatpush1.bf16.msra.mxu0 0
        %4915 = vmatprep.subr.bf16.mxu0 0
        %4916 = vmatpush1.bf16.msra.mxu0 0
        %4917 = vmatprep.subr.bf16.mxu0 0
        %4918 = vmatpush1.bf16.msra.mxu0 0
        %4919 = vmatprep.subr.bf16.mxu0 0
        %4920 = vmatpush1.bf16.msra.mxu0 0
        %4921 = vmatprep.subr.bf16.mxu0 0
        %4922 = vmatpush1.bf16.msra.mxu0 0
        %4923 = vmatprep.subr.bf16.mxu0 0
        %4924 = vmatpush1.bf16.msra.mxu0 0
        %4925 = vmatprep.subr.bf16.mxu0 0
        %4926 = vmatpush1.bf16.msra.mxu0 0
        %4927 = vmatprep.subr.bf16.mxu0 0
        %4928 = vmatpush1.bf16.msra.mxu0 0
        %4929 = vmatprep.subr.bf16.mxu0 0
        %4930 = vmatpush1.bf16.msra.mxu0 0
        %4931 = vmatprep.subr.bf16.mxu0 0
        %4932 = vmatpush1.bf16.msra.mxu0 0
        %4933 = vmatprep.subr.bf16.mxu0 0
        %4934 = vmatpush1.bf16.msra.mxu0 0
        %4935 = vmatprep.mubr.bf16.mxu0 0
        %4936 = vmatmul.mubr.bf16.gmra.mrb[0].mxu0 %v4901
        %v4937 = vpop.f32.mrb[0].mxu0
        %v4938 = vadd.f32 0.0, %v4937
        %v4939 = vpop.f32.mrb[0].mxu0
        %v4940 = vadd.f32 0.0, %v4939
        %v4941 = vpop.f32.mrb[0].mxu0
        %v4942 = vpop.f32.mrb[0].mxu0
        %4943 = vdwg.mxu0
        %v4944 = vadd.f32 %v4895, %v4938
        %v4945 = vadd.f32 %v4896, %v4940
        %s4946 = scalar_lea.vmem %s21, 28
        %v4947 = vld [vmem:[%s4946] sm:$0xf]
        %v4948 = vpack.c.bf16 %v4947, %v4947
        %v4950 = vsel %vm4100, %v4948, 0
        %4952 = vmatprep.subr.bf16.mxu0 %v4498
        %4953 = vmatpush1.bf16.msra.mxu0 %v4495
        %4954 = vmatprep.subr.bf16.mxu0 0
        %4955 = vmatpush1.bf16.msra.mxu0 0
        %4956 = vmatprep.subr.bf16.mxu0 0
        %4957 = vmatpush1.bf16.msra.mxu0 0
        %4958 = vmatprep.subr.bf16.mxu0 0
        %4959 = vmatpush1.bf16.msra.mxu0 0
        %4960 = vmatprep.subr.bf16.mxu0 0
        %4961 = vmatpush1.bf16.msra.mxu0 0
        %4962 = vmatprep.subr.bf16.mxu0 0
        %4963 = vmatpush1.bf16.msra.mxu0 0
        %4964 = vmatprep.subr.bf16.mxu0 0
        %4965 = vmatpush1.bf16.msra.mxu0 0
        %4966 = vmatprep.subr.bf16.mxu0 0
        %4967 = vmatpush1.bf16.msra.mxu0 0
        %4968 = vmatprep.subr.bf16.mxu0 0
        %4969 = vmatpush1.bf16.msra.mxu0 0
        %4970 = vmatprep.subr.bf16.mxu0 0
        %4971 = vmatpush1.bf16.msra.mxu0 0
        %4972 = vmatprep.subr.bf16.mxu0 0
        %4973 = vmatpush1.bf16.msra.mxu0 0
        %4974 = vmatprep.subr.bf16.mxu0 0
        %4975 = vmatpush1.bf16.msra.mxu0 0
        %4976 = vmatprep.subr.bf16.mxu0 0
        %4977 = vmatpush1.bf16.msra.mxu0 0
        %4978 = vmatprep.subr.bf16.mxu0 0
        %4979 = vmatpush1.bf16.msra.mxu0 0
        %4980 = vmatprep.subr.bf16.mxu0 0
        %4981 = vmatpush1.bf16.msra.mxu0 0
        %4982 = vmatprep.subr.bf16.mxu0 0
        %4983 = vmatpush1.bf16.msra.mxu0 0
        %4984 = vmatprep.mubr.bf16.mxu0 0
        %4985 = vmatmul.mubr.bf16.gmra.mrb[0].mxu0 %v4950
        %v4986 = vpop.f32.mrb[0].mxu0
        %v4987 = vadd.f32 0.0, %v4986
        %v4988 = vpop.f32.mrb[0].mxu0
        %v4989 = vadd.f32 0.0, %v4988
        %v4990 = vpop.f32.mrb[0].mxu0
        %v4991 = vpop.f32.mrb[0].mxu0
        %4992 = vdwg.mxu0
        %v4993 = vadd.f32 %v4944, %v4987
        %v4994 = vadd.f32 %v4945, %v4989
        %s4995 = scalar_lea.vmem %s21, 32
        %v4996 = vld [vmem:[%s4995] sm:$0xf]
        %v4997 = vpack.c.bf16 %v4996, %v4996
        %v4999 = vsel %vm4100, %v4997, 0
        %5001 = vmatprep.subr.bf16.mxu0 %v4555
        %5002 = vmatpush1.bf16.msra.mxu0 %v4552
        %5003 = vmatprep.subr.bf16.mxu0 0
        %5004 = vmatpush1.bf16.msra.mxu0 0
        %5005 = vmatprep.subr.bf16.mxu0 0
        %5006 = vmatpush1.bf16.msra.mxu0 0
        %5007 = vmatprep.subr.bf16.mxu0 0
        %5008 = vmatpush1.bf16.msra.mxu0 0
        %5009 = vmatprep.subr.bf16.mxu0 0
        %5010 = vmatpush1.bf16.msra.mxu0 0
        %5011 = vmatprep.subr.bf16.mxu0 0
        %5012 = vmatpush1.bf16.msra.mxu0 0
        %5013 = vmatprep.subr.bf16.mxu0 0
        %5014 = vmatpush1.bf16.msra.mxu0 0
        %5015 = vmatprep.subr.bf16.mxu0 0
        %5016 = vmatpush1.bf16.msra.mxu0 0
        %5017 = vmatprep.subr.bf16.mxu0 0
        %5018 = vmatpush1.bf16.msra.mxu0 0
        %5019 = vmatprep.subr.bf16.mxu0 0
        %5020 = vmatpush1.bf16.msra.mxu0 0
        %5021 = vmatprep.subr.bf16.mxu0 0
        %5022 = vmatpush1.bf16.msra.mxu0 0
        %5023 = vmatprep.subr.bf16.mxu0 0
        %5024 = vmatpush1.bf16.msra.mxu0 0
        %5025 = vmatprep.subr.bf16.mxu0 0
        %5026 = vmatpush1.bf16.msra.mxu0 0
        %5027 = vmatprep.subr.bf16.mxu0 0
        %5028 = vmatpush1.bf16.msra.mxu0 0
        %5029 = vmatprep.subr.bf16.mxu0 0
        %5030 = vmatpush1.bf16.msra.mxu0 0
        %5031 = vmatprep.subr.bf16.mxu0 0
        %5032 = vmatpush1.bf16.msra.mxu0 0
        %5033 = vmatprep.mubr.bf16.mxu0 0
        %5034 = vmatmul.mubr.bf16.gmra.mrb[0].mxu0 %v4999
        %v5035 = vpop.f32.mrb[0].mxu0
        %v5036 = vadd.f32 0.0, %v5035
        %v5037 = vpop.f32.mrb[0].mxu0
        %v5038 = vadd.f32 0.0, %v5037
        %v5039 = vpop.f32.mrb[0].mxu0
        %v5040 = vpop.f32.mrb[0].mxu0
        %5041 = vdwg.mxu0
        %v5042 = vadd.f32 %v4993, %v5036
        %v5043 = vadd.f32 %v4994, %v5038
        %v5044 = vld [vmem:[%s23] sm:$0xf]
        %5046 = vset.pattern.permute.xlu0 0
        %5047 = vperm.xlu0 %5046, %v5044
        %v5048 = vpop.permute.xlu0 %5047
        %v5050 = vadd.f32 %v5042, %v5048
        %v5051 = vadd.f32 %v5043, %v5048
        %v5052 = vadd.f32 %v5050, 1.0
        %v5053 = vadd.f32 %v5051, 1.0
        %v5056 = vcombine.low %v5052, %v5053
        %v5058 = vmul.f32 %v1057, %v5056
        %v5061 = vcombine.low %v4606, %v4607
        %v5063 = vadd.f32 %v5058, %v5061
        %v5065 = vcombine.high %v5063, %v5063
        %v5067 = vpack.c.bf16 %v5063, %v5063
        %v5068 = vpack.c.bf16 %v5065, %v5065
        %5069 = vmatprep.subr.bf16.mxu0 %v2244
        %5070 = vmatpush1.bf16.msra.mxu0 %v2243
        %5071 = vmatprep.subr.bf16.mxu0 %v2262
        %5072 = vmatpush1.bf16.msra.mxu0 %v2261
        %5073 = vmatprep.subr.bf16.mxu0 %v2280
        %5074 = vmatpush1.bf16.msra.mxu0 %v2279
        %5075 = vmatprep.subr.bf16.mxu0 %v2298
        %5076 = vmatpush1.bf16.msra.mxu0 %v2297
        %5077 = vmatprep.subr.bf16.mxu0 %v2316
        %5078 = vmatpush1.bf16.msra.mxu0 %v2315
        %5079 = vmatprep.subr.bf16.mxu0 %v2334
        %5080 = vmatpush1.bf16.msra.mxu0 %v2333
        %5081 = vmatprep.subr.bf16.mxu0 %v2352
        %5082 = vmatpush1.bf16.msra.mxu0 %v2351
        %5083 = vmatprep.subr.bf16.mxu0 %v2370
        %5084 = vmatpush1.bf16.msra.mxu0 %v2369
        %5085 = vmatprep.subr.bf16.mxu0 %v2388
        %5086 = vmatpush1.bf16.msra.mxu0 %v2387
        %5087 = vmatprep.subr.bf16.mxu0 %v2406
        %5088 = vmatpush1.bf16.msra.mxu0 %v2405
        %5089 = vmatprep.subr.bf16.mxu0 %v2424
        %5090 = vmatpush1.bf16.msra.mxu0 %v2423
        %5091 = vmatprep.subr.bf16.mxu0 %v2442
        %5092 = vmatpush1.bf16.msra.mxu0 %v2441
        %5093 = vmatprep.subr.bf16.mxu0 %v2460
        %5094 = vmatpush1.bf16.msra.mxu0 %v2459
        %5095 = vmatprep.subr.bf16.mxu0 %v2478
        %5096 = vmatpush1.bf16.msra.mxu0 %v2477
        %5097 = vmatprep.subr.bf16.mxu0 %v2496
        %5098 = vmatpush1.bf16.msra.mxu0 %v2495
        %5099 = vmatprep.subr.bf16.mxu0 %v2514
        %5100 = vmatpush1.bf16.msra.mxu0 %v2513
        %5101 = vmatprep.mubr.bf16.mxu0 %v5068
        %5102 = vmatmul.mubr.bf16.gmra.mrb[0].mxu0 %v5067
        %v5103 = vpop.f32.mrb[0].mxu0
        %v5104 = vadd.f32 0.0, %v5103
        %v5105 = vpop.f32.mrb[0].mxu0
        %v5106 = vadd.f32 0.0, %v5105
        %v5107 = vpop.f32.mrb[0].mxu0
        %v5108 = vpop.f32.mrb[0].mxu0
        %5109 = vdwg.mxu0
        %5110 = vmatprep.subr.bf16.mxu0 %v2246
        %5111 = vmatpush1.bf16.msra.mxu0 %v2245
        %5112 = vmatprep.subr.bf16.mxu0 %v2264
        %5113 = vmatpush1.bf16.msra.mxu0 %v2263
        %5114 = vmatprep.subr.bf16.mxu0 %v2282
        %5115 = vmatpush1.bf16.msra.mxu0 %v2281
        %5116 = vmatprep.subr.bf16.mxu0 %v2300
        %5117 = vmatpush1.bf16.msra.mxu0 %v2299
        %5118 = vmatprep.subr.bf16.mxu0 %v2318
        %5119 = vmatpush1.bf16.msra.mxu0 %v2317
        %5120 = vmatprep.subr.bf16.mxu0 %v2336
        %5121 = vmatpush1.bf16.msra.mxu0 %v2335
        %5122 = vmatprep.subr.bf16.mxu0 %v2354
        %5123 = vmatpush1.bf16.msra.mxu0 %v2353
        %5124 = vmatprep.subr.bf16.mxu0 %v2372
        %5125 = vmatpush1.bf16.msra.mxu0 %v2371
        %5126 = vmatprep.subr.bf16.mxu0 %v2390
        %5127 = vmatpush1.bf16.msra.mxu0 %v2389
        %5128 = vmatprep.subr.bf16.mxu0 %v2408
        %5129 = vmatpush1.bf16.msra.mxu0 %v2407
        %5130 = vmatprep.subr.bf16.mxu0 %v2426
        %5131 = vmatpush1.bf16.msra.mxu0 %v2425
        %5132 = vmatprep.subr.bf16.mxu0 %v2444
        %5133 = vmatpush1.bf16.msra.mxu0 %v2443
        %5134 = vmatprep.subr.bf16.mxu0 %v2462
        %5135 = vmatpush1.bf16.msra.mxu0 %v2461
        %5136 = vmatprep.subr.bf16.mxu0 %v2480
        %5137 = vmatpush1.bf16.msra.mxu0 %v2479
        %5138 = vmatprep.subr.bf16.mxu0 %v2498
        %5139 = vmatpush1.bf16.msra.mxu0 %v2497
        %5140 = vmatprep.subr.bf16.mxu0 %v2516
        %5141 = vmatpush1.bf16.msra.mxu0 %v2515
        %5142 = vmatprep.mubr.bf16.mxu0 %v5068
        %5143 = vmatmul.mubr.bf16.gmra.mrb[0].mxu0 %v5067
        %v5144 = vpop.f32.mrb[0].mxu0
        %v5145 = vadd.f32 0.0, %v5144
        %v5146 = vpop.f32.mrb[0].mxu0
        %v5147 = vadd.f32 0.0, %v5146
        %v5148 = vpop.f32.mrb[0].mxu0
        %v5149 = vpop.f32.mrb[0].mxu0
        %5150 = vdwg.mxu0
        %5151 = vmatprep.subr.bf16.mxu0 %v2248
        %5152 = vmatpush1.bf16.msra.mxu0 %v2247
        %5153 = vmatprep.subr.bf16.mxu0 %v2266
        %5154 = vmatpush1.bf16.msra.mxu0 %v2265
        %5155 = vmatprep.subr.bf16.mxu0 %v2284
        %5156 = vmatpush1.bf16.msra.mxu0 %v2283
        %5157 = vmatprep.subr.bf16.mxu0 %v2302
        %5158 = vmatpush1.bf16.msra.mxu0 %v2301
        %5159 = vmatprep.subr.bf16.mxu0 %v2320
        %5160 = vmatpush1.bf16.msra.mxu0 %v2319
        %5161 = vmatprep.subr.bf16.mxu0 %v2338
        %5162 = vmatpush1.bf16.msra.mxu0 %v2337
        %5163 = vmatprep.subr.bf16.mxu0 %v2356
        %5164 = vmatpush1.bf16.msra.mxu0 %v2355
        %5165 = vmatprep.subr.bf16.mxu0 %v2374
        %5166 = vmatpush1.bf16.msra.mxu0 %v2373
        %5167 = vmatprep.subr.bf16.mxu0 %v2392
        %5168 = vmatpush1.bf16.msra.mxu0 %v2391
        %5169 = vmatprep.subr.bf16.mxu0 %v2410
        %5170 = vmatpush1.bf16.msra.mxu0 %v2409
        %5171 = vmatprep.subr.bf16.mxu0 %v2428
        %5172 = vmatpush1.bf16.msra.mxu0 %v2427
        %5173 = vmatprep.subr.bf16.mxu0 %v2446
        %5174 = vmatpush1.bf16.msra.mxu0 %v2445
        %5175 = vmatprep.subr.bf16.mxu0 %v2464
        %5176 = vmatpush1.bf16.msra.mxu0 %v2463
        %5177 = vmatprep.subr.bf16.mxu0 %v2482
        %5178 = vmatpush1.bf16.msra.mxu0 %v2481
        %5179 = vmatprep.subr.bf16.mxu0 %v2500
        %5180 = vmatpush1.bf16.msra.mxu0 %v2499
        %5181 = vmatprep.subr.bf16.mxu0 %v2518
        %5182 = vmatpush1.bf16.msra.mxu0 %v2517
        %5183 = vmatprep.mubr.bf16.mxu0 %v5068
        %5184 = vmatmul.mubr.bf16.gmra.mrb[0].mxu0 %v5067
        %v5185 = vpop.f32.mrb[0].mxu0
        %v5186 = vadd.f32 0.0, %v5185
        %v5187 = vpop.f32.mrb[0].mxu0
        %v5188 = vadd.f32 0.0, %v5187
        %v5189 = vpop.f32.mrb[0].mxu0
        %v5190 = vpop.f32.mrb[0].mxu0
        %5191 = vdwg.mxu0
        %5192 = vmatprep.subr.bf16.mxu0 %v2250
        %5193 = vmatpush1.bf16.msra.mxu0 %v2249
        %5194 = vmatprep.subr.bf16.mxu0 %v2268
        %5195 = vmatpush1.bf16.msra.mxu0 %v2267
        %5196 = vmatprep.subr.bf16.mxu0 %v2286
        %5197 = vmatpush1.bf16.msra.mxu0 %v2285
        %5198 = vmatprep.subr.bf16.mxu0 %v2304
        %5199 = vmatpush1.bf16.msra.mxu0 %v2303
        %5200 = vmatprep.subr.bf16.mxu0 %v2322
        %5201 = vmatpush1.bf16.msra.mxu0 %v2321
        %5202 = vmatprep.subr.bf16.mxu0 %v2340
        %5203 = vmatpush1.bf16.msra.mxu0 %v2339
        %5204 = vmatprep.subr.bf16.mxu0 %v2358
        %5205 = vmatpush1.bf16.msra.mxu0 %v2357
        %5206 = vmatprep.subr.bf16.mxu0 %v2376
        %5207 = vmatpush1.bf16.msra.mxu0 %v2375
        %5208 = vmatprep.subr.bf16.mxu0 %v2394
        %5209 = vmatpush1.bf16.msra.mxu0 %v2393
        %5210 = vmatprep.subr.bf16.mxu0 %v2412
        %5211 = vmatpush1.bf16.msra.mxu0 %v2411
        %5212 = vmatprep.subr.bf16.mxu0 %v2430
        %5213 = vmatpush1.bf16.msra.mxu0 %v2429
        %5214 = vmatprep.subr.bf16.mxu0 %v2448
        %5215 = vmatpush1.bf16.msra.mxu0 %v2447
        %5216 = vmatprep.subr.bf16.mxu0 %v2466
        %5217 = vmatpush1.bf16.msra.mxu0 %v2465
        %5218 = vmatprep.subr.bf16.mxu0 %v2484
        %5219 = vmatpush1.bf16.msra.mxu0 %v2483
        %5220 = vmatprep.subr.bf16.mxu0 %v2502
        %5221 = vmatpush1.bf16.msra.mxu0 %v2501
        %5222 = vmatprep.subr.bf16.mxu0 %v2520
        %5223 = vmatpush1.bf16.msra.mxu0 %v2519
        %5224 = vmatprep.mubr.bf16.mxu0 %v5068
        %5225 = vmatmul.mubr.bf16.gmra.mrb[0].mxu0 %v5067
        %v5226 = vpop.f32.mrb[0].mxu0
        %v5227 = vadd.f32 0.0, %v5226
        %v5228 = vpop.f32.mrb[0].mxu0
        %v5229 = vadd.f32 0.0, %v5228
        %v5230 = vpop.f32.mrb[0].mxu0
        %v5231 = vpop.f32.mrb[0].mxu0
        %5232 = vdwg.mxu0
        %5233 = vmatprep.subr.bf16.mxu0 %v2252
        %5234 = vmatpush1.bf16.msra.mxu0 %v2251
        %5235 = vmatprep.subr.bf16.mxu0 %v2270
        %5236 = vmatpush1.bf16.msra.mxu0 %v2269
        %5237 = vmatprep.subr.bf16.mxu0 %v2288
        %5238 = vmatpush1.bf16.msra.mxu0 %v2287
        %5239 = vmatprep.subr.bf16.mxu0 %v2306
        %5240 = vmatpush1.bf16.msra.mxu0 %v2305
        %5241 = vmatprep.subr.bf16.mxu0 %v2324
        %5242 = vmatpush1.bf16.msra.mxu0 %v2323
        %5243 = vmatprep.subr.bf16.mxu0 %v2342
        %5244 = vmatpush1.bf16.msra.mxu0 %v2341
        %5245 = vmatprep.subr.bf16.mxu0 %v2360
        %5246 = vmatpush1.bf16.msra.mxu0 %v2359
        %5247 = vmatprep.subr.bf16.mxu0 %v2378
        %5248 = vmatpush1.bf16.msra.mxu0 %v2377
        %5249 = vmatprep.subr.bf16.mxu0 %v2396
        %5250 = vmatpush1.bf16.msra.mxu0 %v2395
        %5251 = vmatprep.subr.bf16.mxu0 %v2414
        %5252 = vmatpush1.bf16.msra.mxu0 %v2413
        %5253 = vmatprep.subr.bf16.mxu0 %v2432
        %5254 = vmatpush1.bf16.msra.mxu0 %v2431
        %5255 = vmatprep.subr.bf16.mxu0 %v2450
        %5256 = vmatpush1.bf16.msra.mxu0 %v2449
        %5257 = vmatprep.subr.bf16.mxu0 %v2468
        %5258 = vmatpush1.bf16.msra.mxu0 %v2467
        %5259 = vmatprep.subr.bf16.mxu0 %v2486
        %5260 = vmatpush1.bf16.msra.mxu0 %v2485
        %5261 = vmatprep.subr.bf16.mxu0 %v2504
        %5262 = vmatpush1.bf16.msra.mxu0 %v2503
        %5263 = vmatprep.subr.bf16.mxu0 %v2522
        %5264 = vmatpush1.bf16.msra.mxu0 %v2521
        %5265 = vmatprep.mubr.bf16.mxu0 %v5068
        %5266 = vmatmul.mubr.bf16.gmra.mrb[0].mxu0 %v5067
        %v5267 = vpop.f32.mrb[0].mxu0
        %v5268 = vadd.f32 0.0, %v5267
        %v5269 = vpop.f32.mrb[0].mxu0
        %v5270 = vadd.f32 0.0, %v5269
        %v5271 = vpop.f32.mrb[0].mxu0
        %v5272 = vpop.f32.mrb[0].mxu0
        %5273 = vdwg.mxu0
        %5274 = vmatprep.subr.bf16.mxu0 %v2254
        %5275 = vmatpush1.bf16.msra.mxu0 %v2253
        %5276 = vmatprep.subr.bf16.mxu0 %v2272
        %5277 = vmatpush1.bf16.msra.mxu0 %v2271
        %5278 = vmatprep.subr.bf16.mxu0 %v2290
        %5279 = vmatpush1.bf16.msra.mxu0 %v2289
        %5280 = vmatprep.subr.bf16.mxu0 %v2308
        %5281 = vmatpush1.bf16.msra.mxu0 %v2307
        %5282 = vmatprep.subr.bf16.mxu0 %v2326
        %5283 = vmatpush1.bf16.msra.mxu0 %v2325
        %5284 = vmatprep.subr.bf16.mxu0 %v2344
        %5285 = vmatpush1.bf16.msra.mxu0 %v2343
        %5286 = vmatprep.subr.bf16.mxu0 %v2362
        %5287 = vmatpush1.bf16.msra.mxu0 %v2361
        %5288 = vmatprep.subr.bf16.mxu0 %v2380
        %5289 = vmatpush1.bf16.msra.mxu0 %v2379
        %5290 = vmatprep.subr.bf16.mxu0 %v2398
        %5291 = vmatpush1.bf16.msra.mxu0 %v2397
        %5292 = vmatprep.subr.bf16.mxu0 %v2416
        %5293 = vmatpush1.bf16.msra.mxu0 %v2415
        %5294 = vmatprep.subr.bf16.mxu0 %v2434
        %5295 = vmatpush1.bf16.msra.mxu0 %v2433
        %5296 = vmatprep.subr.bf16.mxu0 %v2452
        %5297 = vmatpush1.bf16.msra.mxu0 %v2451
        %5298 = vmatprep.subr.bf16.mxu0 %v2470
        %5299 = vmatpush1.bf16.msra.mxu0 %v2469
        %5300 = vmatprep.subr.bf16.mxu0 %v2488
        %5301 = vmatpush1.bf16.msra.mxu0 %v2487
        %5302 = vmatprep.subr.bf16.mxu0 %v2506
        %5303 = vmatpush1.bf16.msra.mxu0 %v2505
        %5304 = vmatprep.subr.bf16.mxu0 %v2524
        %5305 = vmatpush1.bf16.msra.mxu0 %v2523
        %5306 = vmatprep.mubr.bf16.mxu0 %v5068
        %5307 = vmatmul.mubr.bf16.gmra.mrb[0].mxu0 %v5067
        %v5308 = vpop.f32.mrb[0].mxu0
        %v5309 = vadd.f32 0.0, %v5308
        %v5310 = vpop.f32.mrb[0].mxu0
        %v5311 = vadd.f32 0.0, %v5310
        %v5312 = vpop.f32.mrb[0].mxu0
        %v5313 = vpop.f32.mrb[0].mxu0
        %5314 = vdwg.mxu0
        %5315 = vmatprep.subr.bf16.mxu0 %v2256
        %5316 = vmatpush1.bf16.msra.mxu0 %v2255
        %5317 = vmatprep.subr.bf16.mxu0 %v2274
        %5318 = vmatpush1.bf16.msra.mxu0 %v2273
        %5319 = vmatprep.subr.bf16.mxu0 %v2292
        %5320 = vmatpush1.bf16.msra.mxu0 %v2291
        %5321 = vmatprep.subr.bf16.mxu0 %v2310
        %5322 = vmatpush1.bf16.msra.mxu0 %v2309
        %5323 = vmatprep.subr.bf16.mxu0 %v2328
        %5324 = vmatpush1.bf16.msra.mxu0 %v2327
        %5325 = vmatprep.subr.bf16.mxu0 %v2346
        %5326 = vmatpush1.bf16.msra.mxu0 %v2345
        %5327 = vmatprep.subr.bf16.mxu0 %v2364
        %5328 = vmatpush1.bf16.msra.mxu0 %v2363
        %5329 = vmatprep.subr.bf16.mxu0 %v2382
        %5330 = vmatpush1.bf16.msra.mxu0 %v2381
        %5331 = vmatprep.subr.bf16.mxu0 %v2400
        %5332 = vmatpush1.bf16.msra.mxu0 %v2399
        %5333 = vmatprep.subr.bf16.mxu0 %v2418
        %5334 = vmatpush1.bf16.msra.mxu0 %v2417
        %5335 = vmatprep.subr.bf16.mxu0 %v2436
        %5336 = vmatpush1.bf16.msra.mxu0 %v2435
        %5337 = vmatprep.subr.bf16.mxu0 %v2454
        %5338 = vmatpush1.bf16.msra.mxu0 %v2453
        %5339 = vmatprep.subr.bf16.mxu0 %v2472
        %5340 = vmatpush1.bf16.msra.mxu0 %v2471
        %5341 = vmatprep.subr.bf16.mxu0 %v2490
        %5342 = vmatpush1.bf16.msra.mxu0 %v2489
        %5343 = vmatprep.subr.bf16.mxu0 %v2508
        %5344 = vmatpush1.bf16.msra.mxu0 %v2507
        %5345 = vmatprep.subr.bf16.mxu0 %v2526
        %5346 = vmatpush1.bf16.msra.mxu0 %v2525
        %5347 = vmatprep.mubr.bf16.mxu0 %v5068
        %5348 = vmatmul.mubr.bf16.gmra.mrb[0].mxu0 %v5067
        %v5349 = vpop.f32.mrb[0].mxu0
        %v5350 = vadd.f32 0.0, %v5349
        %v5351 = vpop.f32.mrb[0].mxu0
        %v5352 = vadd.f32 0.0, %v5351
        %v5353 = vpop.f32.mrb[0].mxu0
        %v5354 = vpop.f32.mrb[0].mxu0
        %5355 = vdwg.mxu0
        %5356 = vmatprep.subr.bf16.mxu0 %v2258
        %5357 = vmatpush1.bf16.msra.mxu0 %v2257
        %5358 = vmatprep.subr.bf16.mxu0 %v2276
        %5359 = vmatpush1.bf16.msra.mxu0 %v2275
        %5360 = vmatprep.subr.bf16.mxu0 %v2294
        %5361 = vmatpush1.bf16.msra.mxu0 %v2293
        %5362 = vmatprep.subr.bf16.mxu0 %v2312
        %5363 = vmatpush1.bf16.msra.mxu0 %v2311
        %5364 = vmatprep.subr.bf16.mxu0 %v2330
        %5365 = vmatpush1.bf16.msra.mxu0 %v2329
        %5366 = vmatprep.subr.bf16.mxu0 %v2348
        %5367 = vmatpush1.bf16.msra.mxu0 %v2347
        %5368 = vmatprep.subr.bf16.mxu0 %v2366
        %5369 = vmatpush1.bf16.msra.mxu0 %v2365
        %5370 = vmatprep.subr.bf16.mxu0 %v2384
        %5371 = vmatpush1.bf16.msra.mxu0 %v2383
        %5372 = vmatprep.subr.bf16.mxu0 %v2402
        %5373 = vmatpush1.bf16.msra.mxu0 %v2401
        %5374 = vmatprep.subr.bf16.mxu0 %v2420
        %5375 = vmatpush1.bf16.msra.mxu0 %v2419
        %5376 = vmatprep.subr.bf16.mxu0 %v2438
        %5377 = vmatpush1.bf16.msra.mxu0 %v2437
        %5378 = vmatprep.subr.bf16.mxu0 %v2456
        %5379 = vmatpush1.bf16.msra.mxu0 %v2455
        %5380 = vmatprep.subr.bf16.mxu0 %v2474
        %5381 = vmatpush1.bf16.msra.mxu0 %v2473
        %5382 = vmatprep.subr.bf16.mxu0 %v2492
        %5383 = vmatpush1.bf16.msra.mxu0 %v2491
        %5384 = vmatprep.subr.bf16.mxu0 %v2510
        %5385 = vmatpush1.bf16.msra.mxu0 %v2509
        %5386 = vmatprep.subr.bf16.mxu0 %v2528
        %5387 = vmatpush1.bf16.msra.mxu0 %v2527
        %5388 = vmatprep.mubr.bf16.mxu0 %v5068
        %5389 = vmatmul.mubr.bf16.gmra.mrb[0].mxu0 %v5067
        %v5390 = vpop.f32.mrb[0].mxu0
        %v5391 = vadd.f32 0.0, %v5390
        %v5392 = vpop.f32.mrb[0].mxu0
        %v5393 = vadd.f32 0.0, %v5392
        %v5394 = vpop.f32.mrb[0].mxu0
        %v5395 = vpop.f32.mrb[0].mxu0
        %5396 = vdwg.mxu0
        %5397 = vmatprep.subr.bf16.mxu0 %v2260
        %5398 = vmatpush1.bf16.msra.mxu0 %v2259
        %5399 = vmatprep.subr.bf16.mxu0 %v2278
        %5400 = vmatpush1.bf16.msra.mxu0 %v2277
        %5401 = vmatprep.subr.bf16.mxu0 %v2296
        %5402 = vmatpush1.bf16.msra.mxu0 %v2295
        %5403 = vmatprep.subr.bf16.mxu0 %v2314
        %5404 = vmatpush1.bf16.msra.mxu0 %v2313
        %5405 = vmatprep.subr.bf16.mxu0 %v2332
        %5406 = vmatpush1.bf16.msra.mxu0 %v2331
        %5407 = vmatprep.subr.bf16.mxu0 %v2350
        %5408 = vmatpush1.bf16.msra.mxu0 %v2349
        %5409 = vmatprep.subr.bf16.mxu0 %v2368
        %5410 = vmatpush1.bf16.msra.mxu0 %v2367
        %5411 = vmatprep.subr.bf16.mxu0 %v2386
        %5412 = vmatpush1.bf16.msra.mxu0 %v2385
        %5413 = vmatprep.subr.bf16.mxu0 %v2404
        %5414 = vmatpush1.bf16.msra.mxu0 %v2403
        %5415 = vmatprep.subr.bf16.mxu0 %v2422
        %5416 = vmatpush1.bf16.msra.mxu0 %v2421
        %5417 = vmatprep.subr.bf16.mxu0 %v2440
        %5418 = vmatpush1.bf16.msra.mxu0 %v2439
        %5419 = vmatprep.subr.bf16.mxu0 %v2458
        %5420 = vmatpush1.bf16.msra.mxu0 %v2457
        %5421 = vmatprep.subr.bf16.mxu0 %v2476
        %5422 = vmatpush1.bf16.msra.mxu0 %v2475
        %5423 = vmatprep.subr.bf16.mxu0 %v2494
        %5424 = vmatpush1.bf16.msra.mxu0 %v2493
        %5425 = vmatprep.subr.bf16.mxu0 %v2512
        %5426 = vmatpush1.bf16.msra.mxu0 %v2511
        %5427 = vmatprep.subr.bf16.mxu0 %v2530
        %5428 = vmatpush1.bf16.msra.mxu0 %v2529
        %5429 = vmatprep.mubr.bf16.mxu0 %v5068
        %5430 = vmatmul.mubr.bf16.gmra.mrb[0].mxu0 %v5067
        %v5431 = vpop.f32.mrb[0].mxu0
        %v5432 = vadd.f32 0.0, %v5431
        %v5433 = vpop.f32.mrb[0].mxu0
        %v5434 = vadd.f32 0.0, %v5433
        %v5435 = vpop.f32.mrb[0].mxu0
        %v5436 = vpop.f32.mrb[0].mxu0
        %5437 = vdwg.mxu0
        %v5438 = vld [vmem:[%s25] sm:$0xff]
        %v5439 = vld [vmem:[%s25 + $0x8] sm:$0xff]
        %v5440 = vld [vmem:[%s25 + $0x10] sm:$0xff]
        %v5441 = vld [vmem:[%s25 + $0x18] sm:$0xff]
        %v5442 = vpack.c.bf16 %v5439, %v5438
        %v5443 = vpack.c.bf16 %v5441, %v5440
        %v5444 = vpack.c.bf16 %v5104, %v5104
        %v5445 = vpack.c.bf16 %v5106, %v5106
        %s5446 = scalar_lea.vmem %s25, 32
        %v5447 = vld [vmem:[%s5446] sm:$0xff]
        %v5448 = vld [vmem:[%s5446 + $0x8] sm:$0xff]
        %v5449 = vld [vmem:[%s5446 + $0x10] sm:$0xff]
        %v5450 = vld [vmem:[%s5446 + $0x18] sm:$0xff]
        %v5451 = vpack.c.bf16 %v5448, %v5447
        %v5452 = vpack.c.bf16 %v5450, %v5449
        %v5453 = vpack.c.bf16 %v5145, %v5145
        %v5454 = vpack.c.bf16 %v5147, %v5147
        %v5456 = vsel %vm3197, %v5451, 0
        %v5459 = vsel %vm3197, %v5452, 0
        %v5462 = vsel %vm3201, %v5453, 0
        %v5465 = vsel %vm3201, %v5454, 0
        %5467 = vmatprep.subr.bf16.mxu0 %v5465
        %5468 = vmatpush1.bf16.msra.mxu0 %v5462
        %5469 = vmatprep.subr.bf16.mxu0 0
        %5470 = vmatpush1.bf16.msra.mxu0 0
        %5471 = vmatprep.subr.bf16.mxu0 0
        %5472 = vmatpush1.bf16.msra.mxu0 0
        %5473 = vmatprep.subr.bf16.mxu0 0
        %5474 = vmatpush1.bf16.msra.mxu0 0
        %5475 = vmatprep.subr.bf16.mxu0 0
        %5476 = vmatpush1.bf16.msra.mxu0 0
        %5477 = vmatprep.subr.bf16.mxu0 0
        %5478 = vmatpush1.bf16.msra.mxu0 0
        %5479 = vmatprep.subr.bf16.mxu0 0
        %5480 = vmatpush1.bf16.msra.mxu0 0
        %5481 = vmatprep.subr.bf16.mxu0 0
        %5482 = vmatpush1.bf16.msra.mxu0 0
        %5483 = vmatprep.subr.bf16.mxu0 0
        %5484 = vmatpush1.bf16.msra.mxu0 0
        %5485 = vmatprep.subr.bf16.mxu0 0
        %5486 = vmatpush1.bf16.msra.mxu0 0
        %5487 = vmatprep.subr.bf16.mxu0 0
        %5488 = vmatpush1.bf16.msra.mxu0 0
        %5489 = vmatprep.subr.bf16.mxu0 0
        %5490 = vmatpush1.bf16.msra.mxu0 0
        %5491 = vmatprep.subr.bf16.mxu0 0
        %5492 = vmatpush1.bf16.msra.mxu0 0
        %5493 = vmatprep.subr.bf16.mxu0 0
        %5494 = vmatpush1.bf16.msra.mxu0 0
        %5495 = vmatprep.subr.bf16.mxu0 0
        %5496 = vmatpush1.bf16.msra.mxu0 0
        %5497 = vmatprep.subr.bf16.mxu0 0
        %5498 = vmatpush1.bf16.msra.mxu0 0
        %5499 = vmatprep.mubr.bf16.mxu0 0
        %5500 = vmatmul.mubr.bf16.gmra.mrb[0].mxu0 %v5456
        %v5501 = vpop.f32.mrb[0].mxu0
        %v5502 = vadd.f32 0.0, %v5501
        %v5503 = vpop.f32.mrb[0].mxu0
        %v5504 = vadd.f32 0.0, %v5503
        %v5505 = vpop.f32.mrb[0].mxu0
        %v5506 = vadd.f32 0.0, %v5505
        %v5507 = vpop.f32.mrb[0].mxu0
        %v5508 = vadd.f32 0.0, %v5507
        %5509 = vmatprep.mubr.bf16.mxu0 0
        %5510 = vmatmul.mubr.bf16.gmra.mrb[0].mxu0 %v5459
        %v5511 = vpop.f32.mrb[0].mxu0
        %v5512 = vadd.f32 0.0, %v5511
        %v5513 = vpop.f32.mrb[0].mxu0
        %v5514 = vadd.f32 0.0, %v5513
        %v5515 = vpop.f32.mrb[0].mxu0
        %v5516 = vadd.f32 0.0, %v5515
        %v5517 = vpop.f32.mrb[0].mxu0
        %v5518 = vadd.f32 0.0, %v5517
        %5519 = vdwg.mxu0
        %v5521 = vsel %vm3197, %v5442, 0
        %v5524 = vsel %vm3197, %v5443, 0
        %v5527 = vsel %vm3201, %v5444, 0
        %v5530 = vsel %vm3201, %v5445, 0
        %5532 = vmatprep.subr.bf16.mxu0 %v5530
        %5533 = vmatpush1.bf16.msra.mxu0 %v5527
        %5534 = vmatprep.subr.bf16.mxu0 0
        %5535 = vmatpush1.bf16.msra.mxu0 0
        %5536 = vmatprep.subr.bf16.mxu0 0
        %5537 = vmatpush1.bf16.msra.mxu0 0
        %5538 = vmatprep.subr.bf16.mxu0 0
        %5539 = vmatpush1.bf16.msra.mxu0 0
        %5540 = vmatprep.subr.bf16.mxu0 0
        %5541 = vmatpush1.bf16.msra.mxu0 0
        %5542 = vmatprep.subr.bf16.mxu0 0
        %5543 = vmatpush1.bf16.msra.mxu0 0
        %5544 = vmatprep.subr.bf16.mxu0 0
        %5545 = vmatpush1.bf16.msra.mxu0 0
        %5546 = vmatprep.subr.bf16.mxu0 0
        %5547 = vmatpush1.bf16.msra.mxu0 0
        %5548 = vmatprep.subr.bf16.mxu0 0
        %5549 = vmatpush1.bf16.msra.mxu0 0
        %5550 = vmatprep.subr.bf16.mxu0 0
        %5551 = vmatpush1.bf16.msra.mxu0 0
        %5552 = vmatprep.subr.bf16.mxu0 0
        %5553 = vmatpush1.bf16.msra.mxu0 0
        %5554 = vmatprep.subr.bf16.mxu0 0
        %5555 = vmatpush1.bf16.msra.mxu0 0
        %5556 = vmatprep.subr.bf16.mxu0 0
        %5557 = vmatpush1.bf16.msra.mxu0 0
        %5558 = vmatprep.subr.bf16.mxu0 0
        %5559 = vmatpush1.bf16.msra.mxu0 0
        %5560 = vmatprep.subr.bf16.mxu0 0
        %5561 = vmatpush1.bf16.msra.mxu0 0
        %5562 = vmatprep.subr.bf16.mxu0 0
        %5563 = vmatpush1.bf16.msra.mxu0 0
        %5564 = vmatprep.mubr.bf16.mxu0 0
        %5565 = vmatmul.mubr.bf16.gmra.mrb[0].mxu0 %v5521
        %v5566 = vpop.f32.mrb[0].mxu0
        %v5567 = vadd.f32 %v5502, %v5566
        %v5568 = vpop.f32.mrb[0].mxu0
        %v5569 = vadd.f32 %v5504, %v5568
        %v5570 = vpop.f32.mrb[0].mxu0
        %v5571 = vadd.f32 %v5506, %v5570
        %v5572 = vpop.f32.mrb[0].mxu0
        %v5573 = vadd.f32 %v5508, %v5572
        %5574 = vmatprep.mubr.bf16.mxu0 0
        %5575 = vmatmul.mubr.bf16.gmra.mrb[0].mxu0 %v5524
        %v5576 = vpop.f32.mrb[0].mxu0
        %v5577 = vadd.f32 %v5512, %v5576
        %v5578 = vpop.f32.mrb[0].mxu0
        %v5579 = vadd.f32 %v5514, %v5578
        %v5580 = vpop.f32.mrb[0].mxu0
        %v5581 = vadd.f32 %v5516, %v5580
        %v5582 = vpop.f32.mrb[0].mxu0
        %v5583 = vadd.f32 %v5518, %v5582
        %5584 = vdwg.mxu0
        %s5585 = scalar_lea.vmem %s25, 64
        %v5586 = vld [vmem:[%s5585] sm:$0xff]
        %v5587 = vld [vmem:[%s5585 + $0x8] sm:$0xff]
        %v5588 = vld [vmem:[%s5585 + $0x10] sm:$0xff]
        %v5589 = vld [vmem:[%s5585 + $0x18] sm:$0xff]
        %v5590 = vpack.c.bf16 %v5587, %v5586
        %v5591 = vpack.c.bf16 %v5589, %v5588
        %v5592 = vpack.c.bf16 %v5186, %v5186
        %v5593 = vpack.c.bf16 %v5188, %v5188
        %v5595 = vsel %vm3197, %v5590, 0
        %v5598 = vsel %vm3197, %v5591, 0
        %v5601 = vsel %vm3201, %v5592, 0
        %v5604 = vsel %vm3201, %v5593, 0
        %5606 = vmatprep.subr.bf16.mxu0 %v5604
        %5607 = vmatpush1.bf16.msra.mxu0 %v5601
        %5608 = vmatprep.subr.bf16.mxu0 0
        %5609 = vmatpush1.bf16.msra.mxu0 0
        %5610 = vmatprep.subr.bf16.mxu0 0
        %5611 = vmatpush1.bf16.msra.mxu0 0
        %5612 = vmatprep.subr.bf16.mxu0 0
        %5613 = vmatpush1.bf16.msra.mxu0 0
        %5614 = vmatprep.subr.bf16.mxu0 0
        %5615 = vmatpush1.bf16.msra.mxu0 0
        %5616 = vmatprep.subr.bf16.mxu0 0
        %5617 = vmatpush1.bf16.msra.mxu0 0
        %5618 = vmatprep.subr.bf16.mxu0 0
        %5619 = vmatpush1.bf16.msra.mxu0 0
        %5620 = vmatprep.subr.bf16.mxu0 0
        %5621 = vmatpush1.bf16.msra.mxu0 0
        %5622 = vmatprep.subr.bf16.mxu0 0
        %5623 = vmatpush1.bf16.msra.mxu0 0
        %5624 = vmatprep.subr.bf16.mxu0 0
        %5625 = vmatpush1.bf16.msra.mxu0 0
        %5626 = vmatprep.subr.bf16.mxu0 0
        %5627 = vmatpush1.bf16.msra.mxu0 0
        %5628 = vmatprep.subr.bf16.mxu0 0
        %5629 = vmatpush1.bf16.msra.mxu0 0
        %5630 = vmatprep.subr.bf16.mxu0 0
        %5631 = vmatpush1.bf16.msra.mxu0 0
        %5632 = vmatprep.subr.bf16.mxu0 0
        %5633 = vmatpush1.bf16.msra.mxu0 0
        %5634 = vmatprep.subr.bf16.mxu0 0
        %5635 = vmatpush1.bf16.msra.mxu0 0
        %5636 = vmatprep.subr.bf16.mxu0 0
        %5637 = vmatpush1.bf16.msra.mxu0 0
        %5638 = vmatprep.mubr.bf16.mxu0 0
        %5639 = vmatmul.mubr.bf16.gmra.mrb[0].mxu0 %v5595
        %v5640 = vpop.f32.mrb[0].mxu0
        %v5641 = vadd.f32 0.0, %v5640
        %v5642 = vpop.f32.mrb[0].mxu0
        %v5643 = vadd.f32 0.0, %v5642
        %v5644 = vpop.f32.mrb[0].mxu0
        %v5645 = vadd.f32 0.0, %v5644
        %v5646 = vpop.f32.mrb[0].mxu0
        %v5647 = vadd.f32 0.0, %v5646
        %5648 = vmatprep.mubr.bf16.mxu0 0
        %5649 = vmatmul.mubr.bf16.gmra.mrb[0].mxu0 %v5598
        %v5650 = vpop.f32.mrb[0].mxu0
        %v5651 = vadd.f32 0.0, %v5650
        %v5652 = vpop.f32.mrb[0].mxu0
        %v5653 = vadd.f32 0.0, %v5652
        %v5654 = vpop.f32.mrb[0].mxu0
        %v5655 = vadd.f32 0.0, %v5654
        %v5656 = vpop.f32.mrb[0].mxu0
        %v5657 = vadd.f32 0.0, %v5656
        %5658 = vdwg.mxu0
        %v5659 = vadd.f32 %v5567, %v5641
        %v5660 = vadd.f32 %v5569, %v5643
        %v5661 = vadd.f32 %v5571, %v5645
        %v5662 = vadd.f32 %v5573, %v5647
        %v5663 = vadd.f32 %v5577, %v5651
        %v5664 = vadd.f32 %v5579, %v5653
        %v5665 = vadd.f32 %v5581, %v5655
        %v5666 = vadd.f32 %v5583, %v5657
        %s5667 = scalar_lea.vmem %s25, 96
        %v5668 = vld [vmem:[%s5667] sm:$0xff]
        %v5669 = vld [vmem:[%s5667 + $0x8] sm:$0xff]
        %v5670 = vld [vmem:[%s5667 + $0x10] sm:$0xff]
        %v5671 = vld [vmem:[%s5667 + $0x18] sm:$0xff]
        %v5672 = vpack.c.bf16 %v5669, %v5668
        %v5673 = vpack.c.bf16 %v5671, %v5670
        %v5674 = vpack.c.bf16 %v5227, %v5227
        %v5675 = vpack.c.bf16 %v5229, %v5229
        %v5677 = vsel %vm3197, %v5672, 0
        %v5680 = vsel %vm3197, %v5673, 0
        %v5683 = vsel %vm3201, %v5674, 0
        %v5686 = vsel %vm3201, %v5675, 0
        %5688 = vmatprep.subr.bf16.mxu0 %v5686
        %5689 = vmatpush1.bf16.msra.mxu0 %v5683
        %5690 = vmatprep.subr.bf16.mxu0 0
        %5691 = vmatpush1.bf16.msra.mxu0 0
        %5692 = vmatprep.subr.bf16.mxu0 0
        %5693 = vmatpush1.bf16.msra.mxu0 0
        %5694 = vmatprep.subr.bf16.mxu0 0
        %5695 = vmatpush1.bf16.msra.mxu0 0
        %5696 = vmatprep.subr.bf16.mxu0 0
        %5697 = vmatpush1.bf16.msra.mxu0 0
        %5698 = vmatprep.subr.bf16.mxu0 0
        %5699 = vmatpush1.bf16.msra.mxu0 0
        %5700 = vmatprep.subr.bf16.mxu0 0
        %5701 = vmatpush1.bf16.msra.mxu0 0
        %5702 = vmatprep.subr.bf16.mxu0 0
        %5703 = vmatpush1.bf16.msra.mxu0 0
        %5704 = vmatprep.subr.bf16.mxu0 0
        %5705 = vmatpush1.bf16.msra.mxu0 0
        %5706 = vmatprep.subr.bf16.mxu0 0
        %5707 = vmatpush1.bf16.msra.mxu0 0
        %5708 = vmatprep.subr.bf16.mxu0 0
        %5709 = vmatpush1.bf16.msra.mxu0 0
        %5710 = vmatprep.subr.bf16.mxu0 0
        %5711 = vmatpush1.bf16.msra.mxu0 0
        %5712 = vmatprep.subr.bf16.mxu0 0
        %5713 = vmatpush1.bf16.msra.mxu0 0
        %5714 = vmatprep.subr.bf16.mxu0 0
        %5715 = vmatpush1.bf16.msra.mxu0 0
        %5716 = vmatprep.subr.bf16.mxu0 0
        %5717 = vmatpush1.bf16.msra.mxu0 0
        %5718 = vmatprep.subr.bf16.mxu0 0
        %5719 = vmatpush1.bf16.msra.mxu0 0
        %5720 = vmatprep.mubr.bf16.mxu0 0
        %5721 = vmatmul.mubr.bf16.gmra.mrb[0].mxu0 %v5677
        %v5722 = vpop.f32.mrb[0].mxu0
        %v5723 = vadd.f32 0.0, %v5722
        %v5724 = vpop.f32.mrb[0].mxu0
        %v5725 = vadd.f32 0.0, %v5724
        %v5726 = vpop.f32.mrb[0].mxu0
        %v5727 = vadd.f32 0.0, %v5726
        %v5728 = vpop.f32.mrb[0].mxu0
        %v5729 = vadd.f32 0.0, %v5728
        %5730 = vmatprep.mubr.bf16.mxu0 0
        %5731 = vmatmul.mubr.bf16.gmra.mrb[0].mxu0 %v5680
        %v5732 = vpop.f32.mrb[0].mxu0
        %v5733 = vadd.f32 0.0, %v5732
        %v5734 = vpop.f32.mrb[0].mxu0
        %v5735 = vadd.f32 0.0, %v5734
        %v5736 = vpop.f32.mrb[0].mxu0
        %v5737 = vadd.f32 0.0, %v5736
        %v5738 = vpop.f32.mrb[0].mxu0
        %v5739 = vadd.f32 0.0, %v5738
        %5740 = vdwg.mxu0
        %v5741 = vadd.f32 %v5659, %v5723
        %v5742 = vadd.f32 %v5660, %v5725
        %v5743 = vadd.f32 %v5661, %v5727
        %v5744 = vadd.f32 %v5662, %v5729
        %v5745 = vadd.f32 %v5663, %v5733
        %v5746 = vadd.f32 %v5664, %v5735
        %v5747 = vadd.f32 %v5665, %v5737
        %v5748 = vadd.f32 %v5666, %v5739
        %s5749 = scalar_lea.vmem %s25, 128
        %v5750 = vld [vmem:[%s5749] sm:$0xff]
        %v5751 = vld [vmem:[%s5749 + $0x8] sm:$0xff]
        %v5752 = vld [vmem:[%s5749 + $0x10] sm:$0xff]
        %v5753 = vld [vmem:[%s5749 + $0x18] sm:$0xff]
        %v5754 = vpack.c.bf16 %v5751, %v5750
        %v5755 = vpack.c.bf16 %v5753, %v5752
        %v5756 = vpack.c.bf16 %v5268, %v5268
        %v5757 = vpack.c.bf16 %v5270, %v5270
        %v5759 = vsel %vm3197, %v5754, 0
        %v5762 = vsel %vm3197, %v5755, 0
        %v5765 = vsel %vm3201, %v5756, 0
        %v5768 = vsel %vm3201, %v5757, 0
        %5770 = vmatprep.subr.bf16.mxu0 %v5768
        %5771 = vmatpush1.bf16.msra.mxu0 %v5765
        %5772 = vmatprep.subr.bf16.mxu0 0
        %5773 = vmatpush1.bf16.msra.mxu0 0
        %5774 = vmatprep.subr.bf16.mxu0 0
        %5775 = vmatpush1.bf16.msra.mxu0 0
        %5776 = vmatprep.subr.bf16.mxu0 0
        %5777 = vmatpush1.bf16.msra.mxu0 0
        %5778 = vmatprep.subr.bf16.mxu0 0
        %5779 = vmatpush1.bf16.msra.mxu0 0
        %5780 = vmatprep.subr.bf16.mxu0 0
        %5781 = vmatpush1.bf16.msra.mxu0 0
        %5782 = vmatprep.subr.bf16.mxu0 0
        %5783 = vmatpush1.bf16.msra.mxu0 0
        %5784 = vmatprep.subr.bf16.mxu0 0
        %5785 = vmatpush1.bf16.msra.mxu0 0
        %5786 = vmatprep.subr.bf16.mxu0 0
        %5787 = vmatpush1.bf16.msra.mxu0 0
        %5788 = vmatprep.subr.bf16.mxu0 0
        %5789 = vmatpush1.bf16.msra.mxu0 0
        %5790 = vmatprep.subr.bf16.mxu0 0
        %5791 = vmatpush1.bf16.msra.mxu0 0
        %5792 = vmatprep.subr.bf16.mxu0 0
        %5793 = vmatpush1.bf16.msra.mxu0 0
        %5794 = vmatprep.subr.bf16.mxu0 0
        %5795 = vmatpush1.bf16.msra.mxu0 0
        %5796 = vmatprep.subr.bf16.mxu0 0
        %5797 = vmatpush1.bf16.msra.mxu0 0
        %5798 = vmatprep.subr.bf16.mxu0 0
        %5799 = vmatpush1.bf16.msra.mxu0 0
        %5800 = vmatprep.subr.bf16.mxu0 0
        %5801 = vmatpush1.bf16.msra.mxu0 0
        %5802 = vmatprep.mubr.bf16.mxu0 0
        %5803 = vmatmul.mubr.bf16.gmra.mrb[0].mxu0 %v5759
        %v5804 = vpop.f32.mrb[0].mxu0
        %v5805 = vadd.f32 0.0, %v5804
        %v5806 = vpop.f32.mrb[0].mxu0
        %v5807 = vadd.f32 0.0, %v5806
        %v5808 = vpop.f32.mrb[0].mxu0
        %v5809 = vadd.f32 0.0, %v5808
        %v5810 = vpop.f32.mrb[0].mxu0
        %v5811 = vadd.f32 0.0, %v5810
        %5812 = vmatprep.mubr.bf16.mxu0 0
        %5813 = vmatmul.mubr.bf16.gmra.mrb[0].mxu0 %v5762
        %v5814 = vpop.f32.mrb[0].mxu0
        %v5815 = vadd.f32 0.0, %v5814
        %v5816 = vpop.f32.mrb[0].mxu0
        %v5817 = vadd.f32 0.0, %v5816
        %v5818 = vpop.f32.mrb[0].mxu0
        %v5819 = vadd.f32 0.0, %v5818
        %v5820 = vpop.f32.mrb[0].mxu0
        %v5821 = vadd.f32 0.0, %v5820
        %5822 = vdwg.mxu0
        %v5823 = vadd.f32 %v5741, %v5805
        %v5824 = vadd.f32 %v5742, %v5807
        %v5825 = vadd.f32 %v5743, %v5809
        %v5826 = vadd.f32 %v5744, %v5811
        %v5827 = vadd.f32 %v5745, %v5815
        %v5828 = vadd.f32 %v5746, %v5817
        %v5829 = vadd.f32 %v5747, %v5819
        %v5830 = vadd.f32 %v5748, %v5821
        %s5831 = scalar_lea.vmem %s25, 160
        %v5832 = vld [vmem:[%s5831] sm:$0xff]
        %v5833 = vld [vmem:[%s5831 + $0x8] sm:$0xff]
        %v5834 = vld [vmem:[%s5831 + $0x10] sm:$0xff]
        %v5835 = vld [vmem:[%s5831 + $0x18] sm:$0xff]
        %v5836 = vpack.c.bf16 %v5833, %v5832
        %v5837 = vpack.c.bf16 %v5835, %v5834
        %v5838 = vpack.c.bf16 %v5309, %v5309
        %v5839 = vpack.c.bf16 %v5311, %v5311
        %v5841 = vsel %vm3197, %v5836, 0
        %v5844 = vsel %vm3197, %v5837, 0
        %v5847 = vsel %vm3201, %v5838, 0
        %v5850 = vsel %vm3201, %v5839, 0
        %5852 = vmatprep.subr.bf16.mxu0 %v5850
        %5853 = vmatpush1.bf16.msra.mxu0 %v5847
        %5854 = vmatprep.subr.bf16.mxu0 0
        %5855 = vmatpush1.bf16.msra.mxu0 0
        %5856 = vmatprep.subr.bf16.mxu0 0
        %5857 = vmatpush1.bf16.msra.mxu0 0
        %5858 = vmatprep.subr.bf16.mxu0 0
        %5859 = vmatpush1.bf16.msra.mxu0 0
        %5860 = vmatprep.subr.bf16.mxu0 0
        %5861 = vmatpush1.bf16.msra.mxu0 0
        %5862 = vmatprep.subr.bf16.mxu0 0
        %5863 = vmatpush1.bf16.msra.mxu0 0
        %5864 = vmatprep.subr.bf16.mxu0 0
        %5865 = vmatpush1.bf16.msra.mxu0 0
        %5866 = vmatprep.subr.bf16.mxu0 0
        %5867 = vmatpush1.bf16.msra.mxu0 0
        %5868 = vmatprep.subr.bf16.mxu0 0
        %5869 = vmatpush1.bf16.msra.mxu0 0
        %5870 = vmatprep.subr.bf16.mxu0 0
        %5871 = vmatpush1.bf16.msra.mxu0 0
        %5872 = vmatprep.subr.bf16.mxu0 0
        %5873 = vmatpush1.bf16.msra.mxu0 0
        %5874 = vmatprep.subr.bf16.mxu0 0
        %5875 = vmatpush1.bf16.msra.mxu0 0
        %5876 = vmatprep.subr.bf16.mxu0 0
        %5877 = vmatpush1.bf16.msra.mxu0 0
        %5878 = vmatprep.subr.bf16.mxu0 0
        %5879 = vmatpush1.bf16.msra.mxu0 0
        %5880 = vmatprep.subr.bf16.mxu0 0
        %5881 = vmatpush1.bf16.msra.mxu0 0
        %5882 = vmatprep.subr.bf16.mxu0 0
        %5883 = vmatpush1.bf16.msra.mxu0 0
        %5884 = vmatprep.mubr.bf16.mxu0 0
        %5885 = vmatmul.mubr.bf16.gmra.mrb[0].mxu0 %v5841
        %v5886 = vpop.f32.mrb[0].mxu0
        %v5887 = vadd.f32 0.0, %v5886
        %v5888 = vpop.f32.mrb[0].mxu0
        %v5889 = vadd.f32 0.0, %v5888
        %v5890 = vpop.f32.mrb[0].mxu0
        %v5891 = vadd.f32 0.0, %v5890
        %v5892 = vpop.f32.mrb[0].mxu0
        %v5893 = vadd.f32 0.0, %v5892
        %5894 = vmatprep.mubr.bf16.mxu0 0
        %5895 = vmatmul.mubr.bf16.gmra.mrb[0].mxu0 %v5844
        %v5896 = vpop.f32.mrb[0].mxu0
        %v5897 = vadd.f32 0.0, %v5896
        %v5898 = vpop.f32.mrb[0].mxu0
        %v5899 = vadd.f32 0.0, %v5898
        %v5900 = vpop.f32.mrb[0].mxu0
        %v5901 = vadd.f32 0.0, %v5900
        %v5902 = vpop.f32.mrb[0].mxu0
        %v5903 = vadd.f32 0.0, %v5902
        %5904 = vdwg.mxu0
        %v5905 = vadd.f32 %v5823, %v5887
        %v5906 = vadd.f32 %v5824, %v5889
        %v5907 = vadd.f32 %v5825, %v5891
        %v5908 = vadd.f32 %v5826, %v5893
        %v5909 = vadd.f32 %v5827, %v5897
        %v5910 = vadd.f32 %v5828, %v5899
        %v5911 = vadd.f32 %v5829, %v5901
        %v5912 = vadd.f32 %v5830, %v5903
        %s5913 = scalar_lea.vmem %s25, 192
        %v5914 = vld [vmem:[%s5913] sm:$0xff]
        %v5915 = vld [vmem:[%s5913 + $0x8] sm:$0xff]
        %v5916 = vld [vmem:[%s5913 + $0x10] sm:$0xff]
        %v5917 = vld [vmem:[%s5913 + $0x18] sm:$0xff]
        %v5918 = vpack.c.bf16 %v5915, %v5914
        %v5919 = vpack.c.bf16 %v5917, %v5916
        %v5920 = vpack.c.bf16 %v5350, %v5350
        %v5921 = vpack.c.bf16 %v5352, %v5352
        %v5923 = vsel %vm3197, %v5918, 0
        %v5926 = vsel %vm3197, %v5919, 0
        %v5929 = vsel %vm3201, %v5920, 0
        %v5932 = vsel %vm3201, %v5921, 0
        %5934 = vmatprep.subr.bf16.mxu0 %v5932
        %5935 = vmatpush1.bf16.msra.mxu0 %v5929
        %5936 = vmatprep.subr.bf16.mxu0 0
        %5937 = vmatpush1.bf16.msra.mxu0 0
        %5938 = vmatprep.subr.bf16.mxu0 0
        %5939 = vmatpush1.bf16.msra.mxu0 0
        %5940 = vmatprep.subr.bf16.mxu0 0
        %5941 = vmatpush1.bf16.msra.mxu0 0
        %5942 = vmatprep.subr.bf16.mxu0 0
        %5943 = vmatpush1.bf16.msra.mxu0 0
        %5944 = vmatprep.subr.bf16.mxu0 0
        %5945 = vmatpush1.bf16.msra.mxu0 0
        %5946 = vmatprep.subr.bf16.mxu0 0
        %5947 = vmatpush1.bf16.msra.mxu0 0
        %5948 = vmatprep.subr.bf16.mxu0 0
        %5949 = vmatpush1.bf16.msra.mxu0 0
        %5950 = vmatprep.subr.bf16.mxu0 0
        %5951 = vmatpush1.bf16.msra.mxu0 0
        %5952 = vmatprep.subr.bf16.mxu0 0
        %5953 = vmatpush1.bf16.msra.mxu0 0
        %5954 = vmatprep.subr.bf16.mxu0 0
        %5955 = vmatpush1.bf16.msra.mxu0 0
        %5956 = vmatprep.subr.bf16.mxu0 0
        %5957 = vmatpush1.bf16.msra.mxu0 0
        %5958 = vmatprep.subr.bf16.mxu0 0
        %5959 = vmatpush1.bf16.msra.mxu0 0
        %5960 = vmatprep.subr.bf16.mxu0 0
        %5961 = vmatpush1.bf16.msra.mxu0 0
        %5962 = vmatprep.subr.bf16.mxu0 0
        %5963 = vmatpush1.bf16.msra.mxu0 0
        %5964 = vmatprep.subr.bf16.mxu0 0
        %5965 = vmatpush1.bf16.msra.mxu0 0
        %5966 = vmatprep.mubr.bf16.mxu0 0
        %5967 = vmatmul.mubr.bf16.gmra.mrb[0].mxu0 %v5923
        %v5968 = vpop.f32.mrb[0].mxu0
        %v5969 = vadd.f32 0.0, %v5968
        %v5970 = vpop.f32.mrb[0].mxu0
        %v5971 = vadd.f32 0.0, %v5970
        %v5972 = vpop.f32.mrb[0].mxu0
        %v5973 = vadd.f32 0.0, %v5972
        %v5974 = vpop.f32.mrb[0].mxu0
        %v5975 = vadd.f32 0.0, %v5974
        %5976 = vmatprep.mubr.bf16.mxu0 0
        %5977 = vmatmul.mubr.bf16.gmra.mrb[0].mxu0 %v5926
        %v5978 = vpop.f32.mrb[0].mxu0
        %v5979 = vadd.f32 0.0, %v5978
        %v5980 = vpop.f32.mrb[0].mxu0
        %v5981 = vadd.f32 0.0, %v5980
        %v5982 = vpop.f32.mrb[0].mxu0
        %v5983 = vadd.f32 0.0, %v5982
        %v5984 = vpop.f32.mrb[0].mxu0
        %v5985 = vadd.f32 0.0, %v5984
        %5986 = vdwg.mxu0
        %v5987 = vadd.f32 %v5905, %v5969
        %v5988 = vadd.f32 %v5906, %v5971
        %v5989 = vadd.f32 %v5907, %v5973
        %v5990 = vadd.f32 %v5908, %v5975
        %v5991 = vadd.f32 %v5909, %v5979
        %v5992 = vadd.f32 %v5910, %v5981
        %v5993 = vadd.f32 %v5911, %v5983
        %v5994 = vadd.f32 %v5912, %v5985
        %s5995 = scalar_lea.vmem %s25, 224
        %v5996 = vld [vmem:[%s5995] sm:$0xff]
        %v5997 = vld [vmem:[%s5995 + $0x8] sm:$0xff]
        %v5998 = vld [vmem:[%s5995 + $0x10] sm:$0xff]
        %v5999 = vld [vmem:[%s5995 + $0x18] sm:$0xff]
        %v6000 = vpack.c.bf16 %v5997, %v5996
        %v6001 = vpack.c.bf16 %v5999, %v5998
        %v6002 = vpack.c.bf16 %v5391, %v5391
        %v6003 = vpack.c.bf16 %v5393, %v5393
        %v6005 = vsel %vm3197, %v6000, 0
        %v6008 = vsel %vm3197, %v6001, 0
        %v6011 = vsel %vm3201, %v6002, 0
        %v6014 = vsel %vm3201, %v6003, 0
        %6016 = vmatprep.subr.bf16.mxu0 %v6014
        %6017 = vmatpush1.bf16.msra.mxu0 %v6011
        %6018 = vmatprep.subr.bf16.mxu0 0
        %6019 = vmatpush1.bf16.msra.mxu0 0
        %6020 = vmatprep.subr.bf16.mxu0 0
        %6021 = vmatpush1.bf16.msra.mxu0 0
        %6022 = vmatprep.subr.bf16.mxu0 0
        %6023 = vmatpush1.bf16.msra.mxu0 0
        %6024 = vmatprep.subr.bf16.mxu0 0
        %6025 = vmatpush1.bf16.msra.mxu0 0
        %6026 = vmatprep.subr.bf16.mxu0 0
        %6027 = vmatpush1.bf16.msra.mxu0 0
        %6028 = vmatprep.subr.bf16.mxu0 0
        %6029 = vmatpush1.bf16.msra.mxu0 0
        %6030 = vmatprep.subr.bf16.mxu0 0
        %6031 = vmatpush1.bf16.msra.mxu0 0
        %6032 = vmatprep.subr.bf16.mxu0 0
        %6033 = vmatpush1.bf16.msra.mxu0 0
        %6034 = vmatprep.subr.bf16.mxu0 0
        %6035 = vmatpush1.bf16.msra.mxu0 0
        %6036 = vmatprep.subr.bf16.mxu0 0
        %6037 = vmatpush1.bf16.msra.mxu0 0
        %6038 = vmatprep.subr.bf16.mxu0 0
        %6039 = vmatpush1.bf16.msra.mxu0 0
        %6040 = vmatprep.subr.bf16.mxu0 0
        %6041 = vmatpush1.bf16.msra.mxu0 0
        %6042 = vmatprep.subr.bf16.mxu0 0
        %6043 = vmatpush1.bf16.msra.mxu0 0
        %6044 = vmatprep.subr.bf16.mxu0 0
        %6045 = vmatpush1.bf16.msra.mxu0 0
        %6046 = vmatprep.subr.bf16.mxu0 0
        %6047 = vmatpush1.bf16.msra.mxu0 0
        %6048 = vmatprep.mubr.bf16.mxu0 0
        %6049 = vmatmul.mubr.bf16.gmra.mrb[0].mxu0 %v6005
        %v6050 = vpop.f32.mrb[0].mxu0
        %v6051 = vadd.f32 0.0, %v6050
        %v6052 = vpop.f32.mrb[0].mxu0
        %v6053 = vadd.f32 0.0, %v6052
        %v6054 = vpop.f32.mrb[0].mxu0
        %v6055 = vadd.f32 0.0, %v6054
        %v6056 = vpop.f32.mrb[0].mxu0
        %v6057 = vadd.f32 0.0, %v6056
        %6058 = vmatprep.mubr.bf16.mxu0 0
        %6059 = vmatmul.mubr.bf16.gmra.mrb[0].mxu0 %v6008
        %v6060 = vpop.f32.mrb[0].mxu0
        %v6061 = vadd.f32 0.0, %v6060
        %v6062 = vpop.f32.mrb[0].mxu0
        %v6063 = vadd.f32 0.0, %v6062
        %v6064 = vpop.f32.mrb[0].mxu0
        %v6065 = vadd.f32 0.0, %v6064
        %v6066 = vpop.f32.mrb[0].mxu0
        %v6067 = vadd.f32 0.0, %v6066
        %6068 = vdwg.mxu0
        %v6069 = vadd.f32 %v5987, %v6051
        %v6070 = vadd.f32 %v5988, %v6053
        %v6071 = vadd.f32 %v5989, %v6055
        %v6072 = vadd.f32 %v5990, %v6057
        %v6073 = vadd.f32 %v5991, %v6061
        %v6074 = vadd.f32 %v5992, %v6063
        %v6075 = vadd.f32 %v5993, %v6065
        %v6076 = vadd.f32 %v5994, %v6067
        %s6077 = scalar_lea.vmem %s25, 256
        %v6078 = vld [vmem:[%s6077] sm:$0xff]
        %v6079 = vld [vmem:[%s6077 + $0x8] sm:$0xff]
        %v6080 = vld [vmem:[%s6077 + $0x10] sm:$0xff]
        %v6081 = vld [vmem:[%s6077 + $0x18] sm:$0xff]
        %v6082 = vpack.c.bf16 %v6079, %v6078
        %v6083 = vpack.c.bf16 %v6081, %v6080
        %v6084 = vpack.c.bf16 %v5432, %v5432
        %v6085 = vpack.c.bf16 %v5434, %v5434
        %v6087 = vsel %vm3197, %v6082, 0
        %v6090 = vsel %vm3197, %v6083, 0
        %v6093 = vsel %vm3201, %v6084, 0
        %v6096 = vsel %vm3201, %v6085, 0
        %6098 = vmatprep.subr.bf16.mxu0 %v6096
        %6099 = vmatpush1.bf16.msra.mxu0 %v6093
        %6100 = vmatprep.subr.bf16.mxu0 0
        %6101 = vmatpush1.bf16.msra.mxu0 0
        %6102 = vmatprep.subr.bf16.mxu0 0
        %6103 = vmatpush1.bf16.msra.mxu0 0
        %6104 = vmatprep.subr.bf16.mxu0 0
        %6105 = vmatpush1.bf16.msra.mxu0 0
        %6106 = vmatprep.subr.bf16.mxu0 0
        %6107 = vmatpush1.bf16.msra.mxu0 0
        %6108 = vmatprep.subr.bf16.mxu0 0
        %6109 = vmatpush1.bf16.msra.mxu0 0
        %6110 = vmatprep.subr.bf16.mxu0 0
        %6111 = vmatpush1.bf16.msra.mxu0 0
        %6112 = vmatprep.subr.bf16.mxu0 0
        %6113 = vmatpush1.bf16.msra.mxu0 0
        %6114 = vmatprep.subr.bf16.mxu0 0
        %6115 = vmatpush1.bf16.msra.mxu0 0
        %6116 = vmatprep.subr.bf16.mxu0 0
        %6117 = vmatpush1.bf16.msra.mxu0 0
        %6118 = vmatprep.subr.bf16.mxu0 0
        %6119 = vmatpush1.bf16.msra.mxu0 0
        %6120 = vmatprep.subr.bf16.mxu0 0
        %6121 = vmatpush1.bf16.msra.mxu0 0
        %6122 = vmatprep.subr.bf16.mxu0 0
        %6123 = vmatpush1.bf16.msra.mxu0 0
        %6124 = vmatprep.subr.bf16.mxu0 0
        %6125 = vmatpush1.bf16.msra.mxu0 0
        %6126 = vmatprep.subr.bf16.mxu0 0
        %6127 = vmatpush1.bf16.msra.mxu0 0
        %6128 = vmatprep.subr.bf16.mxu0 0
        %6129 = vmatpush1.bf16.msra.mxu0 0
        %6130 = vmatprep.mubr.bf16.mxu0 0
        %6131 = vmatmul.mubr.bf16.gmra.mrb[0].mxu0 %v6087
        %v6132 = vpop.f32.mrb[0].mxu0
        %v6133 = vadd.f32 0.0, %v6132
        %v6134 = vpop.f32.mrb[0].mxu0
        %v6135 = vadd.f32 0.0, %v6134
        %v6136 = vpop.f32.mrb[0].mxu0
        %v6137 = vadd.f32 0.0, %v6136
        %v6138 = vpop.f32.mrb[0].mxu0
        %v6139 = vadd.f32 0.0, %v6138
        %6140 = vmatprep.mubr.bf16.mxu0 0
        %6141 = vmatmul.mubr.bf16.gmra.mrb[0].mxu0 %v6090
        %v6142 = vpop.f32.mrb[0].mxu0
        %v6143 = vadd.f32 0.0, %v6142
        %v6144 = vpop.f32.mrb[0].mxu0
        %v6145 = vadd.f32 0.0, %v6144
        %v6146 = vpop.f32.mrb[0].mxu0
        %v6147 = vadd.f32 0.0, %v6146
        %v6148 = vpop.f32.mrb[0].mxu0
        %v6149 = vadd.f32 0.0, %v6148
        %6150 = vdwg.mxu0
        %v6151 = vadd.f32 %v6069, %v6133
        %v6152 = vadd.f32 %v6070, %v6135
        %v6153 = vadd.f32 %v6071, %v6137
        %v6154 = vadd.f32 %v6072, %v6139
        %v6155 = vadd.f32 %v6073, %v6143
        %v6156 = vadd.f32 %v6074, %v6145
        %v6157 = vadd.f32 %v6075, %v6147
        %v6158 = vadd.f32 %v6076, %v6149
        %v6159 = vld [vmem:[%s27] sm:$0xff]
        %v6160 = vld [vmem:[%s27 + $0x8] sm:$0xff]
        %v6161 = vld [vmem:[%s27 + $0x10] sm:$0xff]
        %v6162 = vld [vmem:[%s27 + $0x18] sm:$0xff]
        %6164 = vset.pattern.permute.xlu0 0
        %6165 = vperm.xlu0 %6164, %v6159
        %v6166 = vpop.permute.xlu0 %6165
        %6169 = vset.pattern.permute.xlu0 0
        %6170 = vperm.xlu0 %6169, %v6160
        %v6171 = vpop.permute.xlu0 %6170
        %6174 = vset.pattern.permute.xlu0 0
        %6175 = vperm.xlu0 %6174, %v6161
        %v6176 = vpop.permute.xlu0 %6175
        %6179 = vset.pattern.permute.xlu0 0
        %6180 = vperm.xlu0 %6179, %v6162
        %v6181 = vpop.permute.xlu0 %6180
        %v6183 = vadd.f32 %v6151, %v6166
        %v6184 = vadd.f32 %v6152, %v6166
        %v6185 = vadd.f32 %v6153, %v6171
        %v6186 = vadd.f32 %v6154, %v6171
        %v6187 = vadd.f32 %v6155, %v6176
        %v6188 = vadd.f32 %v6156, %v6176
        %v6189 = vadd.f32 %v6157, %v6181
        %v6190 = vadd.f32 %v6158, %v6181
        %v6191 = vld [vmem:[%s995] sm:$0xff]
        %v6192 = vld [vmem:[%s995 + $0x8] sm:$0xff]
        %v6193 = vld [vmem:[%s995 + $0x10] sm:$0xff]
        %v6194 = vld [vmem:[%s995 + $0x18] sm:$0xff]
        %v6195 = vld [vmem:[%s995 + $0x20] sm:$0xff]
        %v6196 = vld [vmem:[%s995 + $0x28] sm:$0xff]
        %v6197 = vld [vmem:[%s995 + $0x30] sm:$0xff]
        %v6198 = vld [vmem:[%s995 + $0x38] sm:$0xff]
        %v6199 = vld [vmem:[%s995 + $0x40] sm:$0xff]
        %v6200 = vld [vmem:[%s995 + $0x48] sm:$0xff]
        %v6201 = vld [vmem:[%s995 + $0x50] sm:$0xff]
        %v6202 = vld [vmem:[%s995 + $0x58] sm:$0xff]
        %v6203 = vld [vmem:[%s995 + $0x60] sm:$0xff]
        %v6204 = vld [vmem:[%s995 + $0x68] sm:$0xff]
        %v6205 = vld [vmem:[%s995 + $0x70] sm:$0xff]
        %v6206 = vld [vmem:[%s995 + $0x78] sm:$0xff]
        %v6207 = vld [vmem:[%s995 + $0x80] sm:$0xff]
        %v6208 = vld [vmem:[%s995 + $0x88] sm:$0xff]
        %v6209 = vld [vmem:[%s995 + $0x90] sm:$0xff]
        %v6210 = vld [vmem:[%s995 + $0x98] sm:$0xff]
        %v6211 = vld [vmem:[%s995 + $0xa0] sm:$0xff]
        %v6212 = vld [vmem:[%s995 + $0xa8] sm:$0xff]
        %v6213 = vld [vmem:[%s995 + $0xb0] sm:$0xff]
        %v6214 = vld [vmem:[%s995 + $0xb8] sm:$0xff]
        %v6215 = vld [vmem:[%s995 + $0xc0] sm:$0xff]
        %v6216 = vld [vmem:[%s995 + $0xc8] sm:$0xff]
        %v6217 = vld [vmem:[%s995 + $0xd0] sm:$0xff]
        %v6218 = vld [vmem:[%s995 + $0xd8] sm:$0xff]
        %v6219 = vld [vmem:[%s995 + $0xe0] sm:$0xff]
        %v6220 = vld [vmem:[%s995 + $0xe8] sm:$0xff]
        %v6221 = vld [vmem:[%s995 + $0xf0] sm:$0xff]
        %v6222 = vld [vmem:[%s995 + $0xf8] sm:$0xff]
        %6224 = vset.pattern.permute.xlu0 0
        %6225 = vperm.xlu0 %6224, %v6191
        %v6226 = vpop.permute.xlu0 %6225
        %6229 = vset.pattern.permute.xlu0 0
        %6230 = vperm.xlu0 %6229, %v6192
        %v6231 = vpop.permute.xlu0 %6230
        %6234 = vset.pattern.permute.xlu0 0
        %6235 = vperm.xlu0 %6234, %v6193
        %v6236 = vpop.permute.xlu0 %6235
        %6239 = vset.pattern.permute.xlu0 0
        %6240 = vperm.xlu0 %6239, %v6194
        %v6241 = vpop.permute.xlu0 %6240
        %6244 = vset.pattern.permute.xlu0 0
        %6245 = vperm.xlu0 %6244, %v6195
        %v6246 = vpop.permute.xlu0 %6245
        %6249 = vset.pattern.permute.xlu0 0
        %6250 = vperm.xlu0 %6249, %v6196
        %v6251 = vpop.permute.xlu0 %6250
        %6254 = vset.pattern.permute.xlu0 0
        %6255 = vperm.xlu0 %6254, %v6197
        %v6256 = vpop.permute.xlu0 %6255
        %6259 = vset.pattern.permute.xlu0 0
        %6260 = vperm.xlu0 %6259, %v6198
        %v6261 = vpop.permute.xlu0 %6260
        %6264 = vset.pattern.permute.xlu0 0
        %6265 = vperm.xlu0 %6264, %v6199
        %v6266 = vpop.permute.xlu0 %6265
        %6269 = vset.pattern.permute.xlu0 0
        %6270 = vperm.xlu0 %6269, %v6200
        %v6271 = vpop.permute.xlu0 %6270
        %6274 = vset.pattern.permute.xlu0 0
        %6275 = vperm.xlu0 %6274, %v6201
        %v6276 = vpop.permute.xlu0 %6275
        %6279 = vset.pattern.permute.xlu0 0
        %6280 = vperm.xlu0 %6279, %v6202
        %v6281 = vpop.permute.xlu0 %6280
        %6284 = vset.pattern.permute.xlu0 0
        %6285 = vperm.xlu0 %6284, %v6203
        %v6286 = vpop.permute.xlu0 %6285
        %6289 = vset.pattern.permute.xlu0 0
        %6290 = vperm.xlu0 %6289, %v6204
        %v6291 = vpop.permute.xlu0 %6290
        %6294 = vset.pattern.permute.xlu0 0
        %6295 = vperm.xlu0 %6294, %v6205
        %v6296 = vpop.permute.xlu0 %6295
        %6299 = vset.pattern.permute.xlu0 0
        %6300 = vperm.xlu0 %6299, %v6206
        %v6301 = vpop.permute.xlu0 %6300
        %6304 = vset.pattern.permute.xlu0 0
        %6305 = vperm.xlu0 %6304, %v6207
        %v6306 = vpop.permute.xlu0 %6305
        %6309 = vset.pattern.permute.xlu0 0
        %6310 = vperm.xlu0 %6309, %v6208
        %v6311 = vpop.permute.xlu0 %6310
        %6314 = vset.pattern.permute.xlu0 0
        %6315 = vperm.xlu0 %6314, %v6209
        %v6316 = vpop.permute.xlu0 %6315
        %6319 = vset.pattern.permute.xlu0 0
        %6320 = vperm.xlu0 %6319, %v6210
        %v6321 = vpop.permute.xlu0 %6320
        %6324 = vset.pattern.permute.xlu0 0
        %6325 = vperm.xlu0 %6324, %v6211
        %v6326 = vpop.permute.xlu0 %6325
        %6329 = vset.pattern.permute.xlu0 0
        %6330 = vperm.xlu0 %6329, %v6212
        %v6331 = vpop.permute.xlu0 %6330
        %6334 = vset.pattern.permute.xlu0 0
        %6335 = vperm.xlu0 %6334, %v6213
        %v6336 = vpop.permute.xlu0 %6335
        %6339 = vset.pattern.permute.xlu0 0
        %6340 = vperm.xlu0 %6339, %v6214
        %v6341 = vpop.permute.xlu0 %6340
        %6344 = vset.pattern.permute.xlu0 0
        %6345 = vperm.xlu0 %6344, %v6215
        %v6346 = vpop.permute.xlu0 %6345
        %6349 = vset.pattern.permute.xlu0 0
        %6350 = vperm.xlu0 %6349, %v6216
        %v6351 = vpop.permute.xlu0 %6350
        %6354 = vset.pattern.permute.xlu0 0
        %6355 = vperm.xlu0 %6354, %v6217
        %v6356 = vpop.permute.xlu0 %6355
        %6359 = vset.pattern.permute.xlu0 0
        %6360 = vperm.xlu0 %6359, %v6218
        %v6361 = vpop.permute.xlu0 %6360
        %6364 = vset.pattern.permute.xlu0 0
        %6365 = vperm.xlu0 %6364, %v6219
        %v6366 = vpop.permute.xlu0 %6365
        %6369 = vset.pattern.permute.xlu0 0
        %6370 = vperm.xlu0 %6369, %v6220
        %v6371 = vpop.permute.xlu0 %6370
        %6374 = vset.pattern.permute.xlu0 0
        %6375 = vperm.xlu0 %6374, %v6221
        %v6376 = vpop.permute.xlu0 %6375
        %6379 = vset.pattern.permute.xlu0 0
        %6380 = vperm.xlu0 %6379, %v6222
        %v6381 = vpop.permute.xlu0 %6380
        %v6383 = vld [vmem:[%s29] sm:$0xff]
        %v6384 = vld [vmem:[%s29 + $0x8] sm:$0xff]
        %v6385 = vld [vmem:[%s29 + $0x10] sm:$0xff]
        %v6386 = vld [vmem:[%s29 + $0x18] sm:$0xff]
        %v6387 = vld [vmem:[%s29 + $0x20] sm:$0xff]
        %v6388 = vld [vmem:[%s29 + $0x28] sm:$0xff]
        %v6389 = vld [vmem:[%s29 + $0x30] sm:$0xff]
        %v6390 = vld [vmem:[%s29 + $0x38] sm:$0xff]
        %v6391 = vpack.c.bf16 %v6385, %v6383
        %v6392 = vpack.c.bf16 %v6386, %v6384
        %v6393 = vpack.c.bf16 %v6389, %v6387
        %v6394 = vpack.c.bf16 %v6390, %v6388
        %v6395 = vpack.c.bf16 %v6231, %v6226
        %v6396 = vpack.c.bf16 %v6241, %v6236
        %v6397 = vpack.c.bf16 %v6251, %v6246
        %v6398 = vpack.c.bf16 %v6261, %v6256
        %v6399 = vpack.c.bf16 %v6271, %v6266
        %v6400 = vpack.c.bf16 %v6281, %v6276
        %v6401 = vpack.c.bf16 %v6291, %v6286
        %v6402 = vpack.c.bf16 %v6301, %v6296
        %v6403 = vpack.c.bf16 %v6311, %v6306
        %v6404 = vpack.c.bf16 %v6321, %v6316
        %v6405 = vpack.c.bf16 %v6331, %v6326
        %v6406 = vpack.c.bf16 %v6341, %v6336
        %v6407 = vpack.c.bf16 %v6351, %v6346
        %v6408 = vpack.c.bf16 %v6361, %v6356
        %v6409 = vpack.c.bf16 %v6371, %v6366
        %v6410 = vpack.c.bf16 %v6381, %v6376
        %v6411 = vld [vmem:[%s31] sm:$0xff]
        %v6412 = vld [vmem:[%s31 + $0x8] sm:$0xff]
        %v6413 = vld [vmem:[%s31 + $0x10] sm:$0xff]
        %v6414 = vld [vmem:[%s31 + $0x18] sm:$0xff]
        %6416 = vset.pattern.permute.xlu0 0
        %6417 = vperm.xlu0 %6416, %v6411
        %v6418 = vpop.permute.xlu0 %6417
        %6421 = vset.pattern.permute.xlu0 0
        %6422 = vperm.xlu0 %6421, %v6412
        %v6423 = vpop.permute.xlu0 %6422
        %6426 = vset.pattern.permute.xlu0 0
        %6427 = vperm.xlu0 %6426, %v6413
        %v6428 = vpop.permute.xlu0 %6427
        %6431 = vset.pattern.permute.xlu0 0
        %6432 = vperm.xlu0 %6431, %v6414
        %v6433 = vpop.permute.xlu0 %6432
        %6435 = vmatprep.subr.bf16.mxu0 %v6395
        %6436 = vmatpush1.bf16.msra.mxu0 %v6395
        %6437 = vmatprep.subr.bf16.mxu0 %v6396
        %6438 = vmatpush1.bf16.msra.mxu0 %v6396
        %6439 = vmatprep.subr.bf16.mxu0 %v6397
        %6440 = vmatpush1.bf16.msra.mxu0 %v6397
        %6441 = vmatprep.subr.bf16.mxu0 %v6398
        %6442 = vmatpush1.bf16.msra.mxu0 %v6398
        %6443 = vmatprep.subr.bf16.mxu0 %v6399
        %6444 = vmatpush1.bf16.msra.mxu0 %v6399
        %6445 = vmatprep.subr.bf16.mxu0 %v6400
        %6446 = vmatpush1.bf16.msra.mxu0 %v6400
        %6447 = vmatprep.subr.bf16.mxu0 %v6401
        %6448 = vmatpush1.bf16.msra.mxu0 %v6401
        %6449 = vmatprep.subr.bf16.mxu0 %v6402
        %6450 = vmatpush1.bf16.msra.mxu0 %v6402
        %6451 = vmatprep.subr.bf16.mxu0 %v6403
        %6452 = vmatpush1.bf16.msra.mxu0 %v6403
        %6453 = vmatprep.subr.bf16.mxu0 %v6404
        %6454 = vmatpush1.bf16.msra.mxu0 %v6404
        %6455 = vmatprep.subr.bf16.mxu0 %v6405
        %6456 = vmatpush1.bf16.msra.mxu0 %v6405
        %6457 = vmatprep.subr.bf16.mxu0 %v6406
        %6458 = vmatpush1.bf16.msra.mxu0 %v6406
        %6459 = vmatprep.subr.bf16.mxu0 %v6407
        %6460 = vmatpush1.bf16.msra.mxu0 %v6407
        %6461 = vmatprep.subr.bf16.mxu0 %v6408
        %6462 = vmatpush1.bf16.msra.mxu0 %v6408
        %6463 = vmatprep.subr.bf16.mxu0 %v6409
        %6464 = vmatpush1.bf16.msra.mxu0 %v6409
        %6465 = vmatprep.subr.bf16.mxu0 %v6410
        %6466 = vmatpush1.bf16.msra.mxu0 %v6410
        %6467 = vmatprep.mubr.bf16.mxu0 %v6392
        %6468 = vmatmul.mubr.bf16.gmra.mrb[0].mxu0 %v6391
        %v6469 = vpop.f32.mrb[0].mxu0
        %v6470 = vadd.f32 %v6418, %v6469
        %v6471 = vpop.f32.mrb[0].mxu0
        %v6472 = vadd.f32 %v6418, %v6471
        %v6473 = vpop.f32.mrb[0].mxu0
        %v6474 = vadd.f32 %v6423, %v6473
        %v6475 = vpop.f32.mrb[0].mxu0
        %v6476 = vadd.f32 %v6423, %v6475
        %6477 = vmatprep.mubr.bf16.mxu0 %v6394
        %6478 = vmatmul.mubr.bf16.gmra.mrb[0].mxu0 %v6393
        %v6479 = vpop.f32.mrb[0].mxu0
        %v6480 = vadd.f32 %v6428, %v6479
        %v6481 = vpop.f32.mrb[0].mxu0
        %v6482 = vadd.f32 %v6428, %v6481
        %v6483 = vpop.f32.mrb[0].mxu0
        %v6484 = vadd.f32 %v6433, %v6483
        %v6485 = vpop.f32.mrb[0].mxu0
        %v6486 = vadd.f32 %v6433, %v6485
        %6487 = vdwg.mxu0
        %v6488 = vxor.u32 %v6470, 2147483648
        %v6489 = vxor.u32 %v6472, 2147483648
        %v6490 = vxor.u32 %v6474, 2147483648
        %v6491 = vxor.u32 %v6476, 2147483648
        %v6492 = vxor.u32 %v6480, 2147483648
        %v6493 = vxor.u32 %v6482, 2147483648
        %v6494 = vxor.u32 %v6484, 2147483648
        %v6495 = vxor.u32 %v6486, 2147483648
        %v6496 = vmul.f32 %v6488, 1.442695
        %v6497 = vpow.pop %v6496
        %v6498 = vmul.f32 %v6489, 1.442695
        %v6499 = vpow.pop %v6498
        %v6500 = vmul.f32 %v6490, 1.442695
        %v6501 = vpow.pop %v6500
        %v6502 = vmul.f32 %v6491, 1.442695
        %v6503 = vpow.pop %v6502
        %v6504 = vmul.f32 %v6492, 1.442695
        %v6505 = vpow.pop %v6504
        %v6506 = vmul.f32 %v6493, 1.442695
        %v6507 = vpow.pop %v6506
        %v6508 = vmul.f32 %v6494, 1.442695
        %v6509 = vpow.pop %v6508
        %v6510 = vmul.f32 %v6495, 1.442695
        %v6511 = vpow.pop %v6510
        %v6512 = vadd.f32 %v6497, 1.0
        %v6513 = vadd.f32 %v6499, 1.0
        %v6514 = vadd.f32 %v6501, 1.0
        %v6515 = vadd.f32 %v6503, 1.0
        %v6516 = vadd.f32 %v6505, 1.0
        %v6517 = vadd.f32 %v6507, 1.0
        %v6518 = vadd.f32 %v6509, 1.0
        %v6519 = vadd.f32 %v6511, 1.0
        %v6520 = vrcp.pop %v6512
        %v6521 = vmul.f32 1.0, %v6520
        %v6522 = vrcp.pop %v6513
        %v6523 = vmul.f32 1.0, %v6522
        %v6524 = vrcp.pop %v6514
        %v6525 = vmul.f32 1.0, %v6524
        %v6526 = vrcp.pop %v6515
        %v6527 = vmul.f32 1.0, %v6526
        %v6528 = vrcp.pop %v6516
        %v6529 = vmul.f32 1.0, %v6528
        %v6530 = vrcp.pop %v6517
        %v6531 = vmul.f32 1.0, %v6530
        %v6532 = vrcp.pop %v6518
        %v6533 = vmul.f32 1.0, %v6532
        %v6534 = vrcp.pop %v6519
        %v6535 = vmul.f32 1.0, %v6534
        %v6536 = vmul.f32 %v6470, %v6521
        %v6537 = vmul.f32 %v6472, %v6523
        %v6538 = vmul.f32 %v6474, %v6525
        %v6539 = vmul.f32 %v6476, %v6527
        %v6540 = vmul.f32 %v6480, %v6529
        %v6541 = vmul.f32 %v6482, %v6531
        %v6542 = vmul.f32 %v6484, %v6533
        %v6543 = vmul.f32 %v6486, %v6535
        %v6544 = vld [vmem:[#allocation2] sm:$0xff]
        %v6545 = vld [vmem:[#allocation2 + $0x8] sm:$0xff]
        %v6546 = vld [vmem:[#allocation2 + $0x10] sm:$0xff]
        %v6547 = vld [vmem:[#allocation2 + $0x18] sm:$0xff]
        %v6548 = vpack.c.bf16 %v6545, %v6544
        %v6549 = vpack.c.bf16 %v6547, %v6546
        %v6550 = vpack.c.bf16 %v6538, %v6536
        %v6551 = vpack.c.bf16 %v6539, %v6537
        %v6552 = vpack.c.bf16 %v6542, %v6540
        %v6553 = vpack.c.bf16 %v6543, %v6541
        %v6554 = vld [vmem:[%s35] sm:$0xff]
        %v6555 = vld [vmem:[%s35 + $0x8] sm:$0xff]
        %v6556 = vld [vmem:[%s35 + $0x10] sm:$0xff]
        %v6557 = vld [vmem:[%s35 + $0x18] sm:$0xff]
        %6559 = vset.pattern.permute.xlu0 0
        %6560 = vperm.xlu0 %6559, %v6554
        %v6561 = vpop.permute.xlu0 %6560
        %6564 = vset.pattern.permute.xlu0 0
        %6565 = vperm.xlu0 %6564, %v6555
        %v6566 = vpop.permute.xlu0 %6565
        %6569 = vset.pattern.permute.xlu0 0
        %6570 = vperm.xlu0 %6569, %v6556
        %v6571 = vpop.permute.xlu0 %6570
        %6574 = vset.pattern.permute.xlu0 0
        %6575 = vperm.xlu0 %6574, %v6557
        %v6576 = vpop.permute.xlu0 %6575
        %vm6578 = vcmask 261120
        %v6580 = vsel %vm6578, %v6548, 0
        %v6583 = vsel %vm6578, %v6549, 0
        %6585 = vmatprep.subr.bf16.mxu0 %v6551
        %6586 = vmatpush1.bf16.msra.mxu0 %v6550
        %6587 = vmatprep.subr.bf16.mxu0 %v6553
        %6588 = vmatpush1.bf16.msra.mxu0 %v6552
        %6589 = vmatprep.subr.bf16.mxu0 0
        %6590 = vmatpush1.bf16.msra.mxu0 0
        %6591 = vmatprep.subr.bf16.mxu0 0
        %6592 = vmatpush1.bf16.msra.mxu0 0
        %6593 = vmatprep.subr.bf16.mxu0 0
        %6594 = vmatpush1.bf16.msra.mxu0 0
        %6595 = vmatprep.subr.bf16.mxu0 0
        %6596 = vmatpush1.bf16.msra.mxu0 0
        %6597 = vmatprep.subr.bf16.mxu0 0
        %6598 = vmatpush1.bf16.msra.mxu0 0
        %6599 = vmatprep.subr.bf16.mxu0 0
        %6600 = vmatpush1.bf16.msra.mxu0 0
        %6601 = vmatprep.subr.bf16.mxu0 0
        %6602 = vmatpush1.bf16.msra.mxu0 0
        %6603 = vmatprep.subr.bf16.mxu0 0
        %6604 = vmatpush1.bf16.msra.mxu0 0
        %6605 = vmatprep.subr.bf16.mxu0 0
        %6606 = vmatpush1.bf16.msra.mxu0 0
        %6607 = vmatprep.subr.bf16.mxu0 0
        %6608 = vmatpush1.bf16.msra.mxu0 0
        %6609 = vmatprep.subr.bf16.mxu0 0
        %6610 = vmatpush1.bf16.msra.mxu0 0
        %6611 = vmatprep.subr.bf16.mxu0 0
        %6612 = vmatpush1.bf16.msra.mxu0 0
        %6613 = vmatprep.subr.bf16.mxu0 0
        %6614 = vmatpush1.bf16.msra.mxu0 0
        %6615 = vmatprep.subr.bf16.mxu0 0
        %6616 = vmatpush1.bf16.msra.mxu0 0
        %6617 = vmatprep.mubr.bf16.mxu0 0
        %6618 = vmatmul.mubr.bf16.gmra.mrb[0].mxu0 %v6580
        %v6619 = vpop.f32.mrb[0].mxu0
        %v6620 = vadd.f32 %v6561, %v6619
        %v6621 = vpop.f32.mrb[0].mxu0
        %v6622 = vadd.f32 %v6561, %v6621
        %v6623 = vpop.f32.mrb[0].mxu0
        %v6624 = vadd.f32 %v6566, %v6623
        %v6625 = vpop.f32.mrb[0].mxu0
        %v6626 = vadd.f32 %v6566, %v6625
        %6627 = vmatprep.mubr.bf16.mxu0 0
        %6628 = vmatmul.mubr.bf16.gmra.mrb[0].mxu0 %v6583
        %v6629 = vpop.f32.mrb[0].mxu0
        %v6630 = vadd.f32 %v6571, %v6629
        %v6631 = vpop.f32.mrb[0].mxu0
        %v6632 = vadd.f32 %v6571, %v6631
        %v6633 = vpop.f32.mrb[0].mxu0
        %v6634 = vadd.f32 %v6576, %v6633
        %v6635 = vpop.f32.mrb[0].mxu0
        %v6636 = vadd.f32 %v6576, %v6635
        %6637 = vdwg.mxu0
        %v6638 = vadd.f32 %v6620, %v6183
        %v6639 = vadd.f32 %v6622, %v6184
        %v6640 = vadd.f32 %v6624, %v6185
        %v6641 = vadd.f32 %v6626, %v6186
        %v6642 = vadd.f32 %v6630, %v6187
        %v6643 = vadd.f32 %v6632, %v6188
        %v6644 = vadd.f32 %v6634, %v6189
        %v6645 = vadd.f32 %v6636, %v6190
        %v6646 = vxor.u32 %v6638, 2147483648
        %v6647 = vxor.u32 %v6639, 2147483648
        %v6648 = vxor.u32 %v6640, 2147483648
        %v6649 = vxor.u32 %v6641, 2147483648
        %v6650 = vxor.u32 %v6642, 2147483648
        %v6651 = vxor.u32 %v6643, 2147483648
        %v6652 = vxor.u32 %v6644, 2147483648
        %v6653 = vxor.u32 %v6645, 2147483648
        %v6654 = vmul.f32 %v6646, 1.442695
        %v6655 = vpow.pop %v6654
        %v6656 = vmul.f32 %v6647, 1.442695
        %v6657 = vpow.pop %v6656
        %v6658 = vmul.f32 %v6648, 1.442695
        %v6659 = vpow.pop %v6658
        %v6660 = vmul.f32 %v6649, 1.442695
        %v6661 = vpow.pop %v6660
        %v6662 = vmul.f32 %v6650, 1.442695
        %v6663 = vpow.pop %v6662
        %v6664 = vmul.f32 %v6651, 1.442695
        %v6665 = vpow.pop %v6664
        %v6666 = vmul.f32 %v6652, 1.442695
        %v6667 = vpow.pop %v6666
        %v6668 = vmul.f32 %v6653, 1.442695
        %v6669 = vpow.pop %v6668
        %v6670 = vadd.f32 %v6655, 1.0
        %v6671 = vadd.f32 %v6657, 1.0
        %v6672 = vadd.f32 %v6659, 1.0
        %v6673 = vadd.f32 %v6661, 1.0
        %v6674 = vadd.f32 %v6663, 1.0
        %v6675 = vadd.f32 %v6665, 1.0
        %v6676 = vadd.f32 %v6667, 1.0
        %v6677 = vadd.f32 %v6669, 1.0
        %v6678 = vrcp.pop %v6670
        %v6679 = vmul.f32 1.0, %v6678
        %v6680 = vrcp.pop %v6671
        %v6681 = vmul.f32 1.0, %v6680
        %v6682 = vrcp.pop %v6672
        %v6683 = vmul.f32 1.0, %v6682
        %v6684 = vrcp.pop %v6673
        %v6685 = vmul.f32 1.0, %v6684
        %v6686 = vrcp.pop %v6674
        %v6687 = vmul.f32 1.0, %v6686
        %v6688 = vrcp.pop %v6675
        %v6689 = vmul.f32 1.0, %v6688
        %v6690 = vrcp.pop %v6676
        %v6691 = vmul.f32 1.0, %v6690
        %v6692 = vrcp.pop %v6677
        %v6693 = vmul.f32 1.0, %v6692
        %v6694 = vmul.f32 %v6638, %v6679
        %v6695 = vmul.f32 %v6639, %v6681
        %v6696 = vmul.f32 %v6640, %v6683
        %v6697 = vmul.f32 %v6641, %v6685
        %v6698 = vmul.f32 %v6642, %v6687
        %v6699 = vmul.f32 %v6643, %v6689
        %v6700 = vmul.f32 %v6644, %v6691
        %v6701 = vmul.f32 %v6645, %v6693
        %v6702 = vld [vmem:[%s37] sm:$0xff]
        %v6703 = vld [vmem:[%s37 + $0x8] sm:$0xff]
        %v6704 = vld [vmem:[%s37 + $0x10] sm:$0xff]
        %v6705 = vld [vmem:[%s37 + $0x18] sm:$0xff]
        %v6706 = vld [vmem:[%s985] sm:$0xff]
        %v6707 = vpack.c.bf16 %v6703, %v6702
        %v6708 = vpack.c.bf16 %v6705, %v6704
        %v6710 = vcombine.high %v6706, %v6706
        %v6712 = vpack.c.bf16 %v6706, %v6706
        %v6713 = vpack.c.bf16 %v6710, %v6710
        %v6714 = vld [vmem:[%s39] sm:$0xff]
        %v6715 = vld [vmem:[%s39 + $0x8] sm:$0xff]
        %v6716 = vld [vmem:[%s39 + $0x10] sm:$0xff]
        %v6717 = vld [vmem:[%s39 + $0x18] sm:$0xff]
        %6719 = vset.pattern.permute.xlu0 0
        %6720 = vperm.xlu0 %6719, %v6714
        %v6721 = vpop.permute.xlu0 %6720
        %6724 = vset.pattern.permute.xlu0 0
        %6725 = vperm.xlu0 %6724, %v6715
        %v6726 = vpop.permute.xlu0 %6725
        %6729 = vset.pattern.permute.xlu0 0
        %6730 = vperm.xlu0 %6729, %v6716
        %v6731 = vpop.permute.xlu0 %6730
        %6734 = vset.pattern.permute.xlu0 0
        %6735 = vperm.xlu0 %6734, %v6717
        %v6736 = vpop.permute.xlu0 %6735
        %v6739 = vsel %vm3197, %v6707, 0
        %v6742 = vsel %vm3197, %v6708, 0
        %v6745 = vsel %vm3201, %v6712, 0
        %v6748 = vsel %vm3201, %v6713, 0
        %6750 = vmatprep.subr.bf16.mxu0 %v6748
        %6751 = vmatpush1.bf16.msra.mxu0 %v6745
        %6752 = vmatprep.subr.bf16.mxu0 0
        %6753 = vmatpush1.bf16.msra.mxu0 0
        %6754 = vmatprep.subr.bf16.mxu0 0
        %6755 = vmatpush1.bf16.msra.mxu0 0
        %6756 = vmatprep.subr.bf16.mxu0 0
        %6757 = vmatpush1.bf16.msra.mxu0 0
        %6758 = vmatprep.subr.bf16.mxu0 0
        %6759 = vmatpush1.bf16.msra.mxu0 0
        %6760 = vmatprep.subr.bf16.mxu0 0
        %6761 = vmatpush1.bf16.msra.mxu0 0
        %6762 = vmatprep.subr.bf16.mxu0 0
        %6763 = vmatpush1.bf16.msra.mxu0 0
        %6764 = vmatprep.subr.bf16.mxu0 0
        %6765 = vmatpush1.bf16.msra.mxu0 0
        %6766 = vmatprep.subr.bf16.mxu0 0
        %6767 = vmatpush1.bf16.msra.mxu0 0
        %6768 = vmatprep.subr.bf16.mxu0 0
        %6769 = vmatpush1.bf16.msra.mxu0 0
        %6770 = vmatprep.subr.bf16.mxu0 0
        %6771 = vmatpush1.bf16.msra.mxu0 0
        %6772 = vmatprep.subr.bf16.mxu0 0
        %6773 = vmatpush1.bf16.msra.mxu0 0
        %6774 = vmatprep.subr.bf16.mxu0 0
        %6775 = vmatpush1.bf16.msra.mxu0 0
        %6776 = vmatprep.subr.bf16.mxu0 0
        %6777 = vmatpush1.bf16.msra.mxu0 0
        %6778 = vmatprep.subr.bf16.mxu0 0
        %6779 = vmatpush1.bf16.msra.mxu0 0
        %6780 = vmatprep.subr.bf16.mxu0 0
        %6781 = vmatpush1.bf16.msra.mxu0 0
        %6782 = vmatprep.mubr.bf16.mxu0 0
        %6783 = vmatmul.mubr.bf16.gmra.mrb[0].mxu0 %v6739
        %v6784 = vpop.f32.mrb[0].mxu0
        %v6785 = vadd.f32 %v6721, %v6784
        %v6786 = vpop.f32.mrb[0].mxu0
        %v6787 = vadd.f32 %v6721, %v6786
        %v6788 = vpop.f32.mrb[0].mxu0
        %v6789 = vadd.f32 %v6726, %v6788
        %v6790 = vpop.f32.mrb[0].mxu0
        %v6791 = vadd.f32 %v6726, %v6790
        %6792 = vmatprep.mubr.bf16.mxu0 0
        %6793 = vmatmul.mubr.bf16.gmra.mrb[0].mxu0 %v6742
        %v6794 = vpop.f32.mrb[0].mxu0
        %v6795 = vadd.f32 %v6731, %v6794
        %v6796 = vpop.f32.mrb[0].mxu0
        %v6797 = vadd.f32 %v6731, %v6796
        %v6798 = vpop.f32.mrb[0].mxu0
        %v6799 = vadd.f32 %v6736, %v6798
        %v6800 = vpop.f32.mrb[0].mxu0
        %v6801 = vadd.f32 %v6736, %v6800
        %6802 = vdwg.mxu0
        %v6803 = vld [vmem:[%s41] sm:$0xff]
        %v6804 = vld [vmem:[%s41 + $0x8] sm:$0xff]
        %v6805 = vld [vmem:[%s41 + $0x10] sm:$0xff]
        %v6806 = vld [vmem:[%s41 + $0x18] sm:$0xff]
        %v6807 = vld [vmem:[%s41 + $0x20] sm:$0xff]
        %v6808 = vld [vmem:[%s41 + $0x28] sm:$0xff]
        %v6809 = vld [vmem:[%s41 + $0x30] sm:$0xff]
        %v6810 = vld [vmem:[%s41 + $0x38] sm:$0xff]
        %v6811 = vld [vmem:[%s41 + $0x40] sm:$0xff]
        %v6812 = vld [vmem:[%s41 + $0x48] sm:$0xff]
        %v6813 = vld [vmem:[%s41 + $0x50] sm:$0xff]
        %v6814 = vld [vmem:[%s41 + $0x58] sm:$0xff]
        %v6815 = vpack.c.bf16 %v6804, %v6803
        %v6816 = vpack.c.bf16 %v6806, %v6805
        %v6817 = vpack.c.bf16 %v6808, %v6807
        %v6818 = vpack.c.bf16 %v6810, %v6809
        %v6819 = vpack.c.bf16 %v6812, %v6811
        %v6820 = vpack.c.bf16 %v6814, %v6813
        %v6821 = vpack.c.bf16 %v6696, %v6694
        %v6822 = vpack.c.bf16 %v6697, %v6695
        %v6823 = vpack.c.bf16 %v6700, %v6698
        %v6824 = vpack.c.bf16 %v6701, %v6699
        %v6825 = vld [vmem:[%s43] sm:$0xff]
        %v6826 = vld [vmem:[%s43 + $0x8] sm:$0xff]
        %v6827 = vld [vmem:[%s43 + $0x10] sm:$0xff]
        %v6828 = vld [vmem:[%s43 + $0x18] sm:$0xff]
        %v6829 = vld [vmem:[%s43 + $0x20] sm:$0xff]
        %v6830 = vld [vmem:[%s43 + $0x28] sm:$0xff]
        %v6831 = vld [vmem:[%s43 + $0x30] sm:$0xff]
        %v6832 = vld [vmem:[%s43 + $0x38] sm:$0xff]
        %v6833 = vld [vmem:[%s43 + $0x40] sm:$0xff]
        %v6834 = vld [vmem:[%s43 + $0x48] sm:$0xff]
        %v6835 = vld [vmem:[%s43 + $0x50] sm:$0xff]
        %v6836 = vld [vmem:[%s43 + $0x58] sm:$0xff]
        %6838 = vset.pattern.permute.xlu0 0
        %6839 = vperm.xlu0 %6838, %v6825
        %v6840 = vpop.permute.xlu0 %6839
        %6843 = vset.pattern.permute.xlu0 0
        %6844 = vperm.xlu0 %6843, %v6826
        %v6845 = vpop.permute.xlu0 %6844
        %6848 = vset.pattern.permute.xlu0 0
        %6849 = vperm.xlu0 %6848, %v6827
        %v6850 = vpop.permute.xlu0 %6849
        %6853 = vset.pattern.permute.xlu0 0
        %6854 = vperm.xlu0 %6853, %v6828
        %v6855 = vpop.permute.xlu0 %6854
        %6858 = vset.pattern.permute.xlu0 0
        %6859 = vperm.xlu0 %6858, %v6829
        %v6860 = vpop.permute.xlu0 %6859
        %6863 = vset.pattern.permute.xlu0 0
        %6864 = vperm.xlu0 %6863, %v6830
        %v6865 = vpop.permute.xlu0 %6864
        %6868 = vset.pattern.permute.xlu0 0
        %6869 = vperm.xlu0 %6868, %v6831
        %v6870 = vpop.permute.xlu0 %6869
        %6873 = vset.pattern.permute.xlu0 0
        %6874 = vperm.xlu0 %6873, %v6832
        %v6875 = vpop.permute.xlu0 %6874
        %6878 = vset.pattern.permute.xlu0 0
        %6879 = vperm.xlu0 %6878, %v6833
        %v6880 = vpop.permute.xlu0 %6879
        %6883 = vset.pattern.permute.xlu0 0
        %6884 = vperm.xlu0 %6883, %v6834
        %v6885 = vpop.permute.xlu0 %6884
        %6888 = vset.pattern.permute.xlu0 0
        %6889 = vperm.xlu0 %6888, %v6835
        %v6890 = vpop.permute.xlu0 %6889
        %6893 = vset.pattern.permute.xlu0 0
        %6894 = vperm.xlu0 %6893, %v6836
        %v6895 = vpop.permute.xlu0 %6894
        %v6898 = vsel %vm6578, %v6815, 0
        %v6901 = vsel %vm6578, %v6816, 0
        %v6904 = vsel %vm6578, %v6817, 0
        %v6907 = vsel %vm6578, %v6818, 0
        %v6910 = vsel %vm6578, %v6819, 0
        %v6913 = vsel %vm6578, %v6820, 0
        %6915 = vmatprep.subr.bf16.mxu0 %v6822
        %6916 = vmatpush1.bf16.msra.mxu0 %v6821
        %6917 = vmatprep.subr.bf16.mxu0 %v6824
        %6918 = vmatpush1.bf16.msra.mxu0 %v6823
        %6919 = vmatprep.subr.bf16.mxu0 0
        %6920 = vmatpush1.bf16.msra.mxu0 0
        %6921 = vmatprep.subr.bf16.mxu0 0
        %6922 = vmatpush1.bf16.msra.mxu0 0
        %6923 = vmatprep.subr.bf16.mxu0 0
        %6924 = vmatpush1.bf16.msra.mxu0 0
        %6925 = vmatprep.subr.bf16.mxu0 0
        %6926 = vmatpush1.bf16.msra.mxu0 0
        %6927 = vmatprep.subr.bf16.mxu0 0
        %6928 = vmatpush1.bf16.msra.mxu0 0
        %6929 = vmatprep.subr.bf16.mxu0 0
        %6930 = vmatpush1.bf16.msra.mxu0 0
        %6931 = vmatprep.subr.bf16.mxu0 0
        %6932 = vmatpush1.bf16.msra.mxu0 0
        %6933 = vmatprep.subr.bf16.mxu0 0
        %6934 = vmatpush1.bf16.msra.mxu0 0
        %6935 = vmatprep.subr.bf16.mxu0 0
        %6936 = vmatpush1.bf16.msra.mxu0 0
        %6937 = vmatprep.subr.bf16.mxu0 0
        %6938 = vmatpush1.bf16.msra.mxu0 0
        %6939 = vmatprep.subr.bf16.mxu0 0
        %6940 = vmatpush1.bf16.msra.mxu0 0
        %6941 = vmatprep.subr.bf16.mxu0 0
        %6942 = vmatpush1.bf16.msra.mxu0 0
        %6943 = vmatprep.subr.bf16.mxu0 0
        %6944 = vmatpush1.bf16.msra.mxu0 0
        %6945 = vmatprep.subr.bf16.mxu0 0
        %6946 = vmatpush1.bf16.msra.mxu0 0
        %6947 = vmatprep.mubr.bf16.mxu0 0
        %6948 = vmatmul.mubr.bf16.gmra.mrb[0].mxu0 %v6898
        %v6949 = vpop.f32.mrb[0].mxu0
        %v6950 = vadd.f32 %v6840, %v6949
        %v6951 = vpop.f32.mrb[0].mxu0
        %v6952 = vadd.f32 %v6840, %v6951
        %v6953 = vpop.f32.mrb[0].mxu0
        %v6954 = vadd.f32 %v6845, %v6953
        %v6955 = vpop.f32.mrb[0].mxu0
        %v6956 = vadd.f32 %v6845, %v6955
        %6957 = vmatprep.mubr.bf16.mxu0 0
        %6958 = vmatmul.mubr.bf16.gmra.mrb[0].mxu0 %v6901
        %v6959 = vpop.f32.mrb[0].mxu0
        %v6960 = vadd.f32 %v6850, %v6959
        %v6961 = vpop.f32.mrb[0].mxu0
        %v6962 = vadd.f32 %v6850, %v6961
        %v6963 = vpop.f32.mrb[0].mxu0
        %v6964 = vadd.f32 %v6855, %v6963
        %v6965 = vpop.f32.mrb[0].mxu0
        %v6966 = vadd.f32 %v6855, %v6965
        %6967 = vmatprep.mubr.bf16.mxu0 0
        %6968 = vmatmul.mubr.bf16.gmra.mrb[0].mxu0 %v6904
        %v6969 = vpop.f32.mrb[0].mxu0
        %v6970 = vadd.f32 %v6860, %v6969
        %v6971 = vpop.f32.mrb[0].mxu0
        %v6972 = vadd.f32 %v6860, %v6971
        %v6973 = vpop.f32.mrb[0].mxu0
        %v6974 = vadd.f32 %v6865, %v6973
        %v6975 = vpop.f32.mrb[0].mxu0
        %v6976 = vadd.f32 %v6865, %v6975
        %6977 = vmatprep.mubr.bf16.mxu0 0
        %6978 = vmatmul.mubr.bf16.gmra.mrb[0].mxu0 %v6907
        %v6979 = vpop.f32.mrb[0].mxu0
        %v6980 = vadd.f32 %v6870, %v6979
        %v6981 = vpop.f32.mrb[0].mxu0
        %v6982 = vadd.f32 %v6870, %v6981
        %v6983 = vpop.f32.mrb[0].mxu0
        %v6984 = vadd.f32 %v6875, %v6983
        %v6985 = vpop.f32.mrb[0].mxu0
        %v6986 = vadd.f32 %v6875, %v6985
        %6987 = vmatprep.mubr.bf16.mxu0 0
        %6988 = vmatmul.mubr.bf16.gmra.mrb[0].mxu0 %v6910
        %v6989 = vpop.f32.mrb[0].mxu0
        %v6990 = vadd.f32 %v6880, %v6989
        %v6991 = vpop.f32.mrb[0].mxu0
        %v6992 = vadd.f32 %v6880, %v6991
        %v6993 = vpop.f32.mrb[0].mxu0
        %v6994 = vadd.f32 %v6885, %v6993
        %v6995 = vpop.f32.mrb[0].mxu0
        %v6996 = vadd.f32 %v6885, %v6995
        %6997 = vmatprep.mubr.bf16.mxu0 0
        %6998 = vmatmul.mubr.bf16.gmra.mrb[0].mxu0 %v6913
        %v6999 = vpop.f32.mrb[0].mxu0
        %v7000 = vadd.f32 %v6890, %v6999
        %v7001 = vpop.f32.mrb[0].mxu0
        %v7002 = vadd.f32 %v6890, %v7001
        %v7003 = vpop.f32.mrb[0].mxu0
        %v7004 = vadd.f32 %v6895, %v7003
        %v7005 = vpop.f32.mrb[0].mxu0
        %v7006 = vadd.f32 %v6895, %v7005
        %7007 = vdwg.mxu0
        %v7008 = vadd.f32 %v6785, %v6789
        %v7009 = vadd.f32 %v7008, %v6795
        %v7010 = vadd.f32 %v7009, %v6799
        %v7011 = vrot.slane %v7010, 4
        %v7012 = vadd.f32 %v7010, %v7011
        %v7013 = vrot.slane %v7012, 2
        %v7014 = vadd.f32 %v7012, %v7013
        %v7015 = vrot.slane %v7014, 1
        %v7016 = vadd.f32 %v7014, %v7015
        %v7017 = vadd.f32 %v6787, %v6791
        %v7018 = vadd.f32 %v7017, %v6797
        %v7019 = vadd.f32 %v7018, %v6801
        %v7020 = vrot.slane %v7019, 4
        %v7021 = vadd.f32 %v7019, %v7020
        %v7022 = vrot.slane %v7021, 2
        %v7023 = vadd.f32 %v7021, %v7022
        %v7024 = vrot.slane %v7023, 1
        %v7025 = vadd.f32 %v7023, %v7024
        %v7026 = vrcp.pop 32.0
        %v7027 = vmul.f32 %v7016, %v7026
        %v7028 = vmul.f32 %v7025, %v7026
        %v7029 = vsub.f32 %v6785, %v7027
        %v7030 = vsub.f32 %v6787, %v7028
        %v7031 = vsub.f32 %v6789, %v7027
        %v7032 = vsub.f32 %v6791, %v7028
        %v7033 = vsub.f32 %v6795, %v7027
        %v7034 = vsub.f32 %v6797, %v7028
        %v7035 = vsub.f32 %v6799, %v7027
        %v7036 = vsub.f32 %v6801, %v7028
        %v7037 = vmul.f32 %v7029, %v7029
        %v7038 = vmul.f32 %v7030, %v7030
        %v7039 = vmul.f32 %v7031, %v7031
        %v7040 = vmul.f32 %v7032, %v7032
        %v7041 = vmul.f32 %v7033, %v7033
        %v7042 = vmul.f32 %v7034, %v7034
        %v7043 = vmul.f32 %v7035, %v7035
        %v7044 = vmul.f32 %v7036, %v7036
        %v7045 = vadd.f32 %v7037, %v7039
        %v7046 = vadd.f32 %v7045, %v7041
        %v7047 = vadd.f32 %v7046, %v7043
        %v7048 = vrot.slane %v7047, 4
        %v7049 = vadd.f32 %v7047, %v7048
        %v7050 = vrot.slane %v7049, 2
        %v7051 = vadd.f32 %v7049, %v7050
        %v7052 = vrot.slane %v7051, 1
        %v7053 = vadd.f32 %v7051, %v7052
        %v7054 = vadd.f32 %v7038, %v7040
        %v7055 = vadd.f32 %v7054, %v7042
        %v7056 = vadd.f32 %v7055, %v7044
        %v7057 = vrot.slane %v7056, 4
        %v7058 = vadd.f32 %v7056, %v7057
        %v7059 = vrot.slane %v7058, 2
        %v7060 = vadd.f32 %v7058, %v7059
        %v7061 = vrot.slane %v7060, 1
        %v7062 = vadd.f32 %v7060, %v7061
        %v7063 = vmul.f32 %v7053, %v7026
        %v7064 = vmul.f32 %v7062, %v7026
        %v7065 = vadd.f32 %v7063, 1e-06
        %v7066 = vadd.f32 %v7064, 1e-06
        %v7067 = vrsqrt.pop %v7065
        %v7068 = vrsqrt.pop %v7066
        %v7069 = vmul.f32 %v7029, %v7067
        %v7070 = vmul.f32 %v7030, %v7068
        %v7071 = vmul.f32 %v7031, %v7067
        %v7072 = vmul.f32 %v7032, %v7068
        %v7073 = vmul.f32 %v7033, %v7067
        %v7074 = vmul.f32 %v7034, %v7068
        %v7075 = vmul.f32 %v7035, %v7067
        %v7076 = vmul.f32 %v7036, %v7068
        %v7077 = vadd.f32 %v6970, 1.0
        %v7078 = vadd.f32 %v6972, 1.0
        %v7079 = vadd.f32 %v6974, 1.0
        %v7080 = vadd.f32 %v6976, 1.0
        %v7081 = vadd.f32 %v6980, 1.0
        %v7082 = vadd.f32 %v6982, 1.0
        %v7083 = vadd.f32 %v6984, 1.0
        %v7084 = vadd.f32 %v6986, 1.0
        %v7085 = vmul.f32 %v7069, %v7077
        %v7086 = vmul.f32 %v7070, %v7078
        %v7087 = vmul.f32 %v7071, %v7079
        %v7088 = vmul.f32 %v7072, %v7080
        %v7089 = vmul.f32 %v7073, %v7081
        %v7090 = vmul.f32 %v7074, %v7082
        %v7091 = vmul.f32 %v7075, %v7083
        %v7092 = vmul.f32 %v7076, %v7084
        %v7093 = vadd.f32 %v7085, %v6950
        %v7094 = vadd.f32 %v7086, %v6952
        %v7095 = vadd.f32 %v7087, %v6954
        %v7096 = vadd.f32 %v7088, %v6956
        %v7097 = vadd.f32 %v7089, %v6960
        %v7098 = vadd.f32 %v7090, %v6962
        %v7099 = vadd.f32 %v7091, %v6964
        %v7100 = vadd.f32 %v7092, %v6966
        %v7101 = vld [vmem:[%s45] sm:$0xff]
        %v7102 = vld [vmem:[%s45 + $0x8] sm:$0xff]
        %v7103 = vld [vmem:[%s45 + $0x10] sm:$0xff]
        %v7104 = vld [vmem:[%s45 + $0x18] sm:$0xff]
        %v7105 = vpack.c.bf16 %v7102, %v7101
        %v7106 = vpack.c.bf16 %v7104, %v7103
        %v7107 = vpack.c.bf16 %v7095, %v7093
        %v7108 = vpack.c.bf16 %v7096, %v7094
        %v7109 = vpack.c.bf16 %v7099, %v7097
        %v7110 = vpack.c.bf16 %v7100, %v7098
        %v7111 = vld [vmem:[%s47] sm:$0xff]
        %v7112 = vld [vmem:[%s47 + $0x8] sm:$0xff]
        %v7113 = vld [vmem:[%s47 + $0x10] sm:$0xff]
        %v7114 = vld [vmem:[%s47 + $0x18] sm:$0xff]
        %7116 = vset.pattern.permute.xlu0 0
        %7117 = vperm.xlu0 %7116, %v7111
        %v7118 = vpop.permute.xlu0 %7117
        %7121 = vset.pattern.permute.xlu0 0
        %7122 = vperm.xlu0 %7121, %v7112
        %v7123 = vpop.permute.xlu0 %7122
        %7126 = vset.pattern.permute.xlu0 0
        %7127 = vperm.xlu0 %7126, %v7113
        %v7128 = vpop.permute.xlu0 %7127
        %7131 = vset.pattern.permute.xlu0 0
        %7132 = vperm.xlu0 %7131, %v7114
        %v7133 = vpop.permute.xlu0 %7132
        %v7136 = vsel %vm6578, %v7105, 0
        %v7139 = vsel %vm6578, %v7106, 0
        %7141 = vmatprep.subr.bf16.mxu0 %v7108
        %7142 = vmatpush1.bf16.msra.mxu0 %v7107
        %7143 = vmatprep.subr.bf16.mxu0 %v7110
        %7144 = vmatpush1.bf16.msra.mxu0 %v7109
        %7145 = vmatprep.subr.bf16.mxu0 0
        %7146 = vmatpush1.bf16.msra.mxu0 0
        %7147 = vmatprep.subr.bf16.mxu0 0
        %7148 = vmatpush1.bf16.msra.mxu0 0
        %7149 = vmatprep.subr.bf16.mxu0 0
        %7150 = vmatpush1.bf16.msra.mxu0 0
        %7151 = vmatprep.subr.bf16.mxu0 0
        %7152 = vmatpush1.bf16.msra.mxu0 0
        %7153 = vmatprep.subr.bf16.mxu0 0
        %7154 = vmatpush1.bf16.msra.mxu0 0
        %7155 = vmatprep.subr.bf16.mxu0 0
        %7156 = vmatpush1.bf16.msra.mxu0 0
        %7157 = vmatprep.subr.bf16.mxu0 0
        %7158 = vmatpush1.bf16.msra.mxu0 0
        %7159 = vmatprep.subr.bf16.mxu0 0
        %7160 = vmatpush1.bf16.msra.mxu0 0
        %7161 = vmatprep.subr.bf16.mxu0 0
        %7162 = vmatpush1.bf16.msra.mxu0 0
        %7163 = vmatprep.subr.bf16.mxu0 0
        %7164 = vmatpush1.bf16.msra.mxu0 0
        %7165 = vmatprep.subr.bf16.mxu0 0
        %7166 = vmatpush1.bf16.msra.mxu0 0
        %7167 = vmatprep.subr.bf16.mxu0 0
        %7168 = vmatpush1.bf16.msra.mxu0 0
        %7169 = vmatprep.subr.bf16.mxu0 0
        %7170 = vmatpush1.bf16.msra.mxu0 0
        %7171 = vmatprep.subr.bf16.mxu0 0
        %7172 = vmatpush1.bf16.msra.mxu0 0
        %7173 = vmatprep.mubr.bf16.mxu0 0
        %7174 = vmatmul.mubr.bf16.gmra.mrb[0].mxu0 %v7136
        %v7175 = vpop.f32.mrb[0].mxu0
        %v7176 = vadd.f32 %v7118, %v7175
        %v7177 = vpop.f32.mrb[0].mxu0
        %v7178 = vadd.f32 %v7118, %v7177
        %v7179 = vpop.f32.mrb[0].mxu0
        %v7180 = vadd.f32 %v7123, %v7179
        %v7181 = vpop.f32.mrb[0].mxu0
        %v7182 = vadd.f32 %v7123, %v7181
        %7183 = vmatprep.mubr.bf16.mxu0 0
        %7184 = vmatmul.mubr.bf16.gmra.mrb[0].mxu0 %v7139
        %v7185 = vpop.f32.mrb[0].mxu0
        %v7186 = vadd.f32 %v7128, %v7185
        %v7187 = vpop.f32.mrb[0].mxu0
        %v7188 = vadd.f32 %v7128, %v7187
        %v7189 = vpop.f32.mrb[0].mxu0
        %v7190 = vadd.f32 %v7133, %v7189
        %v7191 = vpop.f32.mrb[0].mxu0
        %v7192 = vadd.f32 %v7133, %v7191
        %7193 = vdwg.mxu0
        %v7194 = vxor.u32 %v7176, 2147483648
        %v7195 = vxor.u32 %v7178, 2147483648
        %v7196 = vxor.u32 %v7180, 2147483648
        %v7197 = vxor.u32 %v7182, 2147483648
        %v7198 = vxor.u32 %v7186, 2147483648
        %v7199 = vxor.u32 %v7188, 2147483648
        %v7200 = vxor.u32 %v7190, 2147483648
        %v7201 = vxor.u32 %v7192, 2147483648
        %v7202 = vmul.f32 %v7194, 1.442695
        %v7203 = vpow.pop %v7202
        %v7204 = vmul.f32 %v7195, 1.442695
        %v7205 = vpow.pop %v7204
        %v7206 = vmul.f32 %v7196, 1.442695
        %v7207 = vpow.pop %v7206
        %v7208 = vmul.f32 %v7197, 1.442695
        %v7209 = vpow.pop %v7208
        %v7210 = vmul.f32 %v7198, 1.442695
        %v7211 = vpow.pop %v7210
        %v7212 = vmul.f32 %v7199, 1.442695
        %v7213 = vpow.pop %v7212
        %v7214 = vmul.f32 %v7200, 1.442695
        %v7215 = vpow.pop %v7214
        %v7216 = vmul.f32 %v7201, 1.442695
        %v7217 = vpow.pop %v7216
        %v7218 = vadd.f32 %v7203, 1.0
        %v7219 = vadd.f32 %v7205, 1.0
        %v7220 = vadd.f32 %v7207, 1.0
        %v7221 = vadd.f32 %v7209, 1.0
        %v7222 = vadd.f32 %v7211, 1.0
        %v7223 = vadd.f32 %v7213, 1.0
        %v7224 = vadd.f32 %v7215, 1.0
        %v7225 = vadd.f32 %v7217, 1.0
        %v7226 = vrcp.pop %v7218
        %v7227 = vmul.f32 1.0, %v7226
        %v7228 = vrcp.pop %v7219
        %v7229 = vmul.f32 1.0, %v7228
        %v7230 = vrcp.pop %v7220
        %v7231 = vmul.f32 1.0, %v7230
        %v7232 = vrcp.pop %v7221
        %v7233 = vmul.f32 1.0, %v7232
        %v7234 = vrcp.pop %v7222
        %v7235 = vmul.f32 1.0, %v7234
        %v7236 = vrcp.pop %v7223
        %v7237 = vmul.f32 1.0, %v7236
        %v7238 = vrcp.pop %v7224
        %v7239 = vmul.f32 1.0, %v7238
        %v7240 = vrcp.pop %v7225
        %v7241 = vmul.f32 1.0, %v7240
        %v7242 = vmul.f32 %v7176, %v7227
        %v7243 = vmul.f32 %v7178, %v7229
        %v7244 = vmul.f32 %v7180, %v7231
        %v7245 = vmul.f32 %v7182, %v7233
        %v7246 = vmul.f32 %v7186, %v7235
        %v7247 = vmul.f32 %v7188, %v7237
        %v7248 = vmul.f32 %v7190, %v7239
        %v7249 = vmul.f32 %v7192, %v7241
        %v7250 = vld [vmem:[#allocation4] sm:$0xff]
        %v7251 = vld [vmem:[#allocation4 + $0x8] sm:$0xff]
        %v7252 = vld [vmem:[#allocation4 + $0x10] sm:$0xff]
        %v7253 = vld [vmem:[#allocation4 + $0x18] sm:$0xff]
        %v7254 = vpack.c.bf16 %v7251, %v7250
        %v7255 = vpack.c.bf16 %v7253, %v7252
        %v7256 = vpack.c.bf16 %v7244, %v7242
        %v7257 = vpack.c.bf16 %v7245, %v7243
        %v7258 = vpack.c.bf16 %v7248, %v7246
        %v7259 = vpack.c.bf16 %v7249, %v7247
        %v7260 = vld [vmem:[%s51] sm:$0xff]
        %v7261 = vld [vmem:[%s51 + $0x8] sm:$0xff]
        %v7262 = vld [vmem:[%s51 + $0x10] sm:$0xff]
        %v7263 = vld [vmem:[%s51 + $0x18] sm:$0xff]
        %7265 = vset.pattern.permute.xlu0 0
        %7266 = vperm.xlu0 %7265, %v7260
        %v7267 = vpop.permute.xlu0 %7266
        %7270 = vset.pattern.permute.xlu0 0
        %7271 = vperm.xlu0 %7270, %v7261
        %v7272 = vpop.permute.xlu0 %7271
        %7275 = vset.pattern.permute.xlu0 0
        %7276 = vperm.xlu0 %7275, %v7262
        %v7277 = vpop.permute.xlu0 %7276
        %7280 = vset.pattern.permute.xlu0 0
        %7281 = vperm.xlu0 %7280, %v7263
        %v7282 = vpop.permute.xlu0 %7281
        %v7285 = vsel %vm6578, %v7254, 0
        %v7288 = vsel %vm6578, %v7255, 0
        %7290 = vmatprep.subr.bf16.mxu0 %v7257
        %7291 = vmatpush1.bf16.msra.mxu0 %v7256
        %7292 = vmatprep.subr.bf16.mxu0 %v7259
        %7293 = vmatpush1.bf16.msra.mxu0 %v7258
        %7294 = vmatprep.subr.bf16.mxu0 0
        %7295 = vmatpush1.bf16.msra.mxu0 0
        %7296 = vmatprep.subr.bf16.mxu0 0
        %7297 = vmatpush1.bf16.msra.mxu0 0
        %7298 = vmatprep.subr.bf16.mxu0 0
        %7299 = vmatpush1.bf16.msra.mxu0 0
        %7300 = vmatprep.subr.bf16.mxu0 0
        %7301 = vmatpush1.bf16.msra.mxu0 0
        %7302 = vmatprep.subr.bf16.mxu0 0
        %7303 = vmatpush1.bf16.msra.mxu0 0
        %7304 = vmatprep.subr.bf16.mxu0 0
        %7305 = vmatpush1.bf16.msra.mxu0 0
        %7306 = vmatprep.subr.bf16.mxu0 0
        %7307 = vmatpush1.bf16.msra.mxu0 0
        %7308 = vmatprep.subr.bf16.mxu0 0
        %7309 = vmatpush1.bf16.msra.mxu0 0
        %7310 = vmatprep.subr.bf16.mxu0 0
        %7311 = vmatpush1.bf16.msra.mxu0 0
        %7312 = vmatprep.subr.bf16.mxu0 0
        %7313 = vmatpush1.bf16.msra.mxu0 0
        %7314 = vmatprep.subr.bf16.mxu0 0
        %7315 = vmatpush1.bf16.msra.mxu0 0
        %7316 = vmatprep.subr.bf16.mxu0 0
        %7317 = vmatpush1.bf16.msra.mxu0 0
        %7318 = vmatprep.subr.bf16.mxu0 0
        %7319 = vmatpush1.bf16.msra.mxu0 0
        %7320 = vmatprep.subr.bf16.mxu0 0
        %7321 = vmatpush1.bf16.msra.mxu0 0
        %7322 = vmatprep.mubr.bf16.mxu0 0
        %7323 = vmatmul.mubr.bf16.gmra.mrb[0].mxu0 %v7285
        %v7324 = vpop.f32.mrb[0].mxu0
        %v7325 = vadd.f32 %v7267, %v7324
        %v7326 = vpop.f32.mrb[0].mxu0
        %v7327 = vadd.f32 %v7267, %v7326
        %v7328 = vpop.f32.mrb[0].mxu0
        %v7329 = vadd.f32 %v7272, %v7328
        %v7330 = vpop.f32.mrb[0].mxu0
        %v7331 = vadd.f32 %v7272, %v7330
        %7332 = vmatprep.mubr.bf16.mxu0 0
        %7333 = vmatmul.mubr.bf16.gmra.mrb[0].mxu0 %v7288
        %v7334 = vpop.f32.mrb[0].mxu0
        %v7335 = vadd.f32 %v7277, %v7334
        %v7336 = vpop.f32.mrb[0].mxu0
        %v7337 = vadd.f32 %v7277, %v7336
        %v7338 = vpop.f32.mrb[0].mxu0
        %v7339 = vadd.f32 %v7282, %v7338
        %v7340 = vpop.f32.mrb[0].mxu0
        %v7341 = vadd.f32 %v7282, %v7340
        %7342 = vdwg.mxu0
        %v7343 = vmul.f32 %v6990, %v7325
        %v7344 = vmul.f32 %v6992, %v7327
        %v7345 = vmul.f32 %v6994, %v7329
        %v7346 = vmul.f32 %v6996, %v7331
        %v7347 = vmul.f32 %v7000, %v7335
        %v7348 = vmul.f32 %v7002, %v7337
        %v7349 = vmul.f32 %v7004, %v7339
        %v7350 = vmul.f32 %v7006, %v7341
        %v7351 = vadd.f32 %v6785, %v7343
        %v7352 = vadd.f32 %v6787, %v7344
        %v7353 = vadd.f32 %v6789, %v7345
        %v7354 = vadd.f32 %v6791, %v7346
        %v7355 = vadd.f32 %v6795, %v7347
        %v7356 = vadd.f32 %v6797, %v7348
        %v7357 = vadd.f32 %v6799, %v7349
        %v7358 = vadd.f32 %v6801, %v7350
        %s7359 = scalar_lea.vmem %s41, 96
        %v7360 = vld [vmem:[%s7359] sm:$0xff]
        %v7361 = vld [vmem:[%s7359 + $0x8] sm:$0xff]
        %v7362 = vld [vmem:[%s7359 + $0x10] sm:$0xff]
        %v7363 = vld [vmem:[%s7359 + $0x18] sm:$0xff]
        %v7364 = vld [vmem:[%s7359 + $0x20] sm:$0xff]
        %v7365 = vld [vmem:[%s7359 + $0x28] sm:$0xff]
        %v7366 = vld [vmem:[%s7359 + $0x30] sm:$0xff]
        %v7367 = vld [vmem:[%s7359 + $0x38] sm:$0xff]
        %v7368 = vld [vmem:[%s7359 + $0x40] sm:$0xff]
        %v7369 = vld [vmem:[%s7359 + $0x48] sm:$0xff]
        %v7370 = vld [vmem:[%s7359 + $0x50] sm:$0xff]
        %v7371 = vld [vmem:[%s7359 + $0x58] sm:$0xff]
        %v7372 = vpack.c.bf16 %v7361, %v7360
        %v7373 = vpack.c.bf16 %v7363, %v7362
        %v7374 = vpack.c.bf16 %v7365, %v7364
        %v7375 = vpack.c.bf16 %v7367, %v7366
        %v7376 = vpack.c.bf16 %v7369, %v7368
        %v7377 = vpack.c.bf16 %v7371, %v7370
        %s7378 = scalar_lea.vmem %s43, 96
        %v7379 = vld [vmem:[%s7378] sm:$0xff]
        %v7380 = vld [vmem:[%s7378 + $0x8] sm:$0xff]
        %v7381 = vld [vmem:[%s7378 + $0x10] sm:$0xff]
        %v7382 = vld [vmem:[%s7378 + $0x18] sm:$0xff]
        %v7383 = vld [vmem:[%s7378 + $0x20] sm:$0xff]
        %v7384 = vld [vmem:[%s7378 + $0x28] sm:$0xff]
        %v7385 = vld [vmem:[%s7378 + $0x30] sm:$0xff]
        %v7386 = vld [vmem:[%s7378 + $0x38] sm:$0xff]
        %v7387 = vld [vmem:[%s7378 + $0x40] sm:$0xff]
        %v7388 = vld [vmem:[%s7378 + $0x48] sm:$0xff]
        %v7389 = vld [vmem:[%s7378 + $0x50] sm:$0xff]
        %v7390 = vld [vmem:[%s7378 + $0x58] sm:$0xff]
        %7392 = vset.pattern.permute.xlu0 0
        %7393 = vperm.xlu0 %7392, %v7379
        %v7394 = vpop.permute.xlu0 %7393
        %7397 = vset.pattern.permute.xlu0 0
        %7398 = vperm.xlu0 %7397, %v7380
        %v7399 = vpop.permute.xlu0 %7398
        %7402 = vset.pattern.permute.xlu0 0
        %7403 = vperm.xlu0 %7402, %v7381
        %v7404 = vpop.permute.xlu0 %7403
        %7407 = vset.pattern.permute.xlu0 0
        %7408 = vperm.xlu0 %7407, %v7382
        %v7409 = vpop.permute.xlu0 %7408
        %7412 = vset.pattern.permute.xlu0 0
        %7413 = vperm.xlu0 %7412, %v7383
        %v7414 = vpop.permute.xlu0 %7413
        %7417 = vset.pattern.permute.xlu0 0
        %7418 = vperm.xlu0 %7417, %v7384
        %v7419 = vpop.permute.xlu0 %7418
        %7422 = vset.pattern.permute.xlu0 0
        %7423 = vperm.xlu0 %7422, %v7385
        %v7424 = vpop.permute.xlu0 %7423
        %7427 = vset.pattern.permute.xlu0 0
        %7428 = vperm.xlu0 %7427, %v7386
        %v7429 = vpop.permute.xlu0 %7428
        %7432 = vset.pattern.permute.xlu0 0
        %7433 = vperm.xlu0 %7432, %v7387
        %v7434 = vpop.permute.xlu0 %7433
        %7437 = vset.pattern.permute.xlu0 0
        %7438 = vperm.xlu0 %7437, %v7388
        %v7439 = vpop.permute.xlu0 %7438
        %7442 = vset.pattern.permute.xlu0 0
        %7443 = vperm.xlu0 %7442, %v7389
        %v7444 = vpop.permute.xlu0 %7443
        %7447 = vset.pattern.permute.xlu0 0
        %7448 = vperm.xlu0 %7447, %v7390
        %v7449 = vpop.permute.xlu0 %7448
        %v7452 = vsel %vm6578, %v7372, 0
        %v7455 = vsel %vm6578, %v7373, 0
        %v7458 = vsel %vm6578, %v7374, 0
        %v7461 = vsel %vm6578, %v7375, 0
        %v7464 = vsel %vm6578, %v7376, 0
        %v7467 = vsel %vm6578, %v7377, 0
        %7469 = vmatprep.subr.bf16.mxu0 %v6822
        %7470 = vmatpush1.bf16.msra.mxu0 %v6821
        %7471 = vmatprep.subr.bf16.mxu0 %v6824
        %7472 = vmatpush1.bf16.msra.mxu0 %v6823
        %7473 = vmatprep.subr.bf16.mxu0 0
        %7474 = vmatpush1.bf16.msra.mxu0 0
        %7475 = vmatprep.subr.bf16.mxu0 0
        %7476 = vmatpush1.bf16.msra.mxu0 0
        %7477 = vmatprep.subr.bf16.mxu0 0
        %7478 = vmatpush1.bf16.msra.mxu0 0
        %7479 = vmatprep.subr.bf16.mxu0 0
        %7480 = vmatpush1.bf16.msra.mxu0 0
        %7481 = vmatprep.subr.bf16.mxu0 0
        %7482 = vmatpush1.bf16.msra.mxu0 0
        %7483 = vmatprep.subr.bf16.mxu0 0
        %7484 = vmatpush1.bf16.msra.mxu0 0
        %7485 = vmatprep.subr.bf16.mxu0 0
        %7486 = vmatpush1.bf16.msra.mxu0 0
        %7487 = vmatprep.subr.bf16.mxu0 0
        %7488 = vmatpush1.bf16.msra.mxu0 0
        %7489 = vmatprep.subr.bf16.mxu0 0
        %7490 = vmatpush1.bf16.msra.mxu0 0
        %7491 = vmatprep.subr.bf16.mxu0 0
        %7492 = vmatpush1.bf16.msra.mxu0 0
        %7493 = vmatprep.subr.bf16.mxu0 0
        %7494 = vmatpush1.bf16.msra.mxu0 0
        %7495 = vmatprep.subr.bf16.mxu0 0
        %7496 = vmatpush1.bf16.msra.mxu0 0
        %7497 = vmatprep.subr.bf16.mxu0 0
        %7498 = vmatpush1.bf16.msra.mxu0 0
        %7499 = vmatprep.subr.bf16.mxu0 0
        %7500 = vmatpush1.bf16.msra.mxu0 0
        %7501 = vmatprep.mubr.bf16.mxu0 0
        %7502 = vmatmul.mubr.bf16.gmra.mrb[0].mxu0 %v7452
        %v7503 = vpop.f32.mrb[0].mxu0
        %v7504 = vadd.f32 %v7394, %v7503
        %v7505 = vpop.f32.mrb[0].mxu0
        %v7506 = vadd.f32 %v7394, %v7505
        %v7507 = vpop.f32.mrb[0].mxu0
        %v7508 = vadd.f32 %v7399, %v7507
        %v7509 = vpop.f32.mrb[0].mxu0
        %v7510 = vadd.f32 %v7399, %v7509
        %7511 = vmatprep.mubr.bf16.mxu0 0
        %7512 = vmatmul.mubr.bf16.gmra.mrb[0].mxu0 %v7455
        %v7513 = vpop.f32.mrb[0].mxu0
        %v7514 = vadd.f32 %v7404, %v7513
        %v7515 = vpop.f32.mrb[0].mxu0
        %v7516 = vadd.f32 %v7404, %v7515
        %v7517 = vpop.f32.mrb[0].mxu0
        %v7518 = vadd.f32 %v7409, %v7517
        %v7519 = vpop.f32.mrb[0].mxu0
        %v7520 = vadd.f32 %v7409, %v7519
        %7521 = vmatprep.mubr.bf16.mxu0 0
        %7522 = vmatmul.mubr.bf16.gmra.mrb[0].mxu0 %v7458
        %v7523 = vpop.f32.mrb[0].mxu0
        %v7524 = vadd.f32 %v7414, %v7523
        %v7525 = vpop.f32.mrb[0].mxu0
        %v7526 = vadd.f32 %v7414, %v7525
        %v7527 = vpop.f32.mrb[0].mxu0
        %v7528 = vadd.f32 %v7419, %v7527
        %v7529 = vpop.f32.mrb[0].mxu0
        %v7530 = vadd.f32 %v7419, %v7529
        %7531 = vmatprep.mubr.bf16.mxu0 0
        %7532 = vmatmul.mubr.bf16.gmra.mrb[0].mxu0 %v7461
        %v7533 = vpop.f32.mrb[0].mxu0
        %v7534 = vadd.f32 %v7424, %v7533
        %v7535 = vpop.f32.mrb[0].mxu0
        %v7536 = vadd.f32 %v7424, %v7535
        %v7537 = vpop.f32.mrb[0].mxu0
        %v7538 = vadd.f32 %v7429, %v7537
        %v7539 = vpop.f32.mrb[0].mxu0
        %v7540 = vadd.f32 %v7429, %v7539
        %7541 = vmatprep.mubr.bf16.mxu0 0
        %7542 = vmatmul.mubr.bf16.gmra.mrb[0].mxu0 %v7464
        %v7543 = vpop.f32.mrb[0].mxu0
        %v7544 = vadd.f32 %v7434, %v7543
        %v7545 = vpop.f32.mrb[0].mxu0
        %v7546 = vadd.f32 %v7434, %v7545
        %v7547 = vpop.f32.mrb[0].mxu0
        %v7548 = vadd.f32 %v7439, %v7547
        %v7549 = vpop.f32.mrb[0].mxu0
        %v7550 = vadd.f32 %v7439, %v7549
        %7551 = vmatprep.mubr.bf16.mxu0 0
        %7552 = vmatmul.mubr.bf16.gmra.mrb[0].mxu0 %v7467
        %v7553 = vpop.f32.mrb[0].mxu0
        %v7554 = vadd.f32 %v7444, %v7553
        %v7555 = vpop.f32.mrb[0].mxu0
        %v7556 = vadd.f32 %v7444, %v7555
        %v7557 = vpop.f32.mrb[0].mxu0
        %v7558 = vadd.f32 %v7449, %v7557
        %v7559 = vpop.f32.mrb[0].mxu0
        %v7560 = vadd.f32 %v7449, %v7559
        %7561 = vdwg.mxu0
        %v7562 = vadd.f32 %v7351, %v7353
        %v7563 = vadd.f32 %v7562, %v7355
        %v7564 = vadd.f32 %v7563, %v7357
        %v7565 = vrot.slane %v7564, 4
        %v7566 = vadd.f32 %v7564, %v7565
        %v7567 = vrot.slane %v7566, 2
        %v7568 = vadd.f32 %v7566, %v7567
        %v7569 = vrot.slane %v7568, 1
        %v7570 = vadd.f32 %v7568, %v7569
        %v7571 = vadd.f32 %v7352, %v7354
        %v7572 = vadd.f32 %v7571, %v7356
        %v7573 = vadd.f32 %v7572, %v7358
        %v7574 = vrot.slane %v7573, 4
        %v7575 = vadd.f32 %v7573, %v7574
        %v7576 = vrot.slane %v7575, 2
        %v7577 = vadd.f32 %v7575, %v7576
        %v7578 = vrot.slane %v7577, 1
        %v7579 = vadd.f32 %v7577, %v7578
        %v7580 = vmul.f32 %v7570, %v7026
        %v7581 = vmul.f32 %v7579, %v7026
        %v7582 = vsub.f32 %v7351, %v7580
        %v7583 = vsub.f32 %v7352, %v7581
        %v7584 = vsub.f32 %v7353, %v7580
        %v7585 = vsub.f32 %v7354, %v7581
        %v7586 = vsub.f32 %v7355, %v7580
        %v7587 = vsub.f32 %v7356, %v7581
        %v7588 = vsub.f32 %v7357, %v7580
        %v7589 = vsub.f32 %v7358, %v7581
        %v7590 = vmul.f32 %v7582, %v7582
        %v7591 = vmul.f32 %v7583, %v7583
        %v7592 = vmul.f32 %v7584, %v7584
        %v7593 = vmul.f32 %v7585, %v7585
        %v7594 = vmul.f32 %v7586, %v7586
        %v7595 = vmul.f32 %v7587, %v7587
        %v7596 = vmul.f32 %v7588, %v7588
        %v7597 = vmul.f32 %v7589, %v7589
        %v7598 = vadd.f32 %v7590, %v7592
        %v7599 = vadd.f32 %v7598, %v7594
        %v7600 = vadd.f32 %v7599, %v7596
        %v7601 = vrot.slane %v7600, 4
        %v7602 = vadd.f32 %v7600, %v7601
        %v7603 = vrot.slane %v7602, 2
        %v7604 = vadd.f32 %v7602, %v7603
        %v7605 = vrot.slane %v7604, 1
        %v7606 = vadd.f32 %v7604, %v7605
        %v7607 = vadd.f32 %v7591, %v7593
        %v7608 = vadd.f32 %v7607, %v7595
        %v7609 = vadd.f32 %v7608, %v7597
        %v7610 = vrot.slane %v7609, 4
        %v7611 = vadd.f32 %v7609, %v7610
        %v7612 = vrot.slane %v7611, 2
        %v7613 = vadd.f32 %v7611, %v7612
        %v7614 = vrot.slane %v7613, 1
        %v7615 = vadd.f32 %v7613, %v7614
        %v7616 = vmul.f32 %v7606, %v7026
        %v7617 = vmul.f32 %v7615, %v7026
        %v7618 = vadd.f32 %v7616, 1e-06
        %v7619 = vadd.f32 %v7617, 1e-06
        %v7620 = vrsqrt.pop %v7618
        %v7621 = vrsqrt.pop %v7619
        %v7622 = vmul.f32 %v7582, %v7620
        %v7623 = vmul.f32 %v7583, %v7621
        %v7624 = vmul.f32 %v7584, %v7620
        %v7625 = vmul.f32 %v7585, %v7621
        %v7626 = vmul.f32 %v7586, %v7620
        %v7627 = vmul.f32 %v7587, %v7621
        %v7628 = vmul.f32 %v7588, %v7620
        %v7629 = vmul.f32 %v7589, %v7621
        %v7630 = vadd.f32 %v7524, 1.0
        %v7631 = vadd.f32 %v7526, 1.0
        %v7632 = vadd.f32 %v7528, 1.0
        %v7633 = vadd.f32 %v7530, 1.0
        %v7634 = vadd.f32 %v7534, 1.0
        %v7635 = vadd.f32 %v7536, 1.0
        %v7636 = vadd.f32 %v7538, 1.0
        %v7637 = vadd.f32 %v7540, 1.0
        %v7638 = vmul.f32 %v7622, %v7630
        %v7639 = vmul.f32 %v7623, %v7631
        %v7640 = vmul.f32 %v7624, %v7632
        %v7641 = vmul.f32 %v7625, %v7633
        %v7642 = vmul.f32 %v7626, %v7634
        %v7643 = vmul.f32 %v7627, %v7635
        %v7644 = vmul.f32 %v7628, %v7636
        %v7645 = vmul.f32 %v7629, %v7637
        %v7646 = vadd.f32 %v7638, %v7504
        %v7647 = vadd.f32 %v7639, %v7506
        %v7648 = vadd.f32 %v7640, %v7508
        %v7649 = vadd.f32 %v7641, %v7510
        %v7650 = vadd.f32 %v7642, %v7514
        %v7651 = vadd.f32 %v7643, %v7516
        %v7652 = vadd.f32 %v7644, %v7518
        %v7653 = vadd.f32 %v7645, %v7520
        %s7654 = scalar_lea.vmem %s45, 32
        %v7655 = vld [vmem:[%s7654] sm:$0xff]
        %v7656 = vld [vmem:[%s7654 + $0x8] sm:$0xff]
        %v7657 = vld [vmem:[%s7654 + $0x10] sm:$0xff]
        %v7658 = vld [vmem:[%s7654 + $0x18] sm:$0xff]
        %v7659 = vpack.c.bf16 %v7656, %v7655
        %v7660 = vpack.c.bf16 %v7658, %v7657
        %v7661 = vpack.c.bf16 %v7648, %v7646
        %v7662 = vpack.c.bf16 %v7649, %v7647
        %v7663 = vpack.c.bf16 %v7652, %v7650
        %v7664 = vpack.c.bf16 %v7653, %v7651
        %s7665 = scalar_lea.vmem %s47, 32
        %v7666 = vld [vmem:[%s7665] sm:$0xff]
        %v7667 = vld [vmem:[%s7665 + $0x8] sm:$0xff]
        %v7668 = vld [vmem:[%s7665 + $0x10] sm:$0xff]
        %v7669 = vld [vmem:[%s7665 + $0x18] sm:$0xff]
        %7671 = vset.pattern.permute.xlu0 0
        %7672 = vperm.xlu0 %7671, %v7666
        %v7673 = vpop.permute.xlu0 %7672
        %7676 = vset.pattern.permute.xlu0 0
        %7677 = vperm.xlu0 %7676, %v7667
        %v7678 = vpop.permute.xlu0 %7677
        %7681 = vset.pattern.permute.xlu0 0
        %7682 = vperm.xlu0 %7681, %v7668
        %v7683 = vpop.permute.xlu0 %7682
        %7686 = vset.pattern.permute.xlu0 0
        %7687 = vperm.xlu0 %7686, %v7669
        %v7688 = vpop.permute.xlu0 %7687
        %v7691 = vsel %vm6578, %v7659, 0
        %v7694 = vsel %vm6578, %v7660, 0
        %7696 = vmatprep.subr.bf16.mxu0 %v7662
        %7697 = vmatpush1.bf16.msra.mxu0 %v7661
        %7698 = vmatprep.subr.bf16.mxu0 %v7664
        %7699 = vmatpush1.bf16.msra.mxu0 %v7663
        %7700 = vmatprep.subr.bf16.mxu0 0
        %7701 = vmatpush1.bf16.msra.mxu0 0
        %7702 = vmatprep.subr.bf16.mxu0 0
        %7703 = vmatpush1.bf16.msra.mxu0 0
        %7704 = vmatprep.subr.bf16.mxu0 0
        %7705 = vmatpush1.bf16.msra.mxu0 0
        %7706 = vmatprep.subr.bf16.mxu0 0
        %7707 = vmatpush1.bf16.msra.mxu0 0
        %7708 = vmatprep.subr.bf16.mxu0 0
        %7709 = vmatpush1.bf16.msra.mxu0 0
        %7710 = vmatprep.subr.bf16.mxu0 0
        %7711 = vmatpush1.bf16.msra.mxu0 0
        %7712 = vmatprep.subr.bf16.mxu0 0
        %7713 = vmatpush1.bf16.msra.mxu0 0
        %7714 = vmatprep.subr.bf16.mxu0 0
        %7715 = vmatpush1.bf16.msra.mxu0 0
        %7716 = vmatprep.subr.bf16.mxu0 0
        %7717 = vmatpush1.bf16.msra.mxu0 0
        %7718 = vmatprep.subr.bf16.mxu0 0
        %7719 = vmatpush1.bf16.msra.mxu0 0
        %7720 = vmatprep.subr.bf16.mxu0 0
        %7721 = vmatpush1.bf16.msra.mxu0 0
        %7722 = vmatprep.subr.bf16.mxu0 0
        %7723 = vmatpush1.bf16.msra.mxu0 0
        %7724 = vmatprep.subr.bf16.mxu0 0
        %7725 = vmatpush1.bf16.msra.mxu0 0
        %7726 = vmatprep.subr.bf16.mxu0 0
        %7727 = vmatpush1.bf16.msra.mxu0 0
        %7728 = vmatprep.mubr.bf16.mxu0 0
        %7729 = vmatmul.mubr.bf16.gmra.mrb[0].mxu0 %v7691
        %v7730 = vpop.f32.mrb[0].mxu0
        %v7731 = vadd.f32 %v7673, %v7730
        %v7732 = vpop.f32.mrb[0].mxu0
        %v7733 = vadd.f32 %v7673, %v7732
        %v7734 = vpop.f32.mrb[0].mxu0
        %v7735 = vadd.f32 %v7678, %v7734
        %v7736 = vpop.f32.mrb[0].mxu0
        %v7737 = vadd.f32 %v7678, %v7736
        %7738 = vmatprep.mubr.bf16.mxu0 0
        %7739 = vmatmul.mubr.bf16.gmra.mrb[0].mxu0 %v7694
        %v7740 = vpop.f32.mrb[0].mxu0
        %v7741 = vadd.f32 %v7683, %v7740
        %v7742 = vpop.f32.mrb[0].mxu0
        %v7743 = vadd.f32 %v7683, %v7742
        %v7744 = vpop.f32.mrb[0].mxu0
        %v7745 = vadd.f32 %v7688, %v7744
        %v7746 = vpop.f32.mrb[0].mxu0
        %v7747 = vadd.f32 %v7688, %v7746
        %7748 = vdwg.mxu0
        %v7749 = vxor.u32 %v7731, 2147483648
        %v7750 = vxor.u32 %v7733, 2147483648
        %v7751 = vxor.u32 %v7735, 2147483648
        %v7752 = vxor.u32 %v7737, 2147483648
        %v7753 = vxor.u32 %v7741, 2147483648
        %v7754 = vxor.u32 %v7743, 2147483648
        %v7755 = vxor.u32 %v7745, 2147483648
        %v7756 = vxor.u32 %v7747, 2147483648
        %v7757 = vmul.f32 %v7749, 1.442695
        %v7758 = vpow.pop %v7757
        %v7759 = vmul.f32 %v7750, 1.442695
        %v7760 = vpow.pop %v7759
        %v7761 = vmul.f32 %v7751, 1.442695
        %v7762 = vpow.pop %v7761
        %v7763 = vmul.f32 %v7752, 1.442695
        %v7764 = vpow.pop %v7763
        %v7765 = vmul.f32 %v7753, 1.442695
        %v7766 = vpow.pop %v7765
        %v7767 = vmul.f32 %v7754, 1.442695
        %v7768 = vpow.pop %v7767
        %v7769 = vmul.f32 %v7755, 1.442695
        %v7770 = vpow.pop %v7769
        %v7771 = vmul.f32 %v7756, 1.442695
        %v7772 = vpow.pop %v7771
        %v7773 = vadd.f32 %v7758, 1.0
        %v7774 = vadd.f32 %v7760, 1.0
        %v7775 = vadd.f32 %v7762, 1.0
        %v7776 = vadd.f32 %v7764, 1.0
        %v7777 = vadd.f32 %v7766, 1.0
        %v7778 = vadd.f32 %v7768, 1.0
        %v7779 = vadd.f32 %v7770, 1.0
        %v7780 = vadd.f32 %v7772, 1.0
        %v7781 = vrcp.pop %v7773
        %v7782 = vmul.f32 1.0, %v7781
        %v7783 = vrcp.pop %v7774
        %v7784 = vmul.f32 1.0, %v7783
        %v7785 = vrcp.pop %v7775
        %v7786 = vmul.f32 1.0, %v7785
        %v7787 = vrcp.pop %v7776
        %v7788 = vmul.f32 1.0, %v7787
        %v7789 = vrcp.pop %v7777
        %v7790 = vmul.f32 1.0, %v7789
        %v7791 = vrcp.pop %v7778
        %v7792 = vmul.f32 1.0, %v7791
        %v7793 = vrcp.pop %v7779
        %v7794 = vmul.f32 1.0, %v7793
        %v7795 = vrcp.pop %v7780
        %v7796 = vmul.f32 1.0, %v7795
        %v7797 = vmul.f32 %v7731, %v7782
        %v7798 = vmul.f32 %v7733, %v7784
        %v7799 = vmul.f32 %v7735, %v7786
        %v7800 = vmul.f32 %v7737, %v7788
        %v7801 = vmul.f32 %v7741, %v7790
        %v7802 = vmul.f32 %v7743, %v7792
        %v7803 = vmul.f32 %v7745, %v7794
        %v7804 = vmul.f32 %v7747, %v7796
        %s7805 = scalar_lea.vmem [#allocation4], 32
        %v7806 = vld [vmem:[%s7805] sm:$0xff]
        %v7807 = vld [vmem:[%s7805 + $0x8] sm:$0xff]
        %v7808 = vld [vmem:[%s7805 + $0x10] sm:$0xff]
        %v7809 = vld [vmem:[%s7805 + $0x18] sm:$0xff]
        %v7810 = vpack.c.bf16 %v7807, %v7806
        %v7811 = vpack.c.bf16 %v7809, %v7808
        %v7812 = vpack.c.bf16 %v7799, %v7797
        %v7813 = vpack.c.bf16 %v7800, %v7798
        %v7814 = vpack.c.bf16 %v7803, %v7801
        %v7815 = vpack.c.bf16 %v7804, %v7802
        %s7816 = scalar_lea.vmem %s51, 32
        %v7817 = vld [vmem:[%s7816] sm:$0xff]
        %v7818 = vld [vmem:[%s7816 + $0x8] sm:$0xff]
        %v7819 = vld [vmem:[%s7816 + $0x10] sm:$0xff]
        %v7820 = vld [vmem:[%s7816 + $0x18] sm:$0xff]
        %7822 = vset.pattern.permute.xlu0 0
        %7823 = vperm.xlu0 %7822, %v7817
        %v7824 = vpop.permute.xlu0 %7823
        %7827 = vset.pattern.permute.xlu0 0
        %7828 = vperm.xlu0 %7827, %v7818
        %v7829 = vpop.permute.xlu0 %7828
        %7832 = vset.pattern.permute.xlu0 0
        %7833 = vperm.xlu0 %7832, %v7819
        %v7834 = vpop.permute.xlu0 %7833
        %7837 = vset.pattern.permute.xlu0 0
        %7838 = vperm.xlu0 %7837, %v7820
        %v7839 = vpop.permute.xlu0 %7838
        %v7842 = vsel %vm6578, %v7810, 0
        %v7845 = vsel %vm6578, %v7811, 0
        %7847 = vmatprep.subr.bf16.mxu0 %v7813
        %7848 = vmatpush1.bf16.msra.mxu0 %v7812
        %7849 = vmatprep.subr.bf16.mxu0 %v7815
        %7850 = vmatpush1.bf16.msra.mxu0 %v7814
        %7851 = vmatprep.subr.bf16.mxu0 0
        %7852 = vmatpush1.bf16.msra.mxu0 0
        %7853 = vmatprep.subr.bf16.mxu0 0
        %7854 = vmatpush1.bf16.msra.mxu0 0
        %7855 = vmatprep.subr.bf16.mxu0 0
        %7856 = vmatpush1.bf16.msra.mxu0 0
        %7857 = vmatprep.subr.bf16.mxu0 0
        %7858 = vmatpush1.bf16.msra.mxu0 0
        %7859 = vmatprep.subr.bf16.mxu0 0
        %7860 = vmatpush1.bf16.msra.mxu0 0
        %7861 = vmatprep.subr.bf16.mxu0 0
        %7862 = vmatpush1.bf16.msra.mxu0 0
        %7863 = vmatprep.subr.bf16.mxu0 0
        %7864 = vmatpush1.bf16.msra.mxu0 0
        %7865 = vmatprep.subr.bf16.mxu0 0
        %7866 = vmatpush1.bf16.msra.mxu0 0
        %7867 = vmatprep.subr.bf16.mxu0 0
        %7868 = vmatpush1.bf16.msra.mxu0 0
        %7869 = vmatprep.subr.bf16.mxu0 0
        %7870 = vmatpush1.bf16.msra.mxu0 0
        %7871 = vmatprep.subr.bf16.mxu0 0
        %7872 = vmatpush1.bf16.msra.mxu0 0
        %7873 = vmatprep.subr.bf16.mxu0 0
        %7874 = vmatpush1.bf16.msra.mxu0 0
        %7875 = vmatprep.subr.bf16.mxu0 0
        %7876 = vmatpush1.bf16.msra.mxu0 0
        %7877 = vmatprep.subr.bf16.mxu0 0
        %7878 = vmatpush1.bf16.msra.mxu0 0
        %7879 = vmatprep.mubr.bf16.mxu0 0
        %7880 = vmatmul.mubr.bf16.gmra.mrb[0].mxu0 %v7842
        %v7881 = vpop.f32.mrb[0].mxu0
        %v7882 = vadd.f32 %v7824, %v7881
        %v7883 = vpop.f32.mrb[0].mxu0
        %v7884 = vadd.f32 %v7824, %v7883
        %v7885 = vpop.f32.mrb[0].mxu0
        %v7886 = vadd.f32 %v7829, %v7885
        %v7887 = vpop.f32.mrb[0].mxu0
        %v7888 = vadd.f32 %v7829, %v7887
        %7889 = vmatprep.mubr.bf16.mxu0 0
        %7890 = vmatmul.mubr.bf16.gmra.mrb[0].mxu0 %v7845
        %v7891 = vpop.f32.mrb[0].mxu0
        %v7892 = vadd.f32 %v7834, %v7891
        %v7893 = vpop.f32.mrb[0].mxu0
        %v7894 = vadd.f32 %v7834, %v7893
        %v7895 = vpop.f32.mrb[0].mxu0
        %v7896 = vadd.f32 %v7839, %v7895
        %v7897 = vpop.f32.mrb[0].mxu0
        %v7898 = vadd.f32 %v7839, %v7897
        %7899 = vdwg.mxu0
        %v7900 = vmul.f32 %v7544, %v7882
        %v7901 = vmul.f32 %v7546, %v7884
        %v7902 = vmul.f32 %v7548, %v7886
        %v7903 = vmul.f32 %v7550, %v7888
        %v7904 = vmul.f32 %v7554, %v7892
        %v7905 = vmul.f32 %v7556, %v7894
        %v7906 = vmul.f32 %v7558, %v7896
        %v7907 = vmul.f32 %v7560, %v7898
        %v7908 = vadd.f32 %v7351, %v7900
        %v7909 = vadd.f32 %v7352, %v7901
        %v7910 = vadd.f32 %v7353, %v7902
        %v7911 = vadd.f32 %v7354, %v7903
        %v7912 = vadd.f32 %v7355, %v7904
        %v7913 = vadd.f32 %v7356, %v7905
        %v7914 = vadd.f32 %v7357, %v7906
        %v7915 = vadd.f32 %v7358, %v7907
        %v7916 = vld [vmem:[%s53] sm:$0xff]
        %v7917 = vld [vmem:[%s53 + $0x8] sm:$0xff]
        %v7918 = vld [vmem:[%s53 + $0x10] sm:$0xff]
        %v7919 = vld [vmem:[%s53 + $0x18] sm:$0xff]
        %v7920 = vld [vmem:[%s53 + $0x20] sm:$0xff]
        %v7921 = vld [vmem:[%s53 + $0x28] sm:$0xff]
        %v7922 = vld [vmem:[%s53 + $0x30] sm:$0xff]
        %v7923 = vld [vmem:[%s53 + $0x38] sm:$0xff]
        %v7924 = vpack.c.bf16 %v7917, %v7916
        %v7925 = vpack.c.bf16 %v7919, %v7918
        %v7926 = vpack.c.bf16 %v7921, %v7920
        %v7927 = vpack.c.bf16 %v7923, %v7922
        %v7928 = vld [vmem:[%s55] sm:$0xff]
        %v7929 = vld [vmem:[%s55 + $0x8] sm:$0xff]
        %v7930 = vld [vmem:[%s55 + $0x10] sm:$0xff]
        %v7931 = vld [vmem:[%s55 + $0x18] sm:$0xff]
        %v7932 = vld [vmem:[%s55 + $0x20] sm:$0xff]
        %v7933 = vld [vmem:[%s55 + $0x28] sm:$0xff]
        %v7934 = vld [vmem:[%s55 + $0x30] sm:$0xff]
        %v7935 = vld [vmem:[%s55 + $0x38] sm:$0xff]
        %7937 = vset.pattern.permute.xlu0 0
        %7938 = vperm.xlu0 %7937, %v7928
        %v7939 = vpop.permute.xlu0 %7938
        %7942 = vset.pattern.permute.xlu0 0
        %7943 = vperm.xlu0 %7942, %v7929
        %v7944 = vpop.permute.xlu0 %7943
        %7947 = vset.pattern.permute.xlu0 0
        %7948 = vperm.xlu0 %7947, %v7930
        %v7949 = vpop.permute.xlu0 %7948
        %7952 = vset.pattern.permute.xlu0 0
        %7953 = vperm.xlu0 %7952, %v7931
        %v7954 = vpop.permute.xlu0 %7953
        %7957 = vset.pattern.permute.xlu0 0
        %7958 = vperm.xlu0 %7957, %v7932
        %v7959 = vpop.permute.xlu0 %7958
        %7962 = vset.pattern.permute.xlu0 0
        %7963 = vperm.xlu0 %7962, %v7933
        %v7964 = vpop.permute.xlu0 %7963
        %7967 = vset.pattern.permute.xlu0 0
        %7968 = vperm.xlu0 %7967, %v7934
        %v7969 = vpop.permute.xlu0 %7968
        %7972 = vset.pattern.permute.xlu0 0
        %7973 = vperm.xlu0 %7972, %v7935
        %v7974 = vpop.permute.xlu0 %7973
        %v7977 = vsel %vm6578, %v7924, 0
        %v7980 = vsel %vm6578, %v7925, 0
        %v7983 = vsel %vm6578, %v7926, 0
        %v7986 = vsel %vm6578, %v7927, 0
        %7988 = vmatprep.subr.bf16.mxu0 %v6822
        %7989 = vmatpush1.bf16.msra.mxu0 %v6821
        %7990 = vmatprep.subr.bf16.mxu0 %v6824
        %7991 = vmatpush1.bf16.msra.mxu0 %v6823
        %7992 = vmatprep.subr.bf16.mxu0 0
        %7993 = vmatpush1.bf16.msra.mxu0 0
        %7994 = vmatprep.subr.bf16.mxu0 0
        %7995 = vmatpush1.bf16.msra.mxu0 0
        %7996 = vmatprep.subr.bf16.mxu0 0
        %7997 = vmatpush1.bf16.msra.mxu0 0
        %7998 = vmatprep.subr.bf16.mxu0 0
        %7999 = vmatpush1.bf16.msra.mxu0 0
        %8000 = vmatprep.subr.bf16.mxu0 0
        %8001 = vmatpush1.bf16.msra.mxu0 0
        %8002 = vmatprep.subr.bf16.mxu0 0
        %8003 = vmatpush1.bf16.msra.mxu0 0
        %8004 = vmatprep.subr.bf16.mxu0 0
        %8005 = vmatpush1.bf16.msra.mxu0 0
        %8006 = vmatprep.subr.bf16.mxu0 0
        %8007 = vmatpush1.bf16.msra.mxu0 0
        %8008 = vmatprep.subr.bf16.mxu0 0
        %8009 = vmatpush1.bf16.msra.mxu0 0
        %8010 = vmatprep.subr.bf16.mxu0 0
        %8011 = vmatpush1.bf16.msra.mxu0 0
        %8012 = vmatprep.subr.bf16.mxu0 0
        %8013 = vmatpush1.bf16.msra.mxu0 0
        %8014 = vmatprep.subr.bf16.mxu0 0
        %8015 = vmatpush1.bf16.msra.mxu0 0
        %8016 = vmatprep.subr.bf16.mxu0 0
        %8017 = vmatpush1.bf16.msra.mxu0 0
        %8018 = vmatprep.subr.bf16.mxu0 0
        %8019 = vmatpush1.bf16.msra.mxu0 0
        %8020 = vmatprep.mubr.bf16.mxu0 0
        %8021 = vmatmul.mubr.bf16.gmra.mrb[0].mxu0 %v7977
        %v8022 = vpop.f32.mrb[0].mxu0
        %v8023 = vadd.f32 %v7939, %v8022
        %v8024 = vpop.f32.mrb[0].mxu0
        %v8025 = vadd.f32 %v7939, %v8024
        %v8026 = vpop.f32.mrb[0].mxu0
        %v8027 = vadd.f32 %v7944, %v8026
        %v8028 = vpop.f32.mrb[0].mxu0
        %v8029 = vadd.f32 %v7944, %v8028
        %8030 = vmatprep.mubr.bf16.mxu0 0
        %8031 = vmatmul.mubr.bf16.gmra.mrb[0].mxu0 %v7980
        %v8032 = vpop.f32.mrb[0].mxu0
        %v8033 = vadd.f32 %v7949, %v8032
        %v8034 = vpop.f32.mrb[0].mxu0
        %v8035 = vadd.f32 %v7949, %v8034
        %v8036 = vpop.f32.mrb[0].mxu0
        %v8037 = vadd.f32 %v7954, %v8036
        %v8038 = vpop.f32.mrb[0].mxu0
        %v8039 = vadd.f32 %v7954, %v8038
        %8040 = vmatprep.mubr.bf16.mxu0 0
        %8041 = vmatmul.mubr.bf16.gmra.mrb[0].mxu0 %v7983
        %v8042 = vpop.f32.mrb[0].mxu0
        %v8043 = vadd.f32 %v7959, %v8042
        %v8044 = vpop.f32.mrb[0].mxu0
        %v8045 = vadd.f32 %v7959, %v8044
        %v8046 = vpop.f32.mrb[0].mxu0
        %v8047 = vadd.f32 %v7964, %v8046
        %v8048 = vpop.f32.mrb[0].mxu0
        %v8049 = vadd.f32 %v7964, %v8048
        %8050 = vmatprep.mubr.bf16.mxu0 0
        %8051 = vmatmul.mubr.bf16.gmra.mrb[0].mxu0 %v7986
        %v8052 = vpop.f32.mrb[0].mxu0
        %v8053 = vadd.f32 %v7969, %v8052
        %v8054 = vpop.f32.mrb[0].mxu0
        %v8055 = vadd.f32 %v7969, %v8054
        %v8056 = vpop.f32.mrb[0].mxu0
        %v8057 = vadd.f32 %v7974, %v8056
        %v8058 = vpop.f32.mrb[0].mxu0
        %v8059 = vadd.f32 %v7974, %v8058
        %8060 = vdwg.mxu0
        %v8061 = vadd.f32 %v7908, %v7910
        %v8062 = vadd.f32 %v8061, %v7912
        %v8063 = vadd.f32 %v8062, %v7914
        %v8064 = vrot.slane %v8063, 4
        %v8065 = vadd.f32 %v8063, %v8064
        %v8066 = vrot.slane %v8065, 2
        %v8067 = vadd.f32 %v8065, %v8066
        %v8068 = vrot.slane %v8067, 1
        %v8069 = vadd.f32 %v8067, %v8068
        %v8070 = vadd.f32 %v7909, %v7911
        %v8071 = vadd.f32 %v8070, %v7913
        %v8072 = vadd.f32 %v8071, %v7915
        %v8073 = vrot.slane %v8072, 4
        %v8074 = vadd.f32 %v8072, %v8073
        %v8075 = vrot.slane %v8074, 2
        %v8076 = vadd.f32 %v8074, %v8075
        %v8077 = vrot.slane %v8076, 1
        %v8078 = vadd.f32 %v8076, %v8077
        %v8079 = vmul.f32 %v8069, %v7026
        %v8080 = vmul.f32 %v8078, %v7026
        %v8081 = vsub.f32 %v7908, %v8079
        %v8082 = vsub.f32 %v7909, %v8080
        %v8083 = vsub.f32 %v7910, %v8079
        %v8084 = vsub.f32 %v7911, %v8080
        %v8085 = vsub.f32 %v7912, %v8079
        %v8086 = vsub.f32 %v7913, %v8080
        %v8087 = vsub.f32 %v7914, %v8079
        %v8088 = vsub.f32 %v7915, %v8080
        %v8089 = vmul.f32 %v8081, %v8081
        %v8090 = vmul.f32 %v8082, %v8082
        %v8091 = vmul.f32 %v8083, %v8083
        %v8092 = vmul.f32 %v8084, %v8084
        %v8093 = vmul.f32 %v8085, %v8085
        %v8094 = vmul.f32 %v8086, %v8086
        %v8095 = vmul.f32 %v8087, %v8087
        %v8096 = vmul.f32 %v8088, %v8088
        %v8097 = vadd.f32 %v8089, %v8091
        %v8098 = vadd.f32 %v8097, %v8093
        %v8099 = vadd.f32 %v8098, %v8095
        %v8100 = vrot.slane %v8099, 4
        %v8101 = vadd.f32 %v8099, %v8100
        %v8102 = vrot.slane %v8101, 2
        %v8103 = vadd.f32 %v8101, %v8102
        %v8104 = vrot.slane %v8103, 1
        %v8105 = vadd.f32 %v8103, %v8104
        %v8106 = vadd.f32 %v8090, %v8092
        %v8107 = vadd.f32 %v8106, %v8094
        %v8108 = vadd.f32 %v8107, %v8096
        %v8109 = vrot.slane %v8108, 4
        %v8110 = vadd.f32 %v8108, %v8109
        %v8111 = vrot.slane %v8110, 2
        %v8112 = vadd.f32 %v8110, %v8111
        %v8113 = vrot.slane %v8112, 1
        %v8114 = vadd.f32 %v8112, %v8113
        %v8115 = vmul.f32 %v8105, %v7026
        %v8116 = vmul.f32 %v8114, %v7026
        %v8117 = vadd.f32 %v8115, 1e-06
        %v8118 = vadd.f32 %v8116, 1e-06
        %v8119 = vrsqrt.pop %v8117
        %v8120 = vrsqrt.pop %v8118
        %v8121 = vmul.f32 %v8081, %v8119
        %v8122 = vmul.f32 %v8082, %v8120
        %v8123 = vmul.f32 %v8083, %v8119
        %v8124 = vmul.f32 %v8084, %v8120
        %v8125 = vmul.f32 %v8085, %v8119
        %v8126 = vmul.f32 %v8086, %v8120
        %v8127 = vmul.f32 %v8087, %v8119
        %v8128 = vmul.f32 %v8088, %v8120
        %v8129 = vadd.f32 %v8043, 1.0
        %v8130 = vadd.f32 %v8045, 1.0
        %v8131 = vadd.f32 %v8047, 1.0
        %v8132 = vadd.f32 %v8049, 1.0
        %v8133 = vadd.f32 %v8053, 1.0
        %v8134 = vadd.f32 %v8055, 1.0
        %v8135 = vadd.f32 %v8057, 1.0
        %v8136 = vadd.f32 %v8059, 1.0
        %v8137 = vmul.f32 %v8121, %v8129
        %v8138 = vmul.f32 %v8122, %v8130
        %v8139 = vmul.f32 %v8123, %v8131
        %v8140 = vmul.f32 %v8124, %v8132
        %v8141 = vmul.f32 %v8125, %v8133
        %v8142 = vmul.f32 %v8126, %v8134
        %v8143 = vmul.f32 %v8127, %v8135
        %v8144 = vmul.f32 %v8128, %v8136
        %v8145 = vadd.f32 %v8137, %v8023
        %v8146 = vadd.f32 %v8138, %v8025
        %v8147 = vadd.f32 %v8139, %v8027
        %v8148 = vadd.f32 %v8140, %v8029
        %v8149 = vadd.f32 %v8141, %v8033
        %v8150 = vadd.f32 %v8142, %v8035
        %v8151 = vadd.f32 %v8143, %v8037
        %v8152 = vadd.f32 %v8144, %v8039
        %v8153 = vld [vmem:[%s57] sm:$0xf]
        %v8154 = vpack.c.bf16 %v8153, %v8153
        %v8155 = vpack.c.bf16 %v8147, %v8145
        %v8156 = vpack.c.bf16 %v8148, %v8146
        %v8157 = vpack.c.bf16 %v8151, %v8149
        %v8158 = vpack.c.bf16 %v8152, %v8150
        %v8159 = vld [vmem:[%s59] sm:$0xf]
        %8161 = vset.pattern.permute.xlu0 0
        %8162 = vperm.xlu0 %8161, %v8159
        %v8163 = vpop.permute.xlu0 %8162
        %v8166 = vsel %vm6578, %v8154, 0
        %8168 = vmatprep.subr.bf16.mxu0 %v8156
        %8169 = vmatpush1.bf16.msra.mxu0 %v8155
        %8170 = vmatprep.subr.bf16.mxu0 %v8158
        %8171 = vmatpush1.bf16.msra.mxu0 %v8157
        %8172 = vmatprep.subr.bf16.mxu0 0
        %8173 = vmatpush1.bf16.msra.mxu0 0
        %8174 = vmatprep.subr.bf16.mxu0 0
        %8175 = vmatpush1.bf16.msra.mxu0 0
        %8176 = vmatprep.subr.bf16.mxu0 0
        %8177 = vmatpush1.bf16.msra.mxu0 0
        %8178 = vmatprep.subr.bf16.mxu0 0
        %8179 = vmatpush1.bf16.msra.mxu0 0
        %8180 = vmatprep.subr.bf16.mxu0 0
        %8181 = vmatpush1.bf16.msra.mxu0 0
        %8182 = vmatprep.subr.bf16.mxu0 0
        %8183 = vmatpush1.bf16.msra.mxu0 0
        %8184 = vmatprep.subr.bf16.mxu0 0
        %8185 = vmatpush1.bf16.msra.mxu0 0
        %8186 = vmatprep.subr.bf16.mxu0 0
        %8187 = vmatpush1.bf16.msra.mxu0 0
        %8188 = vmatprep.subr.bf16.mxu0 0
        %8189 = vmatpush1.bf16.msra.mxu0 0
        %8190 = vmatprep.subr.bf16.mxu0 0
        %8191 = vmatpush1.bf16.msra.mxu0 0
        %8192 = vmatprep.subr.bf16.mxu0 0
        %8193 = vmatpush1.bf16.msra.mxu0 0
        %8194 = vmatprep.subr.bf16.mxu0 0
        %8195 = vmatpush1.bf16.msra.mxu0 0
        %8196 = vmatprep.subr.bf16.mxu0 0
        %8197 = vmatpush1.bf16.msra.mxu0 0
        %8198 = vmatprep.subr.bf16.mxu0 0
        %8199 = vmatpush1.bf16.msra.mxu0 0
        %8200 = vmatprep.mubr.bf16.mxu0 0
        %8201 = vmatmul.mubr.bf16.gmra.mrb[0].mxu0 %v8166
        %v8202 = vpop.f32.mrb[0].mxu0
        %v8203 = vadd.f32 %v8163, %v8202
        %v8204 = vpop.f32.mrb[0].mxu0
        %v8205 = vadd.f32 %v8163, %v8204
        %v8206 = vpop.f32.mrb[0].mxu0
        %v8207 = vpop.f32.mrb[0].mxu0
        %8208 = vdwg.mxu0
        %v8211 = vcombine.low %v8203, %v8205
        %8213 = vst [vmem:[%s1000] sm:$0xff] %v8211
        %p8214 = scmp.lt.s32.totalorder %s74, 1
        %s8215 = scalar_select %p8214, %s74, 1
        %s8216 = smul.addr %s8215, 2
        %s8217 = smul.addr %s8216, 4
        %s8218 = scalar_lea.vmem %s61, %s8217
        // Predicated region
        $region149: #{diffusion_mlp_cond_cnn.1} parent=139 // pred_check
          %p8219 = pneg %p737
        $region150: #{diffusion_mlp_cond_cnn.1} parent=139 // pred_check_branch
          %8221 = sbr.rel (%p8219) target = $region152
        $region151: #{diffusion_mlp_cond_cnn.1} parent=139 // pred_region
          _
        $region152: #{diffusion_mlp_cond_cnn.1} parent=139 // pred_fallthru
          _
      $region140: #{diffusion_mlp_cond_cnn.1} parent=5 // pred_fallthru
        _
      %p8222 = scmp.le.s32.totalorder 2, %s69
      // Predicated region
      $region153: #{diffusion_mlp_cond_cnn.1} parent=5 // pred_check
        %p8223 = pneg %p8222
      $region154: #{diffusion_mlp_cond_cnn.1} parent=5 // pred_check_branch
        %8225 = sbr.rel (%p8223) target = $region156
      $region155: #{diffusion_mlp_cond_cnn.1} parent=5 // pred_region
        %s8226 = ssub.s32 %s69, 2
        // Predicated region
        $region157: #{diffusion_mlp_cond_cnn.1} parent=155 // pred_check
          %p8227 = pneg %p743
        $region158: #{diffusion_mlp_cond_cnn.1} parent=155 // pred_check_branch
          %8229 = sbr.rel (%p8227) target = $region160
        $region159: #{diffusion_mlp_cond_cnn.1} parent=155 // pred_region
          %p8230 = scmp.lt.s32.totalorder %s75, 1
          %s8231 = scalar_select %p8230, %s75, 1
          %s8232 = smul.addr %s8231, 2
          %s8233 = smul.addr %s8232, 4
          %s8234 = scalar_lea.vmem %s61, %s8233
        $region160: #{diffusion_mlp_cond_cnn.1} parent=155 // pred_fallthru
          _
      $region156: #{diffusion_mlp_cond_cnn.1} parent=5 // pred_fallthru
        _
    $region6: #{diffusion_mlp_cond_cnn.1} parent=1 // loop_footer
      %s73 = sadd.s32 1, %s69
    $region7: #{diffusion_mlp_cond_cnn.1} parent=1 // loop_footer_branch
      %68 = sbr.rel target = $region3
    $region8: #{diffusion_mlp_cond_cnn.1} parent=1 // loop_exit
      _
    %8235 = vsyncpa [#allocation3], 1
    %s8236 = scalar_lea.sflag [#allocation3], 1
    %8237 = vsyncpa %s8236, 1
    %8238 = vsyncpa [#allocation5], 1

</llo_original>
